<compile_context>
chip_gen: v7x
topology: tpu7x:2x2x1
jax: 0.10.0
libtpu: 0.0.40
codegen_flags: <defaults>
</compile_context>

<pallas_src>
import functools

import jax
import jax.numpy as jnp
from jax import lax
from jax.experimental import pallas as pl
from jax.experimental.pallas import tpu as pltpu

_EPS = 1e-12  # matches torch.nn.functional.normalize default eps


def _infonce_kernel(a_ref, p_ref, n_ref, loss_ref, *, inv_temperature):
    f32 = jnp.float32
    a = a_ref[...].astype(f32)          # (tb, D)
    p = p_ref[...].astype(f32)          # (tb, D)
    n = n_ref[...].astype(f32)          # (tb, N, D)

    inv_t = f32(inv_temperature)
    eps_sq = f32(_EPS * _EPS)

    # Small per-row reductions over (tb, D): VPU/XLU is fine here (1/N of the
    # negatives traffic).
    a_sq = jnp.sum(a * a, axis=-1, keepdims=True)           # (tb, 1)
    p_sq = jnp.sum(p * p, axis=-1, keepdims=True)           # (tb, 1)
    pos_dot = jnp.sum(a * p, axis=-1, keepdims=True)        # (tb, 1)

    # max(||x||, eps) == sqrt(max(||x||^2, eps^2)) (sqrt monotone); rsqrt
    # lowers to the EUP (its own VLIW slot).
    a_inv = lax.rsqrt(jnp.maximum(a_sq, eps_sq))             # (tb, 1)
    p_inv = lax.rsqrt(jnp.maximum(p_sq, eps_sq))             # (tb, 1)

    # Large D-contractions over the negatives tile go to the MXU: batched
    # dot_general (batch b, contract D), i.e. the flash-attention
    # 'bqd,bkd->bqk' pattern with q == 1.  HIGHEST keeps ~f32 accuracy.
    a3 = a[:, None, :]                                       # (tb, 1, D)
    ones3 = jnp.ones_like(a3)                                # (tb, 1, D)
    dn = (((2,), (2,)), ((0,), (0,)))                        # contract d, batch b
    prec = lax.Precision.HIGHEST
    neg_dot = lax.dot_general(a3, n, dn, precision=prec,
                              preferred_element_type=f32)[:, 0, :]       # (tb, N)
    n_sq = lax.dot_general(ones3, n * n, dn, precision=prec,
                           preferred_element_type=f32)[:, 0, :]          # (tb, N)
    n_inv = lax.rsqrt(jnp.maximum(n_sq, eps_sq))             # (tb, N)

    # Normalization folded into the small logit scaling (never touch the big
    # (tb, N, D) tensor with an elementwise divide).
    pos_logit = pos_dot * (a_inv * p_inv) * inv_t            # (tb, 1)
    neg_logit = neg_dot * (a_inv * n_inv) * inv_t            # (tb, N)

    # Cross-entropy with label 0 == logsumexp([pos | negs]) - pos, without
    # materializing the concatenated logits.
    m = jnp.maximum(pos_logit, jnp.max(neg_logit, axis=-1, keepdims=True))
    sum_exp = jnp.exp(pos_logit - m) + jnp.sum(jnp.exp(neg_logit - m),
                                               axis=-1, keepdims=True)
    loss = (m - pos_logit) + jnp.log(sum_exp)                # (tb, 1)

    # Lane-dense (unmasked) store; the wrapper reads column 0.
    loss_ref[...] = jnp.broadcast_to(loss, loss_ref.shape)


def _cdiv(a, b):
    return -(-a // b)


def _round_up(x, m):
    return _cdiv(x, m) * m


def _vmem_capacity_bytes():
    try:
        return int(pltpu.get_tpu_info().vmem_capacity_bytes)
    except Exception:
        return 64 << 20  # conservative (v7x per-TC physical)


def _pick_tile(B, N, D, in_itemsize, vmem_cap):
    # dtype-dependent sublane multiple for the (tb, D) / (tb, N, D) blocks
    sub = {4: 8, 2: 16, 1: 32}.get(in_itemsize, 8)

    if B <= sub:
        return B  # a single full-extent block is always a legal block shape

    # Per-generation working-set budget (well under physical VMEM).
    budget = (48 << 20) if vmem_cap >= (96 << 20) else (24 << 20)

    # Per-row VMEM cost: double-buffered input tiles at their real itemsize,
    # plus the f32 temporaries the body creates over the negatives tile
    # (n*n, multi-pass matmul operand splits, upcast copy for sub-f32 input).
    f32_temp_tiles = 4 if in_itemsize == 4 else 5
    per_row = (2 * N * D * in_itemsize        # negatives, double buffered
               + 4 * D * in_itemsize          # anchor + positives, double buffered
               + 2 * 128 * 4                  # output block, double buffered
               + f32_temp_tiles * N * D * 4   # f32 body temporaries
               + 8 * D * 4)                   # small f32 row temporaries
    tb = (budget // per_row) // sub * sub
    tb = max(sub, min(tb, 1024, (B // sub) * sub))
    # Keep at least two grid steps: DMA/compute overlap and both v7x cores.
    tb = max(sub, min(tb, _round_up(_cdiv(B, 2), sub)))
    return tb


def supervised_infonce_loss(anchor, positives, negatives, *, temperature=0.07):
    """Forward pass of SupervisedInfoNCELoss (mean CE over [pos | negs] logits)."""
    B, D = anchor.shape
    Bn, N, Dn = negatives.shape
    assert positives.shape == (B, D) and Bn == B and Dn == D

    in_itemsize = min(jnp.dtype(anchor.dtype).itemsize,
                      jnp.dtype(positives.dtype).itemsize,
                      jnp.dtype(negatives.dtype).itemsize)
    vmem_cap = _vmem_capacity_bytes()
    tb = _pick_tile(B, N, D, in_itemsize, vmem_cap)
    grid_b = _cdiv(B, tb)
    rows_out = grid_b * tb
    vmem_limit = int(min(vmem_cap * 3 // 4, 96 << 20))

    neg_item = jnp.dtype(negatives.dtype).itemsize
    cost = pl.CostEstimate(
        flops=int(4 * B * N * D + 8 * B * D),
        transcendentals=int(B * (N + 5)),
        bytes_accessed=int((B * N * D + 2 * B * D) * neg_item + rows_out * 128 * 4),
    )

    kernel = functools.partial(_infonce_kernel, inv_temperature=1.0 / temperature)
    out = pl.pallas_call(
        kernel,
        out_shape=jax.ShapeDtypeStruct((rows_out, 128), jnp.float32),
        grid=(grid_b,),
        in_specs=[
            pl.BlockSpec((tb, D), lambda i: (i, 0)),
            pl.BlockSpec((tb, D), lambda i: (i, 0)),
            pl.BlockSpec((tb, N, D), lambda i: (i, 0, 0)),
        ],
        out_specs=pl.BlockSpec((tb, 128), lambda i: (i, 0)),
        compiler_params=pltpu.CompilerParams(
            dimension_semantics=("parallel",),
            vmem_limit_bytes=vmem_limit),
        cost_estimate=cost,
    )(anchor, positives, negatives)

    # Mean over the real rows only; any ragged-tail rows are discarded, so a
    # non-dividing tile never biases the loss.
    return jnp.mean(out[:B, 0])


def _reference_loss(anchor, positives, negatives, temperature=0.07):
    # Pure-JAX reference mirroring the PyTorch module (f32 throughout).
    def norm(x):
        return x / jnp.maximum(jnp.linalg.norm(x, axis=-1, keepdims=True), _EPS)
    a, p, n = norm(anchor), norm(positives), norm(negatives)
    pos_sim = jnp.sum(a * p, axis=-1, keepdims=True) / temperature
    neg_sim = jnp.einsum('bnd,bd->bn', n, a,
                         precision=lax.Precision.HIGHEST) / temperature
    logits = jnp.concatenate([pos_sim, neg_sim], axis=1)
    lse = jax.scipy.special.logsumexp(logits, axis=-1)
    return jnp.mean(lse - logits[:, 0])


if __name__ == "__main__":
    key = jax.random.PRNGKey(0)
    k1, k2, k3 = jax.random.split(key, 3)

    B, N, D = 8, 7, 32  # batch, num_negatives, embedding_dim
    anchor = jax.random.normal(k1, (B, D), dtype=jnp.float32)
    positives = jax.random.normal(k2, (B, D), dtype=jnp.float32)
    negatives = jax.random.normal(k3, (B, N, D), dtype=jnp.float32)

    loss = supervised_infonce_loss(anchor, positives, negatives)
    loss = jax.block_until_ready(loss)

    ref = _reference_loss(anchor, positives, negatives)
    assert jnp.allclose(loss, ref, atol=5e-5, rtol=5e-5), (loss, ref)

    print("KERNEL_OK")
</pallas_src>

<mosaic_0001>
module attributes {stable_mosaic.version = 11 : i64} {
  func.func @_infonce_kernel(%arg0: i32, %arg1: memref<8x32xf32, #tpu.memory_space<vmem>>, %arg2: memref<8x32xf32, #tpu.memory_space<vmem>>, %arg3: memref<8x7x32xf32, #tpu.memory_space<vmem>>, %arg4: memref<8x128xf32, #tpu.memory_space<vmem>>) attributes {dimension_semantics = [#tpu.dimension_semantics<parallel>], iteration_bounds = array<i64: 1>, scalar_prefetch = 0 : i64, scratch_operands = 0 : i64, tpu.core_type = #tpu.core_type<tc>, window_params = [{transform_indices = @transform_0, window_bounds = array<i64: 8, 32>}, {transform_indices = @transform_1, window_bounds = array<i64: 8, 32>}, {transform_indices = @transform_2, window_bounds = array<i64: 8, 7, 32>}, {transform_indices = @transform_3, window_bounds = array<i64: 8, 128>}]} {
    %c0 = arith.constant 0 : index
    %c0_0 = arith.constant 0 : index
    %0 = vector.load %arg1[%c0, %c0_0] : memref<8x32xf32, #tpu.memory_space<vmem>>, vector<8x32xf32>
    %c0_1 = arith.constant 0 : index
    %c0_2 = arith.constant 0 : index
    %1 = vector.load %arg2[%c0_1, %c0_2] : memref<8x32xf32, #tpu.memory_space<vmem>>, vector<8x32xf32>
    %c0_3 = arith.constant 0 : index
    %c0_4 = arith.constant 0 : index
    %c0_5 = arith.constant 0 : index
    %2 = vector.load %arg3[%c0_3, %c0_4, %c0_5] : memref<8x7x32xf32, #tpu.memory_space<vmem>>, vector<8x7x32xf32>
    %3 = arith.mulf %0, %0 : vector<8x32xf32>
    %cst = arith.constant dense<0.000000e+00> : vector<8xf32>
    %4 = vector.multi_reduction <add>, %3, %cst [1] : vector<8x32xf32> to vector<8xf32>
    %5 = vector.shape_cast %4 : vector<8xf32> to vector<8x1xf32>
    %6 = arith.mulf %1, %1 : vector<8x32xf32>
    %cst_6 = arith.constant dense<0.000000e+00> : vector<8xf32>
    %7 = vector.multi_reduction <add>, %6, %cst_6 [1] : vector<8x32xf32> to vector<8xf32>
    %8 = vector.shape_cast %7 : vector<8xf32> to vector<8x1xf32>
    %9 = arith.mulf %0, %1 : vector<8x32xf32>
    %cst_7 = arith.constant dense<0.000000e+00> : vector<8xf32>
    %10 = vector.multi_reduction <add>, %9, %cst_7 [1] : vector<8x32xf32> to vector<8xf32>
    %11 = vector.shape_cast %10 : vector<8xf32> to vector<8x1xf32>
    %cst_8 = arith.constant 1.000000e-24 : f32
    %12 = vector.broadcast %cst_8 : f32 to vector<8x1xf32>
    %13 = arith.maximumf %5, %12 : vector<8x1xf32>
    %14 = math.rsqrt %13 : vector<8x1xf32>
    %cst_9 = arith.constant 1.000000e-24 : f32
    %15 = vector.broadcast %cst_9 : f32 to vector<8x1xf32>
    %16 = arith.maximumf %8, %15 : vector<8x1xf32>
    %17 = math.rsqrt %16 : vector<8x1xf32>
    %18 = vector.shape_cast %0 : vector<8x32xf32> to vector<8x1x32xf32>
    %cst_10 = arith.constant 1.000000e+00 : f32
    %19 = vector.broadcast %cst_10 : f32 to vector<8x1x32xf32>
    %cst_11 = arith.constant dense<0.000000e+00> : vector<8x1x7xf32>
    %20 = tpu.matmul %18, %2, %cst_11 {dimension_numbers = #tpu.dot_dimension_numbers<[2], [2], [1], [1], [0, 0, 0, 1, 1, 1], [0], [0]>, precision = #tpu.contract_precision<fp32>} : vector<8x1x32xf32>, vector<8x7x32xf32>, vector<8x1x7xf32> -> vector<8x1x7xf32>
    %21 = vector.shape_cast %20 : vector<8x1x7xf32> to vector<8x7xf32>
    %22 = arith.mulf %2, %2 : vector<8x7x32xf32>
    %cst_12 = arith.constant dense<0.000000e+00> : vector<8x1x7xf32>
    %23 = tpu.matmul %19, %22, %cst_12 {dimension_numbers = #tpu.dot_dimension_numbers<[2], [2], [1], [1], [0, 0, 0, 1, 1, 1], [0], [0]>, precision = #tpu.contract_precision<fp32>} : vector<8x1x32xf32>, vector<8x7x32xf32>, vector<8x1x7xf32> -> vector<8x1x7xf32>
    %24 = vector.shape_cast %23 : vector<8x1x7xf32> to vector<8x7xf32>
    %cst_13 = arith.constant 1.000000e-24 : f32
    %25 = vector.broadcast %cst_13 : f32 to vector<8x7xf32>
    %26 = arith.maximumf %24, %25 : vector<8x7xf32>
    %27 = math.rsqrt %26 : vector<8x7xf32>
    %28 = arith.mulf %14, %17 : vector<8x1xf32>
    %29 = arith.mulf %11, %28 : vector<8x1xf32>
    %cst_14 = arith.constant 14.2857141 : f32
    %30 = vector.broadcast %cst_14 : f32 to vector<8x1xf32>
    %31 = arith.mulf %29, %30 : vector<8x1xf32>
    %32 = vector.broadcast %14 : vector<8x1xf32> to vector<8x7xf32>
    %33 = arith.mulf %32, %27 : vector<8x7xf32>
    %34 = arith.mulf %21, %33 : vector<8x7xf32>
    %cst_15 = arith.constant 14.2857141 : f32
    %35 = vector.broadcast %cst_15 : f32 to vector<8x7xf32>
    %36 = arith.mulf %34, %35 : vector<8x7xf32>
    %cst_16 = arith.constant dense<0xFF800000> : vector<8xf32>
    %37 = vector.multi_reduction <maximumf>, %36, %cst_16 [1] : vector<8x7xf32> to vector<8xf32>
    %38 = vector.shape_cast %37 : vector<8xf32> to vector<8x1xf32>
    %39 = arith.maximumf %31, %38 : vector<8x1xf32>
    %40 = arith.subf %31, %39 : vector<8x1xf32>
    %41 = math.exp %40 : vector<8x1xf32>
    %42 = vector.broadcast %39 : vector<8x1xf32> to vector<8x7xf32>
    %43 = arith.subf %36, %42 : vector<8x7xf32>
    %44 = math.exp %43 : vector<8x7xf32>
    %cst_17 = arith.constant dense<0.000000e+00> : vector<8xf32>
    %45 = vector.multi_reduction <add>, %44, %cst_17 [1] : vector<8x7xf32> to vector<8xf32>
    %46 = vector.shape_cast %45 : vector<8xf32> to vector<8x1xf32>
    %47 = arith.addf %41, %46 : vector<8x1xf32>
    %48 = arith.subf %39, %31 : vector<8x1xf32>
    %49 = math.log %47 : vector<8x1xf32>
    %50 = arith.addf %48, %49 : vector<8x1xf32>
    %51 = vector.shape_cast %50 : vector<8x1xf32> to vector<8x1xf32>
    %52 = vector.broadcast %51 : vector<8x1xf32> to vector<8x128xf32>
    %c0_18 = arith.constant 0 : index
    %c0_19 = arith.constant 0 : index
    %53 = vector.load %arg4[%c0_18, %c0_19] : memref<8x128xf32, #tpu.memory_space<vmem>>, vector<8x128xf32>
    tpu.vector_store %arg4[%c0_18, %c0_19], %52 {strides = array<i32>} : memref<8x128xf32, #tpu.memory_space<vmem>>, vector<8x128xf32>,
    return
  }
  func.func @transform_0(%arg0: i32) -> (i32, i32) {
    %c0_i32 = arith.constant 0 : i32
    %c0_i32_0 = arith.constant 0 : i32
    return %arg0, %c0_i32 : i32, i32
  }
  func.func @transform_1(%arg0: i32) -> (i32, i32) {
    %c0_i32 = arith.constant 0 : i32
    %c0_i32_0 = arith.constant 0 : i32
    return %arg0, %c0_i32 : i32, i32
  }
  func.func @transform_2(%arg0: i32) -> (i32, i32, i32) {
    %c0_i32 = arith.constant 0 : i32
    %c0_i32_0 = arith.constant 0 : i32
    %c0_i32_1 = arith.constant 0 : i32
    return %arg0, %c0_i32, %c0_i32_0 : i32, i32, i32
  }
  func.func @transform_3(%arg0: i32) -> (i32, i32) {
    %c0_i32 = arith.constant 0 : i32
    %c0_i32_0 = arith.constant 0 : i32
    return %arg0, %c0_i32 : i32, i32
  }
}

</mosaic_0001>

<llo_original>
// kernel: tpu_custom_call.1
$region0: #{tpu_custom_call.1}
  #allocation0 [shape = 'u32[]', space=smem, size = 0x4, offset = 0x4, fixed_abs, tag = 'smem constant byte address 0x4 - core index']
  #allocation1 [shape = 'u32[144,128]{1,0:T(1,128)}', space=vmem, size = 0x12000, scoped, tag = 'internal scratch']
  %s0 = inlined_call_operand.vmem [shape: f32[8,32], index: 0, kind: input, shape index: {}]
  %s1 = inlined_call_operand.vmem [shape: f32[8,32], index: 1, kind: input, shape index: {}]
  %s2 = inlined_call_operand.vmem [shape: f32[8,7,32], index: 2, kind: input, shape index: {}]
  %s3 = inlined_call_operand.hbm [shape: f32[8,128], index: 3, kind: output, shape index: {}]
  %s4 = sld [smem:[#allocation0]]
  $region22: #{tpu_custom_call.1} parent=0
    _
  %s6 = ssub.s32 1, %s4
  %s7 = scalar_select 0, %s6, %s4
  $region1: #{tpu_custom_call.1} parent=0
    #allocation2 [shape = 'u8[4096]{0}', space=vmem, size = 0x1000, scoped, tag = 'output window, operand 0, single buffered']
    #allocation3 [shape = 's32[1]{0}', space=sflag, size = 0x4, scoped, tag = 'scoped memory for tpu_custom_call.1']
    %8 = vsyncpa [#allocation3], 0
    // Predicated region
    $region2: #{tpu_custom_call.1} parent=1 // pred_check
      _
    $region3: #{tpu_custom_call.1} parent=1 // pred_check_branch
      %10 = sbr.rel (0) target = $region5
    $region4: #{tpu_custom_call.1} parent=1 // pred_region
      _
    $region5: #{tpu_custom_call.1} parent=1 // pred_fallthru
      _
    // Predicated region
    $region6: #{tpu_custom_call.1} parent=1 // pred_check
      _
    $region7: #{tpu_custom_call.1} parent=1 // pred_check_branch
      %12 = sbr.rel (0) target = $region9
    $region8: #{tpu_custom_call.1} parent=1 // pred_region
      _
    $region9: #{tpu_custom_call.1} parent=1 // pred_fallthru
      _
    // Predicated region
    $region10: #{tpu_custom_call.1} parent=1 // pred_check
      _
    $region11: #{tpu_custom_call.1} parent=1 // pred_check_branch
      %14 = sbr.rel (0) target = $region13
    $region12: #{tpu_custom_call.1} parent=1 // pred_region
      _
    $region13: #{tpu_custom_call.1} parent=1 // pred_fallthru
      _
    %v15 = vld [vmem:[%s0] sm:$0xff]
    %v16 = vld [vmem:[%s1] sm:$0xff]
    %v17 = vld [vmem:[%s2] sm:$0x7f]
    %v18 = vld [vmem:[%s2 + $0x8] sm:$0x7f]
    %v19 = vld [vmem:[%s2 + $0x10] sm:$0x7f]
    %v20 = vld [vmem:[%s2 + $0x18] sm:$0x7f]
    %v21 = vld [vmem:[%s2 + $0x20] sm:$0x7f]
    %v22 = vld [vmem:[%s2 + $0x28] sm:$0x7f]
    %v23 = vld [vmem:[%s2 + $0x30] sm:$0x7f]
    %v24 = vld [vmem:[%s2 + $0x38] sm:$0x7f]
    %v25 = vmul.f32 %v15, %v15
    %vm26 = vcmask 261120
    %v27 = vsel %vm26, %v25, 0.0
    %28 = vadd.xlane.f32.xlu0 %v27
    %v29 = vpop.xlane.xlu0 %28
    %v30 = vmul.f32 %v16, %v16
    %v31 = vsel %vm26, %v30, 0.0
    %32 = vadd.xlane.f32.xlu0 %v31
    %v33 = vpop.xlane.xlu0 %32
    %v34 = vmul.f32 %v15, %v16
    %v35 = vsel %vm26, %v34, 0.0
    %36 = vadd.xlane.f32.xlu0 %v35
    %v37 = vpop.xlane.xlu0 %36
    %v38 = vmax.f32 %v29, 1e-24
    %v39 = vrsqrt.pop %v38
    %v40 = vmax.f32 %v33, 1e-24
    %v41 = vrsqrt.pop %v40
    %v43 = vcombine.high %v15, %v15
    %v45 = vunpack.c.l.s4 1966171168
    %v46 = vunpack.c.0.s8 %v45
    %v47 = vlaneseq
    %v48 = vshrl.u32 %v47, 7
    %v49 = vsub.s32 %v46, %v48
    %v50 = vrot.slane %v15, %v49
    %v52 = vunpack.c.l.s4 1966171168
    %v53 = vunpack.c.0.s8 %v52
    %v54 = vlaneseq
    %v55 = vshrl.u32 %v54, 7
    %v56 = vsub.s32 %v53, %v55
    %v57 = vrot.slane %v43, %v56
    %v58 = vcombine.high %v50, %v50
    %v59 = vcombine.high %v57, %v57
    %v61 = vunpack.c.l.s4 1966171168
    %v62 = vunpack.c.0.s8 %v61
    %v63 = vlaneseq
    %v64 = vshrl.u32 %v63, 7
    %v65 = vsub.s32 %v62, %v64
    %v66 = vrot.slane %v50, %v65
    %v68 = vunpack.c.l.s4 1966171168
    %v69 = vunpack.c.0.s8 %v68
    %v70 = vlaneseq
    %v71 = vshrl.u32 %v70, 7
    %v72 = vsub.s32 %v69, %v71
    %v73 = vrot.slane %v57, %v72
    %v75 = vunpack.c.l.s4 1966171168
    %v76 = vunpack.c.0.s8 %v75
    %v77 = vlaneseq
    %v78 = vshrl.u32 %v77, 7
    %v79 = vsub.s32 %v76, %v78
    %v80 = vrot.slane %v58, %v79
    %v82 = vunpack.c.l.s4 1966171168
    %v83 = vunpack.c.0.s8 %v82
    %v84 = vlaneseq
    %v85 = vshrl.u32 %v84, 7
    %v86 = vsub.s32 %v83, %v85
    %v87 = vrot.slane %v59, %v86
    %v88 = vcombine.high %v66, %v66
    %v89 = vcombine.high %v73, %v73
    %v90 = vcombine.high %v80, %v80
    %v91 = vcombine.high %v87, %v87
    %v92 = vsel %vm26, %v66, 0
    %v95 = vsel %vm26, %v17, 0
    %97 = vmatprep.subr.mxu0 0.0
    %v98 = vand.u32 %v95, 4294901760
    %99 = vmatpush1.xpose.msra.mxu0 %v98
    %100 = vmatprep.subr.mxu0 0.0
    %101 = vmatpush1.xpose.msra.mxu0 0.0
    %102 = vmatprep.subr.mxu0 0.0
    %103 = vmatpush1.xpose.msra.mxu0 0.0
    %104 = vmatprep.subr.mxu0 0.0
    %105 = vmatpush1.xpose.msra.mxu0 0.0
    %106 = vmatprep.subr.mxu0 0.0
    %107 = vmatpush1.xpose.msra.mxu0 0.0
    %108 = vmatprep.subr.mxu0 0.0
    %109 = vmatpush1.xpose.msra.mxu0 0.0
    %110 = vmatprep.subr.mxu0 0.0
    %111 = vmatpush1.xpose.msra.mxu0 0.0
    %112 = vmatprep.subr.mxu0 0.0
    %113 = vmatpush1.xpose.msra.mxu0 0.0
    %114 = vmatprep.subr.mxu0 0.0
    %115 = vmatpush1.xpose.msra.mxu0 0.0
    %116 = vmatprep.subr.mxu0 0.0
    %117 = vmatpush1.xpose.msra.mxu0 0.0
    %118 = vmatprep.subr.mxu0 0.0
    %119 = vmatpush1.xpose.msra.mxu0 0.0
    %120 = vmatprep.subr.mxu0 0.0
    %121 = vmatpush1.xpose.msra.mxu0 0.0
    %122 = vmatprep.subr.mxu0 0.0
    %123 = vmatpush1.xpose.msra.mxu0 0.0
    %124 = vmatprep.subr.mxu0 0.0
    %125 = vmatpush1.xpose.msra.mxu0 0.0
    %126 = vmatprep.subr.mxu0 0.0
    %127 = vmatpush1.xpose.msra.mxu0 0.0
    %128 = vmatprep.subr.mxu0 0.0
    %129 = vmatpush1.xpose.msra.mxu0 0.0
    %130 = vmatprep.subr.mxu0 0.0
    %131 = vmatpush1.xpose.msra.mxu0 0.0
    %132 = vmatprep.subr.mxu0 0.0
    %133 = vmatpush1.xpose.msra.mxu0 0.0
    %134 = vmatprep.subr.mxu0 0.0
    %135 = vmatpush1.xpose.msra.mxu0 0.0
    %136 = vmatprep.subr.mxu0 0.0
    %137 = vmatpush1.xpose.msra.mxu0 0.0
    %138 = vmatprep.subr.mxu0 0.0
    %139 = vmatpush1.xpose.msra.mxu0 0.0
    %140 = vmatprep.subr.mxu0 0.0
    %141 = vmatpush1.xpose.msra.mxu0 0.0
    %142 = vmatprep.subr.mxu0 0.0
    %143 = vmatpush1.xpose.msra.mxu0 0.0
    %144 = vmatprep.subr.mxu0 0.0
    %145 = vmatpush1.xpose.msra.mxu0 0.0
    %146 = vmatprep.subr.mxu0 0.0
    %147 = vmatpush1.xpose.msra.mxu0 0.0
    %148 = vmatprep.subr.mxu0 0.0
    %149 = vmatpush1.xpose.msra.mxu0 0.0
    %150 = vmatprep.subr.mxu0 0.0
    %151 = vmatpush1.xpose.msra.mxu0 0.0
    %152 = vmatprep.subr.mxu0 0.0
    %153 = vmatpush1.xpose.msra.mxu0 0.0
    %154 = vmatprep.subr.mxu0 0.0
    %155 = vmatpush1.xpose.msra.mxu0 0.0
    %156 = vmatprep.subr.mxu0 0.0
    %157 = vmatpush1.xpose.msra.mxu0 0.0
    %158 = vmatprep.subr.mxu0 0.0
    %159 = vmatpush1.xpose.msra.mxu0 0.0
    %160 = vmatprep.subr.mxu0 0.0
    %161 = vmatpush1.xpose.msra.mxu0 0.0
    %162 = vmatprep.mubr.f32.mxu0 0.0
    %v163 = vand.u32 %v92, 4294901760
    %v164 = vsub.f32 %v92, %v163
    %v165 = vand.u32 %v164, 4294901760
    %v166 = vsub.f32 %v164, %v165
    %v167 = vand.u32 %v166, 4294901760
    %168 = vmatmul.mubr.f32.gmra.mrb[0].mxu0 %v167
    %v169 = vpop.f32.mrb[0].mxu0
    %v170 = vadd.f32 0.0, %v169
    %v171 = vpop.f32.mrb[0].mxu0
    %172 = vdwg.mxu0
    %173 = vmatprep.subr.mxu0 0.0
    %v174 = vand.u32 %v95, 4294901760
    %v175 = vsub.f32 %v95, %v174
    %v176 = vand.u32 %v175, 4294901760
    %v177 = vsub.f32 %v175, %v176
    %v178 = vand.u32 %v177, 4294901760
    %179 = vmatpush1.xpose.msra.mxu0 %v178
    %180 = vmatprep.subr.mxu0 0.0
    %181 = vmatpush1.xpose.msra.mxu0 0.0
    %182 = vmatprep.subr.mxu0 0.0
    %183 = vmatpush1.xpose.msra.mxu0 0.0
    %184 = vmatprep.subr.mxu0 0.0
    %185 = vmatpush1.xpose.msra.mxu0 0.0
    %186 = vmatprep.subr.mxu0 0.0
    %187 = vmatpush1.xpose.msra.mxu0 0.0
    %188 = vmatprep.subr.mxu0 0.0
    %189 = vmatpush1.xpose.msra.mxu0 0.0
    %190 = vmatprep.subr.mxu0 0.0
    %191 = vmatpush1.xpose.msra.mxu0 0.0
    %192 = vmatprep.subr.mxu0 0.0
    %193 = vmatpush1.xpose.msra.mxu0 0.0
    %194 = vmatprep.subr.mxu0 0.0
    %195 = vmatpush1.xpose.msra.mxu0 0.0
    %196 = vmatprep.subr.mxu0 0.0
    %197 = vmatpush1.xpose.msra.mxu0 0.0
    %198 = vmatprep.subr.mxu0 0.0
    %199 = vmatpush1.xpose.msra.mxu0 0.0
    %200 = vmatprep.subr.mxu0 0.0
    %201 = vmatpush1.xpose.msra.mxu0 0.0
    %202 = vmatprep.subr.mxu0 0.0
    %203 = vmatpush1.xpose.msra.mxu0 0.0
    %204 = vmatprep.subr.mxu0 0.0
    %205 = vmatpush1.xpose.msra.mxu0 0.0
    %206 = vmatprep.subr.mxu0 0.0
    %207 = vmatpush1.xpose.msra.mxu0 0.0
    %208 = vmatprep.subr.mxu0 0.0
    %209 = vmatpush1.xpose.msra.mxu0 0.0
    %210 = vmatprep.subr.mxu0 0.0
    %211 = vmatpush1.xpose.msra.mxu0 0.0
    %212 = vmatprep.subr.mxu0 0.0
    %213 = vmatpush1.xpose.msra.mxu0 0.0
    %214 = vmatprep.subr.mxu0 0.0
    %215 = vmatpush1.xpose.msra.mxu0 0.0
    %216 = vmatprep.subr.mxu0 0.0
    %217 = vmatpush1.xpose.msra.mxu0 0.0
    %218 = vmatprep.subr.mxu0 0.0
    %219 = vmatpush1.xpose.msra.mxu0 0.0
    %220 = vmatprep.subr.mxu0 0.0
    %221 = vmatpush1.xpose.msra.mxu0 0.0
    %222 = vmatprep.subr.mxu0 0.0
    %223 = vmatpush1.xpose.msra.mxu0 0.0
    %224 = vmatprep.subr.mxu0 0.0
    %225 = vmatpush1.xpose.msra.mxu0 0.0
    %226 = vmatprep.subr.mxu0 0.0
    %227 = vmatpush1.xpose.msra.mxu0 0.0
    %228 = vmatprep.subr.mxu0 0.0
    %229 = vmatpush1.xpose.msra.mxu0 0.0
    %230 = vmatprep.subr.mxu0 0.0
    %231 = vmatpush1.xpose.msra.mxu0 0.0
    %232 = vmatprep.subr.mxu0 0.0
    %233 = vmatpush1.xpose.msra.mxu0 0.0
    %234 = vmatprep.subr.mxu0 0.0
    %235 = vmatpush1.xpose.msra.mxu0 0.0
    %236 = vmatprep.subr.mxu0 0.0
    %237 = vmatpush1.xpose.msra.mxu0 0.0
    %238 = vmatprep.subr.mxu0 0.0
    %239 = vmatpush1.xpose.msra.mxu0 0.0
    %240 = vmatprep.subr.mxu0 0.0
    %241 = vmatpush1.xpose.msra.mxu0 0.0
    %242 = vmatprep.mubr.f32.mxu0 0.0
    %v243 = vand.u32 %v92, 4294901760
    %244 = vmatmul.mubr.f32.gmra.mrb[0].mxu0 %v243
    %v245 = vpop.f32.mrb[0].mxu0
    %v246 = vadd.f32 %v170, %v245
    %v247 = vpop.f32.mrb[0].mxu0
    %248 = vdwg.mxu0
    %249 = vmatprep.subr.mxu0 0.0
    %v250 = vand.u32 %v95, 4294901760
    %v251 = vsub.f32 %v95, %v250
    %252 = vmatpush1.xpose.msra.mxu0 %v251
    %253 = vmatprep.subr.mxu0 0.0
    %254 = vmatpush1.xpose.msra.mxu0 0.0
    %255 = vmatprep.subr.mxu0 0.0
    %256 = vmatpush1.xpose.msra.mxu0 0.0
    %257 = vmatprep.subr.mxu0 0.0
    %258 = vmatpush1.xpose.msra.mxu0 0.0
    %259 = vmatprep.subr.mxu0 0.0
    %260 = vmatpush1.xpose.msra.mxu0 0.0
    %261 = vmatprep.subr.mxu0 0.0
    %262 = vmatpush1.xpose.msra.mxu0 0.0
    %263 = vmatprep.subr.mxu0 0.0
    %264 = vmatpush1.xpose.msra.mxu0 0.0
    %265 = vmatprep.subr.mxu0 0.0
    %266 = vmatpush1.xpose.msra.mxu0 0.0
    %267 = vmatprep.subr.mxu0 0.0
    %268 = vmatpush1.xpose.msra.mxu0 0.0
    %269 = vmatprep.subr.mxu0 0.0
    %270 = vmatpush1.xpose.msra.mxu0 0.0
    %271 = vmatprep.subr.mxu0 0.0
    %272 = vmatpush1.xpose.msra.mxu0 0.0
    %273 = vmatprep.subr.mxu0 0.0
    %274 = vmatpush1.xpose.msra.mxu0 0.0
    %275 = vmatprep.subr.mxu0 0.0
    %276 = vmatpush1.xpose.msra.mxu0 0.0
    %277 = vmatprep.subr.mxu0 0.0
    %278 = vmatpush1.xpose.msra.mxu0 0.0
    %279 = vmatprep.subr.mxu0 0.0
    %280 = vmatpush1.xpose.msra.mxu0 0.0
    %281 = vmatprep.subr.mxu0 0.0
    %282 = vmatpush1.xpose.msra.mxu0 0.0
    %283 = vmatprep.subr.mxu0 0.0
    %284 = vmatpush1.xpose.msra.mxu0 0.0
    %285 = vmatprep.subr.mxu0 0.0
    %286 = vmatpush1.xpose.msra.mxu0 0.0
    %287 = vmatprep.subr.mxu0 0.0
    %288 = vmatpush1.xpose.msra.mxu0 0.0
    %289 = vmatprep.subr.mxu0 0.0
    %290 = vmatpush1.xpose.msra.mxu0 0.0
    %291 = vmatprep.subr.mxu0 0.0
    %292 = vmatpush1.xpose.msra.mxu0 0.0
    %293 = vmatprep.subr.mxu0 0.0
    %294 = vmatpush1.xpose.msra.mxu0 0.0
    %295 = vmatprep.subr.mxu0 0.0
    %296 = vmatpush1.xpose.msra.mxu0 0.0
    %297 = vmatprep.subr.mxu0 0.0
    %298 = vmatpush1.xpose.msra.mxu0 0.0
    %299 = vmatprep.subr.mxu0 0.0
    %300 = vmatpush1.xpose.msra.mxu0 0.0
    %301 = vmatprep.subr.mxu0 0.0
    %302 = vmatpush1.xpose.msra.mxu0 0.0
    %303 = vmatprep.subr.mxu0 0.0
    %304 = vmatpush1.xpose.msra.mxu0 0.0
    %305 = vmatprep.subr.mxu0 0.0
    %306 = vmatpush1.xpose.msra.mxu0 0.0
    %307 = vmatprep.subr.mxu0 0.0
    %308 = vmatpush1.xpose.msra.mxu0 0.0
    %309 = vmatprep.subr.mxu0 0.0
    %310 = vmatpush1.xpose.msra.mxu0 0.0
    %311 = vmatprep.subr.mxu0 0.0
    %312 = vmatpush1.xpose.msra.mxu0 0.0
    %313 = vmatprep.subr.mxu0 0.0
    %314 = vmatpush1.xpose.msra.mxu0 0.0
    %315 = vmatprep.mubr.f32.mxu0 0.0
    %v316 = vand.u32 %v92, 4294901760
    %v317 = vsub.f32 %v92, %v316
    %318 = vmatmul.mubr.f32.gmra.mrb[0].mxu0 %v317
    %v319 = vpop.f32.mrb[0].mxu0
    %v320 = vadd.f32 %v246, %v319
    %v321 = vpop.f32.mrb[0].mxu0
    %322 = vdwg.mxu0
    %323 = vmatprep.subr.mxu0 0.0
    %v324 = vand.u32 %v95, 4294901760
    %325 = vmatpush1.xpose.msra.mxu0 %v324
    %326 = vmatprep.subr.mxu0 0.0
    %327 = vmatpush1.xpose.msra.mxu0 0.0
    %328 = vmatprep.subr.mxu0 0.0
    %329 = vmatpush1.xpose.msra.mxu0 0.0
    %330 = vmatprep.subr.mxu0 0.0
    %331 = vmatpush1.xpose.msra.mxu0 0.0
    %332 = vmatprep.subr.mxu0 0.0
    %333 = vmatpush1.xpose.msra.mxu0 0.0
    %334 = vmatprep.subr.mxu0 0.0
    %335 = vmatpush1.xpose.msra.mxu0 0.0
    %336 = vmatprep.subr.mxu0 0.0
    %337 = vmatpush1.xpose.msra.mxu0 0.0
    %338 = vmatprep.subr.mxu0 0.0
    %339 = vmatpush1.xpose.msra.mxu0 0.0
    %340 = vmatprep.subr.mxu0 0.0
    %341 = vmatpush1.xpose.msra.mxu0 0.0
    %342 = vmatprep.subr.mxu0 0.0
    %343 = vmatpush1.xpose.msra.mxu0 0.0
    %344 = vmatprep.subr.mxu0 0.0
    %345 = vmatpush1.xpose.msra.mxu0 0.0
    %346 = vmatprep.subr.mxu0 0.0
    %347 = vmatpush1.xpose.msra.mxu0 0.0
    %348 = vmatprep.subr.mxu0 0.0
    %349 = vmatpush1.xpose.msra.mxu0 0.0
    %350 = vmatprep.subr.mxu0 0.0
    %351 = vmatpush1.xpose.msra.mxu0 0.0
    %352 = vmatprep.subr.mxu0 0.0
    %353 = vmatpush1.xpose.msra.mxu0 0.0
    %354 = vmatprep.subr.mxu0 0.0
    %355 = vmatpush1.xpose.msra.mxu0 0.0
    %356 = vmatprep.subr.mxu0 0.0
    %357 = vmatpush1.xpose.msra.mxu0 0.0
    %358 = vmatprep.subr.mxu0 0.0
    %359 = vmatpush1.xpose.msra.mxu0 0.0
    %360 = vmatprep.subr.mxu0 0.0
    %361 = vmatpush1.xpose.msra.mxu0 0.0
    %362 = vmatprep.subr.mxu0 0.0
    %363 = vmatpush1.xpose.msra.mxu0 0.0
    %364 = vmatprep.subr.mxu0 0.0
    %365 = vmatpush1.xpose.msra.mxu0 0.0
    %366 = vmatprep.subr.mxu0 0.0
    %367 = vmatpush1.xpose.msra.mxu0 0.0
    %368 = vmatprep.subr.mxu0 0.0
    %369 = vmatpush1.xpose.msra.mxu0 0.0
    %370 = vmatprep.subr.mxu0 0.0
    %371 = vmatpush1.xpose.msra.mxu0 0.0
    %372 = vmatprep.subr.mxu0 0.0
    %373 = vmatpush1.xpose.msra.mxu0 0.0
    %374 = vmatprep.subr.mxu0 0.0
    %375 = vmatpush1.xpose.msra.mxu0 0.0
    %376 = vmatprep.subr.mxu0 0.0
    %377 = vmatpush1.xpose.msra.mxu0 0.0
    %378 = vmatprep.subr.mxu0 0.0
    %379 = vmatpush1.xpose.msra.mxu0 0.0
    %380 = vmatprep.subr.mxu0 0.0
    %381 = vmatpush1.xpose.msra.mxu0 0.0
    %382 = vmatprep.subr.mxu0 0.0
    %383 = vmatpush1.xpose.msra.mxu0 0.0
    %384 = vmatprep.subr.mxu0 0.0
    %385 = vmatpush1.xpose.msra.mxu0 0.0
    %386 = vmatprep.subr.mxu0 0.0
    %387 = vmatpush1.xpose.msra.mxu0 0.0
    %388 = vmatprep.mubr.f32.mxu0 0.0
    %v389 = vand.u32 %v92, 4294901760
    %v390 = vsub.f32 %v92, %v389
    %v391 = vand.u32 %v390, 4294901760
    %392 = vmatmul.mubr.f32.gmra.mrb[0].mxu0 %v391
    %v393 = vpop.f32.mrb[0].mxu0
    %v394 = vadd.f32 %v320, %v393
    %v395 = vpop.f32.mrb[0].mxu0
    %396 = vdwg.mxu0
    %397 = vmatprep.subr.mxu0 0.0
    %v398 = vand.u32 %v95, 4294901760
    %v399 = vsub.f32 %v95, %v398
    %v400 = vand.u32 %v399, 4294901760
    %401 = vmatpush1.xpose.msra.mxu0 %v400
    %402 = vmatprep.subr.mxu0 0.0
    %403 = vmatpush1.xpose.msra.mxu0 0.0
    %404 = vmatprep.subr.mxu0 0.0
    %405 = vmatpush1.xpose.msra.mxu0 0.0
    %406 = vmatprep.subr.mxu0 0.0
    %407 = vmatpush1.xpose.msra.mxu0 0.0
    %408 = vmatprep.subr.mxu0 0.0
    %409 = vmatpush1.xpose.msra.mxu0 0.0
    %410 = vmatprep.subr.mxu0 0.0
    %411 = vmatpush1.xpose.msra.mxu0 0.0
    %412 = vmatprep.subr.mxu0 0.0
    %413 = vmatpush1.xpose.msra.mxu0 0.0
    %414 = vmatprep.subr.mxu0 0.0
    %415 = vmatpush1.xpose.msra.mxu0 0.0
    %416 = vmatprep.subr.mxu0 0.0
    %417 = vmatpush1.xpose.msra.mxu0 0.0
    %418 = vmatprep.subr.mxu0 0.0
    %419 = vmatpush1.xpose.msra.mxu0 0.0
    %420 = vmatprep.subr.mxu0 0.0
    %421 = vmatpush1.xpose.msra.mxu0 0.0
    %422 = vmatprep.subr.mxu0 0.0
    %423 = vmatpush1.xpose.msra.mxu0 0.0
    %424 = vmatprep.subr.mxu0 0.0
    %425 = vmatpush1.xpose.msra.mxu0 0.0
    %426 = vmatprep.subr.mxu0 0.0
    %427 = vmatpush1.xpose.msra.mxu0 0.0
    %428 = vmatprep.subr.mxu0 0.0
    %429 = vmatpush1.xpose.msra.mxu0 0.0
    %430 = vmatprep.subr.mxu0 0.0
    %431 = vmatpush1.xpose.msra.mxu0 0.0
    %432 = vmatprep.subr.mxu0 0.0
    %433 = vmatpush1.xpose.msra.mxu0 0.0
    %434 = vmatprep.subr.mxu0 0.0
    %435 = vmatpush1.xpose.msra.mxu0 0.0
    %436 = vmatprep.subr.mxu0 0.0
    %437 = vmatpush1.xpose.msra.mxu0 0.0
    %438 = vmatprep.subr.mxu0 0.0
    %439 = vmatpush1.xpose.msra.mxu0 0.0
    %440 = vmatprep.subr.mxu0 0.0
    %441 = vmatpush1.xpose.msra.mxu0 0.0
    %442 = vmatprep.subr.mxu0 0.0
    %443 = vmatpush1.xpose.msra.mxu0 0.0
    %444 = vmatprep.subr.mxu0 0.0
    %445 = vmatpush1.xpose.msra.mxu0 0.0
    %446 = vmatprep.subr.mxu0 0.0
    %447 = vmatpush1.xpose.msra.mxu0 0.0
    %448 = vmatprep.subr.mxu0 0.0
    %449 = vmatpush1.xpose.msra.mxu0 0.0
    %450 = vmatprep.subr.mxu0 0.0
    %451 = vmatpush1.xpose.msra.mxu0 0.0
    %452 = vmatprep.subr.mxu0 0.0
    %453 = vmatpush1.xpose.msra.mxu0 0.0
    %454 = vmatprep.subr.mxu0 0.0
    %455 = vmatpush1.xpose.msra.mxu0 0.0
    %456 = vmatprep.subr.mxu0 0.0
    %457 = vmatpush1.xpose.msra.mxu0 0.0
    %458 = vmatprep.subr.mxu0 0.0
    %459 = vmatpush1.xpose.msra.mxu0 0.0
    %460 = vmatprep.subr.mxu0 0.0
    %461 = vmatpush1.xpose.msra.mxu0 0.0
    %462 = vmatprep.subr.mxu0 0.0
    %463 = vmatpush1.xpose.msra.mxu0 0.0
    %464 = vmatprep.mubr.f32.mxu0 0.0
    %v465 = vand.u32 %v92, 4294901760
    %466 = vmatmul.mubr.f32.gmra.mrb[0].mxu0 %v465
    %v467 = vpop.f32.mrb[0].mxu0
    %v468 = vadd.f32 %v394, %v467
    %v469 = vpop.f32.mrb[0].mxu0
    %470 = vdwg.mxu0
    %471 = vmatprep.subr.mxu0 0.0
    %v472 = vand.u32 %v95, 4294901760
    %473 = vmatpush1.xpose.msra.mxu0 %v472
    %474 = vmatprep.subr.mxu0 0.0
    %475 = vmatpush1.xpose.msra.mxu0 0.0
    %476 = vmatprep.subr.mxu0 0.0
    %477 = vmatpush1.xpose.msra.mxu0 0.0
    %478 = vmatprep.subr.mxu0 0.0
    %479 = vmatpush1.xpose.msra.mxu0 0.0
    %480 = vmatprep.subr.mxu0 0.0
    %481 = vmatpush1.xpose.msra.mxu0 0.0
    %482 = vmatprep.subr.mxu0 0.0
    %483 = vmatpush1.xpose.msra.mxu0 0.0
    %484 = vmatprep.subr.mxu0 0.0
    %485 = vmatpush1.xpose.msra.mxu0 0.0
    %486 = vmatprep.subr.mxu0 0.0
    %487 = vmatpush1.xpose.msra.mxu0 0.0
    %488 = vmatprep.subr.mxu0 0.0
    %489 = vmatpush1.xpose.msra.mxu0 0.0
    %490 = vmatprep.subr.mxu0 0.0
    %491 = vmatpush1.xpose.msra.mxu0 0.0
    %492 = vmatprep.subr.mxu0 0.0
    %493 = vmatpush1.xpose.msra.mxu0 0.0
    %494 = vmatprep.subr.mxu0 0.0
    %495 = vmatpush1.xpose.msra.mxu0 0.0
    %496 = vmatprep.subr.mxu0 0.0
    %497 = vmatpush1.xpose.msra.mxu0 0.0
    %498 = vmatprep.subr.mxu0 0.0
    %499 = vmatpush1.xpose.msra.mxu0 0.0
    %500 = vmatprep.subr.mxu0 0.0
    %501 = vmatpush1.xpose.msra.mxu0 0.0
    %502 = vmatprep.subr.mxu0 0.0
    %503 = vmatpush1.xpose.msra.mxu0 0.0
    %504 = vmatprep.subr.mxu0 0.0
    %505 = vmatpush1.xpose.msra.mxu0 0.0
    %506 = vmatprep.subr.mxu0 0.0
    %507 = vmatpush1.xpose.msra.mxu0 0.0
    %508 = vmatprep.subr.mxu0 0.0
    %509 = vmatpush1.xpose.msra.mxu0 0.0
    %510 = vmatprep.subr.mxu0 0.0
    %511 = vmatpush1.xpose.msra.mxu0 0.0
    %512 = vmatprep.subr.mxu0 0.0
    %513 = vmatpush1.xpose.msra.mxu0 0.0
    %514 = vmatprep.subr.mxu0 0.0
    %515 = vmatpush1.xpose.msra.mxu0 0.0
    %516 = vmatprep.subr.mxu0 0.0
    %517 = vmatpush1.xpose.msra.mxu0 0.0
    %518 = vmatprep.subr.mxu0 0.0
    %519 = vmatpush1.xpose.msra.mxu0 0.0
    %520 = vmatprep.subr.mxu0 0.0
    %521 = vmatpush1.xpose.msra.mxu0 0.0
    %522 = vmatprep.subr.mxu0 0.0
    %523 = vmatpush1.xpose.msra.mxu0 0.0
    %524 = vmatprep.subr.mxu0 0.0
    %525 = vmatpush1.xpose.msra.mxu0 0.0
    %526 = vmatprep.subr.mxu0 0.0
    %527 = vmatpush1.xpose.msra.mxu0 0.0
    %528 = vmatprep.subr.mxu0 0.0
    %529 = vmatpush1.xpose.msra.mxu0 0.0
    %530 = vmatprep.subr.mxu0 0.0
    %531 = vmatpush1.xpose.msra.mxu0 0.0
    %532 = vmatprep.subr.mxu0 0.0
    %533 = vmatpush1.xpose.msra.mxu0 0.0
    %534 = vmatprep.subr.mxu0 0.0
    %535 = vmatpush1.xpose.msra.mxu0 0.0
    %536 = vmatprep.mubr.f32.mxu0 0.0
    %v537 = vand.u32 %v92, 4294901760
    %538 = vmatmul.mubr.f32.gmra.mrb[0].mxu0 %v537
    %v539 = vpop.f32.mrb[0].mxu0
    %v540 = vadd.f32 %v468, %v539
    %v541 = vpop.f32.mrb[0].mxu0
    %542 = vdwg.mxu0
    %v543 = vsel %vm26, %v80, 0
    %v546 = vsel %vm26, %v18, 0
    %548 = vmatprep.subr.mxu0 0.0
    %v549 = vand.u32 %v546, 4294901760
    %550 = vmatpush1.xpose.msra.mxu0 %v549
    %551 = vmatprep.subr.mxu0 0.0
    %552 = vmatpush1.xpose.msra.mxu0 0.0
    %553 = vmatprep.subr.mxu0 0.0
    %554 = vmatpush1.xpose.msra.mxu0 0.0
    %555 = vmatprep.subr.mxu0 0.0
    %556 = vmatpush1.xpose.msra.mxu0 0.0
    %557 = vmatprep.subr.mxu0 0.0
    %558 = vmatpush1.xpose.msra.mxu0 0.0
    %559 = vmatprep.subr.mxu0 0.0
    %560 = vmatpush1.xpose.msra.mxu0 0.0
    %561 = vmatprep.subr.mxu0 0.0
    %562 = vmatpush1.xpose.msra.mxu0 0.0
    %563 = vmatprep.subr.mxu0 0.0
    %564 = vmatpush1.xpose.msra.mxu0 0.0
    %565 = vmatprep.subr.mxu0 0.0
    %566 = vmatpush1.xpose.msra.mxu0 0.0
    %567 = vmatprep.subr.mxu0 0.0
    %568 = vmatpush1.xpose.msra.mxu0 0.0
    %569 = vmatprep.subr.mxu0 0.0
    %570 = vmatpush1.xpose.msra.mxu0 0.0
    %571 = vmatprep.subr.mxu0 0.0
    %572 = vmatpush1.xpose.msra.mxu0 0.0
    %573 = vmatprep.subr.mxu0 0.0
    %574 = vmatpush1.xpose.msra.mxu0 0.0
    %575 = vmatprep.subr.mxu0 0.0
    %576 = vmatpush1.xpose.msra.mxu0 0.0
    %577 = vmatprep.subr.mxu0 0.0
    %578 = vmatpush1.xpose.msra.mxu0 0.0
    %579 = vmatprep.subr.mxu0 0.0
    %580 = vmatpush1.xpose.msra.mxu0 0.0
    %581 = vmatprep.subr.mxu0 0.0
    %582 = vmatpush1.xpose.msra.mxu0 0.0
    %583 = vmatprep.subr.mxu0 0.0
    %584 = vmatpush1.xpose.msra.mxu0 0.0
    %585 = vmatprep.subr.mxu0 0.0
    %586 = vmatpush1.xpose.msra.mxu0 0.0
    %587 = vmatprep.subr.mxu0 0.0
    %588 = vmatpush1.xpose.msra.mxu0 0.0
    %589 = vmatprep.subr.mxu0 0.0
    %590 = vmatpush1.xpose.msra.mxu0 0.0
    %591 = vmatprep.subr.mxu0 0.0
    %592 = vmatpush1.xpose.msra.mxu0 0.0
    %593 = vmatprep.subr.mxu0 0.0
    %594 = vmatpush1.xpose.msra.mxu0 0.0
    %595 = vmatprep.subr.mxu0 0.0
    %596 = vmatpush1.xpose.msra.mxu0 0.0
    %597 = vmatprep.subr.mxu0 0.0
    %598 = vmatpush1.xpose.msra.mxu0 0.0
    %599 = vmatprep.subr.mxu0 0.0
    %600 = vmatpush1.xpose.msra.mxu0 0.0
    %601 = vmatprep.subr.mxu0 0.0
    %602 = vmatpush1.xpose.msra.mxu0 0.0
    %603 = vmatprep.subr.mxu0 0.0
    %604 = vmatpush1.xpose.msra.mxu0 0.0
    %605 = vmatprep.subr.mxu0 0.0
    %606 = vmatpush1.xpose.msra.mxu0 0.0
    %607 = vmatprep.subr.mxu0 0.0
    %608 = vmatpush1.xpose.msra.mxu0 0.0
    %609 = vmatprep.subr.mxu0 0.0
    %610 = vmatpush1.xpose.msra.mxu0 0.0
    %611 = vmatprep.subr.mxu0 0.0
    %612 = vmatpush1.xpose.msra.mxu0 0.0
    %613 = vmatprep.mubr.f32.mxu0 0.0
    %v614 = vand.u32 %v543, 4294901760
    %v615 = vsub.f32 %v543, %v614
    %v616 = vand.u32 %v615, 4294901760
    %v617 = vsub.f32 %v615, %v616
    %v618 = vand.u32 %v617, 4294901760
    %619 = vmatmul.mubr.f32.gmra.mrb[0].mxu0 %v618
    %v620 = vpop.f32.mrb[0].mxu0
    %v621 = vadd.f32 0.0, %v620
    %v622 = vpop.f32.mrb[0].mxu0
    %623 = vdwg.mxu0
    %624 = vmatprep.subr.mxu0 0.0
    %v625 = vand.u32 %v546, 4294901760
    %v626 = vsub.f32 %v546, %v625
    %v627 = vand.u32 %v626, 4294901760
    %v628 = vsub.f32 %v626, %v627
    %v629 = vand.u32 %v628, 4294901760
    %630 = vmatpush1.xpose.msra.mxu0 %v629
    %631 = vmatprep.subr.mxu0 0.0
    %632 = vmatpush1.xpose.msra.mxu0 0.0
    %633 = vmatprep.subr.mxu0 0.0
    %634 = vmatpush1.xpose.msra.mxu0 0.0
    %635 = vmatprep.subr.mxu0 0.0
    %636 = vmatpush1.xpose.msra.mxu0 0.0
    %637 = vmatprep.subr.mxu0 0.0
    %638 = vmatpush1.xpose.msra.mxu0 0.0
    %639 = vmatprep.subr.mxu0 0.0
    %640 = vmatpush1.xpose.msra.mxu0 0.0
    %641 = vmatprep.subr.mxu0 0.0
    %642 = vmatpush1.xpose.msra.mxu0 0.0
    %643 = vmatprep.subr.mxu0 0.0
    %644 = vmatpush1.xpose.msra.mxu0 0.0
    %645 = vmatprep.subr.mxu0 0.0
    %646 = vmatpush1.xpose.msra.mxu0 0.0
    %647 = vmatprep.subr.mxu0 0.0
    %648 = vmatpush1.xpose.msra.mxu0 0.0
    %649 = vmatprep.subr.mxu0 0.0
    %650 = vmatpush1.xpose.msra.mxu0 0.0
    %651 = vmatprep.subr.mxu0 0.0
    %652 = vmatpush1.xpose.msra.mxu0 0.0
    %653 = vmatprep.subr.mxu0 0.0
    %654 = vmatpush1.xpose.msra.mxu0 0.0
    %655 = vmatprep.subr.mxu0 0.0
    %656 = vmatpush1.xpose.msra.mxu0 0.0
    %657 = vmatprep.subr.mxu0 0.0
    %658 = vmatpush1.xpose.msra.mxu0 0.0
    %659 = vmatprep.subr.mxu0 0.0
    %660 = vmatpush1.xpose.msra.mxu0 0.0
    %661 = vmatprep.subr.mxu0 0.0
    %662 = vmatpush1.xpose.msra.mxu0 0.0
    %663 = vmatprep.subr.mxu0 0.0
    %664 = vmatpush1.xpose.msra.mxu0 0.0
    %665 = vmatprep.subr.mxu0 0.0
    %666 = vmatpush1.xpose.msra.mxu0 0.0
    %667 = vmatprep.subr.mxu0 0.0
    %668 = vmatpush1.xpose.msra.mxu0 0.0
    %669 = vmatprep.subr.mxu0 0.0
    %670 = vmatpush1.xpose.msra.mxu0 0.0
    %671 = vmatprep.subr.mxu0 0.0
    %672 = vmatpush1.xpose.msra.mxu0 0.0
    %673 = vmatprep.subr.mxu0 0.0
    %674 = vmatpush1.xpose.msra.mxu0 0.0
    %675 = vmatprep.subr.mxu0 0.0
    %676 = vmatpush1.xpose.msra.mxu0 0.0
    %677 = vmatprep.subr.mxu0 0.0
    %678 = vmatpush1.xpose.msra.mxu0 0.0
    %679 = vmatprep.subr.mxu0 0.0
    %680 = vmatpush1.xpose.msra.mxu0 0.0
    %681 = vmatprep.subr.mxu0 0.0
    %682 = vmatpush1.xpose.msra.mxu0 0.0
    %683 = vmatprep.subr.mxu0 0.0
    %684 = vmatpush1.xpose.msra.mxu0 0.0
    %685 = vmatprep.subr.mxu0 0.0
    %686 = vmatpush1.xpose.msra.mxu0 0.0
    %687 = vmatprep.subr.mxu0 0.0
    %688 = vmatpush1.xpose.msra.mxu0 0.0
    %689 = vmatprep.subr.mxu0 0.0
    %690 = vmatpush1.xpose.msra.mxu0 0.0
    %691 = vmatprep.subr.mxu0 0.0
    %692 = vmatpush1.xpose.msra.mxu0 0.0
    %693 = vmatprep.mubr.f32.mxu0 0.0
    %v694 = vand.u32 %v543, 4294901760
    %695 = vmatmul.mubr.f32.gmra.mrb[0].mxu0 %v694
    %v696 = vpop.f32.mrb[0].mxu0
    %v697 = vadd.f32 %v621, %v696
    %v698 = vpop.f32.mrb[0].mxu0
    %699 = vdwg.mxu0
    %700 = vmatprep.subr.mxu0 0.0
    %v701 = vand.u32 %v546, 4294901760
    %v702 = vsub.f32 %v546, %v701
    %703 = vmatpush1.xpose.msra.mxu0 %v702
    %704 = vmatprep.subr.mxu0 0.0
    %705 = vmatpush1.xpose.msra.mxu0 0.0
    %706 = vmatprep.subr.mxu0 0.0
    %707 = vmatpush1.xpose.msra.mxu0 0.0
    %708 = vmatprep.subr.mxu0 0.0
    %709 = vmatpush1.xpose.msra.mxu0 0.0
    %710 = vmatprep.subr.mxu0 0.0
    %711 = vmatpush1.xpose.msra.mxu0 0.0
    %712 = vmatprep.subr.mxu0 0.0
    %713 = vmatpush1.xpose.msra.mxu0 0.0
    %714 = vmatprep.subr.mxu0 0.0
    %715 = vmatpush1.xpose.msra.mxu0 0.0
    %716 = vmatprep.subr.mxu0 0.0
    %717 = vmatpush1.xpose.msra.mxu0 0.0
    %718 = vmatprep.subr.mxu0 0.0
    %719 = vmatpush1.xpose.msra.mxu0 0.0
    %720 = vmatprep.subr.mxu0 0.0
    %721 = vmatpush1.xpose.msra.mxu0 0.0
    %722 = vmatprep.subr.mxu0 0.0
    %723 = vmatpush1.xpose.msra.mxu0 0.0
    %724 = vmatprep.subr.mxu0 0.0
    %725 = vmatpush1.xpose.msra.mxu0 0.0
    %726 = vmatprep.subr.mxu0 0.0
    %727 = vmatpush1.xpose.msra.mxu0 0.0
    %728 = vmatprep.subr.mxu0 0.0
    %729 = vmatpush1.xpose.msra.mxu0 0.0
    %730 = vmatprep.subr.mxu0 0.0
    %731 = vmatpush1.xpose.msra.mxu0 0.0
    %732 = vmatprep.subr.mxu0 0.0
    %733 = vmatpush1.xpose.msra.mxu0 0.0
    %734 = vmatprep.subr.mxu0 0.0
    %735 = vmatpush1.xpose.msra.mxu0 0.0
    %736 = vmatprep.subr.mxu0 0.0
    %737 = vmatpush1.xpose.msra.mxu0 0.0
    %738 = vmatprep.subr.mxu0 0.0
    %739 = vmatpush1.xpose.msra.mxu0 0.0
    %740 = vmatprep.subr.mxu0 0.0
    %741 = vmatpush1.xpose.msra.mxu0 0.0
    %742 = vmatprep.subr.mxu0 0.0
    %743 = vmatpush1.xpose.msra.mxu0 0.0
    %744 = vmatprep.subr.mxu0 0.0
    %745 = vmatpush1.xpose.msra.mxu0 0.0
    %746 = vmatprep.subr.mxu0 0.0
    %747 = vmatpush1.xpose.msra.mxu0 0.0
    %748 = vmatprep.subr.mxu0 0.0
    %749 = vmatpush1.xpose.msra.mxu0 0.0
    %750 = vmatprep.subr.mxu0 0.0
    %751 = vmatpush1.xpose.msra.mxu0 0.0
    %752 = vmatprep.subr.mxu0 0.0
    %753 = vmatpush1.xpose.msra.mxu0 0.0
    %754 = vmatprep.subr.mxu0 0.0
    %755 = vmatpush1.xpose.msra.mxu0 0.0
    %756 = vmatprep.subr.mxu0 0.0
    %757 = vmatpush1.xpose.msra.mxu0 0.0
    %758 = vmatprep.subr.mxu0 0.0
    %759 = vmatpush1.xpose.msra.mxu0 0.0
    %760 = vmatprep.subr.mxu0 0.0
    %761 = vmatpush1.xpose.msra.mxu0 0.0
    %762 = vmatprep.subr.mxu0 0.0
    %763 = vmatpush1.xpose.msra.mxu0 0.0
    %764 = vmatprep.subr.mxu0 0.0
    %765 = vmatpush1.xpose.msra.mxu0 0.0
    %766 = vmatprep.mubr.f32.mxu0 0.0
    %v767 = vand.u32 %v543, 4294901760
    %v768 = vsub.f32 %v543, %v767
    %769 = vmatmul.mubr.f32.gmra.mrb[0].mxu0 %v768
    %v770 = vpop.f32.mrb[0].mxu0
    %v771 = vadd.f32 %v697, %v770
    %v772 = vpop.f32.mrb[0].mxu0
    %773 = vdwg.mxu0
    %774 = vmatprep.subr.mxu0 0.0
    %v775 = vand.u32 %v546, 4294901760
    %776 = vmatpush1.xpose.msra.mxu0 %v775
    %777 = vmatprep.subr.mxu0 0.0
    %778 = vmatpush1.xpose.msra.mxu0 0.0
    %779 = vmatprep.subr.mxu0 0.0
    %780 = vmatpush1.xpose.msra.mxu0 0.0
    %781 = vmatprep.subr.mxu0 0.0
    %782 = vmatpush1.xpose.msra.mxu0 0.0
    %783 = vmatprep.subr.mxu0 0.0
    %784 = vmatpush1.xpose.msra.mxu0 0.0
    %785 = vmatprep.subr.mxu0 0.0
    %786 = vmatpush1.xpose.msra.mxu0 0.0
    %787 = vmatprep.subr.mxu0 0.0
    %788 = vmatpush1.xpose.msra.mxu0 0.0
    %789 = vmatprep.subr.mxu0 0.0
    %790 = vmatpush1.xpose.msra.mxu0 0.0
    %791 = vmatprep.subr.mxu0 0.0
    %792 = vmatpush1.xpose.msra.mxu0 0.0
    %793 = vmatprep.subr.mxu0 0.0
    %794 = vmatpush1.xpose.msra.mxu0 0.0
    %795 = vmatprep.subr.mxu0 0.0
    %796 = vmatpush1.xpose.msra.mxu0 0.0
    %797 = vmatprep.subr.mxu0 0.0
    %798 = vmatpush1.xpose.msra.mxu0 0.0
    %799 = vmatprep.subr.mxu0 0.0
    %800 = vmatpush1.xpose.msra.mxu0 0.0
    %801 = vmatprep.subr.mxu0 0.0
    %802 = vmatpush1.xpose.msra.mxu0 0.0
    %803 = vmatprep.subr.mxu0 0.0
    %804 = vmatpush1.xpose.msra.mxu0 0.0
    %805 = vmatprep.subr.mxu0 0.0
    %806 = vmatpush1.xpose.msra.mxu0 0.0
    %807 = vmatprep.subr.mxu0 0.0
    %808 = vmatpush1.xpose.msra.mxu0 0.0
    %809 = vmatprep.subr.mxu0 0.0
    %810 = vmatpush1.xpose.msra.mxu0 0.0
    %811 = vmatprep.subr.mxu0 0.0
    %812 = vmatpush1.xpose.msra.mxu0 0.0
    %813 = vmatprep.subr.mxu0 0.0
    %814 = vmatpush1.xpose.msra.mxu0 0.0
    %815 = vmatprep.subr.mxu0 0.0
    %816 = vmatpush1.xpose.msra.mxu0 0.0
    %817 = vmatprep.subr.mxu0 0.0
    %818 = vmatpush1.xpose.msra.mxu0 0.0
    %819 = vmatprep.subr.mxu0 0.0
    %820 = vmatpush1.xpose.msra.mxu0 0.0
    %821 = vmatprep.subr.mxu0 0.0
    %822 = vmatpush1.xpose.msra.mxu0 0.0
    %823 = vmatprep.subr.mxu0 0.0
    %824 = vmatpush1.xpose.msra.mxu0 0.0
    %825 = vmatprep.subr.mxu0 0.0
    %826 = vmatpush1.xpose.msra.mxu0 0.0
    %827 = vmatprep.subr.mxu0 0.0
    %828 = vmatpush1.xpose.msra.mxu0 0.0
    %829 = vmatprep.subr.mxu0 0.0
    %830 = vmatpush1.xpose.msra.mxu0 0.0
    %831 = vmatprep.subr.mxu0 0.0
    %832 = vmatpush1.xpose.msra.mxu0 0.0
    %833 = vmatprep.subr.mxu0 0.0
    %834 = vmatpush1.xpose.msra.mxu0 0.0
    %835 = vmatprep.subr.mxu0 0.0
    %836 = vmatpush1.xpose.msra.mxu0 0.0
    %837 = vmatprep.subr.mxu0 0.0
    %838 = vmatpush1.xpose.msra.mxu0 0.0
    %839 = vmatprep.mubr.f32.mxu0 0.0
    %v840 = vand.u32 %v543, 4294901760
    %v841 = vsub.f32 %v543, %v840
    %v842 = vand.u32 %v841, 4294901760
    %843 = vmatmul.mubr.f32.gmra.mrb[0].mxu0 %v842
    %v844 = vpop.f32.mrb[0].mxu0
    %v845 = vadd.f32 %v771, %v844
    %v846 = vpop.f32.mrb[0].mxu0
    %847 = vdwg.mxu0
    %848 = vmatprep.subr.mxu0 0.0
    %v849 = vand.u32 %v546, 4294901760
    %v850 = vsub.f32 %v546, %v849
    %v851 = vand.u32 %v850, 4294901760
    %852 = vmatpush1.xpose.msra.mxu0 %v851
    %853 = vmatprep.subr.mxu0 0.0
    %854 = vmatpush1.xpose.msra.mxu0 0.0
    %855 = vmatprep.subr.mxu0 0.0
    %856 = vmatpush1.xpose.msra.mxu0 0.0
    %857 = vmatprep.subr.mxu0 0.0
    %858 = vmatpush1.xpose.msra.mxu0 0.0
    %859 = vmatprep.subr.mxu0 0.0
    %860 = vmatpush1.xpose.msra.mxu0 0.0
    %861 = vmatprep.subr.mxu0 0.0
    %862 = vmatpush1.xpose.msra.mxu0 0.0
    %863 = vmatprep.subr.mxu0 0.0
    %864 = vmatpush1.xpose.msra.mxu0 0.0
    %865 = vmatprep.subr.mxu0 0.0
    %866 = vmatpush1.xpose.msra.mxu0 0.0
    %867 = vmatprep.subr.mxu0 0.0
    %868 = vmatpush1.xpose.msra.mxu0 0.0
    %869 = vmatprep.subr.mxu0 0.0
    %870 = vmatpush1.xpose.msra.mxu0 0.0
    %871 = vmatprep.subr.mxu0 0.0
    %872 = vmatpush1.xpose.msra.mxu0 0.0
    %873 = vmatprep.subr.mxu0 0.0
    %874 = vmatpush1.xpose.msra.mxu0 0.0
    %875 = vmatprep.subr.mxu0 0.0
    %876 = vmatpush1.xpose.msra.mxu0 0.0
    %877 = vmatprep.subr.mxu0 0.0
    %878 = vmatpush1.xpose.msra.mxu0 0.0
    %879 = vmatprep.subr.mxu0 0.0
    %880 = vmatpush1.xpose.msra.mxu0 0.0
    %881 = vmatprep.subr.mxu0 0.0
    %882 = vmatpush1.xpose.msra.mxu0 0.0
    %883 = vmatprep.subr.mxu0 0.0
    %884 = vmatpush1.xpose.msra.mxu0 0.0
    %885 = vmatprep.subr.mxu0 0.0
    %886 = vmatpush1.xpose.msra.mxu0 0.0
    %887 = vmatprep.subr.mxu0 0.0
    %888 = vmatpush1.xpose.msra.mxu0 0.0
    %889 = vmatprep.subr.mxu0 0.0
    %890 = vmatpush1.xpose.msra.mxu0 0.0
    %891 = vmatprep.subr.mxu0 0.0
    %892 = vmatpush1.xpose.msra.mxu0 0.0
    %893 = vmatprep.subr.mxu0 0.0
    %894 = vmatpush1.xpose.msra.mxu0 0.0
    %895 = vmatprep.subr.mxu0 0.0
    %896 = vmatpush1.xpose.msra.mxu0 0.0
    %897 = vmatprep.subr.mxu0 0.0
    %898 = vmatpush1.xpose.msra.mxu0 0.0
    %899 = vmatprep.subr.mxu0 0.0
    %900 = vmatpush1.xpose.msra.mxu0 0.0
    %901 = vmatprep.subr.mxu0 0.0
    %902 = vmatpush1.xpose.msra.mxu0 0.0
    %903 = vmatprep.subr.mxu0 0.0
    %904 = vmatpush1.xpose.msra.mxu0 0.0
    %905 = vmatprep.subr.mxu0 0.0
    %906 = vmatpush1.xpose.msra.mxu0 0.0
    %907 = vmatprep.subr.mxu0 0.0
    %908 = vmatpush1.xpose.msra.mxu0 0.0
    %909 = vmatprep.subr.mxu0 0.0
    %910 = vmatpush1.xpose.msra.mxu0 0.0
    %911 = vmatprep.subr.mxu0 0.0
    %912 = vmatpush1.xpose.msra.mxu0 0.0
    %913 = vmatprep.subr.mxu0 0.0
    %914 = vmatpush1.xpose.msra.mxu0 0.0
    %915 = vmatprep.mubr.f32.mxu0 0.0
    %v916 = vand.u32 %v543, 4294901760
    %917 = vmatmul.mubr.f32.gmra.mrb[0].mxu0 %v916
    %v918 = vpop.f32.mrb[0].mxu0
    %v919 = vadd.f32 %v845, %v918
    %v920 = vpop.f32.mrb[0].mxu0
    %921 = vdwg.mxu0
    %922 = vmatprep.subr.mxu0 0.0
    %v923 = vand.u32 %v546, 4294901760
    %924 = vmatpush1.xpose.msra.mxu0 %v923
    %925 = vmatprep.subr.mxu0 0.0
    %926 = vmatpush1.xpose.msra.mxu0 0.0
    %927 = vmatprep.subr.mxu0 0.0
    %928 = vmatpush1.xpose.msra.mxu0 0.0
    %929 = vmatprep.subr.mxu0 0.0
    %930 = vmatpush1.xpose.msra.mxu0 0.0
    %931 = vmatprep.subr.mxu0 0.0
    %932 = vmatpush1.xpose.msra.mxu0 0.0
    %933 = vmatprep.subr.mxu0 0.0
    %934 = vmatpush1.xpose.msra.mxu0 0.0
    %935 = vmatprep.subr.mxu0 0.0
    %936 = vmatpush1.xpose.msra.mxu0 0.0
    %937 = vmatprep.subr.mxu0 0.0
    %938 = vmatpush1.xpose.msra.mxu0 0.0
    %939 = vmatprep.subr.mxu0 0.0
    %940 = vmatpush1.xpose.msra.mxu0 0.0
    %941 = vmatprep.subr.mxu0 0.0
    %942 = vmatpush1.xpose.msra.mxu0 0.0
    %943 = vmatprep.subr.mxu0 0.0
    %944 = vmatpush1.xpose.msra.mxu0 0.0
    %945 = vmatprep.subr.mxu0 0.0
    %946 = vmatpush1.xpose.msra.mxu0 0.0
    %947 = vmatprep.subr.mxu0 0.0
    %948 = vmatpush1.xpose.msra.mxu0 0.0
    %949 = vmatprep.subr.mxu0 0.0
    %950 = vmatpush1.xpose.msra.mxu0 0.0
    %951 = vmatprep.subr.mxu0 0.0
    %952 = vmatpush1.xpose.msra.mxu0 0.0
    %953 = vmatprep.subr.mxu0 0.0
    %954 = vmatpush1.xpose.msra.mxu0 0.0
    %955 = vmatprep.subr.mxu0 0.0
    %956 = vmatpush1.xpose.msra.mxu0 0.0
    %957 = vmatprep.subr.mxu0 0.0
    %958 = vmatpush1.xpose.msra.mxu0 0.0
    %959 = vmatprep.subr.mxu0 0.0
    %960 = vmatpush1.xpose.msra.mxu0 0.0
    %961 = vmatprep.subr.mxu0 0.0
    %962 = vmatpush1.xpose.msra.mxu0 0.0
    %963 = vmatprep.subr.mxu0 0.0
    %964 = vmatpush1.xpose.msra.mxu0 0.0
    %965 = vmatprep.subr.mxu0 0.0
    %966 = vmatpush1.xpose.msra.mxu0 0.0
    %967 = vmatprep.subr.mxu0 0.0
    %968 = vmatpush1.xpose.msra.mxu0 0.0
    %969 = vmatprep.subr.mxu0 0.0
    %970 = vmatpush1.xpose.msra.mxu0 0.0
    %971 = vmatprep.subr.mxu0 0.0
    %972 = vmatpush1.xpose.msra.mxu0 0.0
    %973 = vmatprep.subr.mxu0 0.0
    %974 = vmatpush1.xpose.msra.mxu0 0.0
    %975 = vmatprep.subr.mxu0 0.0
    %976 = vmatpush1.xpose.msra.mxu0 0.0
    %977 = vmatprep.subr.mxu0 0.0
    %978 = vmatpush1.xpose.msra.mxu0 0.0
    %979 = vmatprep.subr.mxu0 0.0
    %980 = vmatpush1.xpose.msra.mxu0 0.0
    %981 = vmatprep.subr.mxu0 0.0
    %982 = vmatpush1.xpose.msra.mxu0 0.0
    %983 = vmatprep.subr.mxu0 0.0
    %984 = vmatpush1.xpose.msra.mxu0 0.0
    %985 = vmatprep.subr.mxu0 0.0
    %986 = vmatpush1.xpose.msra.mxu0 0.0
    %987 = vmatprep.mubr.f32.mxu0 0.0
    %v988 = vand.u32 %v543, 4294901760
    %989 = vmatmul.mubr.f32.gmra.mrb[0].mxu0 %v988
    %v990 = vpop.f32.mrb[0].mxu0
    %v991 = vadd.f32 %v919, %v990
    %v992 = vpop.f32.mrb[0].mxu0
    %993 = vdwg.mxu0
    %v994 = vsel %vm26, %v88, 0
    %v997 = vsel %vm26, %v19, 0
    %999 = vmatprep.subr.mxu0 0.0
    %v1000 = vand.u32 %v997, 4294901760
    %1001 = vmatpush1.xpose.msra.mxu0 %v1000
    %1002 = vmatprep.subr.mxu0 0.0
    %1003 = vmatpush1.xpose.msra.mxu0 0.0
    %1004 = vmatprep.subr.mxu0 0.0
    %1005 = vmatpush1.xpose.msra.mxu0 0.0
    %1006 = vmatprep.subr.mxu0 0.0
    %1007 = vmatpush1.xpose.msra.mxu0 0.0
    %1008 = vmatprep.subr.mxu0 0.0
    %1009 = vmatpush1.xpose.msra.mxu0 0.0
    %1010 = vmatprep.subr.mxu0 0.0
    %1011 = vmatpush1.xpose.msra.mxu0 0.0
    %1012 = vmatprep.subr.mxu0 0.0
    %1013 = vmatpush1.xpose.msra.mxu0 0.0
    %1014 = vmatprep.subr.mxu0 0.0
    %1015 = vmatpush1.xpose.msra.mxu0 0.0
    %1016 = vmatprep.subr.mxu0 0.0
    %1017 = vmatpush1.xpose.msra.mxu0 0.0
    %1018 = vmatprep.subr.mxu0 0.0
    %1019 = vmatpush1.xpose.msra.mxu0 0.0
    %1020 = vmatprep.subr.mxu0 0.0
    %1021 = vmatpush1.xpose.msra.mxu0 0.0
    %1022 = vmatprep.subr.mxu0 0.0
    %1023 = vmatpush1.xpose.msra.mxu0 0.0
    %1024 = vmatprep.subr.mxu0 0.0
    %1025 = vmatpush1.xpose.msra.mxu0 0.0
    %1026 = vmatprep.subr.mxu0 0.0
    %1027 = vmatpush1.xpose.msra.mxu0 0.0
    %1028 = vmatprep.subr.mxu0 0.0
    %1029 = vmatpush1.xpose.msra.mxu0 0.0
    %1030 = vmatprep.subr.mxu0 0.0
    %1031 = vmatpush1.xpose.msra.mxu0 0.0
    %1032 = vmatprep.subr.mxu0 0.0
    %1033 = vmatpush1.xpose.msra.mxu0 0.0
    %1034 = vmatprep.subr.mxu0 0.0
    %1035 = vmatpush1.xpose.msra.mxu0 0.0
    %1036 = vmatprep.subr.mxu0 0.0
    %1037 = vmatpush1.xpose.msra.mxu0 0.0
    %1038 = vmatprep.subr.mxu0 0.0
    %1039 = vmatpush1.xpose.msra.mxu0 0.0
    %1040 = vmatprep.subr.mxu0 0.0
    %1041 = vmatpush1.xpose.msra.mxu0 0.0
    %1042 = vmatprep.subr.mxu0 0.0
    %1043 = vmatpush1.xpose.msra.mxu0 0.0
    %1044 = vmatprep.subr.mxu0 0.0
    %1045 = vmatpush1.xpose.msra.mxu0 0.0
    %1046 = vmatprep.subr.mxu0 0.0
    %1047 = vmatpush1.xpose.msra.mxu0 0.0
    %1048 = vmatprep.subr.mxu0 0.0
    %1049 = vmatpush1.xpose.msra.mxu0 0.0
    %1050 = vmatprep.subr.mxu0 0.0
    %1051 = vmatpush1.xpose.msra.mxu0 0.0
    %1052 = vmatprep.subr.mxu0 0.0
    %1053 = vmatpush1.xpose.msra.mxu0 0.0
    %1054 = vmatprep.subr.mxu0 0.0
    %1055 = vmatpush1.xpose.msra.mxu0 0.0
    %1056 = vmatprep.subr.mxu0 0.0
    %1057 = vmatpush1.xpose.msra.mxu0 0.0
    %1058 = vmatprep.subr.mxu0 0.0
    %1059 = vmatpush1.xpose.msra.mxu0 0.0
    %1060 = vmatprep.subr.mxu0 0.0
    %1061 = vmatpush1.xpose.msra.mxu0 0.0
    %1062 = vmatprep.subr.mxu0 0.0
    %1063 = vmatpush1.xpose.msra.mxu0 0.0
    %1064 = vmatprep.mubr.f32.mxu0 0.0
    %v1065 = vand.u32 %v994, 4294901760
    %v1066 = vsub.f32 %v994, %v1065
    %v1067 = vand.u32 %v1066, 4294901760
    %v1068 = vsub.f32 %v1066, %v1067
    %v1069 = vand.u32 %v1068, 4294901760
    %1070 = vmatmul.mubr.f32.gmra.mrb[0].mxu0 %v1069
    %v1071 = vpop.f32.mrb[0].mxu0
    %v1072 = vadd.f32 0.0, %v1071
    %v1073 = vpop.f32.mrb[0].mxu0
    %1074 = vdwg.mxu0
    %1075 = vmatprep.subr.mxu0 0.0
    %v1076 = vand.u32 %v997, 4294901760
    %v1077 = vsub.f32 %v997, %v1076
    %v1078 = vand.u32 %v1077, 4294901760
    %v1079 = vsub.f32 %v1077, %v1078
    %v1080 = vand.u32 %v1079, 4294901760
    %1081 = vmatpush1.xpose.msra.mxu0 %v1080
    %1082 = vmatprep.subr.mxu0 0.0
    %1083 = vmatpush1.xpose.msra.mxu0 0.0
    %1084 = vmatprep.subr.mxu0 0.0
    %1085 = vmatpush1.xpose.msra.mxu0 0.0
    %1086 = vmatprep.subr.mxu0 0.0
    %1087 = vmatpush1.xpose.msra.mxu0 0.0
    %1088 = vmatprep.subr.mxu0 0.0
    %1089 = vmatpush1.xpose.msra.mxu0 0.0
    %1090 = vmatprep.subr.mxu0 0.0
    %1091 = vmatpush1.xpose.msra.mxu0 0.0
    %1092 = vmatprep.subr.mxu0 0.0
    %1093 = vmatpush1.xpose.msra.mxu0 0.0
    %1094 = vmatprep.subr.mxu0 0.0
    %1095 = vmatpush1.xpose.msra.mxu0 0.0
    %1096 = vmatprep.subr.mxu0 0.0
    %1097 = vmatpush1.xpose.msra.mxu0 0.0
    %1098 = vmatprep.subr.mxu0 0.0
    %1099 = vmatpush1.xpose.msra.mxu0 0.0
    %1100 = vmatprep.subr.mxu0 0.0
    %1101 = vmatpush1.xpose.msra.mxu0 0.0
    %1102 = vmatprep.subr.mxu0 0.0
    %1103 = vmatpush1.xpose.msra.mxu0 0.0
    %1104 = vmatprep.subr.mxu0 0.0
    %1105 = vmatpush1.xpose.msra.mxu0 0.0
    %1106 = vmatprep.subr.mxu0 0.0
    %1107 = vmatpush1.xpose.msra.mxu0 0.0
    %1108 = vmatprep.subr.mxu0 0.0
    %1109 = vmatpush1.xpose.msra.mxu0 0.0
    %1110 = vmatprep.subr.mxu0 0.0
    %1111 = vmatpush1.xpose.msra.mxu0 0.0
    %1112 = vmatprep.subr.mxu0 0.0
    %1113 = vmatpush1.xpose.msra.mxu0 0.0
    %1114 = vmatprep.subr.mxu0 0.0
    %1115 = vmatpush1.xpose.msra.mxu0 0.0
    %1116 = vmatprep.subr.mxu0 0.0
    %1117 = vmatpush1.xpose.msra.mxu0 0.0
    %1118 = vmatprep.subr.mxu0 0.0
    %1119 = vmatpush1.xpose.msra.mxu0 0.0
    %1120 = vmatprep.subr.mxu0 0.0
    %1121 = vmatpush1.xpose.msra.mxu0 0.0
    %1122 = vmatprep.subr.mxu0 0.0
    %1123 = vmatpush1.xpose.msra.mxu0 0.0
    %1124 = vmatprep.subr.mxu0 0.0
    %1125 = vmatpush1.xpose.msra.mxu0 0.0
    %1126 = vmatprep.subr.mxu0 0.0
    %1127 = vmatpush1.xpose.msra.mxu0 0.0
    %1128 = vmatprep.subr.mxu0 0.0
    %1129 = vmatpush1.xpose.msra.mxu0 0.0
    %1130 = vmatprep.subr.mxu0 0.0
    %1131 = vmatpush1.xpose.msra.mxu0 0.0
    %1132 = vmatprep.subr.mxu0 0.0
    %1133 = vmatpush1.xpose.msra.mxu0 0.0
    %1134 = vmatprep.subr.mxu0 0.0
    %1135 = vmatpush1.xpose.msra.mxu0 0.0
    %1136 = vmatprep.subr.mxu0 0.0
    %1137 = vmatpush1.xpose.msra.mxu0 0.0
    %1138 = vmatprep.subr.mxu0 0.0
    %1139 = vmatpush1.xpose.msra.mxu0 0.0
    %1140 = vmatprep.subr.mxu0 0.0
    %1141 = vmatpush1.xpose.msra.mxu0 0.0
    %1142 = vmatprep.subr.mxu0 0.0
    %1143 = vmatpush1.xpose.msra.mxu0 0.0
    %1144 = vmatprep.mubr.f32.mxu0 0.0
    %v1145 = vand.u32 %v994, 4294901760
    %1146 = vmatmul.mubr.f32.gmra.mrb[0].mxu0 %v1145
    %v1147 = vpop.f32.mrb[0].mxu0
    %v1148 = vadd.f32 %v1072, %v1147
    %v1149 = vpop.f32.mrb[0].mxu0
    %1150 = vdwg.mxu0
    %1151 = vmatprep.subr.mxu0 0.0
    %v1152 = vand.u32 %v997, 4294901760
    %v1153 = vsub.f32 %v997, %v1152
    %1154 = vmatpush1.xpose.msra.mxu0 %v1153
    %1155 = vmatprep.subr.mxu0 0.0
    %1156 = vmatpush1.xpose.msra.mxu0 0.0
    %1157 = vmatprep.subr.mxu0 0.0
    %1158 = vmatpush1.xpose.msra.mxu0 0.0
    %1159 = vmatprep.subr.mxu0 0.0
    %1160 = vmatpush1.xpose.msra.mxu0 0.0
    %1161 = vmatprep.subr.mxu0 0.0
    %1162 = vmatpush1.xpose.msra.mxu0 0.0
    %1163 = vmatprep.subr.mxu0 0.0
    %1164 = vmatpush1.xpose.msra.mxu0 0.0
    %1165 = vmatprep.subr.mxu0 0.0
    %1166 = vmatpush1.xpose.msra.mxu0 0.0
    %1167 = vmatprep.subr.mxu0 0.0
    %1168 = vmatpush1.xpose.msra.mxu0 0.0
    %1169 = vmatprep.subr.mxu0 0.0
    %1170 = vmatpush1.xpose.msra.mxu0 0.0
    %1171 = vmatprep.subr.mxu0 0.0
    %1172 = vmatpush1.xpose.msra.mxu0 0.0
    %1173 = vmatprep.subr.mxu0 0.0
    %1174 = vmatpush1.xpose.msra.mxu0 0.0
    %1175 = vmatprep.subr.mxu0 0.0
    %1176 = vmatpush1.xpose.msra.mxu0 0.0
    %1177 = vmatprep.subr.mxu0 0.0
    %1178 = vmatpush1.xpose.msra.mxu0 0.0
    %1179 = vmatprep.subr.mxu0 0.0
    %1180 = vmatpush1.xpose.msra.mxu0 0.0
    %1181 = vmatprep.subr.mxu0 0.0
    %1182 = vmatpush1.xpose.msra.mxu0 0.0
    %1183 = vmatprep.subr.mxu0 0.0
    %1184 = vmatpush1.xpose.msra.mxu0 0.0
    %1185 = vmatprep.subr.mxu0 0.0
    %1186 = vmatpush1.xpose.msra.mxu0 0.0
    %1187 = vmatprep.subr.mxu0 0.0
    %1188 = vmatpush1.xpose.msra.mxu0 0.0
    %1189 = vmatprep.subr.mxu0 0.0
    %1190 = vmatpush1.xpose.msra.mxu0 0.0
    %1191 = vmatprep.subr.mxu0 0.0
    %1192 = vmatpush1.xpose.msra.mxu0 0.0
    %1193 = vmatprep.subr.mxu0 0.0
    %1194 = vmatpush1.xpose.msra.mxu0 0.0
    %1195 = vmatprep.subr.mxu0 0.0
    %1196 = vmatpush1.xpose.msra.mxu0 0.0
    %1197 = vmatprep.subr.mxu0 0.0
    %1198 = vmatpush1.xpose.msra.mxu0 0.0
    %1199 = vmatprep.subr.mxu0 0.0
    %1200 = vmatpush1.xpose.msra.mxu0 0.0
    %1201 = vmatprep.subr.mxu0 0.0
    %1202 = vmatpush1.xpose.msra.mxu0 0.0
    %1203 = vmatprep.subr.mxu0 0.0
    %1204 = vmatpush1.xpose.msra.mxu0 0.0
    %1205 = vmatprep.subr.mxu0 0.0
    %1206 = vmatpush1.xpose.msra.mxu0 0.0
    %1207 = vmatprep.subr.mxu0 0.0
    %1208 = vmatpush1.xpose.msra.mxu0 0.0
    %1209 = vmatprep.subr.mxu0 0.0
    %1210 = vmatpush1.xpose.msra.mxu0 0.0
    %1211 = vmatprep.subr.mxu0 0.0
    %1212 = vmatpush1.xpose.msra.mxu0 0.0
    %1213 = vmatprep.subr.mxu0 0.0
    %1214 = vmatpush1.xpose.msra.mxu0 0.0
    %1215 = vmatprep.subr.mxu0 0.0
    %1216 = vmatpush1.xpose.msra.mxu0 0.0
    %1217 = vmatprep.mubr.f32.mxu0 0.0
    %v1218 = vand.u32 %v994, 4294901760
    %v1219 = vsub.f32 %v994, %v1218
    %1220 = vmatmul.mubr.f32.gmra.mrb[0].mxu0 %v1219
    %v1221 = vpop.f32.mrb[0].mxu0
    %v1222 = vadd.f32 %v1148, %v1221
    %v1223 = vpop.f32.mrb[0].mxu0
    %1224 = vdwg.mxu0
    %1225 = vmatprep.subr.mxu0 0.0
    %v1226 = vand.u32 %v997, 4294901760
    %1227 = vmatpush1.xpose.msra.mxu0 %v1226
    %1228 = vmatprep.subr.mxu0 0.0
    %1229 = vmatpush1.xpose.msra.mxu0 0.0
    %1230 = vmatprep.subr.mxu0 0.0
    %1231 = vmatpush1.xpose.msra.mxu0 0.0
    %1232 = vmatprep.subr.mxu0 0.0
    %1233 = vmatpush1.xpose.msra.mxu0 0.0
    %1234 = vmatprep.subr.mxu0 0.0
    %1235 = vmatpush1.xpose.msra.mxu0 0.0
    %1236 = vmatprep.subr.mxu0 0.0
    %1237 = vmatpush1.xpose.msra.mxu0 0.0
    %1238 = vmatprep.subr.mxu0 0.0
    %1239 = vmatpush1.xpose.msra.mxu0 0.0
    %1240 = vmatprep.subr.mxu0 0.0
    %1241 = vmatpush1.xpose.msra.mxu0 0.0
    %1242 = vmatprep.subr.mxu0 0.0
    %1243 = vmatpush1.xpose.msra.mxu0 0.0
    %1244 = vmatprep.subr.mxu0 0.0
    %1245 = vmatpush1.xpose.msra.mxu0 0.0
    %1246 = vmatprep.subr.mxu0 0.0
    %1247 = vmatpush1.xpose.msra.mxu0 0.0
    %1248 = vmatprep.subr.mxu0 0.0
    %1249 = vmatpush1.xpose.msra.mxu0 0.0
    %1250 = vmatprep.subr.mxu0 0.0
    %1251 = vmatpush1.xpose.msra.mxu0 0.0
    %1252 = vmatprep.subr.mxu0 0.0
    %1253 = vmatpush1.xpose.msra.mxu0 0.0
    %1254 = vmatprep.subr.mxu0 0.0
    %1255 = vmatpush1.xpose.msra.mxu0 0.0
    %1256 = vmatprep.subr.mxu0 0.0
    %1257 = vmatpush1.xpose.msra.mxu0 0.0
    %1258 = vmatprep.subr.mxu0 0.0
    %1259 = vmatpush1.xpose.msra.mxu0 0.0
    %1260 = vmatprep.subr.mxu0 0.0
    %1261 = vmatpush1.xpose.msra.mxu0 0.0
    %1262 = vmatprep.subr.mxu0 0.0
    %1263 = vmatpush1.xpose.msra.mxu0 0.0
    %1264 = vmatprep.subr.mxu0 0.0
    %1265 = vmatpush1.xpose.msra.mxu0 0.0
    %1266 = vmatprep.subr.mxu0 0.0
    %1267 = vmatpush1.xpose.msra.mxu0 0.0
    %1268 = vmatprep.subr.mxu0 0.0
    %1269 = vmatpush1.xpose.msra.mxu0 0.0
    %1270 = vmatprep.subr.mxu0 0.0
    %1271 = vmatpush1.xpose.msra.mxu0 0.0
    %1272 = vmatprep.subr.mxu0 0.0
    %1273 = vmatpush1.xpose.msra.mxu0 0.0
    %1274 = vmatprep.subr.mxu0 0.0
    %1275 = vmatpush1.xpose.msra.mxu0 0.0
    %1276 = vmatprep.subr.mxu0 0.0
    %1277 = vmatpush1.xpose.msra.mxu0 0.0
    %1278 = vmatprep.subr.mxu0 0.0
    %1279 = vmatpush1.xpose.msra.mxu0 0.0
    %1280 = vmatprep.subr.mxu0 0.0
    %1281 = vmatpush1.xpose.msra.mxu0 0.0
    %1282 = vmatprep.subr.mxu0 0.0
    %1283 = vmatpush1.xpose.msra.mxu0 0.0
    %1284 = vmatprep.subr.mxu0 0.0
    %1285 = vmatpush1.xpose.msra.mxu0 0.0
    %1286 = vmatprep.subr.mxu0 0.0
    %1287 = vmatpush1.xpose.msra.mxu0 0.0
    %1288 = vmatprep.subr.mxu0 0.0
    %1289 = vmatpush1.xpose.msra.mxu0 0.0
    %1290 = vmatprep.mubr.f32.mxu0 0.0
    %v1291 = vand.u32 %v994, 4294901760
    %v1292 = vsub.f32 %v994, %v1291
    %v1293 = vand.u32 %v1292, 4294901760
    %1294 = vmatmul.mubr.f32.gmra.mrb[0].mxu0 %v1293
    %v1295 = vpop.f32.mrb[0].mxu0
    %v1296 = vadd.f32 %v1222, %v1295
    %v1297 = vpop.f32.mrb[0].mxu0
    %1298 = vdwg.mxu0
    %1299 = vmatprep.subr.mxu0 0.0
    %v1300 = vand.u32 %v997, 4294901760
    %v1301 = vsub.f32 %v997, %v1300
    %v1302 = vand.u32 %v1301, 4294901760
    %1303 = vmatpush1.xpose.msra.mxu0 %v1302
    %1304 = vmatprep.subr.mxu0 0.0
    %1305 = vmatpush1.xpose.msra.mxu0 0.0
    %1306 = vmatprep.subr.mxu0 0.0
    %1307 = vmatpush1.xpose.msra.mxu0 0.0
    %1308 = vmatprep.subr.mxu0 0.0
    %1309 = vmatpush1.xpose.msra.mxu0 0.0
    %1310 = vmatprep.subr.mxu0 0.0
    %1311 = vmatpush1.xpose.msra.mxu0 0.0
    %1312 = vmatprep.subr.mxu0 0.0
    %1313 = vmatpush1.xpose.msra.mxu0 0.0
    %1314 = vmatprep.subr.mxu0 0.0
    %1315 = vmatpush1.xpose.msra.mxu0 0.0
    %1316 = vmatprep.subr.mxu0 0.0
    %1317 = vmatpush1.xpose.msra.mxu0 0.0
    %1318 = vmatprep.subr.mxu0 0.0
    %1319 = vmatpush1.xpose.msra.mxu0 0.0
    %1320 = vmatprep.subr.mxu0 0.0
    %1321 = vmatpush1.xpose.msra.mxu0 0.0
    %1322 = vmatprep.subr.mxu0 0.0
    %1323 = vmatpush1.xpose.msra.mxu0 0.0
    %1324 = vmatprep.subr.mxu0 0.0
    %1325 = vmatpush1.xpose.msra.mxu0 0.0
    %1326 = vmatprep.subr.mxu0 0.0
    %1327 = vmatpush1.xpose.msra.mxu0 0.0
    %1328 = vmatprep.subr.mxu0 0.0
    %1329 = vmatpush1.xpose.msra.mxu0 0.0
    %1330 = vmatprep.subr.mxu0 0.0
    %1331 = vmatpush1.xpose.msra.mxu0 0.0
    %1332 = vmatprep.subr.mxu0 0.0
    %1333 = vmatpush1.xpose.msra.mxu0 0.0
    %1334 = vmatprep.subr.mxu0 0.0
    %1335 = vmatpush1.xpose.msra.mxu0 0.0
    %1336 = vmatprep.subr.mxu0 0.0
    %1337 = vmatpush1.xpose.msra.mxu0 0.0
    %1338 = vmatprep.subr.mxu0 0.0
    %1339 = vmatpush1.xpose.msra.mxu0 0.0
    %1340 = vmatprep.subr.mxu0 0.0
    %1341 = vmatpush1.xpose.msra.mxu0 0.0
    %1342 = vmatprep.subr.mxu0 0.0
    %1343 = vmatpush1.xpose.msra.mxu0 0.0
    %1344 = vmatprep.subr.mxu0 0.0
    %1345 = vmatpush1.xpose.msra.mxu0 0.0
    %1346 = vmatprep.subr.mxu0 0.0
    %1347 = vmatpush1.xpose.msra.mxu0 0.0
    %1348 = vmatprep.subr.mxu0 0.0
    %1349 = vmatpush1.xpose.msra.mxu0 0.0
    %1350 = vmatprep.subr.mxu0 0.0
    %1351 = vmatpush1.xpose.msra.mxu0 0.0
    %1352 = vmatprep.subr.mxu0 0.0
    %1353 = vmatpush1.xpose.msra.mxu0 0.0
    %1354 = vmatprep.subr.mxu0 0.0
    %1355 = vmatpush1.xpose.msra.mxu0 0.0
    %1356 = vmatprep.subr.mxu0 0.0
    %1357 = vmatpush1.xpose.msra.mxu0 0.0
    %1358 = vmatprep.subr.mxu0 0.0
    %1359 = vmatpush1.xpose.msra.mxu0 0.0
    %1360 = vmatprep.subr.mxu0 0.0
    %1361 = vmatpush1.xpose.msra.mxu0 0.0
    %1362 = vmatprep.subr.mxu0 0.0
    %1363 = vmatpush1.xpose.msra.mxu0 0.0
    %1364 = vmatprep.subr.mxu0 0.0
    %1365 = vmatpush1.xpose.msra.mxu0 0.0
    %1366 = vmatprep.mubr.f32.mxu0 0.0
    %v1367 = vand.u32 %v994, 4294901760
    %1368 = vmatmul.mubr.f32.gmra.mrb[0].mxu0 %v1367
    %v1369 = vpop.f32.mrb[0].mxu0
    %v1370 = vadd.f32 %v1296, %v1369
    %v1371 = vpop.f32.mrb[0].mxu0
    %1372 = vdwg.mxu0
    %1373 = vmatprep.subr.mxu0 0.0
    %v1374 = vand.u32 %v997, 4294901760
    %1375 = vmatpush1.xpose.msra.mxu0 %v1374
    %1376 = vmatprep.subr.mxu0 0.0
    %1377 = vmatpush1.xpose.msra.mxu0 0.0
    %1378 = vmatprep.subr.mxu0 0.0
    %1379 = vmatpush1.xpose.msra.mxu0 0.0
    %1380 = vmatprep.subr.mxu0 0.0
    %1381 = vmatpush1.xpose.msra.mxu0 0.0
    %1382 = vmatprep.subr.mxu0 0.0
    %1383 = vmatpush1.xpose.msra.mxu0 0.0
    %1384 = vmatprep.subr.mxu0 0.0
    %1385 = vmatpush1.xpose.msra.mxu0 0.0
    %1386 = vmatprep.subr.mxu0 0.0
    %1387 = vmatpush1.xpose.msra.mxu0 0.0
    %1388 = vmatprep.subr.mxu0 0.0
    %1389 = vmatpush1.xpose.msra.mxu0 0.0
    %1390 = vmatprep.subr.mxu0 0.0
    %1391 = vmatpush1.xpose.msra.mxu0 0.0
    %1392 = vmatprep.subr.mxu0 0.0
    %1393 = vmatpush1.xpose.msra.mxu0 0.0
    %1394 = vmatprep.subr.mxu0 0.0
    %1395 = vmatpush1.xpose.msra.mxu0 0.0
    %1396 = vmatprep.subr.mxu0 0.0
    %1397 = vmatpush1.xpose.msra.mxu0 0.0
    %1398 = vmatprep.subr.mxu0 0.0
    %1399 = vmatpush1.xpose.msra.mxu0 0.0
    %1400 = vmatprep.subr.mxu0 0.0
    %1401 = vmatpush1.xpose.msra.mxu0 0.0
    %1402 = vmatprep.subr.mxu0 0.0
    %1403 = vmatpush1.xpose.msra.mxu0 0.0
    %1404 = vmatprep.subr.mxu0 0.0
    %1405 = vmatpush1.xpose.msra.mxu0 0.0
    %1406 = vmatprep.subr.mxu0 0.0
    %1407 = vmatpush1.xpose.msra.mxu0 0.0
    %1408 = vmatprep.subr.mxu0 0.0
    %1409 = vmatpush1.xpose.msra.mxu0 0.0
    %1410 = vmatprep.subr.mxu0 0.0
    %1411 = vmatpush1.xpose.msra.mxu0 0.0
    %1412 = vmatprep.subr.mxu0 0.0
    %1413 = vmatpush1.xpose.msra.mxu0 0.0
    %1414 = vmatprep.subr.mxu0 0.0
    %1415 = vmatpush1.xpose.msra.mxu0 0.0
    %1416 = vmatprep.subr.mxu0 0.0
    %1417 = vmatpush1.xpose.msra.mxu0 0.0
    %1418 = vmatprep.subr.mxu0 0.0
    %1419 = vmatpush1.xpose.msra.mxu0 0.0
    %1420 = vmatprep.subr.mxu0 0.0
    %1421 = vmatpush1.xpose.msra.mxu0 0.0
    %1422 = vmatprep.subr.mxu0 0.0
    %1423 = vmatpush1.xpose.msra.mxu0 0.0
    %1424 = vmatprep.subr.mxu0 0.0
    %1425 = vmatpush1.xpose.msra.mxu0 0.0
    %1426 = vmatprep.subr.mxu0 0.0
    %1427 = vmatpush1.xpose.msra.mxu0 0.0
    %1428 = vmatprep.subr.mxu0 0.0
    %1429 = vmatpush1.xpose.msra.mxu0 0.0
    %1430 = vmatprep.subr.mxu0 0.0
    %1431 = vmatpush1.xpose.msra.mxu0 0.0
    %1432 = vmatprep.subr.mxu0 0.0
    %1433 = vmatpush1.xpose.msra.mxu0 0.0
    %1434 = vmatprep.subr.mxu0 0.0
    %1435 = vmatpush1.xpose.msra.mxu0 0.0
    %1436 = vmatprep.subr.mxu0 0.0
    %1437 = vmatpush1.xpose.msra.mxu0 0.0
    %1438 = vmatprep.mubr.f32.mxu0 0.0
    %v1439 = vand.u32 %v994, 4294901760
    %1440 = vmatmul.mubr.f32.gmra.mrb[0].mxu0 %v1439
    %v1441 = vpop.f32.mrb[0].mxu0
    %v1442 = vadd.f32 %v1370, %v1441
    %v1443 = vpop.f32.mrb[0].mxu0
    %1444 = vdwg.mxu0
    %v1445 = vsel %vm26, %v90, 0
    %v1448 = vsel %vm26, %v20, 0
    %1450 = vmatprep.subr.mxu0 0.0
    %v1451 = vand.u32 %v1448, 4294901760
    %1452 = vmatpush1.xpose.msra.mxu0 %v1451
    %1453 = vmatprep.subr.mxu0 0.0
    %1454 = vmatpush1.xpose.msra.mxu0 0.0
    %1455 = vmatprep.subr.mxu0 0.0
    %1456 = vmatpush1.xpose.msra.mxu0 0.0
    %1457 = vmatprep.subr.mxu0 0.0
    %1458 = vmatpush1.xpose.msra.mxu0 0.0
    %1459 = vmatprep.subr.mxu0 0.0
    %1460 = vmatpush1.xpose.msra.mxu0 0.0
    %1461 = vmatprep.subr.mxu0 0.0
    %1462 = vmatpush1.xpose.msra.mxu0 0.0
    %1463 = vmatprep.subr.mxu0 0.0
    %1464 = vmatpush1.xpose.msra.mxu0 0.0
    %1465 = vmatprep.subr.mxu0 0.0
    %1466 = vmatpush1.xpose.msra.mxu0 0.0
    %1467 = vmatprep.subr.mxu0 0.0
    %1468 = vmatpush1.xpose.msra.mxu0 0.0
    %1469 = vmatprep.subr.mxu0 0.0
    %1470 = vmatpush1.xpose.msra.mxu0 0.0
    %1471 = vmatprep.subr.mxu0 0.0
    %1472 = vmatpush1.xpose.msra.mxu0 0.0
    %1473 = vmatprep.subr.mxu0 0.0
    %1474 = vmatpush1.xpose.msra.mxu0 0.0
    %1475 = vmatprep.subr.mxu0 0.0
    %1476 = vmatpush1.xpose.msra.mxu0 0.0
    %1477 = vmatprep.subr.mxu0 0.0
    %1478 = vmatpush1.xpose.msra.mxu0 0.0
    %1479 = vmatprep.subr.mxu0 0.0
    %1480 = vmatpush1.xpose.msra.mxu0 0.0
    %1481 = vmatprep.subr.mxu0 0.0
    %1482 = vmatpush1.xpose.msra.mxu0 0.0
    %1483 = vmatprep.subr.mxu0 0.0
    %1484 = vmatpush1.xpose.msra.mxu0 0.0
    %1485 = vmatprep.subr.mxu0 0.0
    %1486 = vmatpush1.xpose.msra.mxu0 0.0
    %1487 = vmatprep.subr.mxu0 0.0
    %1488 = vmatpush1.xpose.msra.mxu0 0.0
    %1489 = vmatprep.subr.mxu0 0.0
    %1490 = vmatpush1.xpose.msra.mxu0 0.0
    %1491 = vmatprep.subr.mxu0 0.0
    %1492 = vmatpush1.xpose.msra.mxu0 0.0
    %1493 = vmatprep.subr.mxu0 0.0
    %1494 = vmatpush1.xpose.msra.mxu0 0.0
    %1495 = vmatprep.subr.mxu0 0.0
    %1496 = vmatpush1.xpose.msra.mxu0 0.0
    %1497 = vmatprep.subr.mxu0 0.0
    %1498 = vmatpush1.xpose.msra.mxu0 0.0
    %1499 = vmatprep.subr.mxu0 0.0
    %1500 = vmatpush1.xpose.msra.mxu0 0.0
    %1501 = vmatprep.subr.mxu0 0.0
    %1502 = vmatpush1.xpose.msra.mxu0 0.0
    %1503 = vmatprep.subr.mxu0 0.0
    %1504 = vmatpush1.xpose.msra.mxu0 0.0
    %1505 = vmatprep.subr.mxu0 0.0
    %1506 = vmatpush1.xpose.msra.mxu0 0.0
    %1507 = vmatprep.subr.mxu0 0.0
    %1508 = vmatpush1.xpose.msra.mxu0 0.0
    %1509 = vmatprep.subr.mxu0 0.0
    %1510 = vmatpush1.xpose.msra.mxu0 0.0
    %1511 = vmatprep.subr.mxu0 0.0
    %1512 = vmatpush1.xpose.msra.mxu0 0.0
    %1513 = vmatprep.subr.mxu0 0.0
    %1514 = vmatpush1.xpose.msra.mxu0 0.0
    %1515 = vmatprep.mubr.f32.mxu0 0.0
    %v1516 = vand.u32 %v1445, 4294901760
    %v1517 = vsub.f32 %v1445, %v1516
    %v1518 = vand.u32 %v1517, 4294901760
    %v1519 = vsub.f32 %v1517, %v1518
    %v1520 = vand.u32 %v1519, 4294901760
    %1521 = vmatmul.mubr.f32.gmra.mrb[0].mxu0 %v1520
    %v1522 = vpop.f32.mrb[0].mxu0
    %v1523 = vadd.f32 0.0, %v1522
    %v1524 = vpop.f32.mrb[0].mxu0
    %1525 = vdwg.mxu0
    %1526 = vmatprep.subr.mxu0 0.0
    %v1527 = vand.u32 %v1448, 4294901760
    %v1528 = vsub.f32 %v1448, %v1527
    %v1529 = vand.u32 %v1528, 4294901760
    %v1530 = vsub.f32 %v1528, %v1529
    %v1531 = vand.u32 %v1530, 4294901760
    %1532 = vmatpush1.xpose.msra.mxu0 %v1531
    %1533 = vmatprep.subr.mxu0 0.0
    %1534 = vmatpush1.xpose.msra.mxu0 0.0
    %1535 = vmatprep.subr.mxu0 0.0
    %1536 = vmatpush1.xpose.msra.mxu0 0.0
    %1537 = vmatprep.subr.mxu0 0.0
    %1538 = vmatpush1.xpose.msra.mxu0 0.0
    %1539 = vmatprep.subr.mxu0 0.0
    %1540 = vmatpush1.xpose.msra.mxu0 0.0
    %1541 = vmatprep.subr.mxu0 0.0
    %1542 = vmatpush1.xpose.msra.mxu0 0.0
    %1543 = vmatprep.subr.mxu0 0.0
    %1544 = vmatpush1.xpose.msra.mxu0 0.0
    %1545 = vmatprep.subr.mxu0 0.0
    %1546 = vmatpush1.xpose.msra.mxu0 0.0
    %1547 = vmatprep.subr.mxu0 0.0
    %1548 = vmatpush1.xpose.msra.mxu0 0.0
    %1549 = vmatprep.subr.mxu0 0.0
    %1550 = vmatpush1.xpose.msra.mxu0 0.0
    %1551 = vmatprep.subr.mxu0 0.0
    %1552 = vmatpush1.xpose.msra.mxu0 0.0
    %1553 = vmatprep.subr.mxu0 0.0
    %1554 = vmatpush1.xpose.msra.mxu0 0.0
    %1555 = vmatprep.subr.mxu0 0.0
    %1556 = vmatpush1.xpose.msra.mxu0 0.0
    %1557 = vmatprep.subr.mxu0 0.0
    %1558 = vmatpush1.xpose.msra.mxu0 0.0
    %1559 = vmatprep.subr.mxu0 0.0
    %1560 = vmatpush1.xpose.msra.mxu0 0.0
    %1561 = vmatprep.subr.mxu0 0.0
    %1562 = vmatpush1.xpose.msra.mxu0 0.0
    %1563 = vmatprep.subr.mxu0 0.0
    %1564 = vmatpush1.xpose.msra.mxu0 0.0
    %1565 = vmatprep.subr.mxu0 0.0
    %1566 = vmatpush1.xpose.msra.mxu0 0.0
    %1567 = vmatprep.subr.mxu0 0.0
    %1568 = vmatpush1.xpose.msra.mxu0 0.0
    %1569 = vmatprep.subr.mxu0 0.0
    %1570 = vmatpush1.xpose.msra.mxu0 0.0
    %1571 = vmatprep.subr.mxu0 0.0
    %1572 = vmatpush1.xpose.msra.mxu0 0.0
    %1573 = vmatprep.subr.mxu0 0.0
    %1574 = vmatpush1.xpose.msra.mxu0 0.0
    %1575 = vmatprep.subr.mxu0 0.0
    %1576 = vmatpush1.xpose.msra.mxu0 0.0
    %1577 = vmatprep.subr.mxu0 0.0
    %1578 = vmatpush1.xpose.msra.mxu0 0.0
    %1579 = vmatprep.subr.mxu0 0.0
    %1580 = vmatpush1.xpose.msra.mxu0 0.0
    %1581 = vmatprep.subr.mxu0 0.0
    %1582 = vmatpush1.xpose.msra.mxu0 0.0
    %1583 = vmatprep.subr.mxu0 0.0
    %1584 = vmatpush1.xpose.msra.mxu0 0.0
    %1585 = vmatprep.subr.mxu0 0.0
    %1586 = vmatpush1.xpose.msra.mxu0 0.0
    %1587 = vmatprep.subr.mxu0 0.0
    %1588 = vmatpush1.xpose.msra.mxu0 0.0
    %1589 = vmatprep.subr.mxu0 0.0
    %1590 = vmatpush1.xpose.msra.mxu0 0.0
    %1591 = vmatprep.subr.mxu0 0.0
    %1592 = vmatpush1.xpose.msra.mxu0 0.0
    %1593 = vmatprep.subr.mxu0 0.0
    %1594 = vmatpush1.xpose.msra.mxu0 0.0
    %1595 = vmatprep.mubr.f32.mxu0 0.0
    %v1596 = vand.u32 %v1445, 4294901760
    %1597 = vmatmul.mubr.f32.gmra.mrb[0].mxu0 %v1596
    %v1598 = vpop.f32.mrb[0].mxu0
    %v1599 = vadd.f32 %v1523, %v1598
    %v1600 = vpop.f32.mrb[0].mxu0
    %1601 = vdwg.mxu0
    %1602 = vmatprep.subr.mxu0 0.0
    %v1603 = vand.u32 %v1448, 4294901760
    %v1604 = vsub.f32 %v1448, %v1603
    %1605 = vmatpush1.xpose.msra.mxu0 %v1604
    %1606 = vmatprep.subr.mxu0 0.0
    %1607 = vmatpush1.xpose.msra.mxu0 0.0
    %1608 = vmatprep.subr.mxu0 0.0
    %1609 = vmatpush1.xpose.msra.mxu0 0.0
    %1610 = vmatprep.subr.mxu0 0.0
    %1611 = vmatpush1.xpose.msra.mxu0 0.0
    %1612 = vmatprep.subr.mxu0 0.0
    %1613 = vmatpush1.xpose.msra.mxu0 0.0
    %1614 = vmatprep.subr.mxu0 0.0
    %1615 = vmatpush1.xpose.msra.mxu0 0.0
    %1616 = vmatprep.subr.mxu0 0.0
    %1617 = vmatpush1.xpose.msra.mxu0 0.0
    %1618 = vmatprep.subr.mxu0 0.0
    %1619 = vmatpush1.xpose.msra.mxu0 0.0
    %1620 = vmatprep.subr.mxu0 0.0
    %1621 = vmatpush1.xpose.msra.mxu0 0.0
    %1622 = vmatprep.subr.mxu0 0.0
    %1623 = vmatpush1.xpose.msra.mxu0 0.0
    %1624 = vmatprep.subr.mxu0 0.0
    %1625 = vmatpush1.xpose.msra.mxu0 0.0
    %1626 = vmatprep.subr.mxu0 0.0
    %1627 = vmatpush1.xpose.msra.mxu0 0.0
    %1628 = vmatprep.subr.mxu0 0.0
    %1629 = vmatpush1.xpose.msra.mxu0 0.0
    %1630 = vmatprep.subr.mxu0 0.0
    %1631 = vmatpush1.xpose.msra.mxu0 0.0
    %1632 = vmatprep.subr.mxu0 0.0
    %1633 = vmatpush1.xpose.msra.mxu0 0.0
    %1634 = vmatprep.subr.mxu0 0.0
    %1635 = vmatpush1.xpose.msra.mxu0 0.0
    %1636 = vmatprep.subr.mxu0 0.0
    %1637 = vmatpush1.xpose.msra.mxu0 0.0
    %1638 = vmatprep.subr.mxu0 0.0
    %1639 = vmatpush1.xpose.msra.mxu0 0.0
    %1640 = vmatprep.subr.mxu0 0.0
    %1641 = vmatpush1.xpose.msra.mxu0 0.0
    %1642 = vmatprep.subr.mxu0 0.0
    %1643 = vmatpush1.xpose.msra.mxu0 0.0
    %1644 = vmatprep.subr.mxu0 0.0
    %1645 = vmatpush1.xpose.msra.mxu0 0.0
    %1646 = vmatprep.subr.mxu0 0.0
    %1647 = vmatpush1.xpose.msra.mxu0 0.0
    %1648 = vmatprep.subr.mxu0 0.0
    %1649 = vmatpush1.xpose.msra.mxu0 0.0
    %1650 = vmatprep.subr.mxu0 0.0
    %1651 = vmatpush1.xpose.msra.mxu0 0.0
    %1652 = vmatprep.subr.mxu0 0.0
    %1653 = vmatpush1.xpose.msra.mxu0 0.0
    %1654 = vmatprep.subr.mxu0 0.0
    %1655 = vmatpush1.xpose.msra.mxu0 0.0
    %1656 = vmatprep.subr.mxu0 0.0
    %1657 = vmatpush1.xpose.msra.mxu0 0.0
    %1658 = vmatprep.subr.mxu0 0.0
    %1659 = vmatpush1.xpose.msra.mxu0 0.0
    %1660 = vmatprep.subr.mxu0 0.0
    %1661 = vmatpush1.xpose.msra.mxu0 0.0
    %1662 = vmatprep.subr.mxu0 0.0
    %1663 = vmatpush1.xpose.msra.mxu0 0.0
    %1664 = vmatprep.subr.mxu0 0.0
    %1665 = vmatpush1.xpose.msra.mxu0 0.0
    %1666 = vmatprep.subr.mxu0 0.0
    %1667 = vmatpush1.xpose.msra.mxu0 0.0
    %1668 = vmatprep.mubr.f32.mxu0 0.0
    %v1669 = vand.u32 %v1445, 4294901760
    %v1670 = vsub.f32 %v1445, %v1669
    %1671 = vmatmul.mubr.f32.gmra.mrb[0].mxu0 %v1670
    %v1672 = vpop.f32.mrb[0].mxu0
    %v1673 = vadd.f32 %v1599, %v1672
    %v1674 = vpop.f32.mrb[0].mxu0
    %1675 = vdwg.mxu0
    %1676 = vmatprep.subr.mxu0 0.0
    %v1677 = vand.u32 %v1448, 4294901760
    %1678 = vmatpush1.xpose.msra.mxu0 %v1677
    %1679 = vmatprep.subr.mxu0 0.0
    %1680 = vmatpush1.xpose.msra.mxu0 0.0
    %1681 = vmatprep.subr.mxu0 0.0
    %1682 = vmatpush1.xpose.msra.mxu0 0.0
    %1683 = vmatprep.subr.mxu0 0.0
    %1684 = vmatpush1.xpose.msra.mxu0 0.0
    %1685 = vmatprep.subr.mxu0 0.0
    %1686 = vmatpush1.xpose.msra.mxu0 0.0
    %1687 = vmatprep.subr.mxu0 0.0
    %1688 = vmatpush1.xpose.msra.mxu0 0.0
    %1689 = vmatprep.subr.mxu0 0.0
    %1690 = vmatpush1.xpose.msra.mxu0 0.0
    %1691 = vmatprep.subr.mxu0 0.0
    %1692 = vmatpush1.xpose.msra.mxu0 0.0
    %1693 = vmatprep.subr.mxu0 0.0
    %1694 = vmatpush1.xpose.msra.mxu0 0.0
    %1695 = vmatprep.subr.mxu0 0.0
    %1696 = vmatpush1.xpose.msra.mxu0 0.0
    %1697 = vmatprep.subr.mxu0 0.0
    %1698 = vmatpush1.xpose.msra.mxu0 0.0
    %1699 = vmatprep.subr.mxu0 0.0
    %1700 = vmatpush1.xpose.msra.mxu0 0.0
    %1701 = vmatprep.subr.mxu0 0.0
    %1702 = vmatpush1.xpose.msra.mxu0 0.0
    %1703 = vmatprep.subr.mxu0 0.0
    %1704 = vmatpush1.xpose.msra.mxu0 0.0
    %1705 = vmatprep.subr.mxu0 0.0
    %1706 = vmatpush1.xpose.msra.mxu0 0.0
    %1707 = vmatprep.subr.mxu0 0.0
    %1708 = vmatpush1.xpose.msra.mxu0 0.0
    %1709 = vmatprep.subr.mxu0 0.0
    %1710 = vmatpush1.xpose.msra.mxu0 0.0
    %1711 = vmatprep.subr.mxu0 0.0
    %1712 = vmatpush1.xpose.msra.mxu0 0.0
    %1713 = vmatprep.subr.mxu0 0.0
    %1714 = vmatpush1.xpose.msra.mxu0 0.0
    %1715 = vmatprep.subr.mxu0 0.0
    %1716 = vmatpush1.xpose.msra.mxu0 0.0
    %1717 = vmatprep.subr.mxu0 0.0
    %1718 = vmatpush1.xpose.msra.mxu0 0.0
    %1719 = vmatprep.subr.mxu0 0.0
    %1720 = vmatpush1.xpose.msra.mxu0 0.0
    %1721 = vmatprep.subr.mxu0 0.0
    %1722 = vmatpush1.xpose.msra.mxu0 0.0
    %1723 = vmatprep.subr.mxu0 0.0
    %1724 = vmatpush1.xpose.msra.mxu0 0.0
    %1725 = vmatprep.subr.mxu0 0.0
    %1726 = vmatpush1.xpose.msra.mxu0 0.0
    %1727 = vmatprep.subr.mxu0 0.0
    %1728 = vmatpush1.xpose.msra.mxu0 0.0
    %1729 = vmatprep.subr.mxu0 0.0
    %1730 = vmatpush1.xpose.msra.mxu0 0.0
    %1731 = vmatprep.subr.mxu0 0.0
    %1732 = vmatpush1.xpose.msra.mxu0 0.0
    %1733 = vmatprep.subr.mxu0 0.0
    %1734 = vmatpush1.xpose.msra.mxu0 0.0
    %1735 = vmatprep.subr.mxu0 0.0
    %1736 = vmatpush1.xpose.msra.mxu0 0.0
    %1737 = vmatprep.subr.mxu0 0.0
    %1738 = vmatpush1.xpose.msra.mxu0 0.0
    %1739 = vmatprep.subr.mxu0 0.0
    %1740 = vmatpush1.xpose.msra.mxu0 0.0
    %1741 = vmatprep.mubr.f32.mxu0 0.0
    %v1742 = vand.u32 %v1445, 4294901760
    %v1743 = vsub.f32 %v1445, %v1742
    %v1744 = vand.u32 %v1743, 4294901760
    %1745 = vmatmul.mubr.f32.gmra.mrb[0].mxu0 %v1744
    %v1746 = vpop.f32.mrb[0].mxu0
    %v1747 = vadd.f32 %v1673, %v1746
    %v1748 = vpop.f32.mrb[0].mxu0
    %1749 = vdwg.mxu0
    %1750 = vmatprep.subr.mxu0 0.0
    %v1751 = vand.u32 %v1448, 4294901760
    %v1752 = vsub.f32 %v1448, %v1751
    %v1753 = vand.u32 %v1752, 4294901760
    %1754 = vmatpush1.xpose.msra.mxu0 %v1753
    %1755 = vmatprep.subr.mxu0 0.0
    %1756 = vmatpush1.xpose.msra.mxu0 0.0
    %1757 = vmatprep.subr.mxu0 0.0
    %1758 = vmatpush1.xpose.msra.mxu0 0.0
    %1759 = vmatprep.subr.mxu0 0.0
    %1760 = vmatpush1.xpose.msra.mxu0 0.0
    %1761 = vmatprep.subr.mxu0 0.0
    %1762 = vmatpush1.xpose.msra.mxu0 0.0
    %1763 = vmatprep.subr.mxu0 0.0
    %1764 = vmatpush1.xpose.msra.mxu0 0.0
    %1765 = vmatprep.subr.mxu0 0.0
    %1766 = vmatpush1.xpose.msra.mxu0 0.0
    %1767 = vmatprep.subr.mxu0 0.0
    %1768 = vmatpush1.xpose.msra.mxu0 0.0
    %1769 = vmatprep.subr.mxu0 0.0
    %1770 = vmatpush1.xpose.msra.mxu0 0.0
    %1771 = vmatprep.subr.mxu0 0.0
    %1772 = vmatpush1.xpose.msra.mxu0 0.0
    %1773 = vmatprep.subr.mxu0 0.0
    %1774 = vmatpush1.xpose.msra.mxu0 0.0
    %1775 = vmatprep.subr.mxu0 0.0
    %1776 = vmatpush1.xpose.msra.mxu0 0.0
    %1777 = vmatprep.subr.mxu0 0.0
    %1778 = vmatpush1.xpose.msra.mxu0 0.0
    %1779 = vmatprep.subr.mxu0 0.0
    %1780 = vmatpush1.xpose.msra.mxu0 0.0
    %1781 = vmatprep.subr.mxu0 0.0
    %1782 = vmatpush1.xpose.msra.mxu0 0.0
    %1783 = vmatprep.subr.mxu0 0.0
    %1784 = vmatpush1.xpose.msra.mxu0 0.0
    %1785 = vmatprep.subr.mxu0 0.0
    %1786 = vmatpush1.xpose.msra.mxu0 0.0
    %1787 = vmatprep.subr.mxu0 0.0
    %1788 = vmatpush1.xpose.msra.mxu0 0.0
    %1789 = vmatprep.subr.mxu0 0.0
    %1790 = vmatpush1.xpose.msra.mxu0 0.0
    %1791 = vmatprep.subr.mxu0 0.0
    %1792 = vmatpush1.xpose.msra.mxu0 0.0
    %1793 = vmatprep.subr.mxu0 0.0
    %1794 = vmatpush1.xpose.msra.mxu0 0.0
    %1795 = vmatprep.subr.mxu0 0.0
    %1796 = vmatpush1.xpose.msra.mxu0 0.0
    %1797 = vmatprep.subr.mxu0 0.0
    %1798 = vmatpush1.xpose.msra.mxu0 0.0
    %1799 = vmatprep.subr.mxu0 0.0
    %1800 = vmatpush1.xpose.msra.mxu0 0.0
    %1801 = vmatprep.subr.mxu0 0.0
    %1802 = vmatpush1.xpose.msra.mxu0 0.0
    %1803 = vmatprep.subr.mxu0 0.0
    %1804 = vmatpush1.xpose.msra.mxu0 0.0
    %1805 = vmatprep.subr.mxu0 0.0
    %1806 = vmatpush1.xpose.msra.mxu0 0.0
    %1807 = vmatprep.subr.mxu0 0.0
    %1808 = vmatpush1.xpose.msra.mxu0 0.0
    %1809 = vmatprep.subr.mxu0 0.0
    %1810 = vmatpush1.xpose.msra.mxu0 0.0
    %1811 = vmatprep.subr.mxu0 0.0
    %1812 = vmatpush1.xpose.msra.mxu0 0.0
    %1813 = vmatprep.subr.mxu0 0.0
    %1814 = vmatpush1.xpose.msra.mxu0 0.0
    %1815 = vmatprep.subr.mxu0 0.0
    %1816 = vmatpush1.xpose.msra.mxu0 0.0
    %1817 = vmatprep.mubr.f32.mxu0 0.0
    %v1818 = vand.u32 %v1445, 4294901760
    %1819 = vmatmul.mubr.f32.gmra.mrb[0].mxu0 %v1818
    %v1820 = vpop.f32.mrb[0].mxu0
    %v1821 = vadd.f32 %v1747, %v1820
    %v1822 = vpop.f32.mrb[0].mxu0
    %1823 = vdwg.mxu0
    %1824 = vmatprep.subr.mxu0 0.0
    %v1825 = vand.u32 %v1448, 4294901760
    %1826 = vmatpush1.xpose.msra.mxu0 %v1825
    %1827 = vmatprep.subr.mxu0 0.0
    %1828 = vmatpush1.xpose.msra.mxu0 0.0
    %1829 = vmatprep.subr.mxu0 0.0
    %1830 = vmatpush1.xpose.msra.mxu0 0.0
    %1831 = vmatprep.subr.mxu0 0.0
    %1832 = vmatpush1.xpose.msra.mxu0 0.0
    %1833 = vmatprep.subr.mxu0 0.0
    %1834 = vmatpush1.xpose.msra.mxu0 0.0
    %1835 = vmatprep.subr.mxu0 0.0
    %1836 = vmatpush1.xpose.msra.mxu0 0.0
    %1837 = vmatprep.subr.mxu0 0.0
    %1838 = vmatpush1.xpose.msra.mxu0 0.0
    %1839 = vmatprep.subr.mxu0 0.0
    %1840 = vmatpush1.xpose.msra.mxu0 0.0
    %1841 = vmatprep.subr.mxu0 0.0
    %1842 = vmatpush1.xpose.msra.mxu0 0.0
    %1843 = vmatprep.subr.mxu0 0.0
    %1844 = vmatpush1.xpose.msra.mxu0 0.0
    %1845 = vmatprep.subr.mxu0 0.0
    %1846 = vmatpush1.xpose.msra.mxu0 0.0
    %1847 = vmatprep.subr.mxu0 0.0
    %1848 = vmatpush1.xpose.msra.mxu0 0.0
    %1849 = vmatprep.subr.mxu0 0.0
    %1850 = vmatpush1.xpose.msra.mxu0 0.0
    %1851 = vmatprep.subr.mxu0 0.0
    %1852 = vmatpush1.xpose.msra.mxu0 0.0
    %1853 = vmatprep.subr.mxu0 0.0
    %1854 = vmatpush1.xpose.msra.mxu0 0.0
    %1855 = vmatprep.subr.mxu0 0.0
    %1856 = vmatpush1.xpose.msra.mxu0 0.0
    %1857 = vmatprep.subr.mxu0 0.0
    %1858 = vmatpush1.xpose.msra.mxu0 0.0
    %1859 = vmatprep.subr.mxu0 0.0
    %1860 = vmatpush1.xpose.msra.mxu0 0.0
    %1861 = vmatprep.subr.mxu0 0.0
    %1862 = vmatpush1.xpose.msra.mxu0 0.0
    %1863 = vmatprep.subr.mxu0 0.0
    %1864 = vmatpush1.xpose.msra.mxu0 0.0
    %1865 = vmatprep.subr.mxu0 0.0
    %1866 = vmatpush1.xpose.msra.mxu0 0.0
    %1867 = vmatprep.subr.mxu0 0.0
    %1868 = vmatpush1.xpose.msra.mxu0 0.0
    %1869 = vmatprep.subr.mxu0 0.0
    %1870 = vmatpush1.xpose.msra.mxu0 0.0
    %1871 = vmatprep.subr.mxu0 0.0
    %1872 = vmatpush1.xpose.msra.mxu0 0.0
    %1873 = vmatprep.subr.mxu0 0.0
    %1874 = vmatpush1.xpose.msra.mxu0 0.0
    %1875 = vmatprep.subr.mxu0 0.0
    %1876 = vmatpush1.xpose.msra.mxu0 0.0
    %1877 = vmatprep.subr.mxu0 0.0
    %1878 = vmatpush1.xpose.msra.mxu0 0.0
    %1879 = vmatprep.subr.mxu0 0.0
    %1880 = vmatpush1.xpose.msra.mxu0 0.0
    %1881 = vmatprep.subr.mxu0 0.0
    %1882 = vmatpush1.xpose.msra.mxu0 0.0
    %1883 = vmatprep.subr.mxu0 0.0
    %1884 = vmatpush1.xpose.msra.mxu0 0.0
    %1885 = vmatprep.subr.mxu0 0.0
    %1886 = vmatpush1.xpose.msra.mxu0 0.0
    %1887 = vmatprep.subr.mxu0 0.0
    %1888 = vmatpush1.xpose.msra.mxu0 0.0
    %1889 = vmatprep.mubr.f32.mxu0 0.0
    %v1890 = vand.u32 %v1445, 4294901760
    %1891 = vmatmul.mubr.f32.gmra.mrb[0].mxu0 %v1890
    %v1892 = vpop.f32.mrb[0].mxu0
    %v1893 = vadd.f32 %v1821, %v1892
    %v1894 = vpop.f32.mrb[0].mxu0
    %1895 = vdwg.mxu0
    %v1896 = vsel %vm26, %v73, 0
    %v1899 = vsel %vm26, %v21, 0
    %1901 = vmatprep.subr.mxu0 0.0
    %v1902 = vand.u32 %v1899, 4294901760
    %1903 = vmatpush1.xpose.msra.mxu0 %v1902
    %1904 = vmatprep.subr.mxu0 0.0
    %1905 = vmatpush1.xpose.msra.mxu0 0.0
    %1906 = vmatprep.subr.mxu0 0.0
    %1907 = vmatpush1.xpose.msra.mxu0 0.0
    %1908 = vmatprep.subr.mxu0 0.0
    %1909 = vmatpush1.xpose.msra.mxu0 0.0
    %1910 = vmatprep.subr.mxu0 0.0
    %1911 = vmatpush1.xpose.msra.mxu0 0.0
    %1912 = vmatprep.subr.mxu0 0.0
    %1913 = vmatpush1.xpose.msra.mxu0 0.0
    %1914 = vmatprep.subr.mxu0 0.0
    %1915 = vmatpush1.xpose.msra.mxu0 0.0
    %1916 = vmatprep.subr.mxu0 0.0
    %1917 = vmatpush1.xpose.msra.mxu0 0.0
    %1918 = vmatprep.subr.mxu0 0.0
    %1919 = vmatpush1.xpose.msra.mxu0 0.0
    %1920 = vmatprep.subr.mxu0 0.0
    %1921 = vmatpush1.xpose.msra.mxu0 0.0
    %1922 = vmatprep.subr.mxu0 0.0
    %1923 = vmatpush1.xpose.msra.mxu0 0.0
    %1924 = vmatprep.subr.mxu0 0.0
    %1925 = vmatpush1.xpose.msra.mxu0 0.0
    %1926 = vmatprep.subr.mxu0 0.0
    %1927 = vmatpush1.xpose.msra.mxu0 0.0
    %1928 = vmatprep.subr.mxu0 0.0
    %1929 = vmatpush1.xpose.msra.mxu0 0.0
    %1930 = vmatprep.subr.mxu0 0.0
    %1931 = vmatpush1.xpose.msra.mxu0 0.0
    %1932 = vmatprep.subr.mxu0 0.0
    %1933 = vmatpush1.xpose.msra.mxu0 0.0
    %1934 = vmatprep.subr.mxu0 0.0
    %1935 = vmatpush1.xpose.msra.mxu0 0.0
    %1936 = vmatprep.subr.mxu0 0.0
    %1937 = vmatpush1.xpose.msra.mxu0 0.0
    %1938 = vmatprep.subr.mxu0 0.0
    %1939 = vmatpush1.xpose.msra.mxu0 0.0
    %1940 = vmatprep.subr.mxu0 0.0
    %1941 = vmatpush1.xpose.msra.mxu0 0.0
    %1942 = vmatprep.subr.mxu0 0.0
    %1943 = vmatpush1.xpose.msra.mxu0 0.0
    %1944 = vmatprep.subr.mxu0 0.0
    %1945 = vmatpush1.xpose.msra.mxu0 0.0
    %1946 = vmatprep.subr.mxu0 0.0
    %1947 = vmatpush1.xpose.msra.mxu0 0.0
    %1948 = vmatprep.subr.mxu0 0.0
    %1949 = vmatpush1.xpose.msra.mxu0 0.0
    %1950 = vmatprep.subr.mxu0 0.0
    %1951 = vmatpush1.xpose.msra.mxu0 0.0
    %1952 = vmatprep.subr.mxu0 0.0
    %1953 = vmatpush1.xpose.msra.mxu0 0.0
    %1954 = vmatprep.subr.mxu0 0.0
    %1955 = vmatpush1.xpose.msra.mxu0 0.0
    %1956 = vmatprep.subr.mxu0 0.0
    %1957 = vmatpush1.xpose.msra.mxu0 0.0
    %1958 = vmatprep.subr.mxu0 0.0
    %1959 = vmatpush1.xpose.msra.mxu0 0.0
    %1960 = vmatprep.subr.mxu0 0.0
    %1961 = vmatpush1.xpose.msra.mxu0 0.0
    %1962 = vmatprep.subr.mxu0 0.0
    %1963 = vmatpush1.xpose.msra.mxu0 0.0
    %1964 = vmatprep.subr.mxu0 0.0
    %1965 = vmatpush1.xpose.msra.mxu0 0.0
    %1966 = vmatprep.mubr.f32.mxu0 0.0
    %v1967 = vand.u32 %v1896, 4294901760
    %v1968 = vsub.f32 %v1896, %v1967
    %v1969 = vand.u32 %v1968, 4294901760
    %v1970 = vsub.f32 %v1968, %v1969
    %v1971 = vand.u32 %v1970, 4294901760
    %1972 = vmatmul.mubr.f32.gmra.mrb[0].mxu0 %v1971
    %v1973 = vpop.f32.mrb[0].mxu0
    %v1974 = vadd.f32 0.0, %v1973
    %v1975 = vpop.f32.mrb[0].mxu0
    %1976 = vdwg.mxu0
    %1977 = vmatprep.subr.mxu0 0.0
    %v1978 = vand.u32 %v1899, 4294901760
    %v1979 = vsub.f32 %v1899, %v1978
    %v1980 = vand.u32 %v1979, 4294901760
    %v1981 = vsub.f32 %v1979, %v1980
    %v1982 = vand.u32 %v1981, 4294901760
    %1983 = vmatpush1.xpose.msra.mxu0 %v1982
    %1984 = vmatprep.subr.mxu0 0.0
    %1985 = vmatpush1.xpose.msra.mxu0 0.0
    %1986 = vmatprep.subr.mxu0 0.0
    %1987 = vmatpush1.xpose.msra.mxu0 0.0
    %1988 = vmatprep.subr.mxu0 0.0
    %1989 = vmatpush1.xpose.msra.mxu0 0.0
    %1990 = vmatprep.subr.mxu0 0.0
    %1991 = vmatpush1.xpose.msra.mxu0 0.0
    %1992 = vmatprep.subr.mxu0 0.0
    %1993 = vmatpush1.xpose.msra.mxu0 0.0
    %1994 = vmatprep.subr.mxu0 0.0
    %1995 = vmatpush1.xpose.msra.mxu0 0.0
    %1996 = vmatprep.subr.mxu0 0.0
    %1997 = vmatpush1.xpose.msra.mxu0 0.0
    %1998 = vmatprep.subr.mxu0 0.0
    %1999 = vmatpush1.xpose.msra.mxu0 0.0
    %2000 = vmatprep.subr.mxu0 0.0
    %2001 = vmatpush1.xpose.msra.mxu0 0.0
    %2002 = vmatprep.subr.mxu0 0.0
    %2003 = vmatpush1.xpose.msra.mxu0 0.0
    %2004 = vmatprep.subr.mxu0 0.0
    %2005 = vmatpush1.xpose.msra.mxu0 0.0
    %2006 = vmatprep.subr.mxu0 0.0
    %2007 = vmatpush1.xpose.msra.mxu0 0.0
    %2008 = vmatprep.subr.mxu0 0.0
    %2009 = vmatpush1.xpose.msra.mxu0 0.0
    %2010 = vmatprep.subr.mxu0 0.0
    %2011 = vmatpush1.xpose.msra.mxu0 0.0
    %2012 = vmatprep.subr.mxu0 0.0
    %2013 = vmatpush1.xpose.msra.mxu0 0.0
    %2014 = vmatprep.subr.mxu0 0.0
    %2015 = vmatpush1.xpose.msra.mxu0 0.0
    %2016 = vmatprep.subr.mxu0 0.0
    %2017 = vmatpush1.xpose.msra.mxu0 0.0
    %2018 = vmatprep.subr.mxu0 0.0
    %2019 = vmatpush1.xpose.msra.mxu0 0.0
    %2020 = vmatprep.subr.mxu0 0.0
    %2021 = vmatpush1.xpose.msra.mxu0 0.0
    %2022 = vmatprep.subr.mxu0 0.0
    %2023 = vmatpush1.xpose.msra.mxu0 0.0
    %2024 = vmatprep.subr.mxu0 0.0
    %2025 = vmatpush1.xpose.msra.mxu0 0.0
    %2026 = vmatprep.subr.mxu0 0.0
    %2027 = vmatpush1.xpose.msra.mxu0 0.0
    %2028 = vmatprep.subr.mxu0 0.0
    %2029 = vmatpush1.xpose.msra.mxu0 0.0
    %2030 = vmatprep.subr.mxu0 0.0
    %2031 = vmatpush1.xpose.msra.mxu0 0.0
    %2032 = vmatprep.subr.mxu0 0.0
    %2033 = vmatpush1.xpose.msra.mxu0 0.0
    %2034 = vmatprep.subr.mxu0 0.0
    %2035 = vmatpush1.xpose.msra.mxu0 0.0
    %2036 = vmatprep.subr.mxu0 0.0
    %2037 = vmatpush1.xpose.msra.mxu0 0.0
    %2038 = vmatprep.subr.mxu0 0.0
    %2039 = vmatpush1.xpose.msra.mxu0 0.0
    %2040 = vmatprep.subr.mxu0 0.0
    %2041 = vmatpush1.xpose.msra.mxu0 0.0
    %2042 = vmatprep.subr.mxu0 0.0
    %2043 = vmatpush1.xpose.msra.mxu0 0.0
    %2044 = vmatprep.subr.mxu0 0.0
    %2045 = vmatpush1.xpose.msra.mxu0 0.0
    %2046 = vmatprep.mubr.f32.mxu0 0.0
    %v2047 = vand.u32 %v1896, 4294901760
    %2048 = vmatmul.mubr.f32.gmra.mrb[0].mxu0 %v2047
    %v2049 = vpop.f32.mrb[0].mxu0
    %v2050 = vadd.f32 %v1974, %v2049
    %v2051 = vpop.f32.mrb[0].mxu0
    %2052 = vdwg.mxu0
    %2053 = vmatprep.subr.mxu0 0.0
    %v2054 = vand.u32 %v1899, 4294901760
    %v2055 = vsub.f32 %v1899, %v2054
    %2056 = vmatpush1.xpose.msra.mxu0 %v2055
    %2057 = vmatprep.subr.mxu0 0.0
    %2058 = vmatpush1.xpose.msra.mxu0 0.0
    %2059 = vmatprep.subr.mxu0 0.0
    %2060 = vmatpush1.xpose.msra.mxu0 0.0
    %2061 = vmatprep.subr.mxu0 0.0
    %2062 = vmatpush1.xpose.msra.mxu0 0.0
    %2063 = vmatprep.subr.mxu0 0.0
    %2064 = vmatpush1.xpose.msra.mxu0 0.0
    %2065 = vmatprep.subr.mxu0 0.0
    %2066 = vmatpush1.xpose.msra.mxu0 0.0
    %2067 = vmatprep.subr.mxu0 0.0
    %2068 = vmatpush1.xpose.msra.mxu0 0.0
    %2069 = vmatprep.subr.mxu0 0.0
    %2070 = vmatpush1.xpose.msra.mxu0 0.0
    %2071 = vmatprep.subr.mxu0 0.0
    %2072 = vmatpush1.xpose.msra.mxu0 0.0
    %2073 = vmatprep.subr.mxu0 0.0
    %2074 = vmatpush1.xpose.msra.mxu0 0.0
    %2075 = vmatprep.subr.mxu0 0.0
    %2076 = vmatpush1.xpose.msra.mxu0 0.0
    %2077 = vmatprep.subr.mxu0 0.0
    %2078 = vmatpush1.xpose.msra.mxu0 0.0
    %2079 = vmatprep.subr.mxu0 0.0
    %2080 = vmatpush1.xpose.msra.mxu0 0.0
    %2081 = vmatprep.subr.mxu0 0.0
    %2082 = vmatpush1.xpose.msra.mxu0 0.0
    %2083 = vmatprep.subr.mxu0 0.0
    %2084 = vmatpush1.xpose.msra.mxu0 0.0
    %2085 = vmatprep.subr.mxu0 0.0
    %2086 = vmatpush1.xpose.msra.mxu0 0.0
    %2087 = vmatprep.subr.mxu0 0.0
    %2088 = vmatpush1.xpose.msra.mxu0 0.0
    %2089 = vmatprep.subr.mxu0 0.0
    %2090 = vmatpush1.xpose.msra.mxu0 0.0
    %2091 = vmatprep.subr.mxu0 0.0
    %2092 = vmatpush1.xpose.msra.mxu0 0.0
    %2093 = vmatprep.subr.mxu0 0.0
    %2094 = vmatpush1.xpose.msra.mxu0 0.0
    %2095 = vmatprep.subr.mxu0 0.0
    %2096 = vmatpush1.xpose.msra.mxu0 0.0
    %2097 = vmatprep.subr.mxu0 0.0
    %2098 = vmatpush1.xpose.msra.mxu0 0.0
    %2099 = vmatprep.subr.mxu0 0.0
    %2100 = vmatpush1.xpose.msra.mxu0 0.0
    %2101 = vmatprep.subr.mxu0 0.0
    %2102 = vmatpush1.xpose.msra.mxu0 0.0
    %2103 = vmatprep.subr.mxu0 0.0
    %2104 = vmatpush1.xpose.msra.mxu0 0.0
    %2105 = vmatprep.subr.mxu0 0.0
    %2106 = vmatpush1.xpose.msra.mxu0 0.0
    %2107 = vmatprep.subr.mxu0 0.0
    %2108 = vmatpush1.xpose.msra.mxu0 0.0
    %2109 = vmatprep.subr.mxu0 0.0
    %2110 = vmatpush1.xpose.msra.mxu0 0.0
    %2111 = vmatprep.subr.mxu0 0.0
    %2112 = vmatpush1.xpose.msra.mxu0 0.0
    %2113 = vmatprep.subr.mxu0 0.0
    %2114 = vmatpush1.xpose.msra.mxu0 0.0
    %2115 = vmatprep.subr.mxu0 0.0
    %2116 = vmatpush1.xpose.msra.mxu0 0.0
    %2117 = vmatprep.subr.mxu0 0.0
    %2118 = vmatpush1.xpose.msra.mxu0 0.0
    %2119 = vmatprep.mubr.f32.mxu0 0.0
    %v2120 = vand.u32 %v1896, 4294901760
    %v2121 = vsub.f32 %v1896, %v2120
    %2122 = vmatmul.mubr.f32.gmra.mrb[0].mxu0 %v2121
    %v2123 = vpop.f32.mrb[0].mxu0
    %v2124 = vadd.f32 %v2050, %v2123
    %v2125 = vpop.f32.mrb[0].mxu0
    %2126 = vdwg.mxu0
    %2127 = vmatprep.subr.mxu0 0.0
    %v2128 = vand.u32 %v1899, 4294901760
    %2129 = vmatpush1.xpose.msra.mxu0 %v2128
    %2130 = vmatprep.subr.mxu0 0.0
    %2131 = vmatpush1.xpose.msra.mxu0 0.0
    %2132 = vmatprep.subr.mxu0 0.0
    %2133 = vmatpush1.xpose.msra.mxu0 0.0
    %2134 = vmatprep.subr.mxu0 0.0
    %2135 = vmatpush1.xpose.msra.mxu0 0.0
    %2136 = vmatprep.subr.mxu0 0.0
    %2137 = vmatpush1.xpose.msra.mxu0 0.0
    %2138 = vmatprep.subr.mxu0 0.0
    %2139 = vmatpush1.xpose.msra.mxu0 0.0
    %2140 = vmatprep.subr.mxu0 0.0
    %2141 = vmatpush1.xpose.msra.mxu0 0.0
    %2142 = vmatprep.subr.mxu0 0.0
    %2143 = vmatpush1.xpose.msra.mxu0 0.0
    %2144 = vmatprep.subr.mxu0 0.0
    %2145 = vmatpush1.xpose.msra.mxu0 0.0
    %2146 = vmatprep.subr.mxu0 0.0
    %2147 = vmatpush1.xpose.msra.mxu0 0.0
    %2148 = vmatprep.subr.mxu0 0.0
    %2149 = vmatpush1.xpose.msra.mxu0 0.0
    %2150 = vmatprep.subr.mxu0 0.0
    %2151 = vmatpush1.xpose.msra.mxu0 0.0
    %2152 = vmatprep.subr.mxu0 0.0
    %2153 = vmatpush1.xpose.msra.mxu0 0.0
    %2154 = vmatprep.subr.mxu0 0.0
    %2155 = vmatpush1.xpose.msra.mxu0 0.0
    %2156 = vmatprep.subr.mxu0 0.0
    %2157 = vmatpush1.xpose.msra.mxu0 0.0
    %2158 = vmatprep.subr.mxu0 0.0
    %2159 = vmatpush1.xpose.msra.mxu0 0.0
    %2160 = vmatprep.subr.mxu0 0.0
    %2161 = vmatpush1.xpose.msra.mxu0 0.0
    %2162 = vmatprep.subr.mxu0 0.0
    %2163 = vmatpush1.xpose.msra.mxu0 0.0
    %2164 = vmatprep.subr.mxu0 0.0
    %2165 = vmatpush1.xpose.msra.mxu0 0.0
    %2166 = vmatprep.subr.mxu0 0.0
    %2167 = vmatpush1.xpose.msra.mxu0 0.0
    %2168 = vmatprep.subr.mxu0 0.0
    %2169 = vmatpush1.xpose.msra.mxu0 0.0
    %2170 = vmatprep.subr.mxu0 0.0
    %2171 = vmatpush1.xpose.msra.mxu0 0.0
    %2172 = vmatprep.subr.mxu0 0.0
    %2173 = vmatpush1.xpose.msra.mxu0 0.0
    %2174 = vmatprep.subr.mxu0 0.0
    %2175 = vmatpush1.xpose.msra.mxu0 0.0
    %2176 = vmatprep.subr.mxu0 0.0
    %2177 = vmatpush1.xpose.msra.mxu0 0.0
    %2178 = vmatprep.subr.mxu0 0.0
    %2179 = vmatpush1.xpose.msra.mxu0 0.0
    %2180 = vmatprep.subr.mxu0 0.0
    %2181 = vmatpush1.xpose.msra.mxu0 0.0
    %2182 = vmatprep.subr.mxu0 0.0
    %2183 = vmatpush1.xpose.msra.mxu0 0.0
    %2184 = vmatprep.subr.mxu0 0.0
    %2185 = vmatpush1.xpose.msra.mxu0 0.0
    %2186 = vmatprep.subr.mxu0 0.0
    %2187 = vmatpush1.xpose.msra.mxu0 0.0
    %2188 = vmatprep.subr.mxu0 0.0
    %2189 = vmatpush1.xpose.msra.mxu0 0.0
    %2190 = vmatprep.subr.mxu0 0.0
    %2191 = vmatpush1.xpose.msra.mxu0 0.0
    %2192 = vmatprep.mubr.f32.mxu0 0.0
    %v2193 = vand.u32 %v1896, 4294901760
    %v2194 = vsub.f32 %v1896, %v2193
    %v2195 = vand.u32 %v2194, 4294901760
    %2196 = vmatmul.mubr.f32.gmra.mrb[0].mxu0 %v2195
    %v2197 = vpop.f32.mrb[0].mxu0
    %v2198 = vadd.f32 %v2124, %v2197
    %v2199 = vpop.f32.mrb[0].mxu0
    %2200 = vdwg.mxu0
    %2201 = vmatprep.subr.mxu0 0.0
    %v2202 = vand.u32 %v1899, 4294901760
    %v2203 = vsub.f32 %v1899, %v2202
    %v2204 = vand.u32 %v2203, 4294901760
    %2205 = vmatpush1.xpose.msra.mxu0 %v2204
    %2206 = vmatprep.subr.mxu0 0.0
    %2207 = vmatpush1.xpose.msra.mxu0 0.0
    %2208 = vmatprep.subr.mxu0 0.0
    %2209 = vmatpush1.xpose.msra.mxu0 0.0
    %2210 = vmatprep.subr.mxu0 0.0
    %2211 = vmatpush1.xpose.msra.mxu0 0.0
    %2212 = vmatprep.subr.mxu0 0.0
    %2213 = vmatpush1.xpose.msra.mxu0 0.0
    %2214 = vmatprep.subr.mxu0 0.0
    %2215 = vmatpush1.xpose.msra.mxu0 0.0
    %2216 = vmatprep.subr.mxu0 0.0
    %2217 = vmatpush1.xpose.msra.mxu0 0.0
    %2218 = vmatprep.subr.mxu0 0.0
    %2219 = vmatpush1.xpose.msra.mxu0 0.0
    %2220 = vmatprep.subr.mxu0 0.0
    %2221 = vmatpush1.xpose.msra.mxu0 0.0
    %2222 = vmatprep.subr.mxu0 0.0
    %2223 = vmatpush1.xpose.msra.mxu0 0.0
    %2224 = vmatprep.subr.mxu0 0.0
    %2225 = vmatpush1.xpose.msra.mxu0 0.0
    %2226 = vmatprep.subr.mxu0 0.0
    %2227 = vmatpush1.xpose.msra.mxu0 0.0
    %2228 = vmatprep.subr.mxu0 0.0
    %2229 = vmatpush1.xpose.msra.mxu0 0.0
    %2230 = vmatprep.subr.mxu0 0.0
    %2231 = vmatpush1.xpose.msra.mxu0 0.0
    %2232 = vmatprep.subr.mxu0 0.0
    %2233 = vmatpush1.xpose.msra.mxu0 0.0
    %2234 = vmatprep.subr.mxu0 0.0
    %2235 = vmatpush1.xpose.msra.mxu0 0.0
    %2236 = vmatprep.subr.mxu0 0.0
    %2237 = vmatpush1.xpose.msra.mxu0 0.0
    %2238 = vmatprep.subr.mxu0 0.0
    %2239 = vmatpush1.xpose.msra.mxu0 0.0
    %2240 = vmatprep.subr.mxu0 0.0
    %2241 = vmatpush1.xpose.msra.mxu0 0.0
    %2242 = vmatprep.subr.mxu0 0.0
    %2243 = vmatpush1.xpose.msra.mxu0 0.0
    %2244 = vmatprep.subr.mxu0 0.0
    %2245 = vmatpush1.xpose.msra.mxu0 0.0
    %2246 = vmatprep.subr.mxu0 0.0
    %2247 = vmatpush1.xpose.msra.mxu0 0.0
    %2248 = vmatprep.subr.mxu0 0.0
    %2249 = vmatpush1.xpose.msra.mxu0 0.0
    %2250 = vmatprep.subr.mxu0 0.0
    %2251 = vmatpush1.xpose.msra.mxu0 0.0
    %2252 = vmatprep.subr.mxu0 0.0
    %2253 = vmatpush1.xpose.msra.mxu0 0.0
    %2254 = vmatprep.subr.mxu0 0.0
    %2255 = vmatpush1.xpose.msra.mxu0 0.0
    %2256 = vmatprep.subr.mxu0 0.0
    %2257 = vmatpush1.xpose.msra.mxu0 0.0
    %2258 = vmatprep.subr.mxu0 0.0
    %2259 = vmatpush1.xpose.msra.mxu0 0.0
    %2260 = vmatprep.subr.mxu0 0.0
    %2261 = vmatpush1.xpose.msra.mxu0 0.0
    %2262 = vmatprep.subr.mxu0 0.0
    %2263 = vmatpush1.xpose.msra.mxu0 0.0
    %2264 = vmatprep.subr.mxu0 0.0
    %2265 = vmatpush1.xpose.msra.mxu0 0.0
    %2266 = vmatprep.subr.mxu0 0.0
    %2267 = vmatpush1.xpose.msra.mxu0 0.0
    %2268 = vmatprep.mubr.f32.mxu0 0.0
    %v2269 = vand.u32 %v1896, 4294901760
    %2270 = vmatmul.mubr.f32.gmra.mrb[0].mxu0 %v2269
    %v2271 = vpop.f32.mrb[0].mxu0
    %v2272 = vadd.f32 %v2198, %v2271
    %v2273 = vpop.f32.mrb[0].mxu0
    %2274 = vdwg.mxu0
    %2275 = vmatprep.subr.mxu0 0.0
    %v2276 = vand.u32 %v1899, 4294901760
    %2277 = vmatpush1.xpose.msra.mxu0 %v2276
    %2278 = vmatprep.subr.mxu0 0.0
    %2279 = vmatpush1.xpose.msra.mxu0 0.0
    %2280 = vmatprep.subr.mxu0 0.0
    %2281 = vmatpush1.xpose.msra.mxu0 0.0
    %2282 = vmatprep.subr.mxu0 0.0
    %2283 = vmatpush1.xpose.msra.mxu0 0.0
    %2284 = vmatprep.subr.mxu0 0.0
    %2285 = vmatpush1.xpose.msra.mxu0 0.0
    %2286 = vmatprep.subr.mxu0 0.0
    %2287 = vmatpush1.xpose.msra.mxu0 0.0
    %2288 = vmatprep.subr.mxu0 0.0
    %2289 = vmatpush1.xpose.msra.mxu0 0.0
    %2290 = vmatprep.subr.mxu0 0.0
    %2291 = vmatpush1.xpose.msra.mxu0 0.0
    %2292 = vmatprep.subr.mxu0 0.0
    %2293 = vmatpush1.xpose.msra.mxu0 0.0
    %2294 = vmatprep.subr.mxu0 0.0
    %2295 = vmatpush1.xpose.msra.mxu0 0.0
    %2296 = vmatprep.subr.mxu0 0.0
    %2297 = vmatpush1.xpose.msra.mxu0 0.0
    %2298 = vmatprep.subr.mxu0 0.0
    %2299 = vmatpush1.xpose.msra.mxu0 0.0
    %2300 = vmatprep.subr.mxu0 0.0
    %2301 = vmatpush1.xpose.msra.mxu0 0.0
    %2302 = vmatprep.subr.mxu0 0.0
    %2303 = vmatpush1.xpose.msra.mxu0 0.0
    %2304 = vmatprep.subr.mxu0 0.0
    %2305 = vmatpush1.xpose.msra.mxu0 0.0
    %2306 = vmatprep.subr.mxu0 0.0
    %2307 = vmatpush1.xpose.msra.mxu0 0.0
    %2308 = vmatprep.subr.mxu0 0.0
    %2309 = vmatpush1.xpose.msra.mxu0 0.0
    %2310 = vmatprep.subr.mxu0 0.0
    %2311 = vmatpush1.xpose.msra.mxu0 0.0
    %2312 = vmatprep.subr.mxu0 0.0
    %2313 = vmatpush1.xpose.msra.mxu0 0.0
    %2314 = vmatprep.subr.mxu0 0.0
    %2315 = vmatpush1.xpose.msra.mxu0 0.0
    %2316 = vmatprep.subr.mxu0 0.0
    %2317 = vmatpush1.xpose.msra.mxu0 0.0
    %2318 = vmatprep.subr.mxu0 0.0
    %2319 = vmatpush1.xpose.msra.mxu0 0.0
    %2320 = vmatprep.subr.mxu0 0.0
    %2321 = vmatpush1.xpose.msra.mxu0 0.0
    %2322 = vmatprep.subr.mxu0 0.0
    %2323 = vmatpush1.xpose.msra.mxu0 0.0
    %2324 = vmatprep.subr.mxu0 0.0
    %2325 = vmatpush1.xpose.msra.mxu0 0.0
    %2326 = vmatprep.subr.mxu0 0.0
    %2327 = vmatpush1.xpose.msra.mxu0 0.0
    %2328 = vmatprep.subr.mxu0 0.0
    %2329 = vmatpush1.xpose.msra.mxu0 0.0
    %2330 = vmatprep.subr.mxu0 0.0
    %2331 = vmatpush1.xpose.msra.mxu0 0.0
    %2332 = vmatprep.subr.mxu0 0.0
    %2333 = vmatpush1.xpose.msra.mxu0 0.0
    %2334 = vmatprep.subr.mxu0 0.0
    %2335 = vmatpush1.xpose.msra.mxu0 0.0
    %2336 = vmatprep.subr.mxu0 0.0
    %2337 = vmatpush1.xpose.msra.mxu0 0.0
    %2338 = vmatprep.subr.mxu0 0.0
    %2339 = vmatpush1.xpose.msra.mxu0 0.0
    %2340 = vmatprep.mubr.f32.mxu0 0.0
    %v2341 = vand.u32 %v1896, 4294901760
    %2342 = vmatmul.mubr.f32.gmra.mrb[0].mxu0 %v2341
    %v2343 = vpop.f32.mrb[0].mxu0
    %v2344 = vadd.f32 %v2272, %v2343
    %v2345 = vpop.f32.mrb[0].mxu0
    %2346 = vdwg.mxu0
    %v2347 = vsel %vm26, %v87, 0
    %v2350 = vsel %vm26, %v22, 0
    %2352 = vmatprep.subr.mxu0 0.0
    %v2353 = vand.u32 %v2350, 4294901760
    %2354 = vmatpush1.xpose.msra.mxu0 %v2353
    %2355 = vmatprep.subr.mxu0 0.0
    %2356 = vmatpush1.xpose.msra.mxu0 0.0
    %2357 = vmatprep.subr.mxu0 0.0
    %2358 = vmatpush1.xpose.msra.mxu0 0.0
    %2359 = vmatprep.subr.mxu0 0.0
    %2360 = vmatpush1.xpose.msra.mxu0 0.0
    %2361 = vmatprep.subr.mxu0 0.0
    %2362 = vmatpush1.xpose.msra.mxu0 0.0
    %2363 = vmatprep.subr.mxu0 0.0
    %2364 = vmatpush1.xpose.msra.mxu0 0.0
    %2365 = vmatprep.subr.mxu0 0.0
    %2366 = vmatpush1.xpose.msra.mxu0 0.0
    %2367 = vmatprep.subr.mxu0 0.0
    %2368 = vmatpush1.xpose.msra.mxu0 0.0
    %2369 = vmatprep.subr.mxu0 0.0
    %2370 = vmatpush1.xpose.msra.mxu0 0.0
    %2371 = vmatprep.subr.mxu0 0.0
    %2372 = vmatpush1.xpose.msra.mxu0 0.0
    %2373 = vmatprep.subr.mxu0 0.0
    %2374 = vmatpush1.xpose.msra.mxu0 0.0
    %2375 = vmatprep.subr.mxu0 0.0
    %2376 = vmatpush1.xpose.msra.mxu0 0.0
    %2377 = vmatprep.subr.mxu0 0.0
    %2378 = vmatpush1.xpose.msra.mxu0 0.0
    %2379 = vmatprep.subr.mxu0 0.0
    %2380 = vmatpush1.xpose.msra.mxu0 0.0
    %2381 = vmatprep.subr.mxu0 0.0
    %2382 = vmatpush1.xpose.msra.mxu0 0.0
    %2383 = vmatprep.subr.mxu0 0.0
    %2384 = vmatpush1.xpose.msra.mxu0 0.0
    %2385 = vmatprep.subr.mxu0 0.0
    %2386 = vmatpush1.xpose.msra.mxu0 0.0
    %2387 = vmatprep.subr.mxu0 0.0
    %2388 = vmatpush1.xpose.msra.mxu0 0.0
    %2389 = vmatprep.subr.mxu0 0.0
    %2390 = vmatpush1.xpose.msra.mxu0 0.0
    %2391 = vmatprep.subr.mxu0 0.0
    %2392 = vmatpush1.xpose.msra.mxu0 0.0
    %2393 = vmatprep.subr.mxu0 0.0
    %2394 = vmatpush1.xpose.msra.mxu0 0.0
    %2395 = vmatprep.subr.mxu0 0.0
    %2396 = vmatpush1.xpose.msra.mxu0 0.0
    %2397 = vmatprep.subr.mxu0 0.0
    %2398 = vmatpush1.xpose.msra.mxu0 0.0
    %2399 = vmatprep.subr.mxu0 0.0
    %2400 = vmatpush1.xpose.msra.mxu0 0.0
    %2401 = vmatprep.subr.mxu0 0.0
    %2402 = vmatpush1.xpose.msra.mxu0 0.0
    %2403 = vmatprep.subr.mxu0 0.0
    %2404 = vmatpush1.xpose.msra.mxu0 0.0
    %2405 = vmatprep.subr.mxu0 0.0
    %2406 = vmatpush1.xpose.msra.mxu0 0.0
    %2407 = vmatprep.subr.mxu0 0.0
    %2408 = vmatpush1.xpose.msra.mxu0 0.0
    %2409 = vmatprep.subr.mxu0 0.0
    %2410 = vmatpush1.xpose.msra.mxu0 0.0
    %2411 = vmatprep.subr.mxu0 0.0
    %2412 = vmatpush1.xpose.msra.mxu0 0.0
    %2413 = vmatprep.subr.mxu0 0.0
    %2414 = vmatpush1.xpose.msra.mxu0 0.0
    %2415 = vmatprep.subr.mxu0 0.0
    %2416 = vmatpush1.xpose.msra.mxu0 0.0
    %2417 = vmatprep.mubr.f32.mxu0 0.0
    %v2418 = vand.u32 %v2347, 4294901760
    %v2419 = vsub.f32 %v2347, %v2418
    %v2420 = vand.u32 %v2419, 4294901760
    %v2421 = vsub.f32 %v2419, %v2420
    %v2422 = vand.u32 %v2421, 4294901760
    %2423 = vmatmul.mubr.f32.gmra.mrb[0].mxu0 %v2422
    %v2424 = vpop.f32.mrb[0].mxu0
    %v2425 = vadd.f32 0.0, %v2424
    %v2426 = vpop.f32.mrb[0].mxu0
    %2427 = vdwg.mxu0
    %2428 = vmatprep.subr.mxu0 0.0
    %v2429 = vand.u32 %v2350, 4294901760
    %v2430 = vsub.f32 %v2350, %v2429
    %v2431 = vand.u32 %v2430, 4294901760
    %v2432 = vsub.f32 %v2430, %v2431
    %v2433 = vand.u32 %v2432, 4294901760
    %2434 = vmatpush1.xpose.msra.mxu0 %v2433
    %2435 = vmatprep.subr.mxu0 0.0
    %2436 = vmatpush1.xpose.msra.mxu0 0.0
    %2437 = vmatprep.subr.mxu0 0.0
    %2438 = vmatpush1.xpose.msra.mxu0 0.0
    %2439 = vmatprep.subr.mxu0 0.0
    %2440 = vmatpush1.xpose.msra.mxu0 0.0
    %2441 = vmatprep.subr.mxu0 0.0
    %2442 = vmatpush1.xpose.msra.mxu0 0.0
    %2443 = vmatprep.subr.mxu0 0.0
    %2444 = vmatpush1.xpose.msra.mxu0 0.0
    %2445 = vmatprep.subr.mxu0 0.0
    %2446 = vmatpush1.xpose.msra.mxu0 0.0
    %2447 = vmatprep.subr.mxu0 0.0
    %2448 = vmatpush1.xpose.msra.mxu0 0.0
    %2449 = vmatprep.subr.mxu0 0.0
    %2450 = vmatpush1.xpose.msra.mxu0 0.0
    %2451 = vmatprep.subr.mxu0 0.0
    %2452 = vmatpush1.xpose.msra.mxu0 0.0
    %2453 = vmatprep.subr.mxu0 0.0
    %2454 = vmatpush1.xpose.msra.mxu0 0.0
    %2455 = vmatprep.subr.mxu0 0.0
    %2456 = vmatpush1.xpose.msra.mxu0 0.0
    %2457 = vmatprep.subr.mxu0 0.0
    %2458 = vmatpush1.xpose.msra.mxu0 0.0
    %2459 = vmatprep.subr.mxu0 0.0
    %2460 = vmatpush1.xpose.msra.mxu0 0.0
    %2461 = vmatprep.subr.mxu0 0.0
    %2462 = vmatpush1.xpose.msra.mxu0 0.0
    %2463 = vmatprep.subr.mxu0 0.0
    %2464 = vmatpush1.xpose.msra.mxu0 0.0
    %2465 = vmatprep.subr.mxu0 0.0
    %2466 = vmatpush1.xpose.msra.mxu0 0.0
    %2467 = vmatprep.subr.mxu0 0.0
    %2468 = vmatpush1.xpose.msra.mxu0 0.0
    %2469 = vmatprep.subr.mxu0 0.0
    %2470 = vmatpush1.xpose.msra.mxu0 0.0
    %2471 = vmatprep.subr.mxu0 0.0
    %2472 = vmatpush1.xpose.msra.mxu0 0.0
    %2473 = vmatprep.subr.mxu0 0.0
    %2474 = vmatpush1.xpose.msra.mxu0 0.0
    %2475 = vmatprep.subr.mxu0 0.0
    %2476 = vmatpush1.xpose.msra.mxu0 0.0
    %2477 = vmatprep.subr.mxu0 0.0
    %2478 = vmatpush1.xpose.msra.mxu0 0.0
    %2479 = vmatprep.subr.mxu0 0.0
    %2480 = vmatpush1.xpose.msra.mxu0 0.0
    %2481 = vmatprep.subr.mxu0 0.0
    %2482 = vmatpush1.xpose.msra.mxu0 0.0
    %2483 = vmatprep.subr.mxu0 0.0
    %2484 = vmatpush1.xpose.msra.mxu0 0.0
    %2485 = vmatprep.subr.mxu0 0.0
    %2486 = vmatpush1.xpose.msra.mxu0 0.0
    %2487 = vmatprep.subr.mxu0 0.0
    %2488 = vmatpush1.xpose.msra.mxu0 0.0
    %2489 = vmatprep.subr.mxu0 0.0
    %2490 = vmatpush1.xpose.msra.mxu0 0.0
    %2491 = vmatprep.subr.mxu0 0.0
    %2492 = vmatpush1.xpose.msra.mxu0 0.0
    %2493 = vmatprep.subr.mxu0 0.0
    %2494 = vmatpush1.xpose.msra.mxu0 0.0
    %2495 = vmatprep.subr.mxu0 0.0
    %2496 = vmatpush1.xpose.msra.mxu0 0.0
    %2497 = vmatprep.mubr.f32.mxu0 0.0
    %v2498 = vand.u32 %v2347, 4294901760
    %2499 = vmatmul.mubr.f32.gmra.mrb[0].mxu0 %v2498
    %v2500 = vpop.f32.mrb[0].mxu0
    %v2501 = vadd.f32 %v2425, %v2500
    %v2502 = vpop.f32.mrb[0].mxu0
    %2503 = vdwg.mxu0
    %2504 = vmatprep.subr.mxu0 0.0
    %v2505 = vand.u32 %v2350, 4294901760
    %v2506 = vsub.f32 %v2350, %v2505
    %2507 = vmatpush1.xpose.msra.mxu0 %v2506
    %2508 = vmatprep.subr.mxu0 0.0
    %2509 = vmatpush1.xpose.msra.mxu0 0.0
    %2510 = vmatprep.subr.mxu0 0.0
    %2511 = vmatpush1.xpose.msra.mxu0 0.0
    %2512 = vmatprep.subr.mxu0 0.0
    %2513 = vmatpush1.xpose.msra.mxu0 0.0
    %2514 = vmatprep.subr.mxu0 0.0
    %2515 = vmatpush1.xpose.msra.mxu0 0.0
    %2516 = vmatprep.subr.mxu0 0.0
    %2517 = vmatpush1.xpose.msra.mxu0 0.0
    %2518 = vmatprep.subr.mxu0 0.0
    %2519 = vmatpush1.xpose.msra.mxu0 0.0
    %2520 = vmatprep.subr.mxu0 0.0
    %2521 = vmatpush1.xpose.msra.mxu0 0.0
    %2522 = vmatprep.subr.mxu0 0.0
    %2523 = vmatpush1.xpose.msra.mxu0 0.0
    %2524 = vmatprep.subr.mxu0 0.0
    %2525 = vmatpush1.xpose.msra.mxu0 0.0
    %2526 = vmatprep.subr.mxu0 0.0
    %2527 = vmatpush1.xpose.msra.mxu0 0.0
    %2528 = vmatprep.subr.mxu0 0.0
    %2529 = vmatpush1.xpose.msra.mxu0 0.0
    %2530 = vmatprep.subr.mxu0 0.0
    %2531 = vmatpush1.xpose.msra.mxu0 0.0
    %2532 = vmatprep.subr.mxu0 0.0
    %2533 = vmatpush1.xpose.msra.mxu0 0.0
    %2534 = vmatprep.subr.mxu0 0.0
    %2535 = vmatpush1.xpose.msra.mxu0 0.0
    %2536 = vmatprep.subr.mxu0 0.0
    %2537 = vmatpush1.xpose.msra.mxu0 0.0
    %2538 = vmatprep.subr.mxu0 0.0
    %2539 = vmatpush1.xpose.msra.mxu0 0.0
    %2540 = vmatprep.subr.mxu0 0.0
    %2541 = vmatpush1.xpose.msra.mxu0 0.0
    %2542 = vmatprep.subr.mxu0 0.0
    %2543 = vmatpush1.xpose.msra.mxu0 0.0
    %2544 = vmatprep.subr.mxu0 0.0
    %2545 = vmatpush1.xpose.msra.mxu0 0.0
    %2546 = vmatprep.subr.mxu0 0.0
    %2547 = vmatpush1.xpose.msra.mxu0 0.0
    %2548 = vmatprep.subr.mxu0 0.0
    %2549 = vmatpush1.xpose.msra.mxu0 0.0
    %2550 = vmatprep.subr.mxu0 0.0
    %2551 = vmatpush1.xpose.msra.mxu0 0.0
    %2552 = vmatprep.subr.mxu0 0.0
    %2553 = vmatpush1.xpose.msra.mxu0 0.0
    %2554 = vmatprep.subr.mxu0 0.0
    %2555 = vmatpush1.xpose.msra.mxu0 0.0
    %2556 = vmatprep.subr.mxu0 0.0
    %2557 = vmatpush1.xpose.msra.mxu0 0.0
    %2558 = vmatprep.subr.mxu0 0.0
    %2559 = vmatpush1.xpose.msra.mxu0 0.0
    %2560 = vmatprep.subr.mxu0 0.0
    %2561 = vmatpush1.xpose.msra.mxu0 0.0
    %2562 = vmatprep.subr.mxu0 0.0
    %2563 = vmatpush1.xpose.msra.mxu0 0.0
    %2564 = vmatprep.subr.mxu0 0.0
    %2565 = vmatpush1.xpose.msra.mxu0 0.0
    %2566 = vmatprep.subr.mxu0 0.0
    %2567 = vmatpush1.xpose.msra.mxu0 0.0
    %2568 = vmatprep.subr.mxu0 0.0
    %2569 = vmatpush1.xpose.msra.mxu0 0.0
    %2570 = vmatprep.mubr.f32.mxu0 0.0
    %v2571 = vand.u32 %v2347, 4294901760
    %v2572 = vsub.f32 %v2347, %v2571
    %2573 = vmatmul.mubr.f32.gmra.mrb[0].mxu0 %v2572
    %v2574 = vpop.f32.mrb[0].mxu0
    %v2575 = vadd.f32 %v2501, %v2574
    %v2576 = vpop.f32.mrb[0].mxu0
    %2577 = vdwg.mxu0
    %2578 = vmatprep.subr.mxu0 0.0
    %v2579 = vand.u32 %v2350, 4294901760
    %2580 = vmatpush1.xpose.msra.mxu0 %v2579
    %2581 = vmatprep.subr.mxu0 0.0
    %2582 = vmatpush1.xpose.msra.mxu0 0.0
    %2583 = vmatprep.subr.mxu0 0.0
    %2584 = vmatpush1.xpose.msra.mxu0 0.0
    %2585 = vmatprep.subr.mxu0 0.0
    %2586 = vmatpush1.xpose.msra.mxu0 0.0
    %2587 = vmatprep.subr.mxu0 0.0
    %2588 = vmatpush1.xpose.msra.mxu0 0.0
    %2589 = vmatprep.subr.mxu0 0.0
    %2590 = vmatpush1.xpose.msra.mxu0 0.0
    %2591 = vmatprep.subr.mxu0 0.0
    %2592 = vmatpush1.xpose.msra.mxu0 0.0
    %2593 = vmatprep.subr.mxu0 0.0
    %2594 = vmatpush1.xpose.msra.mxu0 0.0
    %2595 = vmatprep.subr.mxu0 0.0
    %2596 = vmatpush1.xpose.msra.mxu0 0.0
    %2597 = vmatprep.subr.mxu0 0.0
    %2598 = vmatpush1.xpose.msra.mxu0 0.0
    %2599 = vmatprep.subr.mxu0 0.0
    %2600 = vmatpush1.xpose.msra.mxu0 0.0
    %2601 = vmatprep.subr.mxu0 0.0
    %2602 = vmatpush1.xpose.msra.mxu0 0.0
    %2603 = vmatprep.subr.mxu0 0.0
    %2604 = vmatpush1.xpose.msra.mxu0 0.0
    %2605 = vmatprep.subr.mxu0 0.0
    %2606 = vmatpush1.xpose.msra.mxu0 0.0
    %2607 = vmatprep.subr.mxu0 0.0
    %2608 = vmatpush1.xpose.msra.mxu0 0.0
    %2609 = vmatprep.subr.mxu0 0.0
    %2610 = vmatpush1.xpose.msra.mxu0 0.0
    %2611 = vmatprep.subr.mxu0 0.0
    %2612 = vmatpush1.xpose.msra.mxu0 0.0
    %2613 = vmatprep.subr.mxu0 0.0
    %2614 = vmatpush1.xpose.msra.mxu0 0.0
    %2615 = vmatprep.subr.mxu0 0.0
    %2616 = vmatpush1.xpose.msra.mxu0 0.0
    %2617 = vmatprep.subr.mxu0 0.0
    %2618 = vmatpush1.xpose.msra.mxu0 0.0
    %2619 = vmatprep.subr.mxu0 0.0
    %2620 = vmatpush1.xpose.msra.mxu0 0.0
    %2621 = vmatprep.subr.mxu0 0.0
    %2622 = vmatpush1.xpose.msra.mxu0 0.0
    %2623 = vmatprep.subr.mxu0 0.0
    %2624 = vmatpush1.xpose.msra.mxu0 0.0
    %2625 = vmatprep.subr.mxu0 0.0
    %2626 = vmatpush1.xpose.msra.mxu0 0.0
    %2627 = vmatprep.subr.mxu0 0.0
    %2628 = vmatpush1.xpose.msra.mxu0 0.0
    %2629 = vmatprep.subr.mxu0 0.0
    %2630 = vmatpush1.xpose.msra.mxu0 0.0
    %2631 = vmatprep.subr.mxu0 0.0
    %2632 = vmatpush1.xpose.msra.mxu0 0.0
    %2633 = vmatprep.subr.mxu0 0.0
    %2634 = vmatpush1.xpose.msra.mxu0 0.0
    %2635 = vmatprep.subr.mxu0 0.0
    %2636 = vmatpush1.xpose.msra.mxu0 0.0
    %2637 = vmatprep.subr.mxu0 0.0
    %2638 = vmatpush1.xpose.msra.mxu0 0.0
    %2639 = vmatprep.subr.mxu0 0.0
    %2640 = vmatpush1.xpose.msra.mxu0 0.0
    %2641 = vmatprep.subr.mxu0 0.0
    %2642 = vmatpush1.xpose.msra.mxu0 0.0
    %2643 = vmatprep.mubr.f32.mxu0 0.0
    %v2644 = vand.u32 %v2347, 4294901760
    %v2645 = vsub.f32 %v2347, %v2644
    %v2646 = vand.u32 %v2645, 4294901760
    %2647 = vmatmul.mubr.f32.gmra.mrb[0].mxu0 %v2646
    %v2648 = vpop.f32.mrb[0].mxu0
    %v2649 = vadd.f32 %v2575, %v2648
    %v2650 = vpop.f32.mrb[0].mxu0
    %2651 = vdwg.mxu0
    %2652 = vmatprep.subr.mxu0 0.0
    %v2653 = vand.u32 %v2350, 4294901760
    %v2654 = vsub.f32 %v2350, %v2653
    %v2655 = vand.u32 %v2654, 4294901760
    %2656 = vmatpush1.xpose.msra.mxu0 %v2655
    %2657 = vmatprep.subr.mxu0 0.0
    %2658 = vmatpush1.xpose.msra.mxu0 0.0
    %2659 = vmatprep.subr.mxu0 0.0
    %2660 = vmatpush1.xpose.msra.mxu0 0.0
    %2661 = vmatprep.subr.mxu0 0.0
    %2662 = vmatpush1.xpose.msra.mxu0 0.0
    %2663 = vmatprep.subr.mxu0 0.0
    %2664 = vmatpush1.xpose.msra.mxu0 0.0
    %2665 = vmatprep.subr.mxu0 0.0
    %2666 = vmatpush1.xpose.msra.mxu0 0.0
    %2667 = vmatprep.subr.mxu0 0.0
    %2668 = vmatpush1.xpose.msra.mxu0 0.0
    %2669 = vmatprep.subr.mxu0 0.0
    %2670 = vmatpush1.xpose.msra.mxu0 0.0
    %2671 = vmatprep.subr.mxu0 0.0
    %2672 = vmatpush1.xpose.msra.mxu0 0.0
    %2673 = vmatprep.subr.mxu0 0.0
    %2674 = vmatpush1.xpose.msra.mxu0 0.0
    %2675 = vmatprep.subr.mxu0 0.0
    %2676 = vmatpush1.xpose.msra.mxu0 0.0
    %2677 = vmatprep.subr.mxu0 0.0
    %2678 = vmatpush1.xpose.msra.mxu0 0.0
    %2679 = vmatprep.subr.mxu0 0.0
    %2680 = vmatpush1.xpose.msra.mxu0 0.0
    %2681 = vmatprep.subr.mxu0 0.0
    %2682 = vmatpush1.xpose.msra.mxu0 0.0
    %2683 = vmatprep.subr.mxu0 0.0
    %2684 = vmatpush1.xpose.msra.mxu0 0.0
    %2685 = vmatprep.subr.mxu0 0.0
    %2686 = vmatpush1.xpose.msra.mxu0 0.0
    %2687 = vmatprep.subr.mxu0 0.0
    %2688 = vmatpush1.xpose.msra.mxu0 0.0
    %2689 = vmatprep.subr.mxu0 0.0
    %2690 = vmatpush1.xpose.msra.mxu0 0.0
    %2691 = vmatprep.subr.mxu0 0.0
    %2692 = vmatpush1.xpose.msra.mxu0 0.0
    %2693 = vmatprep.subr.mxu0 0.0
    %2694 = vmatpush1.xpose.msra.mxu0 0.0
    %2695 = vmatprep.subr.mxu0 0.0
    %2696 = vmatpush1.xpose.msra.mxu0 0.0
    %2697 = vmatprep.subr.mxu0 0.0
    %2698 = vmatpush1.xpose.msra.mxu0 0.0
    %2699 = vmatprep.subr.mxu0 0.0
    %2700 = vmatpush1.xpose.msra.mxu0 0.0
    %2701 = vmatprep.subr.mxu0 0.0
    %2702 = vmatpush1.xpose.msra.mxu0 0.0
    %2703 = vmatprep.subr.mxu0 0.0
    %2704 = vmatpush1.xpose.msra.mxu0 0.0
    %2705 = vmatprep.subr.mxu0 0.0
    %2706 = vmatpush1.xpose.msra.mxu0 0.0
    %2707 = vmatprep.subr.mxu0 0.0
    %2708 = vmatpush1.xpose.msra.mxu0 0.0
    %2709 = vmatprep.subr.mxu0 0.0
    %2710 = vmatpush1.xpose.msra.mxu0 0.0
    %2711 = vmatprep.subr.mxu0 0.0
    %2712 = vmatpush1.xpose.msra.mxu0 0.0
    %2713 = vmatprep.subr.mxu0 0.0
    %2714 = vmatpush1.xpose.msra.mxu0 0.0
    %2715 = vmatprep.subr.mxu0 0.0
    %2716 = vmatpush1.xpose.msra.mxu0 0.0
    %2717 = vmatprep.subr.mxu0 0.0
    %2718 = vmatpush1.xpose.msra.mxu0 0.0
    %2719 = vmatprep.mubr.f32.mxu0 0.0
    %v2720 = vand.u32 %v2347, 4294901760
    %2721 = vmatmul.mubr.f32.gmra.mrb[0].mxu0 %v2720
    %v2722 = vpop.f32.mrb[0].mxu0
    %v2723 = vadd.f32 %v2649, %v2722
    %v2724 = vpop.f32.mrb[0].mxu0
    %2725 = vdwg.mxu0
    %2726 = vmatprep.subr.mxu0 0.0
    %v2727 = vand.u32 %v2350, 4294901760
    %2728 = vmatpush1.xpose.msra.mxu0 %v2727
    %2729 = vmatprep.subr.mxu0 0.0
    %2730 = vmatpush1.xpose.msra.mxu0 0.0
    %2731 = vmatprep.subr.mxu0 0.0
    %2732 = vmatpush1.xpose.msra.mxu0 0.0
    %2733 = vmatprep.subr.mxu0 0.0
    %2734 = vmatpush1.xpose.msra.mxu0 0.0
    %2735 = vmatprep.subr.mxu0 0.0
    %2736 = vmatpush1.xpose.msra.mxu0 0.0
    %2737 = vmatprep.subr.mxu0 0.0
    %2738 = vmatpush1.xpose.msra.mxu0 0.0
    %2739 = vmatprep.subr.mxu0 0.0
    %2740 = vmatpush1.xpose.msra.mxu0 0.0
    %2741 = vmatprep.subr.mxu0 0.0
    %2742 = vmatpush1.xpose.msra.mxu0 0.0
    %2743 = vmatprep.subr.mxu0 0.0
    %2744 = vmatpush1.xpose.msra.mxu0 0.0
    %2745 = vmatprep.subr.mxu0 0.0
    %2746 = vmatpush1.xpose.msra.mxu0 0.0
    %2747 = vmatprep.subr.mxu0 0.0
    %2748 = vmatpush1.xpose.msra.mxu0 0.0
    %2749 = vmatprep.subr.mxu0 0.0
    %2750 = vmatpush1.xpose.msra.mxu0 0.0
    %2751 = vmatprep.subr.mxu0 0.0
    %2752 = vmatpush1.xpose.msra.mxu0 0.0
    %2753 = vmatprep.subr.mxu0 0.0
    %2754 = vmatpush1.xpose.msra.mxu0 0.0
    %2755 = vmatprep.subr.mxu0 0.0
    %2756 = vmatpush1.xpose.msra.mxu0 0.0
    %2757 = vmatprep.subr.mxu0 0.0
    %2758 = vmatpush1.xpose.msra.mxu0 0.0
    %2759 = vmatprep.subr.mxu0 0.0
    %2760 = vmatpush1.xpose.msra.mxu0 0.0
    %2761 = vmatprep.subr.mxu0 0.0
    %2762 = vmatpush1.xpose.msra.mxu0 0.0
    %2763 = vmatprep.subr.mxu0 0.0
    %2764 = vmatpush1.xpose.msra.mxu0 0.0
    %2765 = vmatprep.subr.mxu0 0.0
    %2766 = vmatpush1.xpose.msra.mxu0 0.0
    %2767 = vmatprep.subr.mxu0 0.0
    %2768 = vmatpush1.xpose.msra.mxu0 0.0
    %2769 = vmatprep.subr.mxu0 0.0
    %2770 = vmatpush1.xpose.msra.mxu0 0.0
    %2771 = vmatprep.subr.mxu0 0.0
    %2772 = vmatpush1.xpose.msra.mxu0 0.0
    %2773 = vmatprep.subr.mxu0 0.0
    %2774 = vmatpush1.xpose.msra.mxu0 0.0
    %2775 = vmatprep.subr.mxu0 0.0
    %2776 = vmatpush1.xpose.msra.mxu0 0.0
    %2777 = vmatprep.subr.mxu0 0.0
    %2778 = vmatpush1.xpose.msra.mxu0 0.0
    %2779 = vmatprep.subr.mxu0 0.0
    %2780 = vmatpush1.xpose.msra.mxu0 0.0
    %2781 = vmatprep.subr.mxu0 0.0
    %2782 = vmatpush1.xpose.msra.mxu0 0.0
    %2783 = vmatprep.subr.mxu0 0.0
    %2784 = vmatpush1.xpose.msra.mxu0 0.0
    %2785 = vmatprep.subr.mxu0 0.0
    %2786 = vmatpush1.xpose.msra.mxu0 0.0
    %2787 = vmatprep.subr.mxu0 0.0
    %2788 = vmatpush1.xpose.msra.mxu0 0.0
    %2789 = vmatprep.subr.mxu0 0.0
    %2790 = vmatpush1.xpose.msra.mxu0 0.0
    %2791 = vmatprep.mubr.f32.mxu0 0.0
    %v2792 = vand.u32 %v2347, 4294901760
    %2793 = vmatmul.mubr.f32.gmra.mrb[0].mxu0 %v2792
    %v2794 = vpop.f32.mrb[0].mxu0
    %v2795 = vadd.f32 %v2723, %v2794
    %v2796 = vpop.f32.mrb[0].mxu0
    %2797 = vdwg.mxu0
    %v2798 = vsel %vm26, %v89, 0
    %v2801 = vsel %vm26, %v23, 0
    %2803 = vmatprep.subr.mxu0 0.0
    %v2804 = vand.u32 %v2801, 4294901760
    %2805 = vmatpush1.xpose.msra.mxu0 %v2804
    %2806 = vmatprep.subr.mxu0 0.0
    %2807 = vmatpush1.xpose.msra.mxu0 0.0
    %2808 = vmatprep.subr.mxu0 0.0
    %2809 = vmatpush1.xpose.msra.mxu0 0.0
    %2810 = vmatprep.subr.mxu0 0.0
    %2811 = vmatpush1.xpose.msra.mxu0 0.0
    %2812 = vmatprep.subr.mxu0 0.0
    %2813 = vmatpush1.xpose.msra.mxu0 0.0
    %2814 = vmatprep.subr.mxu0 0.0
    %2815 = vmatpush1.xpose.msra.mxu0 0.0
    %2816 = vmatprep.subr.mxu0 0.0
    %2817 = vmatpush1.xpose.msra.mxu0 0.0
    %2818 = vmatprep.subr.mxu0 0.0
    %2819 = vmatpush1.xpose.msra.mxu0 0.0
    %2820 = vmatprep.subr.mxu0 0.0
    %2821 = vmatpush1.xpose.msra.mxu0 0.0
    %2822 = vmatprep.subr.mxu0 0.0
    %2823 = vmatpush1.xpose.msra.mxu0 0.0
    %2824 = vmatprep.subr.mxu0 0.0
    %2825 = vmatpush1.xpose.msra.mxu0 0.0
    %2826 = vmatprep.subr.mxu0 0.0
    %2827 = vmatpush1.xpose.msra.mxu0 0.0
    %2828 = vmatprep.subr.mxu0 0.0
    %2829 = vmatpush1.xpose.msra.mxu0 0.0
    %2830 = vmatprep.subr.mxu0 0.0
    %2831 = vmatpush1.xpose.msra.mxu0 0.0
    %2832 = vmatprep.subr.mxu0 0.0
    %2833 = vmatpush1.xpose.msra.mxu0 0.0
    %2834 = vmatprep.subr.mxu0 0.0
    %2835 = vmatpush1.xpose.msra.mxu0 0.0
    %2836 = vmatprep.subr.mxu0 0.0
    %2837 = vmatpush1.xpose.msra.mxu0 0.0
    %2838 = vmatprep.subr.mxu0 0.0
    %2839 = vmatpush1.xpose.msra.mxu0 0.0
    %2840 = vmatprep.subr.mxu0 0.0
    %2841 = vmatpush1.xpose.msra.mxu0 0.0
    %2842 = vmatprep.subr.mxu0 0.0
    %2843 = vmatpush1.xpose.msra.mxu0 0.0
    %2844 = vmatprep.subr.mxu0 0.0
    %2845 = vmatpush1.xpose.msra.mxu0 0.0
    %2846 = vmatprep.subr.mxu0 0.0
    %2847 = vmatpush1.xpose.msra.mxu0 0.0
    %2848 = vmatprep.subr.mxu0 0.0
    %2849 = vmatpush1.xpose.msra.mxu0 0.0
    %2850 = vmatprep.subr.mxu0 0.0
    %2851 = vmatpush1.xpose.msra.mxu0 0.0
    %2852 = vmatprep.subr.mxu0 0.0
    %2853 = vmatpush1.xpose.msra.mxu0 0.0
    %2854 = vmatprep.subr.mxu0 0.0
    %2855 = vmatpush1.xpose.msra.mxu0 0.0
    %2856 = vmatprep.subr.mxu0 0.0
    %2857 = vmatpush1.xpose.msra.mxu0 0.0
    %2858 = vmatprep.subr.mxu0 0.0
    %2859 = vmatpush1.xpose.msra.mxu0 0.0
    %2860 = vmatprep.subr.mxu0 0.0
    %2861 = vmatpush1.xpose.msra.mxu0 0.0
    %2862 = vmatprep.subr.mxu0 0.0
    %2863 = vmatpush1.xpose.msra.mxu0 0.0
    %2864 = vmatprep.subr.mxu0 0.0
    %2865 = vmatpush1.xpose.msra.mxu0 0.0
    %2866 = vmatprep.subr.mxu0 0.0
    %2867 = vmatpush1.xpose.msra.mxu0 0.0
    %2868 = vmatprep.mubr.f32.mxu0 0.0
    %v2869 = vand.u32 %v2798, 4294901760
    %v2870 = vsub.f32 %v2798, %v2869
    %v2871 = vand.u32 %v2870, 4294901760
    %v2872 = vsub.f32 %v2870, %v2871
    %v2873 = vand.u32 %v2872, 4294901760
    %2874 = vmatmul.mubr.f32.gmra.mrb[0].mxu0 %v2873
    %v2875 = vpop.f32.mrb[0].mxu0
    %v2876 = vadd.f32 0.0, %v2875
    %v2877 = vpop.f32.mrb[0].mxu0
    %2878 = vdwg.mxu0
    %2879 = vmatprep.subr.mxu0 0.0
    %v2880 = vand.u32 %v2801, 4294901760
    %v2881 = vsub.f32 %v2801, %v2880
    %v2882 = vand.u32 %v2881, 4294901760
    %v2883 = vsub.f32 %v2881, %v2882
    %v2884 = vand.u32 %v2883, 4294901760
    %2885 = vmatpush1.xpose.msra.mxu0 %v2884
    %2886 = vmatprep.subr.mxu0 0.0
    %2887 = vmatpush1.xpose.msra.mxu0 0.0
    %2888 = vmatprep.subr.mxu0 0.0
    %2889 = vmatpush1.xpose.msra.mxu0 0.0
    %2890 = vmatprep.subr.mxu0 0.0
    %2891 = vmatpush1.xpose.msra.mxu0 0.0
    %2892 = vmatprep.subr.mxu0 0.0
    %2893 = vmatpush1.xpose.msra.mxu0 0.0
    %2894 = vmatprep.subr.mxu0 0.0
    %2895 = vmatpush1.xpose.msra.mxu0 0.0
    %2896 = vmatprep.subr.mxu0 0.0
    %2897 = vmatpush1.xpose.msra.mxu0 0.0
    %2898 = vmatprep.subr.mxu0 0.0
    %2899 = vmatpush1.xpose.msra.mxu0 0.0
    %2900 = vmatprep.subr.mxu0 0.0
    %2901 = vmatpush1.xpose.msra.mxu0 0.0
    %2902 = vmatprep.subr.mxu0 0.0
    %2903 = vmatpush1.xpose.msra.mxu0 0.0
    %2904 = vmatprep.subr.mxu0 0.0
    %2905 = vmatpush1.xpose.msra.mxu0 0.0
    %2906 = vmatprep.subr.mxu0 0.0
    %2907 = vmatpush1.xpose.msra.mxu0 0.0
    %2908 = vmatprep.subr.mxu0 0.0
    %2909 = vmatpush1.xpose.msra.mxu0 0.0
    %2910 = vmatprep.subr.mxu0 0.0
    %2911 = vmatpush1.xpose.msra.mxu0 0.0
    %2912 = vmatprep.subr.mxu0 0.0
    %2913 = vmatpush1.xpose.msra.mxu0 0.0
    %2914 = vmatprep.subr.mxu0 0.0
    %2915 = vmatpush1.xpose.msra.mxu0 0.0
    %2916 = vmatprep.subr.mxu0 0.0
    %2917 = vmatpush1.xpose.msra.mxu0 0.0
    %2918 = vmatprep.subr.mxu0 0.0
    %2919 = vmatpush1.xpose.msra.mxu0 0.0
    %2920 = vmatprep.subr.mxu0 0.0
    %2921 = vmatpush1.xpose.msra.mxu0 0.0
    %2922 = vmatprep.subr.mxu0 0.0
    %2923 = vmatpush1.xpose.msra.mxu0 0.0
    %2924 = vmatprep.subr.mxu0 0.0
    %2925 = vmatpush1.xpose.msra.mxu0 0.0
    %2926 = vmatprep.subr.mxu0 0.0
    %2927 = vmatpush1.xpose.msra.mxu0 0.0
    %2928 = vmatprep.subr.mxu0 0.0
    %2929 = vmatpush1.xpose.msra.mxu0 0.0
    %2930 = vmatprep.subr.mxu0 0.0
    %2931 = vmatpush1.xpose.msra.mxu0 0.0
    %2932 = vmatprep.subr.mxu0 0.0
    %2933 = vmatpush1.xpose.msra.mxu0 0.0
    %2934 = vmatprep.subr.mxu0 0.0
    %2935 = vmatpush1.xpose.msra.mxu0 0.0
    %2936 = vmatprep.subr.mxu0 0.0
    %2937 = vmatpush1.xpose.msra.mxu0 0.0
    %2938 = vmatprep.subr.mxu0 0.0
    %2939 = vmatpush1.xpose.msra.mxu0 0.0
    %2940 = vmatprep.subr.mxu0 0.0
    %2941 = vmatpush1.xpose.msra.mxu0 0.0
    %2942 = vmatprep.subr.mxu0 0.0
    %2943 = vmatpush1.xpose.msra.mxu0 0.0
    %2944 = vmatprep.subr.mxu0 0.0
    %2945 = vmatpush1.xpose.msra.mxu0 0.0
    %2946 = vmatprep.subr.mxu0 0.0
    %2947 = vmatpush1.xpose.msra.mxu0 0.0
    %2948 = vmatprep.mubr.f32.mxu0 0.0
    %v2949 = vand.u32 %v2798, 4294901760
    %2950 = vmatmul.mubr.f32.gmra.mrb[0].mxu0 %v2949
    %v2951 = vpop.f32.mrb[0].mxu0
    %v2952 = vadd.f32 %v2876, %v2951
    %v2953 = vpop.f32.mrb[0].mxu0
    %2954 = vdwg.mxu0
    %2955 = vmatprep.subr.mxu0 0.0
    %v2956 = vand.u32 %v2801, 4294901760
    %v2957 = vsub.f32 %v2801, %v2956
    %2958 = vmatpush1.xpose.msra.mxu0 %v2957
    %2959 = vmatprep.subr.mxu0 0.0
    %2960 = vmatpush1.xpose.msra.mxu0 0.0
    %2961 = vmatprep.subr.mxu0 0.0
    %2962 = vmatpush1.xpose.msra.mxu0 0.0
    %2963 = vmatprep.subr.mxu0 0.0
    %2964 = vmatpush1.xpose.msra.mxu0 0.0
    %2965 = vmatprep.subr.mxu0 0.0
    %2966 = vmatpush1.xpose.msra.mxu0 0.0
    %2967 = vmatprep.subr.mxu0 0.0
    %2968 = vmatpush1.xpose.msra.mxu0 0.0
    %2969 = vmatprep.subr.mxu0 0.0
    %2970 = vmatpush1.xpose.msra.mxu0 0.0
    %2971 = vmatprep.subr.mxu0 0.0
    %2972 = vmatpush1.xpose.msra.mxu0 0.0
    %2973 = vmatprep.subr.mxu0 0.0
    %2974 = vmatpush1.xpose.msra.mxu0 0.0
    %2975 = vmatprep.subr.mxu0 0.0
    %2976 = vmatpush1.xpose.msra.mxu0 0.0
    %2977 = vmatprep.subr.mxu0 0.0
    %2978 = vmatpush1.xpose.msra.mxu0 0.0
    %2979 = vmatprep.subr.mxu0 0.0
    %2980 = vmatpush1.xpose.msra.mxu0 0.0
    %2981 = vmatprep.subr.mxu0 0.0
    %2982 = vmatpush1.xpose.msra.mxu0 0.0
    %2983 = vmatprep.subr.mxu0 0.0
    %2984 = vmatpush1.xpose.msra.mxu0 0.0
    %2985 = vmatprep.subr.mxu0 0.0
    %2986 = vmatpush1.xpose.msra.mxu0 0.0
    %2987 = vmatprep.subr.mxu0 0.0
    %2988 = vmatpush1.xpose.msra.mxu0 0.0
    %2989 = vmatprep.subr.mxu0 0.0
    %2990 = vmatpush1.xpose.msra.mxu0 0.0
    %2991 = vmatprep.subr.mxu0 0.0
    %2992 = vmatpush1.xpose.msra.mxu0 0.0
    %2993 = vmatprep.subr.mxu0 0.0
    %2994 = vmatpush1.xpose.msra.mxu0 0.0
    %2995 = vmatprep.subr.mxu0 0.0
    %2996 = vmatpush1.xpose.msra.mxu0 0.0
    %2997 = vmatprep.subr.mxu0 0.0
    %2998 = vmatpush1.xpose.msra.mxu0 0.0
    %2999 = vmatprep.subr.mxu0 0.0
    %3000 = vmatpush1.xpose.msra.mxu0 0.0
    %3001 = vmatprep.subr.mxu0 0.0
    %3002 = vmatpush1.xpose.msra.mxu0 0.0
    %3003 = vmatprep.subr.mxu0 0.0
    %3004 = vmatpush1.xpose.msra.mxu0 0.0
    %3005 = vmatprep.subr.mxu0 0.0
    %3006 = vmatpush1.xpose.msra.mxu0 0.0
    %3007 = vmatprep.subr.mxu0 0.0
    %3008 = vmatpush1.xpose.msra.mxu0 0.0
    %3009 = vmatprep.subr.mxu0 0.0
    %3010 = vmatpush1.xpose.msra.mxu0 0.0
    %3011 = vmatprep.subr.mxu0 0.0
    %3012 = vmatpush1.xpose.msra.mxu0 0.0
    %3013 = vmatprep.subr.mxu0 0.0
    %3014 = vmatpush1.xpose.msra.mxu0 0.0
    %3015 = vmatprep.subr.mxu0 0.0
    %3016 = vmatpush1.xpose.msra.mxu0 0.0
    %3017 = vmatprep.subr.mxu0 0.0
    %3018 = vmatpush1.xpose.msra.mxu0 0.0
    %3019 = vmatprep.subr.mxu0 0.0
    %3020 = vmatpush1.xpose.msra.mxu0 0.0
    %3021 = vmatprep.mubr.f32.mxu0 0.0
    %v3022 = vand.u32 %v2798, 4294901760
    %v3023 = vsub.f32 %v2798, %v3022
    %3024 = vmatmul.mubr.f32.gmra.mrb[0].mxu0 %v3023
    %v3025 = vpop.f32.mrb[0].mxu0
    %v3026 = vadd.f32 %v2952, %v3025
    %v3027 = vpop.f32.mrb[0].mxu0
    %3028 = vdwg.mxu0
    %3029 = vmatprep.subr.mxu0 0.0
    %v3030 = vand.u32 %v2801, 4294901760
    %3031 = vmatpush1.xpose.msra.mxu0 %v3030
    %3032 = vmatprep.subr.mxu0 0.0
    %3033 = vmatpush1.xpose.msra.mxu0 0.0
    %3034 = vmatprep.subr.mxu0 0.0
    %3035 = vmatpush1.xpose.msra.mxu0 0.0
    %3036 = vmatprep.subr.mxu0 0.0
    %3037 = vmatpush1.xpose.msra.mxu0 0.0
    %3038 = vmatprep.subr.mxu0 0.0
    %3039 = vmatpush1.xpose.msra.mxu0 0.0
    %3040 = vmatprep.subr.mxu0 0.0
    %3041 = vmatpush1.xpose.msra.mxu0 0.0
    %3042 = vmatprep.subr.mxu0 0.0
    %3043 = vmatpush1.xpose.msra.mxu0 0.0
    %3044 = vmatprep.subr.mxu0 0.0
    %3045 = vmatpush1.xpose.msra.mxu0 0.0
    %3046 = vmatprep.subr.mxu0 0.0
    %3047 = vmatpush1.xpose.msra.mxu0 0.0
    %3048 = vmatprep.subr.mxu0 0.0
    %3049 = vmatpush1.xpose.msra.mxu0 0.0
    %3050 = vmatprep.subr.mxu0 0.0
    %3051 = vmatpush1.xpose.msra.mxu0 0.0
    %3052 = vmatprep.subr.mxu0 0.0
    %3053 = vmatpush1.xpose.msra.mxu0 0.0
    %3054 = vmatprep.subr.mxu0 0.0
    %3055 = vmatpush1.xpose.msra.mxu0 0.0
    %3056 = vmatprep.subr.mxu0 0.0
    %3057 = vmatpush1.xpose.msra.mxu0 0.0
    %3058 = vmatprep.subr.mxu0 0.0
    %3059 = vmatpush1.xpose.msra.mxu0 0.0
    %3060 = vmatprep.subr.mxu0 0.0
    %3061 = vmatpush1.xpose.msra.mxu0 0.0
    %3062 = vmatprep.subr.mxu0 0.0
    %3063 = vmatpush1.xpose.msra.mxu0 0.0
    %3064 = vmatprep.subr.mxu0 0.0
    %3065 = vmatpush1.xpose.msra.mxu0 0.0
    %3066 = vmatprep.subr.mxu0 0.0
    %3067 = vmatpush1.xpose.msra.mxu0 0.0
    %3068 = vmatprep.subr.mxu0 0.0
    %3069 = vmatpush1.xpose.msra.mxu0 0.0
    %3070 = vmatprep.subr.mxu0 0.0
    %3071 = vmatpush1.xpose.msra.mxu0 0.0
    %3072 = vmatprep.subr.mxu0 0.0
    %3073 = vmatpush1.xpose.msra.mxu0 0.0
    %3074 = vmatprep.subr.mxu0 0.0
    %3075 = vmatpush1.xpose.msra.mxu0 0.0
    %3076 = vmatprep.subr.mxu0 0.0
    %3077 = vmatpush1.xpose.msra.mxu0 0.0
    %3078 = vmatprep.subr.mxu0 0.0
    %3079 = vmatpush1.xpose.msra.mxu0 0.0
    %3080 = vmatprep.subr.mxu0 0.0
    %3081 = vmatpush1.xpose.msra.mxu0 0.0
    %3082 = vmatprep.subr.mxu0 0.0
    %3083 = vmatpush1.xpose.msra.mxu0 0.0
    %3084 = vmatprep.subr.mxu0 0.0
    %3085 = vmatpush1.xpose.msra.mxu0 0.0
    %3086 = vmatprep.subr.mxu0 0.0
    %3087 = vmatpush1.xpose.msra.mxu0 0.0
    %3088 = vmatprep.subr.mxu0 0.0
    %3089 = vmatpush1.xpose.msra.mxu0 0.0
    %3090 = vmatprep.subr.mxu0 0.0
    %3091 = vmatpush1.xpose.msra.mxu0 0.0
    %3092 = vmatprep.subr.mxu0 0.0
    %3093 = vmatpush1.xpose.msra.mxu0 0.0
    %3094 = vmatprep.mubr.f32.mxu0 0.0
    %v3095 = vand.u32 %v2798, 4294901760
    %v3096 = vsub.f32 %v2798, %v3095
    %v3097 = vand.u32 %v3096, 4294901760
    %3098 = vmatmul.mubr.f32.gmra.mrb[0].mxu0 %v3097
    %v3099 = vpop.f32.mrb[0].mxu0
    %v3100 = vadd.f32 %v3026, %v3099
    %v3101 = vpop.f32.mrb[0].mxu0
    %3102 = vdwg.mxu0
    %3103 = vmatprep.subr.mxu0 0.0
    %v3104 = vand.u32 %v2801, 4294901760
    %v3105 = vsub.f32 %v2801, %v3104
    %v3106 = vand.u32 %v3105, 4294901760
    %3107 = vmatpush1.xpose.msra.mxu0 %v3106
    %3108 = vmatprep.subr.mxu0 0.0
    %3109 = vmatpush1.xpose.msra.mxu0 0.0
    %3110 = vmatprep.subr.mxu0 0.0
    %3111 = vmatpush1.xpose.msra.mxu0 0.0
    %3112 = vmatprep.subr.mxu0 0.0
    %3113 = vmatpush1.xpose.msra.mxu0 0.0
    %3114 = vmatprep.subr.mxu0 0.0
    %3115 = vmatpush1.xpose.msra.mxu0 0.0
    %3116 = vmatprep.subr.mxu0 0.0
    %3117 = vmatpush1.xpose.msra.mxu0 0.0
    %3118 = vmatprep.subr.mxu0 0.0
    %3119 = vmatpush1.xpose.msra.mxu0 0.0
    %3120 = vmatprep.subr.mxu0 0.0
    %3121 = vmatpush1.xpose.msra.mxu0 0.0
    %3122 = vmatprep.subr.mxu0 0.0
    %3123 = vmatpush1.xpose.msra.mxu0 0.0
    %3124 = vmatprep.subr.mxu0 0.0
    %3125 = vmatpush1.xpose.msra.mxu0 0.0
    %3126 = vmatprep.subr.mxu0 0.0
    %3127 = vmatpush1.xpose.msra.mxu0 0.0
    %3128 = vmatprep.subr.mxu0 0.0
    %3129 = vmatpush1.xpose.msra.mxu0 0.0
    %3130 = vmatprep.subr.mxu0 0.0
    %3131 = vmatpush1.xpose.msra.mxu0 0.0
    %3132 = vmatprep.subr.mxu0 0.0
    %3133 = vmatpush1.xpose.msra.mxu0 0.0
    %3134 = vmatprep.subr.mxu0 0.0
    %3135 = vmatpush1.xpose.msra.mxu0 0.0
    %3136 = vmatprep.subr.mxu0 0.0
    %3137 = vmatpush1.xpose.msra.mxu0 0.0
    %3138 = vmatprep.subr.mxu0 0.0
    %3139 = vmatpush1.xpose.msra.mxu0 0.0
    %3140 = vmatprep.subr.mxu0 0.0
    %3141 = vmatpush1.xpose.msra.mxu0 0.0
    %3142 = vmatprep.subr.mxu0 0.0
    %3143 = vmatpush1.xpose.msra.mxu0 0.0
    %3144 = vmatprep.subr.mxu0 0.0
    %3145 = vmatpush1.xpose.msra.mxu0 0.0
    %3146 = vmatprep.subr.mxu0 0.0
    %3147 = vmatpush1.xpose.msra.mxu0 0.0
    %3148 = vmatprep.subr.mxu0 0.0
    %3149 = vmatpush1.xpose.msra.mxu0 0.0
    %3150 = vmatprep.subr.mxu0 0.0
    %3151 = vmatpush1.xpose.msra.mxu0 0.0
    %3152 = vmatprep.subr.mxu0 0.0
    %3153 = vmatpush1.xpose.msra.mxu0 0.0
    %3154 = vmatprep.subr.mxu0 0.0
    %3155 = vmatpush1.xpose.msra.mxu0 0.0
    %3156 = vmatprep.subr.mxu0 0.0
    %3157 = vmatpush1.xpose.msra.mxu0 0.0
    %3158 = vmatprep.subr.mxu0 0.0
    %3159 = vmatpush1.xpose.msra.mxu0 0.0
    %3160 = vmatprep.subr.mxu0 0.0
    %3161 = vmatpush1.xpose.msra.mxu0 0.0
    %3162 = vmatprep.subr.mxu0 0.0
    %3163 = vmatpush1.xpose.msra.mxu0 0.0
    %3164 = vmatprep.subr.mxu0 0.0
    %3165 = vmatpush1.xpose.msra.mxu0 0.0
    %3166 = vmatprep.subr.mxu0 0.0
    %3167 = vmatpush1.xpose.msra.mxu0 0.0
    %3168 = vmatprep.subr.mxu0 0.0
    %3169 = vmatpush1.xpose.msra.mxu0 0.0
    %3170 = vmatprep.mubr.f32.mxu0 0.0
    %v3171 = vand.u32 %v2798, 4294901760
    %3172 = vmatmul.mubr.f32.gmra.mrb[0].mxu0 %v3171
    %v3173 = vpop.f32.mrb[0].mxu0
    %v3174 = vadd.f32 %v3100, %v3173
    %v3175 = vpop.f32.mrb[0].mxu0
    %3176 = vdwg.mxu0
    %3177 = vmatprep.subr.mxu0 0.0
    %v3178 = vand.u32 %v2801, 4294901760
    %3179 = vmatpush1.xpose.msra.mxu0 %v3178
    %3180 = vmatprep.subr.mxu0 0.0
    %3181 = vmatpush1.xpose.msra.mxu0 0.0
    %3182 = vmatprep.subr.mxu0 0.0
    %3183 = vmatpush1.xpose.msra.mxu0 0.0
    %3184 = vmatprep.subr.mxu0 0.0
    %3185 = vmatpush1.xpose.msra.mxu0 0.0
    %3186 = vmatprep.subr.mxu0 0.0
    %3187 = vmatpush1.xpose.msra.mxu0 0.0
    %3188 = vmatprep.subr.mxu0 0.0
    %3189 = vmatpush1.xpose.msra.mxu0 0.0
    %3190 = vmatprep.subr.mxu0 0.0
    %3191 = vmatpush1.xpose.msra.mxu0 0.0
    %3192 = vmatprep.subr.mxu0 0.0
    %3193 = vmatpush1.xpose.msra.mxu0 0.0
    %3194 = vmatprep.subr.mxu0 0.0
    %3195 = vmatpush1.xpose.msra.mxu0 0.0
    %3196 = vmatprep.subr.mxu0 0.0
    %3197 = vmatpush1.xpose.msra.mxu0 0.0
    %3198 = vmatprep.subr.mxu0 0.0
    %3199 = vmatpush1.xpose.msra.mxu0 0.0
    %3200 = vmatprep.subr.mxu0 0.0
    %3201 = vmatpush1.xpose.msra.mxu0 0.0
    %3202 = vmatprep.subr.mxu0 0.0
    %3203 = vmatpush1.xpose.msra.mxu0 0.0
    %3204 = vmatprep.subr.mxu0 0.0
    %3205 = vmatpush1.xpose.msra.mxu0 0.0
    %3206 = vmatprep.subr.mxu0 0.0
    %3207 = vmatpush1.xpose.msra.mxu0 0.0
    %3208 = vmatprep.subr.mxu0 0.0
    %3209 = vmatpush1.xpose.msra.mxu0 0.0
    %3210 = vmatprep.subr.mxu0 0.0
    %3211 = vmatpush1.xpose.msra.mxu0 0.0
    %3212 = vmatprep.subr.mxu0 0.0
    %3213 = vmatpush1.xpose.msra.mxu0 0.0
    %3214 = vmatprep.subr.mxu0 0.0
    %3215 = vmatpush1.xpose.msra.mxu0 0.0
    %3216 = vmatprep.subr.mxu0 0.0
    %3217 = vmatpush1.xpose.msra.mxu0 0.0
    %3218 = vmatprep.subr.mxu0 0.0
    %3219 = vmatpush1.xpose.msra.mxu0 0.0
    %3220 = vmatprep.subr.mxu0 0.0
    %3221 = vmatpush1.xpose.msra.mxu0 0.0
    %3222 = vmatprep.subr.mxu0 0.0
    %3223 = vmatpush1.xpose.msra.mxu0 0.0
    %3224 = vmatprep.subr.mxu0 0.0
    %3225 = vmatpush1.xpose.msra.mxu0 0.0
    %3226 = vmatprep.subr.mxu0 0.0
    %3227 = vmatpush1.xpose.msra.mxu0 0.0
    %3228 = vmatprep.subr.mxu0 0.0
    %3229 = vmatpush1.xpose.msra.mxu0 0.0
    %3230 = vmatprep.subr.mxu0 0.0
    %3231 = vmatpush1.xpose.msra.mxu0 0.0
    %3232 = vmatprep.subr.mxu0 0.0
    %3233 = vmatpush1.xpose.msra.mxu0 0.0
    %3234 = vmatprep.subr.mxu0 0.0
    %3235 = vmatpush1.xpose.msra.mxu0 0.0
    %3236 = vmatprep.subr.mxu0 0.0
    %3237 = vmatpush1.xpose.msra.mxu0 0.0
    %3238 = vmatprep.subr.mxu0 0.0
    %3239 = vmatpush1.xpose.msra.mxu0 0.0
    %3240 = vmatprep.subr.mxu0 0.0
    %3241 = vmatpush1.xpose.msra.mxu0 0.0
    %3242 = vmatprep.mubr.f32.mxu0 0.0
    %v3243 = vand.u32 %v2798, 4294901760
    %3244 = vmatmul.mubr.f32.gmra.mrb[0].mxu0 %v3243
    %v3245 = vpop.f32.mrb[0].mxu0
    %v3246 = vadd.f32 %v3174, %v3245
    %v3247 = vpop.f32.mrb[0].mxu0
    %3248 = vdwg.mxu0
    %v3249 = vsel %vm26, %v91, 0
    %v3252 = vsel %vm26, %v24, 0
    %3254 = vmatprep.subr.mxu0 0.0
    %v3255 = vand.u32 %v3252, 4294901760
    %3256 = vmatpush1.xpose.msra.mxu0 %v3255
    %3257 = vmatprep.subr.mxu0 0.0
    %3258 = vmatpush1.xpose.msra.mxu0 0.0
    %3259 = vmatprep.subr.mxu0 0.0
    %3260 = vmatpush1.xpose.msra.mxu0 0.0
    %3261 = vmatprep.subr.mxu0 0.0
    %3262 = vmatpush1.xpose.msra.mxu0 0.0
    %3263 = vmatprep.subr.mxu0 0.0
    %3264 = vmatpush1.xpose.msra.mxu0 0.0
    %3265 = vmatprep.subr.mxu0 0.0
    %3266 = vmatpush1.xpose.msra.mxu0 0.0
    %3267 = vmatprep.subr.mxu0 0.0
    %3268 = vmatpush1.xpose.msra.mxu0 0.0
    %3269 = vmatprep.subr.mxu0 0.0
    %3270 = vmatpush1.xpose.msra.mxu0 0.0
    %3271 = vmatprep.subr.mxu0 0.0
    %3272 = vmatpush1.xpose.msra.mxu0 0.0
    %3273 = vmatprep.subr.mxu0 0.0
    %3274 = vmatpush1.xpose.msra.mxu0 0.0
    %3275 = vmatprep.subr.mxu0 0.0
    %3276 = vmatpush1.xpose.msra.mxu0 0.0
    %3277 = vmatprep.subr.mxu0 0.0
    %3278 = vmatpush1.xpose.msra.mxu0 0.0
    %3279 = vmatprep.subr.mxu0 0.0
    %3280 = vmatpush1.xpose.msra.mxu0 0.0
    %3281 = vmatprep.subr.mxu0 0.0
    %3282 = vmatpush1.xpose.msra.mxu0 0.0
    %3283 = vmatprep.subr.mxu0 0.0
    %3284 = vmatpush1.xpose.msra.mxu0 0.0
    %3285 = vmatprep.subr.mxu0 0.0
    %3286 = vmatpush1.xpose.msra.mxu0 0.0
    %3287 = vmatprep.subr.mxu0 0.0
    %3288 = vmatpush1.xpose.msra.mxu0 0.0
    %3289 = vmatprep.subr.mxu0 0.0
    %3290 = vmatpush1.xpose.msra.mxu0 0.0
    %3291 = vmatprep.subr.mxu0 0.0
    %3292 = vmatpush1.xpose.msra.mxu0 0.0
    %3293 = vmatprep.subr.mxu0 0.0
    %3294 = vmatpush1.xpose.msra.mxu0 0.0
    %3295 = vmatprep.subr.mxu0 0.0
    %3296 = vmatpush1.xpose.msra.mxu0 0.0
    %3297 = vmatprep.subr.mxu0 0.0
    %3298 = vmatpush1.xpose.msra.mxu0 0.0
    %3299 = vmatprep.subr.mxu0 0.0
    %3300 = vmatpush1.xpose.msra.mxu0 0.0
    %3301 = vmatprep.subr.mxu0 0.0
    %3302 = vmatpush1.xpose.msra.mxu0 0.0
    %3303 = vmatprep.subr.mxu0 0.0
    %3304 = vmatpush1.xpose.msra.mxu0 0.0
    %3305 = vmatprep.subr.mxu0 0.0
    %3306 = vmatpush1.xpose.msra.mxu0 0.0
    %3307 = vmatprep.subr.mxu0 0.0
    %3308 = vmatpush1.xpose.msra.mxu0 0.0
    %3309 = vmatprep.subr.mxu0 0.0
    %3310 = vmatpush1.xpose.msra.mxu0 0.0
    %3311 = vmatprep.subr.mxu0 0.0
    %3312 = vmatpush1.xpose.msra.mxu0 0.0
    %3313 = vmatprep.subr.mxu0 0.0
    %3314 = vmatpush1.xpose.msra.mxu0 0.0
    %3315 = vmatprep.subr.mxu0 0.0
    %3316 = vmatpush1.xpose.msra.mxu0 0.0
    %3317 = vmatprep.subr.mxu0 0.0
    %3318 = vmatpush1.xpose.msra.mxu0 0.0
    %3319 = vmatprep.mubr.f32.mxu0 0.0
    %v3320 = vand.u32 %v3249, 4294901760
    %v3321 = vsub.f32 %v3249, %v3320
    %v3322 = vand.u32 %v3321, 4294901760
    %v3323 = vsub.f32 %v3321, %v3322
    %v3324 = vand.u32 %v3323, 4294901760
    %3325 = vmatmul.mubr.f32.gmra.mrb[0].mxu0 %v3324
    %v3326 = vpop.f32.mrb[0].mxu0
    %v3327 = vadd.f32 0.0, %v3326
    %v3328 = vpop.f32.mrb[0].mxu0
    %3329 = vdwg.mxu0
    %3330 = vmatprep.subr.mxu0 0.0
    %v3331 = vand.u32 %v3252, 4294901760
    %v3332 = vsub.f32 %v3252, %v3331
    %v3333 = vand.u32 %v3332, 4294901760
    %v3334 = vsub.f32 %v3332, %v3333
    %v3335 = vand.u32 %v3334, 4294901760
    %3336 = vmatpush1.xpose.msra.mxu0 %v3335
    %3337 = vmatprep.subr.mxu0 0.0
    %3338 = vmatpush1.xpose.msra.mxu0 0.0
    %3339 = vmatprep.subr.mxu0 0.0
    %3340 = vmatpush1.xpose.msra.mxu0 0.0
    %3341 = vmatprep.subr.mxu0 0.0
    %3342 = vmatpush1.xpose.msra.mxu0 0.0
    %3343 = vmatprep.subr.mxu0 0.0
    %3344 = vmatpush1.xpose.msra.mxu0 0.0
    %3345 = vmatprep.subr.mxu0 0.0
    %3346 = vmatpush1.xpose.msra.mxu0 0.0
    %3347 = vmatprep.subr.mxu0 0.0
    %3348 = vmatpush1.xpose.msra.mxu0 0.0
    %3349 = vmatprep.subr.mxu0 0.0
    %3350 = vmatpush1.xpose.msra.mxu0 0.0
    %3351 = vmatprep.subr.mxu0 0.0
    %3352 = vmatpush1.xpose.msra.mxu0 0.0
    %3353 = vmatprep.subr.mxu0 0.0
    %3354 = vmatpush1.xpose.msra.mxu0 0.0
    %3355 = vmatprep.subr.mxu0 0.0
    %3356 = vmatpush1.xpose.msra.mxu0 0.0
    %3357 = vmatprep.subr.mxu0 0.0
    %3358 = vmatpush1.xpose.msra.mxu0 0.0
    %3359 = vmatprep.subr.mxu0 0.0
    %3360 = vmatpush1.xpose.msra.mxu0 0.0
    %3361 = vmatprep.subr.mxu0 0.0
    %3362 = vmatpush1.xpose.msra.mxu0 0.0
    %3363 = vmatprep.subr.mxu0 0.0
    %3364 = vmatpush1.xpose.msra.mxu0 0.0
    %3365 = vmatprep.subr.mxu0 0.0
    %3366 = vmatpush1.xpose.msra.mxu0 0.0
    %3367 = vmatprep.subr.mxu0 0.0
    %3368 = vmatpush1.xpose.msra.mxu0 0.0
    %3369 = vmatprep.subr.mxu0 0.0
    %3370 = vmatpush1.xpose.msra.mxu0 0.0
    %3371 = vmatprep.subr.mxu0 0.0
    %3372 = vmatpush1.xpose.msra.mxu0 0.0
    %3373 = vmatprep.subr.mxu0 0.0
    %3374 = vmatpush1.xpose.msra.mxu0 0.0
    %3375 = vmatprep.subr.mxu0 0.0
    %3376 = vmatpush1.xpose.msra.mxu0 0.0
    %3377 = vmatprep.subr.mxu0 0.0
    %3378 = vmatpush1.xpose.msra.mxu0 0.0
    %3379 = vmatprep.subr.mxu0 0.0
    %3380 = vmatpush1.xpose.msra.mxu0 0.0
    %3381 = vmatprep.subr.mxu0 0.0
    %3382 = vmatpush1.xpose.msra.mxu0 0.0
    %3383 = vmatprep.subr.mxu0 0.0
    %3384 = vmatpush1.xpose.msra.mxu0 0.0
    %3385 = vmatprep.subr.mxu0 0.0
    %3386 = vmatpush1.xpose.msra.mxu0 0.0
    %3387 = vmatprep.subr.mxu0 0.0
    %3388 = vmatpush1.xpose.msra.mxu0 0.0
    %3389 = vmatprep.subr.mxu0 0.0
    %3390 = vmatpush1.xpose.msra.mxu0 0.0
    %3391 = vmatprep.subr.mxu0 0.0
    %3392 = vmatpush1.xpose.msra.mxu0 0.0
    %3393 = vmatprep.subr.mxu0 0.0
    %3394 = vmatpush1.xpose.msra.mxu0 0.0
    %3395 = vmatprep.subr.mxu0 0.0
    %3396 = vmatpush1.xpose.msra.mxu0 0.0
    %3397 = vmatprep.subr.mxu0 0.0
    %3398 = vmatpush1.xpose.msra.mxu0 0.0
    %3399 = vmatprep.mubr.f32.mxu0 0.0
    %v3400 = vand.u32 %v3249, 4294901760
    %3401 = vmatmul.mubr.f32.gmra.mrb[0].mxu0 %v3400
    %v3402 = vpop.f32.mrb[0].mxu0
    %v3403 = vadd.f32 %v3327, %v3402
    %v3404 = vpop.f32.mrb[0].mxu0
    %3405 = vdwg.mxu0
    %3406 = vmatprep.subr.mxu0 0.0
    %v3407 = vand.u32 %v3252, 4294901760
    %v3408 = vsub.f32 %v3252, %v3407
    %3409 = vmatpush1.xpose.msra.mxu0 %v3408
    %3410 = vmatprep.subr.mxu0 0.0
    %3411 = vmatpush1.xpose.msra.mxu0 0.0
    %3412 = vmatprep.subr.mxu0 0.0
    %3413 = vmatpush1.xpose.msra.mxu0 0.0
    %3414 = vmatprep.subr.mxu0 0.0
    %3415 = vmatpush1.xpose.msra.mxu0 0.0
    %3416 = vmatprep.subr.mxu0 0.0
    %3417 = vmatpush1.xpose.msra.mxu0 0.0
    %3418 = vmatprep.subr.mxu0 0.0
    %3419 = vmatpush1.xpose.msra.mxu0 0.0
    %3420 = vmatprep.subr.mxu0 0.0
    %3421 = vmatpush1.xpose.msra.mxu0 0.0
    %3422 = vmatprep.subr.mxu0 0.0
    %3423 = vmatpush1.xpose.msra.mxu0 0.0
    %3424 = vmatprep.subr.mxu0 0.0
    %3425 = vmatpush1.xpose.msra.mxu0 0.0
    %3426 = vmatprep.subr.mxu0 0.0
    %3427 = vmatpush1.xpose.msra.mxu0 0.0
    %3428 = vmatprep.subr.mxu0 0.0
    %3429 = vmatpush1.xpose.msra.mxu0 0.0
    %3430 = vmatprep.subr.mxu0 0.0
    %3431 = vmatpush1.xpose.msra.mxu0 0.0
    %3432 = vmatprep.subr.mxu0 0.0
    %3433 = vmatpush1.xpose.msra.mxu0 0.0
    %3434 = vmatprep.subr.mxu0 0.0
    %3435 = vmatpush1.xpose.msra.mxu0 0.0
    %3436 = vmatprep.subr.mxu0 0.0
    %3437 = vmatpush1.xpose.msra.mxu0 0.0
    %3438 = vmatprep.subr.mxu0 0.0
    %3439 = vmatpush1.xpose.msra.mxu0 0.0
    %3440 = vmatprep.subr.mxu0 0.0
    %3441 = vmatpush1.xpose.msra.mxu0 0.0
    %3442 = vmatprep.subr.mxu0 0.0
    %3443 = vmatpush1.xpose.msra.mxu0 0.0
    %3444 = vmatprep.subr.mxu0 0.0
    %3445 = vmatpush1.xpose.msra.mxu0 0.0
    %3446 = vmatprep.subr.mxu0 0.0
    %3447 = vmatpush1.xpose.msra.mxu0 0.0
    %3448 = vmatprep.subr.mxu0 0.0
    %3449 = vmatpush1.xpose.msra.mxu0 0.0
    %3450 = vmatprep.subr.mxu0 0.0
    %3451 = vmatpush1.xpose.msra.mxu0 0.0
    %3452 = vmatprep.subr.mxu0 0.0
    %3453 = vmatpush1.xpose.msra.mxu0 0.0
    %3454 = vmatprep.subr.mxu0 0.0
    %3455 = vmatpush1.xpose.msra.mxu0 0.0
    %3456 = vmatprep.subr.mxu0 0.0
    %3457 = vmatpush1.xpose.msra.mxu0 0.0
    %3458 = vmatprep.subr.mxu0 0.0
    %3459 = vmatpush1.xpose.msra.mxu0 0.0
    %3460 = vmatprep.subr.mxu0 0.0
    %3461 = vmatpush1.xpose.msra.mxu0 0.0
    %3462 = vmatprep.subr.mxu0 0.0
    %3463 = vmatpush1.xpose.msra.mxu0 0.0
    %3464 = vmatprep.subr.mxu0 0.0
    %3465 = vmatpush1.xpose.msra.mxu0 0.0
    %3466 = vmatprep.subr.mxu0 0.0
    %3467 = vmatpush1.xpose.msra.mxu0 0.0
    %3468 = vmatprep.subr.mxu0 0.0
    %3469 = vmatpush1.xpose.msra.mxu0 0.0
    %3470 = vmatprep.subr.mxu0 0.0
    %3471 = vmatpush1.xpose.msra.mxu0 0.0
    %3472 = vmatprep.mubr.f32.mxu0 0.0
    %v3473 = vand.u32 %v3249, 4294901760
    %v3474 = vsub.f32 %v3249, %v3473
    %3475 = vmatmul.mubr.f32.gmra.mrb[0].mxu0 %v3474
    %v3476 = vpop.f32.mrb[0].mxu0
    %v3477 = vadd.f32 %v3403, %v3476
    %v3478 = vpop.f32.mrb[0].mxu0
    %3479 = vdwg.mxu0
    %3480 = vmatprep.subr.mxu0 0.0
    %v3481 = vand.u32 %v3252, 4294901760
    %3482 = vmatpush1.xpose.msra.mxu0 %v3481
    %3483 = vmatprep.subr.mxu0 0.0
    %3484 = vmatpush1.xpose.msra.mxu0 0.0
    %3485 = vmatprep.subr.mxu0 0.0
    %3486 = vmatpush1.xpose.msra.mxu0 0.0
    %3487 = vmatprep.subr.mxu0 0.0
    %3488 = vmatpush1.xpose.msra.mxu0 0.0
    %3489 = vmatprep.subr.mxu0 0.0
    %3490 = vmatpush1.xpose.msra.mxu0 0.0
    %3491 = vmatprep.subr.mxu0 0.0
    %3492 = vmatpush1.xpose.msra.mxu0 0.0
    %3493 = vmatprep.subr.mxu0 0.0
    %3494 = vmatpush1.xpose.msra.mxu0 0.0
    %3495 = vmatprep.subr.mxu0 0.0
    %3496 = vmatpush1.xpose.msra.mxu0 0.0
    %3497 = vmatprep.subr.mxu0 0.0
    %3498 = vmatpush1.xpose.msra.mxu0 0.0
    %3499 = vmatprep.subr.mxu0 0.0
    %3500 = vmatpush1.xpose.msra.mxu0 0.0
    %3501 = vmatprep.subr.mxu0 0.0
    %3502 = vmatpush1.xpose.msra.mxu0 0.0
    %3503 = vmatprep.subr.mxu0 0.0
    %3504 = vmatpush1.xpose.msra.mxu0 0.0
    %3505 = vmatprep.subr.mxu0 0.0
    %3506 = vmatpush1.xpose.msra.mxu0 0.0
    %3507 = vmatprep.subr.mxu0 0.0
    %3508 = vmatpush1.xpose.msra.mxu0 0.0
    %3509 = vmatprep.subr.mxu0 0.0
    %3510 = vmatpush1.xpose.msra.mxu0 0.0
    %3511 = vmatprep.subr.mxu0 0.0
    %3512 = vmatpush1.xpose.msra.mxu0 0.0
    %3513 = vmatprep.subr.mxu0 0.0
    %3514 = vmatpush1.xpose.msra.mxu0 0.0
    %3515 = vmatprep.subr.mxu0 0.0
    %3516 = vmatpush1.xpose.msra.mxu0 0.0
    %3517 = vmatprep.subr.mxu0 0.0
    %3518 = vmatpush1.xpose.msra.mxu0 0.0
    %3519 = vmatprep.subr.mxu0 0.0
    %3520 = vmatpush1.xpose.msra.mxu0 0.0
    %3521 = vmatprep.subr.mxu0 0.0
    %3522 = vmatpush1.xpose.msra.mxu0 0.0
    %3523 = vmatprep.subr.mxu0 0.0
    %3524 = vmatpush1.xpose.msra.mxu0 0.0
    %3525 = vmatprep.subr.mxu0 0.0
    %3526 = vmatpush1.xpose.msra.mxu0 0.0
    %3527 = vmatprep.subr.mxu0 0.0
    %3528 = vmatpush1.xpose.msra.mxu0 0.0
    %3529 = vmatprep.subr.mxu0 0.0
    %3530 = vmatpush1.xpose.msra.mxu0 0.0
    %3531 = vmatprep.subr.mxu0 0.0
    %3532 = vmatpush1.xpose.msra.mxu0 0.0
    %3533 = vmatprep.subr.mxu0 0.0
    %3534 = vmatpush1.xpose.msra.mxu0 0.0
    %3535 = vmatprep.subr.mxu0 0.0
    %3536 = vmatpush1.xpose.msra.mxu0 0.0
    %3537 = vmatprep.subr.mxu0 0.0
    %3538 = vmatpush1.xpose.msra.mxu0 0.0
    %3539 = vmatprep.subr.mxu0 0.0
    %3540 = vmatpush1.xpose.msra.mxu0 0.0
    %3541 = vmatprep.subr.mxu0 0.0
    %3542 = vmatpush1.xpose.msra.mxu0 0.0
    %3543 = vmatprep.subr.mxu0 0.0
    %3544 = vmatpush1.xpose.msra.mxu0 0.0
    %3545 = vmatprep.mubr.f32.mxu0 0.0
    %v3546 = vand.u32 %v3249, 4294901760
    %v3547 = vsub.f32 %v3249, %v3546
    %v3548 = vand.u32 %v3547, 4294901760
    %3549 = vmatmul.mubr.f32.gmra.mrb[0].mxu0 %v3548
    %v3550 = vpop.f32.mrb[0].mxu0
    %v3551 = vadd.f32 %v3477, %v3550
    %v3552 = vpop.f32.mrb[0].mxu0
    %3553 = vdwg.mxu0
    %3554 = vmatprep.subr.mxu0 0.0
    %v3555 = vand.u32 %v3252, 4294901760
    %v3556 = vsub.f32 %v3252, %v3555
    %v3557 = vand.u32 %v3556, 4294901760
    %3558 = vmatpush1.xpose.msra.mxu0 %v3557
    %3559 = vmatprep.subr.mxu0 0.0
    %3560 = vmatpush1.xpose.msra.mxu0 0.0
    %3561 = vmatprep.subr.mxu0 0.0
    %3562 = vmatpush1.xpose.msra.mxu0 0.0
    %3563 = vmatprep.subr.mxu0 0.0
    %3564 = vmatpush1.xpose.msra.mxu0 0.0
    %3565 = vmatprep.subr.mxu0 0.0
    %3566 = vmatpush1.xpose.msra.mxu0 0.0
    %3567 = vmatprep.subr.mxu0 0.0
    %3568 = vmatpush1.xpose.msra.mxu0 0.0
    %3569 = vmatprep.subr.mxu0 0.0
    %3570 = vmatpush1.xpose.msra.mxu0 0.0
    %3571 = vmatprep.subr.mxu0 0.0
    %3572 = vmatpush1.xpose.msra.mxu0 0.0
    %3573 = vmatprep.subr.mxu0 0.0
    %3574 = vmatpush1.xpose.msra.mxu0 0.0
    %3575 = vmatprep.subr.mxu0 0.0
    %3576 = vmatpush1.xpose.msra.mxu0 0.0
    %3577 = vmatprep.subr.mxu0 0.0
    %3578 = vmatpush1.xpose.msra.mxu0 0.0
    %3579 = vmatprep.subr.mxu0 0.0
    %3580 = vmatpush1.xpose.msra.mxu0 0.0
    %3581 = vmatprep.subr.mxu0 0.0
    %3582 = vmatpush1.xpose.msra.mxu0 0.0
    %3583 = vmatprep.subr.mxu0 0.0
    %3584 = vmatpush1.xpose.msra.mxu0 0.0
    %3585 = vmatprep.subr.mxu0 0.0
    %3586 = vmatpush1.xpose.msra.mxu0 0.0
    %3587 = vmatprep.subr.mxu0 0.0
    %3588 = vmatpush1.xpose.msra.mxu0 0.0
    %3589 = vmatprep.subr.mxu0 0.0
    %3590 = vmatpush1.xpose.msra.mxu0 0.0
    %3591 = vmatprep.subr.mxu0 0.0
    %3592 = vmatpush1.xpose.msra.mxu0 0.0
    %3593 = vmatprep.subr.mxu0 0.0
    %3594 = vmatpush1.xpose.msra.mxu0 0.0
    %3595 = vmatprep.subr.mxu0 0.0
    %3596 = vmatpush1.xpose.msra.mxu0 0.0
    %3597 = vmatprep.subr.mxu0 0.0
    %3598 = vmatpush1.xpose.msra.mxu0 0.0
    %3599 = vmatprep.subr.mxu0 0.0
    %3600 = vmatpush1.xpose.msra.mxu0 0.0
    %3601 = vmatprep.subr.mxu0 0.0
    %3602 = vmatpush1.xpose.msra.mxu0 0.0
    %3603 = vmatprep.subr.mxu0 0.0
    %3604 = vmatpush1.xpose.msra.mxu0 0.0
    %3605 = vmatprep.subr.mxu0 0.0
    %3606 = vmatpush1.xpose.msra.mxu0 0.0
    %3607 = vmatprep.subr.mxu0 0.0
    %3608 = vmatpush1.xpose.msra.mxu0 0.0
    %3609 = vmatprep.subr.mxu0 0.0
    %3610 = vmatpush1.xpose.msra.mxu0 0.0
    %3611 = vmatprep.subr.mxu0 0.0
    %3612 = vmatpush1.xpose.msra.mxu0 0.0
    %3613 = vmatprep.subr.mxu0 0.0
    %3614 = vmatpush1.xpose.msra.mxu0 0.0
    %3615 = vmatprep.subr.mxu0 0.0
    %3616 = vmatpush1.xpose.msra.mxu0 0.0
    %3617 = vmatprep.subr.mxu0 0.0
    %3618 = vmatpush1.xpose.msra.mxu0 0.0
    %3619 = vmatprep.subr.mxu0 0.0
    %3620 = vmatpush1.xpose.msra.mxu0 0.0
    %3621 = vmatprep.mubr.f32.mxu0 0.0
    %v3622 = vand.u32 %v3249, 4294901760
    %3623 = vmatmul.mubr.f32.gmra.mrb[0].mxu0 %v3622
    %v3624 = vpop.f32.mrb[0].mxu0
    %v3625 = vadd.f32 %v3551, %v3624
    %v3626 = vpop.f32.mrb[0].mxu0
    %3627 = vdwg.mxu0
    %3628 = vmatprep.subr.mxu0 0.0
    %v3629 = vand.u32 %v3252, 4294901760
    %3630 = vmatpush1.xpose.msra.mxu0 %v3629
    %3631 = vmatprep.subr.mxu0 0.0
    %3632 = vmatpush1.xpose.msra.mxu0 0.0
    %3633 = vmatprep.subr.mxu0 0.0
    %3634 = vmatpush1.xpose.msra.mxu0 0.0
    %3635 = vmatprep.subr.mxu0 0.0
    %3636 = vmatpush1.xpose.msra.mxu0 0.0
    %3637 = vmatprep.subr.mxu0 0.0
    %3638 = vmatpush1.xpose.msra.mxu0 0.0
    %3639 = vmatprep.subr.mxu0 0.0
    %3640 = vmatpush1.xpose.msra.mxu0 0.0
    %3641 = vmatprep.subr.mxu0 0.0
    %3642 = vmatpush1.xpose.msra.mxu0 0.0
    %3643 = vmatprep.subr.mxu0 0.0
    %3644 = vmatpush1.xpose.msra.mxu0 0.0
    %3645 = vmatprep.subr.mxu0 0.0
    %3646 = vmatpush1.xpose.msra.mxu0 0.0
    %3647 = vmatprep.subr.mxu0 0.0
    %3648 = vmatpush1.xpose.msra.mxu0 0.0
    %3649 = vmatprep.subr.mxu0 0.0
    %3650 = vmatpush1.xpose.msra.mxu0 0.0
    %3651 = vmatprep.subr.mxu0 0.0
    %3652 = vmatpush1.xpose.msra.mxu0 0.0
    %3653 = vmatprep.subr.mxu0 0.0
    %3654 = vmatpush1.xpose.msra.mxu0 0.0
    %3655 = vmatprep.subr.mxu0 0.0
    %3656 = vmatpush1.xpose.msra.mxu0 0.0
    %3657 = vmatprep.subr.mxu0 0.0
    %3658 = vmatpush1.xpose.msra.mxu0 0.0
    %3659 = vmatprep.subr.mxu0 0.0
    %3660 = vmatpush1.xpose.msra.mxu0 0.0
    %3661 = vmatprep.subr.mxu0 0.0
    %3662 = vmatpush1.xpose.msra.mxu0 0.0
    %3663 = vmatprep.subr.mxu0 0.0
    %3664 = vmatpush1.xpose.msra.mxu0 0.0
    %3665 = vmatprep.subr.mxu0 0.0
    %3666 = vmatpush1.xpose.msra.mxu0 0.0
    %3667 = vmatprep.subr.mxu0 0.0
    %3668 = vmatpush1.xpose.msra.mxu0 0.0
    %3669 = vmatprep.subr.mxu0 0.0
    %3670 = vmatpush1.xpose.msra.mxu0 0.0
    %3671 = vmatprep.subr.mxu0 0.0
    %3672 = vmatpush1.xpose.msra.mxu0 0.0
    %3673 = vmatprep.subr.mxu0 0.0
    %3674 = vmatpush1.xpose.msra.mxu0 0.0
    %3675 = vmatprep.subr.mxu0 0.0
    %3676 = vmatpush1.xpose.msra.mxu0 0.0
    %3677 = vmatprep.subr.mxu0 0.0
    %3678 = vmatpush1.xpose.msra.mxu0 0.0
    %3679 = vmatprep.subr.mxu0 0.0
    %3680 = vmatpush1.xpose.msra.mxu0 0.0
    %3681 = vmatprep.subr.mxu0 0.0
    %3682 = vmatpush1.xpose.msra.mxu0 0.0
    %3683 = vmatprep.subr.mxu0 0.0
    %3684 = vmatpush1.xpose.msra.mxu0 0.0
    %3685 = vmatprep.subr.mxu0 0.0
    %3686 = vmatpush1.xpose.msra.mxu0 0.0
    %3687 = vmatprep.subr.mxu0 0.0
    %3688 = vmatpush1.xpose.msra.mxu0 0.0
    %3689 = vmatprep.subr.mxu0 0.0
    %3690 = vmatpush1.xpose.msra.mxu0 0.0
    %3691 = vmatprep.subr.mxu0 0.0
    %3692 = vmatpush1.xpose.msra.mxu0 0.0
    %3693 = vmatprep.mubr.f32.mxu0 0.0
    %v3694 = vand.u32 %v3249, 4294901760
    %3695 = vmatmul.mubr.f32.gmra.mrb[0].mxu0 %v3694
    %v3696 = vpop.f32.mrb[0].mxu0
    %v3697 = vadd.f32 %v3625, %v3696
    %v3698 = vpop.f32.mrb[0].mxu0
    %3699 = vdwg.mxu0
    %v3700 = vmul.f32 %v17, %v17
    %v3701 = vmul.f32 %v18, %v18
    %v3702 = vmul.f32 %v19, %v19
    %v3703 = vmul.f32 %v20, %v20
    %v3704 = vmul.f32 %v21, %v21
    %v3705 = vmul.f32 %v22, %v22
    %v3706 = vmul.f32 %v23, %v23
    %v3707 = vmul.f32 %v24, %v24
    %v3709 = vsel %vm26, 1.0, 0
    %v3712 = vsel %vm26, %v3700, 0
    %3714 = vmatprep.subr.mxu0 0.0
    %v3715 = vand.u32 %v3712, 4294901760
    %3716 = vmatpush1.xpose.msra.mxu0 %v3715
    %3717 = vmatprep.subr.mxu0 0.0
    %3718 = vmatpush1.xpose.msra.mxu0 0.0
    %3719 = vmatprep.subr.mxu0 0.0
    %3720 = vmatpush1.xpose.msra.mxu0 0.0
    %3721 = vmatprep.subr.mxu0 0.0
    %3722 = vmatpush1.xpose.msra.mxu0 0.0
    %3723 = vmatprep.subr.mxu0 0.0
    %3724 = vmatpush1.xpose.msra.mxu0 0.0
    %3725 = vmatprep.subr.mxu0 0.0
    %3726 = vmatpush1.xpose.msra.mxu0 0.0
    %3727 = vmatprep.subr.mxu0 0.0
    %3728 = vmatpush1.xpose.msra.mxu0 0.0
    %3729 = vmatprep.subr.mxu0 0.0
    %3730 = vmatpush1.xpose.msra.mxu0 0.0
    %3731 = vmatprep.subr.mxu0 0.0
    %3732 = vmatpush1.xpose.msra.mxu0 0.0
    %3733 = vmatprep.subr.mxu0 0.0
    %3734 = vmatpush1.xpose.msra.mxu0 0.0
    %3735 = vmatprep.subr.mxu0 0.0
    %3736 = vmatpush1.xpose.msra.mxu0 0.0
    %3737 = vmatprep.subr.mxu0 0.0
    %3738 = vmatpush1.xpose.msra.mxu0 0.0
    %3739 = vmatprep.subr.mxu0 0.0
    %3740 = vmatpush1.xpose.msra.mxu0 0.0
    %3741 = vmatprep.subr.mxu0 0.0
    %3742 = vmatpush1.xpose.msra.mxu0 0.0
    %3743 = vmatprep.subr.mxu0 0.0
    %3744 = vmatpush1.xpose.msra.mxu0 0.0
    %3745 = vmatprep.subr.mxu0 0.0
    %3746 = vmatpush1.xpose.msra.mxu0 0.0
    %3747 = vmatprep.subr.mxu0 0.0
    %3748 = vmatpush1.xpose.msra.mxu0 0.0
    %3749 = vmatprep.subr.mxu0 0.0
    %3750 = vmatpush1.xpose.msra.mxu0 0.0
    %3751 = vmatprep.subr.mxu0 0.0
    %3752 = vmatpush1.xpose.msra.mxu0 0.0
    %3753 = vmatprep.subr.mxu0 0.0
    %3754 = vmatpush1.xpose.msra.mxu0 0.0
    %3755 = vmatprep.subr.mxu0 0.0
    %3756 = vmatpush1.xpose.msra.mxu0 0.0
    %3757 = vmatprep.subr.mxu0 0.0
    %3758 = vmatpush1.xpose.msra.mxu0 0.0
    %3759 = vmatprep.subr.mxu0 0.0
    %3760 = vmatpush1.xpose.msra.mxu0 0.0
    %3761 = vmatprep.subr.mxu0 0.0
    %3762 = vmatpush1.xpose.msra.mxu0 0.0
    %3763 = vmatprep.subr.mxu0 0.0
    %3764 = vmatpush1.xpose.msra.mxu0 0.0
    %3765 = vmatprep.subr.mxu0 0.0
    %3766 = vmatpush1.xpose.msra.mxu0 0.0
    %3767 = vmatprep.subr.mxu0 0.0
    %3768 = vmatpush1.xpose.msra.mxu0 0.0
    %3769 = vmatprep.subr.mxu0 0.0
    %3770 = vmatpush1.xpose.msra.mxu0 0.0
    %3771 = vmatprep.subr.mxu0 0.0
    %3772 = vmatpush1.xpose.msra.mxu0 0.0
    %3773 = vmatprep.subr.mxu0 0.0
    %3774 = vmatpush1.xpose.msra.mxu0 0.0
    %3775 = vmatprep.subr.mxu0 0.0
    %3776 = vmatpush1.xpose.msra.mxu0 0.0
    %3777 = vmatprep.subr.mxu0 0.0
    %3778 = vmatpush1.xpose.msra.mxu0 0.0
    %3779 = vmatprep.mubr.f32.mxu0 0.0
    %v3780 = vand.u32 %v3709, 4294901760
    %v3781 = vsub.f32 %v3709, %v3780
    %v3782 = vand.u32 %v3781, 4294901760
    %v3783 = vsub.f32 %v3781, %v3782
    %v3784 = vand.u32 %v3783, 4294901760
    %3785 = vmatmul.mubr.f32.gmra.mrb[0].mxu0 %v3784
    %v3786 = vpop.f32.mrb[0].mxu0
    %v3787 = vadd.f32 0.0, %v3786
    %v3788 = vpop.f32.mrb[0].mxu0
    %3789 = vdwg.mxu0
    %3790 = vmatprep.subr.mxu0 0.0
    %v3791 = vand.u32 %v3712, 4294901760
    %v3792 = vsub.f32 %v3712, %v3791
    %v3793 = vand.u32 %v3792, 4294901760
    %v3794 = vsub.f32 %v3792, %v3793
    %v3795 = vand.u32 %v3794, 4294901760
    %3796 = vmatpush1.xpose.msra.mxu0 %v3795
    %3797 = vmatprep.subr.mxu0 0.0
    %3798 = vmatpush1.xpose.msra.mxu0 0.0
    %3799 = vmatprep.subr.mxu0 0.0
    %3800 = vmatpush1.xpose.msra.mxu0 0.0
    %3801 = vmatprep.subr.mxu0 0.0
    %3802 = vmatpush1.xpose.msra.mxu0 0.0
    %3803 = vmatprep.subr.mxu0 0.0
    %3804 = vmatpush1.xpose.msra.mxu0 0.0
    %3805 = vmatprep.subr.mxu0 0.0
    %3806 = vmatpush1.xpose.msra.mxu0 0.0
    %3807 = vmatprep.subr.mxu0 0.0
    %3808 = vmatpush1.xpose.msra.mxu0 0.0
    %3809 = vmatprep.subr.mxu0 0.0
    %3810 = vmatpush1.xpose.msra.mxu0 0.0
    %3811 = vmatprep.subr.mxu0 0.0
    %3812 = vmatpush1.xpose.msra.mxu0 0.0
    %3813 = vmatprep.subr.mxu0 0.0
    %3814 = vmatpush1.xpose.msra.mxu0 0.0
    %3815 = vmatprep.subr.mxu0 0.0
    %3816 = vmatpush1.xpose.msra.mxu0 0.0
    %3817 = vmatprep.subr.mxu0 0.0
    %3818 = vmatpush1.xpose.msra.mxu0 0.0
    %3819 = vmatprep.subr.mxu0 0.0
    %3820 = vmatpush1.xpose.msra.mxu0 0.0
    %3821 = vmatprep.subr.mxu0 0.0
    %3822 = vmatpush1.xpose.msra.mxu0 0.0
    %3823 = vmatprep.subr.mxu0 0.0
    %3824 = vmatpush1.xpose.msra.mxu0 0.0
    %3825 = vmatprep.subr.mxu0 0.0
    %3826 = vmatpush1.xpose.msra.mxu0 0.0
    %3827 = vmatprep.subr.mxu0 0.0
    %3828 = vmatpush1.xpose.msra.mxu0 0.0
    %3829 = vmatprep.subr.mxu0 0.0
    %3830 = vmatpush1.xpose.msra.mxu0 0.0
    %3831 = vmatprep.subr.mxu0 0.0
    %3832 = vmatpush1.xpose.msra.mxu0 0.0
    %3833 = vmatprep.subr.mxu0 0.0
    %3834 = vmatpush1.xpose.msra.mxu0 0.0
    %3835 = vmatprep.subr.mxu0 0.0
    %3836 = vmatpush1.xpose.msra.mxu0 0.0
    %3837 = vmatprep.subr.mxu0 0.0
    %3838 = vmatpush1.xpose.msra.mxu0 0.0
    %3839 = vmatprep.subr.mxu0 0.0
    %3840 = vmatpush1.xpose.msra.mxu0 0.0
    %3841 = vmatprep.subr.mxu0 0.0
    %3842 = vmatpush1.xpose.msra.mxu0 0.0
    %3843 = vmatprep.subr.mxu0 0.0
    %3844 = vmatpush1.xpose.msra.mxu0 0.0
    %3845 = vmatprep.subr.mxu0 0.0
    %3846 = vmatpush1.xpose.msra.mxu0 0.0
    %3847 = vmatprep.subr.mxu0 0.0
    %3848 = vmatpush1.xpose.msra.mxu0 0.0
    %3849 = vmatprep.subr.mxu0 0.0
    %3850 = vmatpush1.xpose.msra.mxu0 0.0
    %3851 = vmatprep.subr.mxu0 0.0
    %3852 = vmatpush1.xpose.msra.mxu0 0.0
    %3853 = vmatprep.subr.mxu0 0.0
    %3854 = vmatpush1.xpose.msra.mxu0 0.0
    %3855 = vmatprep.subr.mxu0 0.0
    %3856 = vmatpush1.xpose.msra.mxu0 0.0
    %3857 = vmatprep.subr.mxu0 0.0
    %3858 = vmatpush1.xpose.msra.mxu0 0.0
    %3859 = vmatprep.mubr.f32.mxu0 0.0
    %v3860 = vand.u32 %v3709, 4294901760
    %3861 = vmatmul.mubr.f32.gmra.mrb[0].mxu0 %v3860
    %v3862 = vpop.f32.mrb[0].mxu0
    %v3863 = vadd.f32 %v3787, %v3862
    %v3864 = vpop.f32.mrb[0].mxu0
    %3865 = vdwg.mxu0
    %3866 = vmatprep.subr.mxu0 0.0
    %v3867 = vand.u32 %v3712, 4294901760
    %v3868 = vsub.f32 %v3712, %v3867
    %3869 = vmatpush1.xpose.msra.mxu0 %v3868
    %3870 = vmatprep.subr.mxu0 0.0
    %3871 = vmatpush1.xpose.msra.mxu0 0.0
    %3872 = vmatprep.subr.mxu0 0.0
    %3873 = vmatpush1.xpose.msra.mxu0 0.0
    %3874 = vmatprep.subr.mxu0 0.0
    %3875 = vmatpush1.xpose.msra.mxu0 0.0
    %3876 = vmatprep.subr.mxu0 0.0
    %3877 = vmatpush1.xpose.msra.mxu0 0.0
    %3878 = vmatprep.subr.mxu0 0.0
    %3879 = vmatpush1.xpose.msra.mxu0 0.0
    %3880 = vmatprep.subr.mxu0 0.0
    %3881 = vmatpush1.xpose.msra.mxu0 0.0
    %3882 = vmatprep.subr.mxu0 0.0
    %3883 = vmatpush1.xpose.msra.mxu0 0.0
    %3884 = vmatprep.subr.mxu0 0.0
    %3885 = vmatpush1.xpose.msra.mxu0 0.0
    %3886 = vmatprep.subr.mxu0 0.0
    %3887 = vmatpush1.xpose.msra.mxu0 0.0
    %3888 = vmatprep.subr.mxu0 0.0
    %3889 = vmatpush1.xpose.msra.mxu0 0.0
    %3890 = vmatprep.subr.mxu0 0.0
    %3891 = vmatpush1.xpose.msra.mxu0 0.0
    %3892 = vmatprep.subr.mxu0 0.0
    %3893 = vmatpush1.xpose.msra.mxu0 0.0
    %3894 = vmatprep.subr.mxu0 0.0
    %3895 = vmatpush1.xpose.msra.mxu0 0.0
    %3896 = vmatprep.subr.mxu0 0.0
    %3897 = vmatpush1.xpose.msra.mxu0 0.0
    %3898 = vmatprep.subr.mxu0 0.0
    %3899 = vmatpush1.xpose.msra.mxu0 0.0
    %3900 = vmatprep.subr.mxu0 0.0
    %3901 = vmatpush1.xpose.msra.mxu0 0.0
    %3902 = vmatprep.subr.mxu0 0.0
    %3903 = vmatpush1.xpose.msra.mxu0 0.0
    %3904 = vmatprep.subr.mxu0 0.0
    %3905 = vmatpush1.xpose.msra.mxu0 0.0
    %3906 = vmatprep.subr.mxu0 0.0
    %3907 = vmatpush1.xpose.msra.mxu0 0.0
    %3908 = vmatprep.subr.mxu0 0.0
    %3909 = vmatpush1.xpose.msra.mxu0 0.0
    %3910 = vmatprep.subr.mxu0 0.0
    %3911 = vmatpush1.xpose.msra.mxu0 0.0
    %3912 = vmatprep.subr.mxu0 0.0
    %3913 = vmatpush1.xpose.msra.mxu0 0.0
    %3914 = vmatprep.subr.mxu0 0.0
    %3915 = vmatpush1.xpose.msra.mxu0 0.0
    %3916 = vmatprep.subr.mxu0 0.0
    %3917 = vmatpush1.xpose.msra.mxu0 0.0
    %3918 = vmatprep.subr.mxu0 0.0
    %3919 = vmatpush1.xpose.msra.mxu0 0.0
    %3920 = vmatprep.subr.mxu0 0.0
    %3921 = vmatpush1.xpose.msra.mxu0 0.0
    %3922 = vmatprep.subr.mxu0 0.0
    %3923 = vmatpush1.xpose.msra.mxu0 0.0
    %3924 = vmatprep.subr.mxu0 0.0
    %3925 = vmatpush1.xpose.msra.mxu0 0.0
    %3926 = vmatprep.subr.mxu0 0.0
    %3927 = vmatpush1.xpose.msra.mxu0 0.0
    %3928 = vmatprep.subr.mxu0 0.0
    %3929 = vmatpush1.xpose.msra.mxu0 0.0
    %3930 = vmatprep.subr.mxu0 0.0
    %3931 = vmatpush1.xpose.msra.mxu0 0.0
    %3932 = vmatprep.mubr.f32.mxu0 0.0
    %v3933 = vand.u32 %v3709, 4294901760
    %v3934 = vsub.f32 %v3709, %v3933
    %3935 = vmatmul.mubr.f32.gmra.mrb[0].mxu0 %v3934
    %v3936 = vpop.f32.mrb[0].mxu0
    %v3937 = vadd.f32 %v3863, %v3936
    %v3938 = vpop.f32.mrb[0].mxu0
    %3939 = vdwg.mxu0
    %3940 = vmatprep.subr.mxu0 0.0
    %v3941 = vand.u32 %v3712, 4294901760
    %3942 = vmatpush1.xpose.msra.mxu0 %v3941
    %3943 = vmatprep.subr.mxu0 0.0
    %3944 = vmatpush1.xpose.msra.mxu0 0.0
    %3945 = vmatprep.subr.mxu0 0.0
    %3946 = vmatpush1.xpose.msra.mxu0 0.0
    %3947 = vmatprep.subr.mxu0 0.0
    %3948 = vmatpush1.xpose.msra.mxu0 0.0
    %3949 = vmatprep.subr.mxu0 0.0
    %3950 = vmatpush1.xpose.msra.mxu0 0.0
    %3951 = vmatprep.subr.mxu0 0.0
    %3952 = vmatpush1.xpose.msra.mxu0 0.0
    %3953 = vmatprep.subr.mxu0 0.0
    %3954 = vmatpush1.xpose.msra.mxu0 0.0
    %3955 = vmatprep.subr.mxu0 0.0
    %3956 = vmatpush1.xpose.msra.mxu0 0.0
    %3957 = vmatprep.subr.mxu0 0.0
    %3958 = vmatpush1.xpose.msra.mxu0 0.0
    %3959 = vmatprep.subr.mxu0 0.0
    %3960 = vmatpush1.xpose.msra.mxu0 0.0
    %3961 = vmatprep.subr.mxu0 0.0
    %3962 = vmatpush1.xpose.msra.mxu0 0.0
    %3963 = vmatprep.subr.mxu0 0.0
    %3964 = vmatpush1.xpose.msra.mxu0 0.0
    %3965 = vmatprep.subr.mxu0 0.0
    %3966 = vmatpush1.xpose.msra.mxu0 0.0
    %3967 = vmatprep.subr.mxu0 0.0
    %3968 = vmatpush1.xpose.msra.mxu0 0.0
    %3969 = vmatprep.subr.mxu0 0.0
    %3970 = vmatpush1.xpose.msra.mxu0 0.0
    %3971 = vmatprep.subr.mxu0 0.0
    %3972 = vmatpush1.xpose.msra.mxu0 0.0
    %3973 = vmatprep.subr.mxu0 0.0
    %3974 = vmatpush1.xpose.msra.mxu0 0.0
    %3975 = vmatprep.subr.mxu0 0.0
    %3976 = vmatpush1.xpose.msra.mxu0 0.0
    %3977 = vmatprep.subr.mxu0 0.0
    %3978 = vmatpush1.xpose.msra.mxu0 0.0
    %3979 = vmatprep.subr.mxu0 0.0
    %3980 = vmatpush1.xpose.msra.mxu0 0.0
    %3981 = vmatprep.subr.mxu0 0.0
    %3982 = vmatpush1.xpose.msra.mxu0 0.0
    %3983 = vmatprep.subr.mxu0 0.0
    %3984 = vmatpush1.xpose.msra.mxu0 0.0
    %3985 = vmatprep.subr.mxu0 0.0
    %3986 = vmatpush1.xpose.msra.mxu0 0.0
    %3987 = vmatprep.subr.mxu0 0.0
    %3988 = vmatpush1.xpose.msra.mxu0 0.0
    %3989 = vmatprep.subr.mxu0 0.0
    %3990 = vmatpush1.xpose.msra.mxu0 0.0
    %3991 = vmatprep.subr.mxu0 0.0
    %3992 = vmatpush1.xpose.msra.mxu0 0.0
    %3993 = vmatprep.subr.mxu0 0.0
    %3994 = vmatpush1.xpose.msra.mxu0 0.0
    %3995 = vmatprep.subr.mxu0 0.0
    %3996 = vmatpush1.xpose.msra.mxu0 0.0
    %3997 = vmatprep.subr.mxu0 0.0
    %3998 = vmatpush1.xpose.msra.mxu0 0.0
    %3999 = vmatprep.subr.mxu0 0.0
    %4000 = vmatpush1.xpose.msra.mxu0 0.0
    %4001 = vmatprep.subr.mxu0 0.0
    %4002 = vmatpush1.xpose.msra.mxu0 0.0
    %4003 = vmatprep.subr.mxu0 0.0
    %4004 = vmatpush1.xpose.msra.mxu0 0.0
    %4005 = vmatprep.mubr.f32.mxu0 0.0
    %v4006 = vand.u32 %v3709, 4294901760
    %v4007 = vsub.f32 %v3709, %v4006
    %v4008 = vand.u32 %v4007, 4294901760
    %4009 = vmatmul.mubr.f32.gmra.mrb[0].mxu0 %v4008
    %v4010 = vpop.f32.mrb[0].mxu0
    %v4011 = vadd.f32 %v3937, %v4010
    %v4012 = vpop.f32.mrb[0].mxu0
    %4013 = vdwg.mxu0
    %4014 = vmatprep.subr.mxu0 0.0
    %v4015 = vand.u32 %v3712, 4294901760
    %v4016 = vsub.f32 %v3712, %v4015
    %v4017 = vand.u32 %v4016, 4294901760
    %4018 = vmatpush1.xpose.msra.mxu0 %v4017
    %4019 = vmatprep.subr.mxu0 0.0
    %4020 = vmatpush1.xpose.msra.mxu0 0.0
    %4021 = vmatprep.subr.mxu0 0.0
    %4022 = vmatpush1.xpose.msra.mxu0 0.0
    %4023 = vmatprep.subr.mxu0 0.0
    %4024 = vmatpush1.xpose.msra.mxu0 0.0
    %4025 = vmatprep.subr.mxu0 0.0
    %4026 = vmatpush1.xpose.msra.mxu0 0.0
    %4027 = vmatprep.subr.mxu0 0.0
    %4028 = vmatpush1.xpose.msra.mxu0 0.0
    %4029 = vmatprep.subr.mxu0 0.0
    %4030 = vmatpush1.xpose.msra.mxu0 0.0
    %4031 = vmatprep.subr.mxu0 0.0
    %4032 = vmatpush1.xpose.msra.mxu0 0.0
    %4033 = vmatprep.subr.mxu0 0.0
    %4034 = vmatpush1.xpose.msra.mxu0 0.0
    %4035 = vmatprep.subr.mxu0 0.0
    %4036 = vmatpush1.xpose.msra.mxu0 0.0
    %4037 = vmatprep.subr.mxu0 0.0
    %4038 = vmatpush1.xpose.msra.mxu0 0.0
    %4039 = vmatprep.subr.mxu0 0.0
    %4040 = vmatpush1.xpose.msra.mxu0 0.0
    %4041 = vmatprep.subr.mxu0 0.0
    %4042 = vmatpush1.xpose.msra.mxu0 0.0
    %4043 = vmatprep.subr.mxu0 0.0
    %4044 = vmatpush1.xpose.msra.mxu0 0.0
    %4045 = vmatprep.subr.mxu0 0.0
    %4046 = vmatpush1.xpose.msra.mxu0 0.0
    %4047 = vmatprep.subr.mxu0 0.0
    %4048 = vmatpush1.xpose.msra.mxu0 0.0
    %4049 = vmatprep.subr.mxu0 0.0
    %4050 = vmatpush1.xpose.msra.mxu0 0.0
    %4051 = vmatprep.subr.mxu0 0.0
    %4052 = vmatpush1.xpose.msra.mxu0 0.0
    %4053 = vmatprep.subr.mxu0 0.0
    %4054 = vmatpush1.xpose.msra.mxu0 0.0
    %4055 = vmatprep.subr.mxu0 0.0
    %4056 = vmatpush1.xpose.msra.mxu0 0.0
    %4057 = vmatprep.subr.mxu0 0.0
    %4058 = vmatpush1.xpose.msra.mxu0 0.0
    %4059 = vmatprep.subr.mxu0 0.0
    %4060 = vmatpush1.xpose.msra.mxu0 0.0
    %4061 = vmatprep.subr.mxu0 0.0
    %4062 = vmatpush1.xpose.msra.mxu0 0.0
    %4063 = vmatprep.subr.mxu0 0.0
    %4064 = vmatpush1.xpose.msra.mxu0 0.0
    %4065 = vmatprep.subr.mxu0 0.0
    %4066 = vmatpush1.xpose.msra.mxu0 0.0
    %4067 = vmatprep.subr.mxu0 0.0
    %4068 = vmatpush1.xpose.msra.mxu0 0.0
    %4069 = vmatprep.subr.mxu0 0.0
    %4070 = vmatpush1.xpose.msra.mxu0 0.0
    %4071 = vmatprep.subr.mxu0 0.0
    %4072 = vmatpush1.xpose.msra.mxu0 0.0
    %4073 = vmatprep.subr.mxu0 0.0
    %4074 = vmatpush1.xpose.msra.mxu0 0.0
    %4075 = vmatprep.subr.mxu0 0.0
    %4076 = vmatpush1.xpose.msra.mxu0 0.0
    %4077 = vmatprep.subr.mxu0 0.0
    %4078 = vmatpush1.xpose.msra.mxu0 0.0
    %4079 = vmatprep.subr.mxu0 0.0
    %4080 = vmatpush1.xpose.msra.mxu0 0.0
    %4081 = vmatprep.mubr.f32.mxu0 0.0
    %v4082 = vand.u32 %v3709, 4294901760
    %4083 = vmatmul.mubr.f32.gmra.mrb[0].mxu0 %v4082
    %v4084 = vpop.f32.mrb[0].mxu0
    %v4085 = vadd.f32 %v4011, %v4084
    %v4086 = vpop.f32.mrb[0].mxu0
    %4087 = vdwg.mxu0
    %4088 = vmatprep.subr.mxu0 0.0
    %v4089 = vand.u32 %v3712, 4294901760
    %4090 = vmatpush1.xpose.msra.mxu0 %v4089
    %4091 = vmatprep.subr.mxu0 0.0
    %4092 = vmatpush1.xpose.msra.mxu0 0.0
    %4093 = vmatprep.subr.mxu0 0.0
    %4094 = vmatpush1.xpose.msra.mxu0 0.0
    %4095 = vmatprep.subr.mxu0 0.0
    %4096 = vmatpush1.xpose.msra.mxu0 0.0
    %4097 = vmatprep.subr.mxu0 0.0
    %4098 = vmatpush1.xpose.msra.mxu0 0.0
    %4099 = vmatprep.subr.mxu0 0.0
    %4100 = vmatpush1.xpose.msra.mxu0 0.0
    %4101 = vmatprep.subr.mxu0 0.0
    %4102 = vmatpush1.xpose.msra.mxu0 0.0
    %4103 = vmatprep.subr.mxu0 0.0
    %4104 = vmatpush1.xpose.msra.mxu0 0.0
    %4105 = vmatprep.subr.mxu0 0.0
    %4106 = vmatpush1.xpose.msra.mxu0 0.0
    %4107 = vmatprep.subr.mxu0 0.0
    %4108 = vmatpush1.xpose.msra.mxu0 0.0
    %4109 = vmatprep.subr.mxu0 0.0
    %4110 = vmatpush1.xpose.msra.mxu0 0.0
    %4111 = vmatprep.subr.mxu0 0.0
    %4112 = vmatpush1.xpose.msra.mxu0 0.0
    %4113 = vmatprep.subr.mxu0 0.0
    %4114 = vmatpush1.xpose.msra.mxu0 0.0
    %4115 = vmatprep.subr.mxu0 0.0
    %4116 = vmatpush1.xpose.msra.mxu0 0.0
    %4117 = vmatprep.subr.mxu0 0.0
    %4118 = vmatpush1.xpose.msra.mxu0 0.0
    %4119 = vmatprep.subr.mxu0 0.0
    %4120 = vmatpush1.xpose.msra.mxu0 0.0
    %4121 = vmatprep.subr.mxu0 0.0
    %4122 = vmatpush1.xpose.msra.mxu0 0.0
    %4123 = vmatprep.subr.mxu0 0.0
    %4124 = vmatpush1.xpose.msra.mxu0 0.0
    %4125 = vmatprep.subr.mxu0 0.0
    %4126 = vmatpush1.xpose.msra.mxu0 0.0
    %4127 = vmatprep.subr.mxu0 0.0
    %4128 = vmatpush1.xpose.msra.mxu0 0.0
    %4129 = vmatprep.subr.mxu0 0.0
    %4130 = vmatpush1.xpose.msra.mxu0 0.0
    %4131 = vmatprep.subr.mxu0 0.0
    %4132 = vmatpush1.xpose.msra.mxu0 0.0
    %4133 = vmatprep.subr.mxu0 0.0
    %4134 = vmatpush1.xpose.msra.mxu0 0.0
    %4135 = vmatprep.subr.mxu0 0.0
    %4136 = vmatpush1.xpose.msra.mxu0 0.0
    %4137 = vmatprep.subr.mxu0 0.0
    %4138 = vmatpush1.xpose.msra.mxu0 0.0
    %4139 = vmatprep.subr.mxu0 0.0
    %4140 = vmatpush1.xpose.msra.mxu0 0.0
    %4141 = vmatprep.subr.mxu0 0.0
    %4142 = vmatpush1.xpose.msra.mxu0 0.0
    %4143 = vmatprep.subr.mxu0 0.0
    %4144 = vmatpush1.xpose.msra.mxu0 0.0
    %4145 = vmatprep.subr.mxu0 0.0
    %4146 = vmatpush1.xpose.msra.mxu0 0.0
    %4147 = vmatprep.subr.mxu0 0.0
    %4148 = vmatpush1.xpose.msra.mxu0 0.0
    %4149 = vmatprep.subr.mxu0 0.0
    %4150 = vmatpush1.xpose.msra.mxu0 0.0
    %4151 = vmatprep.subr.mxu0 0.0
    %4152 = vmatpush1.xpose.msra.mxu0 0.0
    %4153 = vmatprep.mubr.f32.mxu0 0.0
    %v4154 = vand.u32 %v3709, 4294901760
    %4155 = vmatmul.mubr.f32.gmra.mrb[0].mxu0 %v4154
    %v4156 = vpop.f32.mrb[0].mxu0
    %v4157 = vadd.f32 %v4085, %v4156
    %v4158 = vpop.f32.mrb[0].mxu0
    %4159 = vdwg.mxu0
    %v4161 = vsel %vm26, %v3701, 0
    %4163 = vmatprep.subr.mxu0 0.0
    %v4164 = vand.u32 %v4161, 4294901760
    %4165 = vmatpush1.xpose.msra.mxu0 %v4164
    %4166 = vmatprep.subr.mxu0 0.0
    %4167 = vmatpush1.xpose.msra.mxu0 0.0
    %4168 = vmatprep.subr.mxu0 0.0
    %4169 = vmatpush1.xpose.msra.mxu0 0.0
    %4170 = vmatprep.subr.mxu0 0.0
    %4171 = vmatpush1.xpose.msra.mxu0 0.0
    %4172 = vmatprep.subr.mxu0 0.0
    %4173 = vmatpush1.xpose.msra.mxu0 0.0
    %4174 = vmatprep.subr.mxu0 0.0
    %4175 = vmatpush1.xpose.msra.mxu0 0.0
    %4176 = vmatprep.subr.mxu0 0.0
    %4177 = vmatpush1.xpose.msra.mxu0 0.0
    %4178 = vmatprep.subr.mxu0 0.0
    %4179 = vmatpush1.xpose.msra.mxu0 0.0
    %4180 = vmatprep.subr.mxu0 0.0
    %4181 = vmatpush1.xpose.msra.mxu0 0.0
    %4182 = vmatprep.subr.mxu0 0.0
    %4183 = vmatpush1.xpose.msra.mxu0 0.0
    %4184 = vmatprep.subr.mxu0 0.0
    %4185 = vmatpush1.xpose.msra.mxu0 0.0
    %4186 = vmatprep.subr.mxu0 0.0
    %4187 = vmatpush1.xpose.msra.mxu0 0.0
    %4188 = vmatprep.subr.mxu0 0.0
    %4189 = vmatpush1.xpose.msra.mxu0 0.0
    %4190 = vmatprep.subr.mxu0 0.0
    %4191 = vmatpush1.xpose.msra.mxu0 0.0
    %4192 = vmatprep.subr.mxu0 0.0
    %4193 = vmatpush1.xpose.msra.mxu0 0.0
    %4194 = vmatprep.subr.mxu0 0.0
    %4195 = vmatpush1.xpose.msra.mxu0 0.0
    %4196 = vmatprep.subr.mxu0 0.0
    %4197 = vmatpush1.xpose.msra.mxu0 0.0
    %4198 = vmatprep.subr.mxu0 0.0
    %4199 = vmatpush1.xpose.msra.mxu0 0.0
    %4200 = vmatprep.subr.mxu0 0.0
    %4201 = vmatpush1.xpose.msra.mxu0 0.0
    %4202 = vmatprep.subr.mxu0 0.0
    %4203 = vmatpush1.xpose.msra.mxu0 0.0
    %4204 = vmatprep.subr.mxu0 0.0
    %4205 = vmatpush1.xpose.msra.mxu0 0.0
    %4206 = vmatprep.subr.mxu0 0.0
    %4207 = vmatpush1.xpose.msra.mxu0 0.0
    %4208 = vmatprep.subr.mxu0 0.0
    %4209 = vmatpush1.xpose.msra.mxu0 0.0
    %4210 = vmatprep.subr.mxu0 0.0
    %4211 = vmatpush1.xpose.msra.mxu0 0.0
    %4212 = vmatprep.subr.mxu0 0.0
    %4213 = vmatpush1.xpose.msra.mxu0 0.0
    %4214 = vmatprep.subr.mxu0 0.0
    %4215 = vmatpush1.xpose.msra.mxu0 0.0
    %4216 = vmatprep.subr.mxu0 0.0
    %4217 = vmatpush1.xpose.msra.mxu0 0.0
    %4218 = vmatprep.subr.mxu0 0.0
    %4219 = vmatpush1.xpose.msra.mxu0 0.0
    %4220 = vmatprep.subr.mxu0 0.0
    %4221 = vmatpush1.xpose.msra.mxu0 0.0
    %4222 = vmatprep.subr.mxu0 0.0
    %4223 = vmatpush1.xpose.msra.mxu0 0.0
    %4224 = vmatprep.subr.mxu0 0.0
    %4225 = vmatpush1.xpose.msra.mxu0 0.0
    %4226 = vmatprep.subr.mxu0 0.0
    %4227 = vmatpush1.xpose.msra.mxu0 0.0
    %4228 = vmatprep.mubr.f32.mxu0 0.0
    %v4229 = vand.u32 %v3709, 4294901760
    %v4230 = vsub.f32 %v3709, %v4229
    %v4231 = vand.u32 %v4230, 4294901760
    %v4232 = vsub.f32 %v4230, %v4231
    %v4233 = vand.u32 %v4232, 4294901760
    %4234 = vmatmul.mubr.f32.gmra.mrb[0].mxu0 %v4233
    %v4235 = vpop.f32.mrb[0].mxu0
    %v4236 = vadd.f32 0.0, %v4235
    %v4237 = vpop.f32.mrb[0].mxu0
    %4238 = vdwg.mxu0
    %4239 = vmatprep.subr.mxu0 0.0
    %v4240 = vand.u32 %v4161, 4294901760
    %v4241 = vsub.f32 %v4161, %v4240
    %v4242 = vand.u32 %v4241, 4294901760
    %v4243 = vsub.f32 %v4241, %v4242
    %v4244 = vand.u32 %v4243, 4294901760
    %4245 = vmatpush1.xpose.msra.mxu0 %v4244
    %4246 = vmatprep.subr.mxu0 0.0
    %4247 = vmatpush1.xpose.msra.mxu0 0.0
    %4248 = vmatprep.subr.mxu0 0.0
    %4249 = vmatpush1.xpose.msra.mxu0 0.0
    %4250 = vmatprep.subr.mxu0 0.0
    %4251 = vmatpush1.xpose.msra.mxu0 0.0
    %4252 = vmatprep.subr.mxu0 0.0
    %4253 = vmatpush1.xpose.msra.mxu0 0.0
    %4254 = vmatprep.subr.mxu0 0.0
    %4255 = vmatpush1.xpose.msra.mxu0 0.0
    %4256 = vmatprep.subr.mxu0 0.0
    %4257 = vmatpush1.xpose.msra.mxu0 0.0
    %4258 = vmatprep.subr.mxu0 0.0
    %4259 = vmatpush1.xpose.msra.mxu0 0.0
    %4260 = vmatprep.subr.mxu0 0.0
    %4261 = vmatpush1.xpose.msra.mxu0 0.0
    %4262 = vmatprep.subr.mxu0 0.0
    %4263 = vmatpush1.xpose.msra.mxu0 0.0
    %4264 = vmatprep.subr.mxu0 0.0
    %4265 = vmatpush1.xpose.msra.mxu0 0.0
    %4266 = vmatprep.subr.mxu0 0.0
    %4267 = vmatpush1.xpose.msra.mxu0 0.0
    %4268 = vmatprep.subr.mxu0 0.0
    %4269 = vmatpush1.xpose.msra.mxu0 0.0
    %4270 = vmatprep.subr.mxu0 0.0
    %4271 = vmatpush1.xpose.msra.mxu0 0.0
    %4272 = vmatprep.subr.mxu0 0.0
    %4273 = vmatpush1.xpose.msra.mxu0 0.0
    %4274 = vmatprep.subr.mxu0 0.0
    %4275 = vmatpush1.xpose.msra.mxu0 0.0
    %4276 = vmatprep.subr.mxu0 0.0
    %4277 = vmatpush1.xpose.msra.mxu0 0.0
    %4278 = vmatprep.subr.mxu0 0.0
    %4279 = vmatpush1.xpose.msra.mxu0 0.0
    %4280 = vmatprep.subr.mxu0 0.0
    %4281 = vmatpush1.xpose.msra.mxu0 0.0
    %4282 = vmatprep.subr.mxu0 0.0
    %4283 = vmatpush1.xpose.msra.mxu0 0.0
    %4284 = vmatprep.subr.mxu0 0.0
    %4285 = vmatpush1.xpose.msra.mxu0 0.0
    %4286 = vmatprep.subr.mxu0 0.0
    %4287 = vmatpush1.xpose.msra.mxu0 0.0
    %4288 = vmatprep.subr.mxu0 0.0
    %4289 = vmatpush1.xpose.msra.mxu0 0.0
    %4290 = vmatprep.subr.mxu0 0.0
    %4291 = vmatpush1.xpose.msra.mxu0 0.0
    %4292 = vmatprep.subr.mxu0 0.0
    %4293 = vmatpush1.xpose.msra.mxu0 0.0
    %4294 = vmatprep.subr.mxu0 0.0
    %4295 = vmatpush1.xpose.msra.mxu0 0.0
    %4296 = vmatprep.subr.mxu0 0.0
    %4297 = vmatpush1.xpose.msra.mxu0 0.0
    %4298 = vmatprep.subr.mxu0 0.0
    %4299 = vmatpush1.xpose.msra.mxu0 0.0
    %4300 = vmatprep.subr.mxu0 0.0
    %4301 = vmatpush1.xpose.msra.mxu0 0.0
    %4302 = vmatprep.subr.mxu0 0.0
    %4303 = vmatpush1.xpose.msra.mxu0 0.0
    %4304 = vmatprep.subr.mxu0 0.0
    %4305 = vmatpush1.xpose.msra.mxu0 0.0
    %4306 = vmatprep.subr.mxu0 0.0
    %4307 = vmatpush1.xpose.msra.mxu0 0.0
    %4308 = vmatprep.mubr.f32.mxu0 0.0
    %v4309 = vand.u32 %v3709, 4294901760
    %4310 = vmatmul.mubr.f32.gmra.mrb[0].mxu0 %v4309
    %v4311 = vpop.f32.mrb[0].mxu0
    %v4312 = vadd.f32 %v4236, %v4311
    %v4313 = vpop.f32.mrb[0].mxu0
    %4314 = vdwg.mxu0
    %4315 = vmatprep.subr.mxu0 0.0
    %v4316 = vand.u32 %v4161, 4294901760
    %v4317 = vsub.f32 %v4161, %v4316
    %4318 = vmatpush1.xpose.msra.mxu0 %v4317
    %4319 = vmatprep.subr.mxu0 0.0
    %4320 = vmatpush1.xpose.msra.mxu0 0.0
    %4321 = vmatprep.subr.mxu0 0.0
    %4322 = vmatpush1.xpose.msra.mxu0 0.0
    %4323 = vmatprep.subr.mxu0 0.0
    %4324 = vmatpush1.xpose.msra.mxu0 0.0
    %4325 = vmatprep.subr.mxu0 0.0
    %4326 = vmatpush1.xpose.msra.mxu0 0.0
    %4327 = vmatprep.subr.mxu0 0.0
    %4328 = vmatpush1.xpose.msra.mxu0 0.0
    %4329 = vmatprep.subr.mxu0 0.0
    %4330 = vmatpush1.xpose.msra.mxu0 0.0
    %4331 = vmatprep.subr.mxu0 0.0
    %4332 = vmatpush1.xpose.msra.mxu0 0.0
    %4333 = vmatprep.subr.mxu0 0.0
    %4334 = vmatpush1.xpose.msra.mxu0 0.0
    %4335 = vmatprep.subr.mxu0 0.0
    %4336 = vmatpush1.xpose.msra.mxu0 0.0
    %4337 = vmatprep.subr.mxu0 0.0
    %4338 = vmatpush1.xpose.msra.mxu0 0.0
    %4339 = vmatprep.subr.mxu0 0.0
    %4340 = vmatpush1.xpose.msra.mxu0 0.0
    %4341 = vmatprep.subr.mxu0 0.0
    %4342 = vmatpush1.xpose.msra.mxu0 0.0
    %4343 = vmatprep.subr.mxu0 0.0
    %4344 = vmatpush1.xpose.msra.mxu0 0.0
    %4345 = vmatprep.subr.mxu0 0.0
    %4346 = vmatpush1.xpose.msra.mxu0 0.0
    %4347 = vmatprep.subr.mxu0 0.0
    %4348 = vmatpush1.xpose.msra.mxu0 0.0
    %4349 = vmatprep.subr.mxu0 0.0
    %4350 = vmatpush1.xpose.msra.mxu0 0.0
    %4351 = vmatprep.subr.mxu0 0.0
    %4352 = vmatpush1.xpose.msra.mxu0 0.0
    %4353 = vmatprep.subr.mxu0 0.0
    %4354 = vmatpush1.xpose.msra.mxu0 0.0
    %4355 = vmatprep.subr.mxu0 0.0
    %4356 = vmatpush1.xpose.msra.mxu0 0.0
    %4357 = vmatprep.subr.mxu0 0.0
    %4358 = vmatpush1.xpose.msra.mxu0 0.0
    %4359 = vmatprep.subr.mxu0 0.0
    %4360 = vmatpush1.xpose.msra.mxu0 0.0
    %4361 = vmatprep.subr.mxu0 0.0
    %4362 = vmatpush1.xpose.msra.mxu0 0.0
    %4363 = vmatprep.subr.mxu0 0.0
    %4364 = vmatpush1.xpose.msra.mxu0 0.0
    %4365 = vmatprep.subr.mxu0 0.0
    %4366 = vmatpush1.xpose.msra.mxu0 0.0
    %4367 = vmatprep.subr.mxu0 0.0
    %4368 = vmatpush1.xpose.msra.mxu0 0.0
    %4369 = vmatprep.subr.mxu0 0.0
    %4370 = vmatpush1.xpose.msra.mxu0 0.0
    %4371 = vmatprep.subr.mxu0 0.0
    %4372 = vmatpush1.xpose.msra.mxu0 0.0
    %4373 = vmatprep.subr.mxu0 0.0
    %4374 = vmatpush1.xpose.msra.mxu0 0.0
    %4375 = vmatprep.subr.mxu0 0.0
    %4376 = vmatpush1.xpose.msra.mxu0 0.0
    %4377 = vmatprep.subr.mxu0 0.0
    %4378 = vmatpush1.xpose.msra.mxu0 0.0
    %4379 = vmatprep.subr.mxu0 0.0
    %4380 = vmatpush1.xpose.msra.mxu0 0.0
    %4381 = vmatprep.mubr.f32.mxu0 0.0
    %v4382 = vand.u32 %v3709, 4294901760
    %v4383 = vsub.f32 %v3709, %v4382
    %4384 = vmatmul.mubr.f32.gmra.mrb[0].mxu0 %v4383
    %v4385 = vpop.f32.mrb[0].mxu0
    %v4386 = vadd.f32 %v4312, %v4385
    %v4387 = vpop.f32.mrb[0].mxu0
    %4388 = vdwg.mxu0
    %4389 = vmatprep.subr.mxu0 0.0
    %v4390 = vand.u32 %v4161, 4294901760
    %4391 = vmatpush1.xpose.msra.mxu0 %v4390
    %4392 = vmatprep.subr.mxu0 0.0
    %4393 = vmatpush1.xpose.msra.mxu0 0.0
    %4394 = vmatprep.subr.mxu0 0.0
    %4395 = vmatpush1.xpose.msra.mxu0 0.0
    %4396 = vmatprep.subr.mxu0 0.0
    %4397 = vmatpush1.xpose.msra.mxu0 0.0
    %4398 = vmatprep.subr.mxu0 0.0
    %4399 = vmatpush1.xpose.msra.mxu0 0.0
    %4400 = vmatprep.subr.mxu0 0.0
    %4401 = vmatpush1.xpose.msra.mxu0 0.0
    %4402 = vmatprep.subr.mxu0 0.0
    %4403 = vmatpush1.xpose.msra.mxu0 0.0
    %4404 = vmatprep.subr.mxu0 0.0
    %4405 = vmatpush1.xpose.msra.mxu0 0.0
    %4406 = vmatprep.subr.mxu0 0.0
    %4407 = vmatpush1.xpose.msra.mxu0 0.0
    %4408 = vmatprep.subr.mxu0 0.0
    %4409 = vmatpush1.xpose.msra.mxu0 0.0
    %4410 = vmatprep.subr.mxu0 0.0
    %4411 = vmatpush1.xpose.msra.mxu0 0.0
    %4412 = vmatprep.subr.mxu0 0.0
    %4413 = vmatpush1.xpose.msra.mxu0 0.0
    %4414 = vmatprep.subr.mxu0 0.0
    %4415 = vmatpush1.xpose.msra.mxu0 0.0
    %4416 = vmatprep.subr.mxu0 0.0
    %4417 = vmatpush1.xpose.msra.mxu0 0.0
    %4418 = vmatprep.subr.mxu0 0.0
    %4419 = vmatpush1.xpose.msra.mxu0 0.0
    %4420 = vmatprep.subr.mxu0 0.0
    %4421 = vmatpush1.xpose.msra.mxu0 0.0
    %4422 = vmatprep.subr.mxu0 0.0
    %4423 = vmatpush1.xpose.msra.mxu0 0.0
    %4424 = vmatprep.subr.mxu0 0.0
    %4425 = vmatpush1.xpose.msra.mxu0 0.0
    %4426 = vmatprep.subr.mxu0 0.0
    %4427 = vmatpush1.xpose.msra.mxu0 0.0
    %4428 = vmatprep.subr.mxu0 0.0
    %4429 = vmatpush1.xpose.msra.mxu0 0.0
    %4430 = vmatprep.subr.mxu0 0.0
    %4431 = vmatpush1.xpose.msra.mxu0 0.0
    %4432 = vmatprep.subr.mxu0 0.0
    %4433 = vmatpush1.xpose.msra.mxu0 0.0
    %4434 = vmatprep.subr.mxu0 0.0
    %4435 = vmatpush1.xpose.msra.mxu0 0.0
    %4436 = vmatprep.subr.mxu0 0.0
    %4437 = vmatpush1.xpose.msra.mxu0 0.0
    %4438 = vmatprep.subr.mxu0 0.0
    %4439 = vmatpush1.xpose.msra.mxu0 0.0
    %4440 = vmatprep.subr.mxu0 0.0
    %4441 = vmatpush1.xpose.msra.mxu0 0.0
    %4442 = vmatprep.subr.mxu0 0.0
    %4443 = vmatpush1.xpose.msra.mxu0 0.0
    %4444 = vmatprep.subr.mxu0 0.0
    %4445 = vmatpush1.xpose.msra.mxu0 0.0
    %4446 = vmatprep.subr.mxu0 0.0
    %4447 = vmatpush1.xpose.msra.mxu0 0.0
    %4448 = vmatprep.subr.mxu0 0.0
    %4449 = vmatpush1.xpose.msra.mxu0 0.0
    %4450 = vmatprep.subr.mxu0 0.0
    %4451 = vmatpush1.xpose.msra.mxu0 0.0
    %4452 = vmatprep.subr.mxu0 0.0
    %4453 = vmatpush1.xpose.msra.mxu0 0.0
    %4454 = vmatprep.mubr.f32.mxu0 0.0
    %v4455 = vand.u32 %v3709, 4294901760
    %v4456 = vsub.f32 %v3709, %v4455
    %v4457 = vand.u32 %v4456, 4294901760
    %4458 = vmatmul.mubr.f32.gmra.mrb[0].mxu0 %v4457
    %v4459 = vpop.f32.mrb[0].mxu0
    %v4460 = vadd.f32 %v4386, %v4459
    %v4461 = vpop.f32.mrb[0].mxu0
    %4462 = vdwg.mxu0
    %4463 = vmatprep.subr.mxu0 0.0
    %v4464 = vand.u32 %v4161, 4294901760
    %v4465 = vsub.f32 %v4161, %v4464
    %v4466 = vand.u32 %v4465, 4294901760
    %4467 = vmatpush1.xpose.msra.mxu0 %v4466
    %4468 = vmatprep.subr.mxu0 0.0
    %4469 = vmatpush1.xpose.msra.mxu0 0.0
    %4470 = vmatprep.subr.mxu0 0.0
    %4471 = vmatpush1.xpose.msra.mxu0 0.0
    %4472 = vmatprep.subr.mxu0 0.0
    %4473 = vmatpush1.xpose.msra.mxu0 0.0
    %4474 = vmatprep.subr.mxu0 0.0
    %4475 = vmatpush1.xpose.msra.mxu0 0.0
    %4476 = vmatprep.subr.mxu0 0.0
    %4477 = vmatpush1.xpose.msra.mxu0 0.0
    %4478 = vmatprep.subr.mxu0 0.0
    %4479 = vmatpush1.xpose.msra.mxu0 0.0
    %4480 = vmatprep.subr.mxu0 0.0
    %4481 = vmatpush1.xpose.msra.mxu0 0.0
    %4482 = vmatprep.subr.mxu0 0.0
    %4483 = vmatpush1.xpose.msra.mxu0 0.0
    %4484 = vmatprep.subr.mxu0 0.0
    %4485 = vmatpush1.xpose.msra.mxu0 0.0
    %4486 = vmatprep.subr.mxu0 0.0
    %4487 = vmatpush1.xpose.msra.mxu0 0.0
    %4488 = vmatprep.subr.mxu0 0.0
    %4489 = vmatpush1.xpose.msra.mxu0 0.0
    %4490 = vmatprep.subr.mxu0 0.0
    %4491 = vmatpush1.xpose.msra.mxu0 0.0
    %4492 = vmatprep.subr.mxu0 0.0
    %4493 = vmatpush1.xpose.msra.mxu0 0.0
    %4494 = vmatprep.subr.mxu0 0.0
    %4495 = vmatpush1.xpose.msra.mxu0 0.0
    %4496 = vmatprep.subr.mxu0 0.0
    %4497 = vmatpush1.xpose.msra.mxu0 0.0
    %4498 = vmatprep.subr.mxu0 0.0
    %4499 = vmatpush1.xpose.msra.mxu0 0.0
    %4500 = vmatprep.subr.mxu0 0.0
    %4501 = vmatpush1.xpose.msra.mxu0 0.0
    %4502 = vmatprep.subr.mxu0 0.0
    %4503 = vmatpush1.xpose.msra.mxu0 0.0
    %4504 = vmatprep.subr.mxu0 0.0
    %4505 = vmatpush1.xpose.msra.mxu0 0.0
    %4506 = vmatprep.subr.mxu0 0.0
    %4507 = vmatpush1.xpose.msra.mxu0 0.0
    %4508 = vmatprep.subr.mxu0 0.0
    %4509 = vmatpush1.xpose.msra.mxu0 0.0
    %4510 = vmatprep.subr.mxu0 0.0
    %4511 = vmatpush1.xpose.msra.mxu0 0.0
    %4512 = vmatprep.subr.mxu0 0.0
    %4513 = vmatpush1.xpose.msra.mxu0 0.0
    %4514 = vmatprep.subr.mxu0 0.0
    %4515 = vmatpush1.xpose.msra.mxu0 0.0
    %4516 = vmatprep.subr.mxu0 0.0
    %4517 = vmatpush1.xpose.msra.mxu0 0.0
    %4518 = vmatprep.subr.mxu0 0.0
    %4519 = vmatpush1.xpose.msra.mxu0 0.0
    %4520 = vmatprep.subr.mxu0 0.0
    %4521 = vmatpush1.xpose.msra.mxu0 0.0
    %4522 = vmatprep.subr.mxu0 0.0
    %4523 = vmatpush1.xpose.msra.mxu0 0.0
    %4524 = vmatprep.subr.mxu0 0.0
    %4525 = vmatpush1.xpose.msra.mxu0 0.0
    %4526 = vmatprep.subr.mxu0 0.0
    %4527 = vmatpush1.xpose.msra.mxu0 0.0
    %4528 = vmatprep.subr.mxu0 0.0
    %4529 = vmatpush1.xpose.msra.mxu0 0.0
    %4530 = vmatprep.mubr.f32.mxu0 0.0
    %v4531 = vand.u32 %v3709, 4294901760
    %4532 = vmatmul.mubr.f32.gmra.mrb[0].mxu0 %v4531
    %v4533 = vpop.f32.mrb[0].mxu0
    %v4534 = vadd.f32 %v4460, %v4533
    %v4535 = vpop.f32.mrb[0].mxu0
    %4536 = vdwg.mxu0
    %4537 = vmatprep.subr.mxu0 0.0
    %v4538 = vand.u32 %v4161, 4294901760
    %4539 = vmatpush1.xpose.msra.mxu0 %v4538
    %4540 = vmatprep.subr.mxu0 0.0
    %4541 = vmatpush1.xpose.msra.mxu0 0.0
    %4542 = vmatprep.subr.mxu0 0.0
    %4543 = vmatpush1.xpose.msra.mxu0 0.0
    %4544 = vmatprep.subr.mxu0 0.0
    %4545 = vmatpush1.xpose.msra.mxu0 0.0
    %4546 = vmatprep.subr.mxu0 0.0
    %4547 = vmatpush1.xpose.msra.mxu0 0.0
    %4548 = vmatprep.subr.mxu0 0.0
    %4549 = vmatpush1.xpose.msra.mxu0 0.0
    %4550 = vmatprep.subr.mxu0 0.0
    %4551 = vmatpush1.xpose.msra.mxu0 0.0
    %4552 = vmatprep.subr.mxu0 0.0
    %4553 = vmatpush1.xpose.msra.mxu0 0.0
    %4554 = vmatprep.subr.mxu0 0.0
    %4555 = vmatpush1.xpose.msra.mxu0 0.0
    %4556 = vmatprep.subr.mxu0 0.0
    %4557 = vmatpush1.xpose.msra.mxu0 0.0
    %4558 = vmatprep.subr.mxu0 0.0
    %4559 = vmatpush1.xpose.msra.mxu0 0.0
    %4560 = vmatprep.subr.mxu0 0.0
    %4561 = vmatpush1.xpose.msra.mxu0 0.0
    %4562 = vmatprep.subr.mxu0 0.0
    %4563 = vmatpush1.xpose.msra.mxu0 0.0
    %4564 = vmatprep.subr.mxu0 0.0
    %4565 = vmatpush1.xpose.msra.mxu0 0.0
    %4566 = vmatprep.subr.mxu0 0.0
    %4567 = vmatpush1.xpose.msra.mxu0 0.0
    %4568 = vmatprep.subr.mxu0 0.0
    %4569 = vmatpush1.xpose.msra.mxu0 0.0
    %4570 = vmatprep.subr.mxu0 0.0
    %4571 = vmatpush1.xpose.msra.mxu0 0.0
    %4572 = vmatprep.subr.mxu0 0.0
    %4573 = vmatpush1.xpose.msra.mxu0 0.0
    %4574 = vmatprep.subr.mxu0 0.0
    %4575 = vmatpush1.xpose.msra.mxu0 0.0
    %4576 = vmatprep.subr.mxu0 0.0
    %4577 = vmatpush1.xpose.msra.mxu0 0.0
    %4578 = vmatprep.subr.mxu0 0.0
    %4579 = vmatpush1.xpose.msra.mxu0 0.0
    %4580 = vmatprep.subr.mxu0 0.0
    %4581 = vmatpush1.xpose.msra.mxu0 0.0
    %4582 = vmatprep.subr.mxu0 0.0
    %4583 = vmatpush1.xpose.msra.mxu0 0.0
    %4584 = vmatprep.subr.mxu0 0.0
    %4585 = vmatpush1.xpose.msra.mxu0 0.0
    %4586 = vmatprep.subr.mxu0 0.0
    %4587 = vmatpush1.xpose.msra.mxu0 0.0
    %4588 = vmatprep.subr.mxu0 0.0
    %4589 = vmatpush1.xpose.msra.mxu0 0.0
    %4590 = vmatprep.subr.mxu0 0.0
    %4591 = vmatpush1.xpose.msra.mxu0 0.0
    %4592 = vmatprep.subr.mxu0 0.0
    %4593 = vmatpush1.xpose.msra.mxu0 0.0
    %4594 = vmatprep.subr.mxu0 0.0
    %4595 = vmatpush1.xpose.msra.mxu0 0.0
    %4596 = vmatprep.subr.mxu0 0.0
    %4597 = vmatpush1.xpose.msra.mxu0 0.0
    %4598 = vmatprep.subr.mxu0 0.0
    %4599 = vmatpush1.xpose.msra.mxu0 0.0
    %4600 = vmatprep.subr.mxu0 0.0
    %4601 = vmatpush1.xpose.msra.mxu0 0.0
    %4602 = vmatprep.mubr.f32.mxu0 0.0
    %v4603 = vand.u32 %v3709, 4294901760
    %4604 = vmatmul.mubr.f32.gmra.mrb[0].mxu0 %v4603
    %v4605 = vpop.f32.mrb[0].mxu0
    %v4606 = vadd.f32 %v4534, %v4605
    %v4607 = vpop.f32.mrb[0].mxu0
    %4608 = vdwg.mxu0
    %v4610 = vsel %vm26, %v3702, 0
    %4612 = vmatprep.subr.mxu0 0.0
    %v4613 = vand.u32 %v4610, 4294901760
    %4614 = vmatpush1.xpose.msra.mxu0 %v4613
    %4615 = vmatprep.subr.mxu0 0.0
    %4616 = vmatpush1.xpose.msra.mxu0 0.0
    %4617 = vmatprep.subr.mxu0 0.0
    %4618 = vmatpush1.xpose.msra.mxu0 0.0
    %4619 = vmatprep.subr.mxu0 0.0
    %4620 = vmatpush1.xpose.msra.mxu0 0.0
    %4621 = vmatprep.subr.mxu0 0.0
    %4622 = vmatpush1.xpose.msra.mxu0 0.0
    %4623 = vmatprep.subr.mxu0 0.0
    %4624 = vmatpush1.xpose.msra.mxu0 0.0
    %4625 = vmatprep.subr.mxu0 0.0
    %4626 = vmatpush1.xpose.msra.mxu0 0.0
    %4627 = vmatprep.subr.mxu0 0.0
    %4628 = vmatpush1.xpose.msra.mxu0 0.0
    %4629 = vmatprep.subr.mxu0 0.0
    %4630 = vmatpush1.xpose.msra.mxu0 0.0
    %4631 = vmatprep.subr.mxu0 0.0
    %4632 = vmatpush1.xpose.msra.mxu0 0.0
    %4633 = vmatprep.subr.mxu0 0.0
    %4634 = vmatpush1.xpose.msra.mxu0 0.0
    %4635 = vmatprep.subr.mxu0 0.0
    %4636 = vmatpush1.xpose.msra.mxu0 0.0
    %4637 = vmatprep.subr.mxu0 0.0
    %4638 = vmatpush1.xpose.msra.mxu0 0.0
    %4639 = vmatprep.subr.mxu0 0.0
    %4640 = vmatpush1.xpose.msra.mxu0 0.0
    %4641 = vmatprep.subr.mxu0 0.0
    %4642 = vmatpush1.xpose.msra.mxu0 0.0
    %4643 = vmatprep.subr.mxu0 0.0
    %4644 = vmatpush1.xpose.msra.mxu0 0.0
    %4645 = vmatprep.subr.mxu0 0.0
    %4646 = vmatpush1.xpose.msra.mxu0 0.0
    %4647 = vmatprep.subr.mxu0 0.0
    %4648 = vmatpush1.xpose.msra.mxu0 0.0
    %4649 = vmatprep.subr.mxu0 0.0
    %4650 = vmatpush1.xpose.msra.mxu0 0.0
    %4651 = vmatprep.subr.mxu0 0.0
    %4652 = vmatpush1.xpose.msra.mxu0 0.0
    %4653 = vmatprep.subr.mxu0 0.0
    %4654 = vmatpush1.xpose.msra.mxu0 0.0
    %4655 = vmatprep.subr.mxu0 0.0
    %4656 = vmatpush1.xpose.msra.mxu0 0.0
    %4657 = vmatprep.subr.mxu0 0.0
    %4658 = vmatpush1.xpose.msra.mxu0 0.0
    %4659 = vmatprep.subr.mxu0 0.0
    %4660 = vmatpush1.xpose.msra.mxu0 0.0
    %4661 = vmatprep.subr.mxu0 0.0
    %4662 = vmatpush1.xpose.msra.mxu0 0.0
    %4663 = vmatprep.subr.mxu0 0.0
    %4664 = vmatpush1.xpose.msra.mxu0 0.0
    %4665 = vmatprep.subr.mxu0 0.0
    %4666 = vmatpush1.xpose.msra.mxu0 0.0
    %4667 = vmatprep.subr.mxu0 0.0
    %4668 = vmatpush1.xpose.msra.mxu0 0.0
    %4669 = vmatprep.subr.mxu0 0.0
    %4670 = vmatpush1.xpose.msra.mxu0 0.0
    %4671 = vmatprep.subr.mxu0 0.0
    %4672 = vmatpush1.xpose.msra.mxu0 0.0
    %4673 = vmatprep.subr.mxu0 0.0
    %4674 = vmatpush1.xpose.msra.mxu0 0.0
    %4675 = vmatprep.subr.mxu0 0.0
    %4676 = vmatpush1.xpose.msra.mxu0 0.0
    %4677 = vmatprep.mubr.f32.mxu0 0.0
    %v4678 = vand.u32 %v3709, 4294901760
    %v4679 = vsub.f32 %v3709, %v4678
    %v4680 = vand.u32 %v4679, 4294901760
    %v4681 = vsub.f32 %v4679, %v4680
    %v4682 = vand.u32 %v4681, 4294901760
    %4683 = vmatmul.mubr.f32.gmra.mrb[0].mxu0 %v4682
    %v4684 = vpop.f32.mrb[0].mxu0
    %v4685 = vadd.f32 0.0, %v4684
    %v4686 = vpop.f32.mrb[0].mxu0
    %4687 = vdwg.mxu0
    %4688 = vmatprep.subr.mxu0 0.0
    %v4689 = vand.u32 %v4610, 4294901760
    %v4690 = vsub.f32 %v4610, %v4689
    %v4691 = vand.u32 %v4690, 4294901760
    %v4692 = vsub.f32 %v4690, %v4691
    %v4693 = vand.u32 %v4692, 4294901760
    %4694 = vmatpush1.xpose.msra.mxu0 %v4693
    %4695 = vmatprep.subr.mxu0 0.0
    %4696 = vmatpush1.xpose.msra.mxu0 0.0
    %4697 = vmatprep.subr.mxu0 0.0
    %4698 = vmatpush1.xpose.msra.mxu0 0.0
    %4699 = vmatprep.subr.mxu0 0.0
    %4700 = vmatpush1.xpose.msra.mxu0 0.0
    %4701 = vmatprep.subr.mxu0 0.0
    %4702 = vmatpush1.xpose.msra.mxu0 0.0
    %4703 = vmatprep.subr.mxu0 0.0
    %4704 = vmatpush1.xpose.msra.mxu0 0.0
    %4705 = vmatprep.subr.mxu0 0.0
    %4706 = vmatpush1.xpose.msra.mxu0 0.0
    %4707 = vmatprep.subr.mxu0 0.0
    %4708 = vmatpush1.xpose.msra.mxu0 0.0
    %4709 = vmatprep.subr.mxu0 0.0
    %4710 = vmatpush1.xpose.msra.mxu0 0.0
    %4711 = vmatprep.subr.mxu0 0.0
    %4712 = vmatpush1.xpose.msra.mxu0 0.0
    %4713 = vmatprep.subr.mxu0 0.0
    %4714 = vmatpush1.xpose.msra.mxu0 0.0
    %4715 = vmatprep.subr.mxu0 0.0
    %4716 = vmatpush1.xpose.msra.mxu0 0.0
    %4717 = vmatprep.subr.mxu0 0.0
    %4718 = vmatpush1.xpose.msra.mxu0 0.0
    %4719 = vmatprep.subr.mxu0 0.0
    %4720 = vmatpush1.xpose.msra.mxu0 0.0
    %4721 = vmatprep.subr.mxu0 0.0
    %4722 = vmatpush1.xpose.msra.mxu0 0.0
    %4723 = vmatprep.subr.mxu0 0.0
    %4724 = vmatpush1.xpose.msra.mxu0 0.0
    %4725 = vmatprep.subr.mxu0 0.0
    %4726 = vmatpush1.xpose.msra.mxu0 0.0
    %4727 = vmatprep.subr.mxu0 0.0
    %4728 = vmatpush1.xpose.msra.mxu0 0.0
    %4729 = vmatprep.subr.mxu0 0.0
    %4730 = vmatpush1.xpose.msra.mxu0 0.0
    %4731 = vmatprep.subr.mxu0 0.0
    %4732 = vmatpush1.xpose.msra.mxu0 0.0
    %4733 = vmatprep.subr.mxu0 0.0
    %4734 = vmatpush1.xpose.msra.mxu0 0.0
    %4735 = vmatprep.subr.mxu0 0.0
    %4736 = vmatpush1.xpose.msra.mxu0 0.0
    %4737 = vmatprep.subr.mxu0 0.0
    %4738 = vmatpush1.xpose.msra.mxu0 0.0
    %4739 = vmatprep.subr.mxu0 0.0
    %4740 = vmatpush1.xpose.msra.mxu0 0.0
    %4741 = vmatprep.subr.mxu0 0.0
    %4742 = vmatpush1.xpose.msra.mxu0 0.0
    %4743 = vmatprep.subr.mxu0 0.0
    %4744 = vmatpush1.xpose.msra.mxu0 0.0
    %4745 = vmatprep.subr.mxu0 0.0
    %4746 = vmatpush1.xpose.msra.mxu0 0.0
    %4747 = vmatprep.subr.mxu0 0.0
    %4748 = vmatpush1.xpose.msra.mxu0 0.0
    %4749 = vmatprep.subr.mxu0 0.0
    %4750 = vmatpush1.xpose.msra.mxu0 0.0
    %4751 = vmatprep.subr.mxu0 0.0
    %4752 = vmatpush1.xpose.msra.mxu0 0.0
    %4753 = vmatprep.subr.mxu0 0.0
    %4754 = vmatpush1.xpose.msra.mxu0 0.0
    %4755 = vmatprep.subr.mxu0 0.0
    %4756 = vmatpush1.xpose.msra.mxu0 0.0
    %4757 = vmatprep.mubr.f32.mxu0 0.0
    %v4758 = vand.u32 %v3709, 4294901760
    %4759 = vmatmul.mubr.f32.gmra.mrb[0].mxu0 %v4758
    %v4760 = vpop.f32.mrb[0].mxu0
    %v4761 = vadd.f32 %v4685, %v4760
    %v4762 = vpop.f32.mrb[0].mxu0
    %4763 = vdwg.mxu0
    %4764 = vmatprep.subr.mxu0 0.0
    %v4765 = vand.u32 %v4610, 4294901760
    %v4766 = vsub.f32 %v4610, %v4765
    %4767 = vmatpush1.xpose.msra.mxu0 %v4766
    %4768 = vmatprep.subr.mxu0 0.0
    %4769 = vmatpush1.xpose.msra.mxu0 0.0
    %4770 = vmatprep.subr.mxu0 0.0
    %4771 = vmatpush1.xpose.msra.mxu0 0.0
    %4772 = vmatprep.subr.mxu0 0.0
    %4773 = vmatpush1.xpose.msra.mxu0 0.0
    %4774 = vmatprep.subr.mxu0 0.0
    %4775 = vmatpush1.xpose.msra.mxu0 0.0
    %4776 = vmatprep.subr.mxu0 0.0
    %4777 = vmatpush1.xpose.msra.mxu0 0.0
    %4778 = vmatprep.subr.mxu0 0.0
    %4779 = vmatpush1.xpose.msra.mxu0 0.0
    %4780 = vmatprep.subr.mxu0 0.0
    %4781 = vmatpush1.xpose.msra.mxu0 0.0
    %4782 = vmatprep.subr.mxu0 0.0
    %4783 = vmatpush1.xpose.msra.mxu0 0.0
    %4784 = vmatprep.subr.mxu0 0.0
    %4785 = vmatpush1.xpose.msra.mxu0 0.0
    %4786 = vmatprep.subr.mxu0 0.0
    %4787 = vmatpush1.xpose.msra.mxu0 0.0
    %4788 = vmatprep.subr.mxu0 0.0
    %4789 = vmatpush1.xpose.msra.mxu0 0.0
    %4790 = vmatprep.subr.mxu0 0.0
    %4791 = vmatpush1.xpose.msra.mxu0 0.0
    %4792 = vmatprep.subr.mxu0 0.0
    %4793 = vmatpush1.xpose.msra.mxu0 0.0
    %4794 = vmatprep.subr.mxu0 0.0
    %4795 = vmatpush1.xpose.msra.mxu0 0.0
    %4796 = vmatprep.subr.mxu0 0.0
    %4797 = vmatpush1.xpose.msra.mxu0 0.0
    %4798 = vmatprep.subr.mxu0 0.0
    %4799 = vmatpush1.xpose.msra.mxu0 0.0
    %4800 = vmatprep.subr.mxu0 0.0
    %4801 = vmatpush1.xpose.msra.mxu0 0.0
    %4802 = vmatprep.subr.mxu0 0.0
    %4803 = vmatpush1.xpose.msra.mxu0 0.0
    %4804 = vmatprep.subr.mxu0 0.0
    %4805 = vmatpush1.xpose.msra.mxu0 0.0
    %4806 = vmatprep.subr.mxu0 0.0
    %4807 = vmatpush1.xpose.msra.mxu0 0.0
    %4808 = vmatprep.subr.mxu0 0.0
    %4809 = vmatpush1.xpose.msra.mxu0 0.0
    %4810 = vmatprep.subr.mxu0 0.0
    %4811 = vmatpush1.xpose.msra.mxu0 0.0
    %4812 = vmatprep.subr.mxu0 0.0
    %4813 = vmatpush1.xpose.msra.mxu0 0.0
    %4814 = vmatprep.subr.mxu0 0.0
    %4815 = vmatpush1.xpose.msra.mxu0 0.0
    %4816 = vmatprep.subr.mxu0 0.0
    %4817 = vmatpush1.xpose.msra.mxu0 0.0
    %4818 = vmatprep.subr.mxu0 0.0
    %4819 = vmatpush1.xpose.msra.mxu0 0.0
    %4820 = vmatprep.subr.mxu0 0.0
    %4821 = vmatpush1.xpose.msra.mxu0 0.0
    %4822 = vmatprep.subr.mxu0 0.0
    %4823 = vmatpush1.xpose.msra.mxu0 0.0
    %4824 = vmatprep.subr.mxu0 0.0
    %4825 = vmatpush1.xpose.msra.mxu0 0.0
    %4826 = vmatprep.subr.mxu0 0.0
    %4827 = vmatpush1.xpose.msra.mxu0 0.0
    %4828 = vmatprep.subr.mxu0 0.0
    %4829 = vmatpush1.xpose.msra.mxu0 0.0
    %4830 = vmatprep.mubr.f32.mxu0 0.0
    %v4831 = vand.u32 %v3709, 4294901760
    %v4832 = vsub.f32 %v3709, %v4831
    %4833 = vmatmul.mubr.f32.gmra.mrb[0].mxu0 %v4832
    %v4834 = vpop.f32.mrb[0].mxu0
    %v4835 = vadd.f32 %v4761, %v4834
    %v4836 = vpop.f32.mrb[0].mxu0
    %4837 = vdwg.mxu0
    %4838 = vmatprep.subr.mxu0 0.0
    %v4839 = vand.u32 %v4610, 4294901760
    %4840 = vmatpush1.xpose.msra.mxu0 %v4839
    %4841 = vmatprep.subr.mxu0 0.0
    %4842 = vmatpush1.xpose.msra.mxu0 0.0
    %4843 = vmatprep.subr.mxu0 0.0
    %4844 = vmatpush1.xpose.msra.mxu0 0.0
    %4845 = vmatprep.subr.mxu0 0.0
    %4846 = vmatpush1.xpose.msra.mxu0 0.0
    %4847 = vmatprep.subr.mxu0 0.0
    %4848 = vmatpush1.xpose.msra.mxu0 0.0
    %4849 = vmatprep.subr.mxu0 0.0
    %4850 = vmatpush1.xpose.msra.mxu0 0.0
    %4851 = vmatprep.subr.mxu0 0.0
    %4852 = vmatpush1.xpose.msra.mxu0 0.0
    %4853 = vmatprep.subr.mxu0 0.0
    %4854 = vmatpush1.xpose.msra.mxu0 0.0
    %4855 = vmatprep.subr.mxu0 0.0
    %4856 = vmatpush1.xpose.msra.mxu0 0.0
    %4857 = vmatprep.subr.mxu0 0.0
    %4858 = vmatpush1.xpose.msra.mxu0 0.0
    %4859 = vmatprep.subr.mxu0 0.0
    %4860 = vmatpush1.xpose.msra.mxu0 0.0
    %4861 = vmatprep.subr.mxu0 0.0
    %4862 = vmatpush1.xpose.msra.mxu0 0.0
    %4863 = vmatprep.subr.mxu0 0.0
    %4864 = vmatpush1.xpose.msra.mxu0 0.0
    %4865 = vmatprep.subr.mxu0 0.0
    %4866 = vmatpush1.xpose.msra.mxu0 0.0
    %4867 = vmatprep.subr.mxu0 0.0
    %4868 = vmatpush1.xpose.msra.mxu0 0.0
    %4869 = vmatprep.subr.mxu0 0.0
    %4870 = vmatpush1.xpose.msra.mxu0 0.0
    %4871 = vmatprep.subr.mxu0 0.0
    %4872 = vmatpush1.xpose.msra.mxu0 0.0
    %4873 = vmatprep.subr.mxu0 0.0
    %4874 = vmatpush1.xpose.msra.mxu0 0.0
    %4875 = vmatprep.subr.mxu0 0.0
    %4876 = vmatpush1.xpose.msra.mxu0 0.0
    %4877 = vmatprep.subr.mxu0 0.0
    %4878 = vmatpush1.xpose.msra.mxu0 0.0
    %4879 = vmatprep.subr.mxu0 0.0
    %4880 = vmatpush1.xpose.msra.mxu0 0.0
    %4881 = vmatprep.subr.mxu0 0.0
    %4882 = vmatpush1.xpose.msra.mxu0 0.0
    %4883 = vmatprep.subr.mxu0 0.0
    %4884 = vmatpush1.xpose.msra.mxu0 0.0
    %4885 = vmatprep.subr.mxu0 0.0
    %4886 = vmatpush1.xpose.msra.mxu0 0.0
    %4887 = vmatprep.subr.mxu0 0.0
    %4888 = vmatpush1.xpose.msra.mxu0 0.0
    %4889 = vmatprep.subr.mxu0 0.0
    %4890 = vmatpush1.xpose.msra.mxu0 0.0
    %4891 = vmatprep.subr.mxu0 0.0
    %4892 = vmatpush1.xpose.msra.mxu0 0.0
    %4893 = vmatprep.subr.mxu0 0.0
    %4894 = vmatpush1.xpose.msra.mxu0 0.0
    %4895 = vmatprep.subr.mxu0 0.0
    %4896 = vmatpush1.xpose.msra.mxu0 0.0
    %4897 = vmatprep.subr.mxu0 0.0
    %4898 = vmatpush1.xpose.msra.mxu0 0.0
    %4899 = vmatprep.subr.mxu0 0.0
    %4900 = vmatpush1.xpose.msra.mxu0 0.0
    %4901 = vmatprep.subr.mxu0 0.0
    %4902 = vmatpush1.xpose.msra.mxu0 0.0
    %4903 = vmatprep.mubr.f32.mxu0 0.0
    %v4904 = vand.u32 %v3709, 4294901760
    %v4905 = vsub.f32 %v3709, %v4904
    %v4906 = vand.u32 %v4905, 4294901760
    %4907 = vmatmul.mubr.f32.gmra.mrb[0].mxu0 %v4906
    %v4908 = vpop.f32.mrb[0].mxu0
    %v4909 = vadd.f32 %v4835, %v4908
    %v4910 = vpop.f32.mrb[0].mxu0
    %4911 = vdwg.mxu0
    %4912 = vmatprep.subr.mxu0 0.0
    %v4913 = vand.u32 %v4610, 4294901760
    %v4914 = vsub.f32 %v4610, %v4913
    %v4915 = vand.u32 %v4914, 4294901760
    %4916 = vmatpush1.xpose.msra.mxu0 %v4915
    %4917 = vmatprep.subr.mxu0 0.0
    %4918 = vmatpush1.xpose.msra.mxu0 0.0
    %4919 = vmatprep.subr.mxu0 0.0
    %4920 = vmatpush1.xpose.msra.mxu0 0.0
    %4921 = vmatprep.subr.mxu0 0.0
    %4922 = vmatpush1.xpose.msra.mxu0 0.0
    %4923 = vmatprep.subr.mxu0 0.0
    %4924 = vmatpush1.xpose.msra.mxu0 0.0
    %4925 = vmatprep.subr.mxu0 0.0
    %4926 = vmatpush1.xpose.msra.mxu0 0.0
    %4927 = vmatprep.subr.mxu0 0.0
    %4928 = vmatpush1.xpose.msra.mxu0 0.0
    %4929 = vmatprep.subr.mxu0 0.0
    %4930 = vmatpush1.xpose.msra.mxu0 0.0
    %4931 = vmatprep.subr.mxu0 0.0
    %4932 = vmatpush1.xpose.msra.mxu0 0.0
    %4933 = vmatprep.subr.mxu0 0.0
    %4934 = vmatpush1.xpose.msra.mxu0 0.0
    %4935 = vmatprep.subr.mxu0 0.0
    %4936 = vmatpush1.xpose.msra.mxu0 0.0
    %4937 = vmatprep.subr.mxu0 0.0
    %4938 = vmatpush1.xpose.msra.mxu0 0.0
    %4939 = vmatprep.subr.mxu0 0.0
    %4940 = vmatpush1.xpose.msra.mxu0 0.0
    %4941 = vmatprep.subr.mxu0 0.0
    %4942 = vmatpush1.xpose.msra.mxu0 0.0
    %4943 = vmatprep.subr.mxu0 0.0
    %4944 = vmatpush1.xpose.msra.mxu0 0.0
    %4945 = vmatprep.subr.mxu0 0.0
    %4946 = vmatpush1.xpose.msra.mxu0 0.0
    %4947 = vmatprep.subr.mxu0 0.0
    %4948 = vmatpush1.xpose.msra.mxu0 0.0
    %4949 = vmatprep.subr.mxu0 0.0
    %4950 = vmatpush1.xpose.msra.mxu0 0.0
    %4951 = vmatprep.subr.mxu0 0.0
    %4952 = vmatpush1.xpose.msra.mxu0 0.0
    %4953 = vmatprep.subr.mxu0 0.0
    %4954 = vmatpush1.xpose.msra.mxu0 0.0
    %4955 = vmatprep.subr.mxu0 0.0
    %4956 = vmatpush1.xpose.msra.mxu0 0.0
    %4957 = vmatprep.subr.mxu0 0.0
    %4958 = vmatpush1.xpose.msra.mxu0 0.0
    %4959 = vmatprep.subr.mxu0 0.0
    %4960 = vmatpush1.xpose.msra.mxu0 0.0
    %4961 = vmatprep.subr.mxu0 0.0
    %4962 = vmatpush1.xpose.msra.mxu0 0.0
    %4963 = vmatprep.subr.mxu0 0.0
    %4964 = vmatpush1.xpose.msra.mxu0 0.0
    %4965 = vmatprep.subr.mxu0 0.0
    %4966 = vmatpush1.xpose.msra.mxu0 0.0
    %4967 = vmatprep.subr.mxu0 0.0
    %4968 = vmatpush1.xpose.msra.mxu0 0.0
    %4969 = vmatprep.subr.mxu0 0.0
    %4970 = vmatpush1.xpose.msra.mxu0 0.0
    %4971 = vmatprep.subr.mxu0 0.0
    %4972 = vmatpush1.xpose.msra.mxu0 0.0
    %4973 = vmatprep.subr.mxu0 0.0
    %4974 = vmatpush1.xpose.msra.mxu0 0.0
    %4975 = vmatprep.subr.mxu0 0.0
    %4976 = vmatpush1.xpose.msra.mxu0 0.0
    %4977 = vmatprep.subr.mxu0 0.0
    %4978 = vmatpush1.xpose.msra.mxu0 0.0
    %4979 = vmatprep.mubr.f32.mxu0 0.0
    %v4980 = vand.u32 %v3709, 4294901760
    %4981 = vmatmul.mubr.f32.gmra.mrb[0].mxu0 %v4980
    %v4982 = vpop.f32.mrb[0].mxu0
    %v4983 = vadd.f32 %v4909, %v4982
    %v4984 = vpop.f32.mrb[0].mxu0
    %4985 = vdwg.mxu0
    %4986 = vmatprep.subr.mxu0 0.0
    %v4987 = vand.u32 %v4610, 4294901760
    %4988 = vmatpush1.xpose.msra.mxu0 %v4987
    %4989 = vmatprep.subr.mxu0 0.0
    %4990 = vmatpush1.xpose.msra.mxu0 0.0
    %4991 = vmatprep.subr.mxu0 0.0
    %4992 = vmatpush1.xpose.msra.mxu0 0.0
    %4993 = vmatprep.subr.mxu0 0.0
    %4994 = vmatpush1.xpose.msra.mxu0 0.0
    %4995 = vmatprep.subr.mxu0 0.0
    %4996 = vmatpush1.xpose.msra.mxu0 0.0
    %4997 = vmatprep.subr.mxu0 0.0
    %4998 = vmatpush1.xpose.msra.mxu0 0.0
    %4999 = vmatprep.subr.mxu0 0.0
    %5000 = vmatpush1.xpose.msra.mxu0 0.0
    %5001 = vmatprep.subr.mxu0 0.0
    %5002 = vmatpush1.xpose.msra.mxu0 0.0
    %5003 = vmatprep.subr.mxu0 0.0
    %5004 = vmatpush1.xpose.msra.mxu0 0.0
    %5005 = vmatprep.subr.mxu0 0.0
    %5006 = vmatpush1.xpose.msra.mxu0 0.0
    %5007 = vmatprep.subr.mxu0 0.0
    %5008 = vmatpush1.xpose.msra.mxu0 0.0
    %5009 = vmatprep.subr.mxu0 0.0
    %5010 = vmatpush1.xpose.msra.mxu0 0.0
    %5011 = vmatprep.subr.mxu0 0.0
    %5012 = vmatpush1.xpose.msra.mxu0 0.0
    %5013 = vmatprep.subr.mxu0 0.0
    %5014 = vmatpush1.xpose.msra.mxu0 0.0
    %5015 = vmatprep.subr.mxu0 0.0
    %5016 = vmatpush1.xpose.msra.mxu0 0.0
    %5017 = vmatprep.subr.mxu0 0.0
    %5018 = vmatpush1.xpose.msra.mxu0 0.0
    %5019 = vmatprep.subr.mxu0 0.0
    %5020 = vmatpush1.xpose.msra.mxu0 0.0
    %5021 = vmatprep.subr.mxu0 0.0
    %5022 = vmatpush1.xpose.msra.mxu0 0.0
    %5023 = vmatprep.subr.mxu0 0.0
    %5024 = vmatpush1.xpose.msra.mxu0 0.0
    %5025 = vmatprep.subr.mxu0 0.0
    %5026 = vmatpush1.xpose.msra.mxu0 0.0
    %5027 = vmatprep.subr.mxu0 0.0
    %5028 = vmatpush1.xpose.msra.mxu0 0.0
    %5029 = vmatprep.subr.mxu0 0.0
    %5030 = vmatpush1.xpose.msra.mxu0 0.0
    %5031 = vmatprep.subr.mxu0 0.0
    %5032 = vmatpush1.xpose.msra.mxu0 0.0
    %5033 = vmatprep.subr.mxu0 0.0
    %5034 = vmatpush1.xpose.msra.mxu0 0.0
    %5035 = vmatprep.subr.mxu0 0.0
    %5036 = vmatpush1.xpose.msra.mxu0 0.0
    %5037 = vmatprep.subr.mxu0 0.0
    %5038 = vmatpush1.xpose.msra.mxu0 0.0
    %5039 = vmatprep.subr.mxu0 0.0
    %5040 = vmatpush1.xpose.msra.mxu0 0.0
    %5041 = vmatprep.subr.mxu0 0.0
    %5042 = vmatpush1.xpose.msra.mxu0 0.0
    %5043 = vmatprep.subr.mxu0 0.0
    %5044 = vmatpush1.xpose.msra.mxu0 0.0
    %5045 = vmatprep.subr.mxu0 0.0
    %5046 = vmatpush1.xpose.msra.mxu0 0.0
    %5047 = vmatprep.subr.mxu0 0.0
    %5048 = vmatpush1.xpose.msra.mxu0 0.0
    %5049 = vmatprep.subr.mxu0 0.0
    %5050 = vmatpush1.xpose.msra.mxu0 0.0
    %5051 = vmatprep.mubr.f32.mxu0 0.0
    %v5052 = vand.u32 %v3709, 4294901760
    %5053 = vmatmul.mubr.f32.gmra.mrb[0].mxu0 %v5052
    %v5054 = vpop.f32.mrb[0].mxu0
    %v5055 = vadd.f32 %v4983, %v5054
    %v5056 = vpop.f32.mrb[0].mxu0
    %5057 = vdwg.mxu0
    %v5059 = vsel %vm26, %v3703, 0
    %5061 = vmatprep.subr.mxu0 0.0
    %v5062 = vand.u32 %v5059, 4294901760
    %5063 = vmatpush1.xpose.msra.mxu0 %v5062
    %5064 = vmatprep.subr.mxu0 0.0
    %5065 = vmatpush1.xpose.msra.mxu0 0.0
    %5066 = vmatprep.subr.mxu0 0.0
    %5067 = vmatpush1.xpose.msra.mxu0 0.0
    %5068 = vmatprep.subr.mxu0 0.0
    %5069 = vmatpush1.xpose.msra.mxu0 0.0
    %5070 = vmatprep.subr.mxu0 0.0
    %5071 = vmatpush1.xpose.msra.mxu0 0.0
    %5072 = vmatprep.subr.mxu0 0.0
    %5073 = vmatpush1.xpose.msra.mxu0 0.0
    %5074 = vmatprep.subr.mxu0 0.0
    %5075 = vmatpush1.xpose.msra.mxu0 0.0
    %5076 = vmatprep.subr.mxu0 0.0
    %5077 = vmatpush1.xpose.msra.mxu0 0.0
    %5078 = vmatprep.subr.mxu0 0.0
    %5079 = vmatpush1.xpose.msra.mxu0 0.0
    %5080 = vmatprep.subr.mxu0 0.0
    %5081 = vmatpush1.xpose.msra.mxu0 0.0
    %5082 = vmatprep.subr.mxu0 0.0
    %5083 = vmatpush1.xpose.msra.mxu0 0.0
    %5084 = vmatprep.subr.mxu0 0.0
    %5085 = vmatpush1.xpose.msra.mxu0 0.0
    %5086 = vmatprep.subr.mxu0 0.0
    %5087 = vmatpush1.xpose.msra.mxu0 0.0
    %5088 = vmatprep.subr.mxu0 0.0
    %5089 = vmatpush1.xpose.msra.mxu0 0.0
    %5090 = vmatprep.subr.mxu0 0.0
    %5091 = vmatpush1.xpose.msra.mxu0 0.0
    %5092 = vmatprep.subr.mxu0 0.0
    %5093 = vmatpush1.xpose.msra.mxu0 0.0
    %5094 = vmatprep.subr.mxu0 0.0
    %5095 = vmatpush1.xpose.msra.mxu0 0.0
    %5096 = vmatprep.subr.mxu0 0.0
    %5097 = vmatpush1.xpose.msra.mxu0 0.0
    %5098 = vmatprep.subr.mxu0 0.0
    %5099 = vmatpush1.xpose.msra.mxu0 0.0
    %5100 = vmatprep.subr.mxu0 0.0
    %5101 = vmatpush1.xpose.msra.mxu0 0.0
    %5102 = vmatprep.subr.mxu0 0.0
    %5103 = vmatpush1.xpose.msra.mxu0 0.0
    %5104 = vmatprep.subr.mxu0 0.0
    %5105 = vmatpush1.xpose.msra.mxu0 0.0
    %5106 = vmatprep.subr.mxu0 0.0
    %5107 = vmatpush1.xpose.msra.mxu0 0.0
    %5108 = vmatprep.subr.mxu0 0.0
    %5109 = vmatpush1.xpose.msra.mxu0 0.0
    %5110 = vmatprep.subr.mxu0 0.0
    %5111 = vmatpush1.xpose.msra.mxu0 0.0
    %5112 = vmatprep.subr.mxu0 0.0
    %5113 = vmatpush1.xpose.msra.mxu0 0.0
    %5114 = vmatprep.subr.mxu0 0.0
    %5115 = vmatpush1.xpose.msra.mxu0 0.0
    %5116 = vmatprep.subr.mxu0 0.0
    %5117 = vmatpush1.xpose.msra.mxu0 0.0
    %5118 = vmatprep.subr.mxu0 0.0
    %5119 = vmatpush1.xpose.msra.mxu0 0.0
    %5120 = vmatprep.subr.mxu0 0.0
    %5121 = vmatpush1.xpose.msra.mxu0 0.0
    %5122 = vmatprep.subr.mxu0 0.0
    %5123 = vmatpush1.xpose.msra.mxu0 0.0
    %5124 = vmatprep.subr.mxu0 0.0
    %5125 = vmatpush1.xpose.msra.mxu0 0.0
    %5126 = vmatprep.mubr.f32.mxu0 0.0
    %v5127 = vand.u32 %v3709, 4294901760
    %v5128 = vsub.f32 %v3709, %v5127
    %v5129 = vand.u32 %v5128, 4294901760
    %v5130 = vsub.f32 %v5128, %v5129
    %v5131 = vand.u32 %v5130, 4294901760
    %5132 = vmatmul.mubr.f32.gmra.mrb[0].mxu0 %v5131
    %v5133 = vpop.f32.mrb[0].mxu0
    %v5134 = vadd.f32 0.0, %v5133
    %v5135 = vpop.f32.mrb[0].mxu0
    %5136 = vdwg.mxu0
    %5137 = vmatprep.subr.mxu0 0.0
    %v5138 = vand.u32 %v5059, 4294901760
    %v5139 = vsub.f32 %v5059, %v5138
    %v5140 = vand.u32 %v5139, 4294901760
    %v5141 = vsub.f32 %v5139, %v5140
    %v5142 = vand.u32 %v5141, 4294901760
    %5143 = vmatpush1.xpose.msra.mxu0 %v5142
    %5144 = vmatprep.subr.mxu0 0.0
    %5145 = vmatpush1.xpose.msra.mxu0 0.0
    %5146 = vmatprep.subr.mxu0 0.0
    %5147 = vmatpush1.xpose.msra.mxu0 0.0
    %5148 = vmatprep.subr.mxu0 0.0
    %5149 = vmatpush1.xpose.msra.mxu0 0.0
    %5150 = vmatprep.subr.mxu0 0.0
    %5151 = vmatpush1.xpose.msra.mxu0 0.0
    %5152 = vmatprep.subr.mxu0 0.0
    %5153 = vmatpush1.xpose.msra.mxu0 0.0
    %5154 = vmatprep.subr.mxu0 0.0
    %5155 = vmatpush1.xpose.msra.mxu0 0.0
    %5156 = vmatprep.subr.mxu0 0.0
    %5157 = vmatpush1.xpose.msra.mxu0 0.0
    %5158 = vmatprep.subr.mxu0 0.0
    %5159 = vmatpush1.xpose.msra.mxu0 0.0
    %5160 = vmatprep.subr.mxu0 0.0
    %5161 = vmatpush1.xpose.msra.mxu0 0.0
    %5162 = vmatprep.subr.mxu0 0.0
    %5163 = vmatpush1.xpose.msra.mxu0 0.0
    %5164 = vmatprep.subr.mxu0 0.0
    %5165 = vmatpush1.xpose.msra.mxu0 0.0
    %5166 = vmatprep.subr.mxu0 0.0
    %5167 = vmatpush1.xpose.msra.mxu0 0.0
    %5168 = vmatprep.subr.mxu0 0.0
    %5169 = vmatpush1.xpose.msra.mxu0 0.0
    %5170 = vmatprep.subr.mxu0 0.0
    %5171 = vmatpush1.xpose.msra.mxu0 0.0
    %5172 = vmatprep.subr.mxu0 0.0
    %5173 = vmatpush1.xpose.msra.mxu0 0.0
    %5174 = vmatprep.subr.mxu0 0.0
    %5175 = vmatpush1.xpose.msra.mxu0 0.0
    %5176 = vmatprep.subr.mxu0 0.0
    %5177 = vmatpush1.xpose.msra.mxu0 0.0
    %5178 = vmatprep.subr.mxu0 0.0
    %5179 = vmatpush1.xpose.msra.mxu0 0.0
    %5180 = vmatprep.subr.mxu0 0.0
    %5181 = vmatpush1.xpose.msra.mxu0 0.0
    %5182 = vmatprep.subr.mxu0 0.0
    %5183 = vmatpush1.xpose.msra.mxu0 0.0
    %5184 = vmatprep.subr.mxu0 0.0
    %5185 = vmatpush1.xpose.msra.mxu0 0.0
    %5186 = vmatprep.subr.mxu0 0.0
    %5187 = vmatpush1.xpose.msra.mxu0 0.0
    %5188 = vmatprep.subr.mxu0 0.0
    %5189 = vmatpush1.xpose.msra.mxu0 0.0
    %5190 = vmatprep.subr.mxu0 0.0
    %5191 = vmatpush1.xpose.msra.mxu0 0.0
    %5192 = vmatprep.subr.mxu0 0.0
    %5193 = vmatpush1.xpose.msra.mxu0 0.0
    %5194 = vmatprep.subr.mxu0 0.0
    %5195 = vmatpush1.xpose.msra.mxu0 0.0
    %5196 = vmatprep.subr.mxu0 0.0
    %5197 = vmatpush1.xpose.msra.mxu0 0.0
    %5198 = vmatprep.subr.mxu0 0.0
    %5199 = vmatpush1.xpose.msra.mxu0 0.0
    %5200 = vmatprep.subr.mxu0 0.0
    %5201 = vmatpush1.xpose.msra.mxu0 0.0
    %5202 = vmatprep.subr.mxu0 0.0
    %5203 = vmatpush1.xpose.msra.mxu0 0.0
    %5204 = vmatprep.subr.mxu0 0.0
    %5205 = vmatpush1.xpose.msra.mxu0 0.0
    %5206 = vmatprep.mubr.f32.mxu0 0.0
    %v5207 = vand.u32 %v3709, 4294901760
    %5208 = vmatmul.mubr.f32.gmra.mrb[0].mxu0 %v5207
    %v5209 = vpop.f32.mrb[0].mxu0
    %v5210 = vadd.f32 %v5134, %v5209
    %v5211 = vpop.f32.mrb[0].mxu0
    %5212 = vdwg.mxu0
    %5213 = vmatprep.subr.mxu0 0.0
    %v5214 = vand.u32 %v5059, 4294901760
    %v5215 = vsub.f32 %v5059, %v5214
    %5216 = vmatpush1.xpose.msra.mxu0 %v5215
    %5217 = vmatprep.subr.mxu0 0.0
    %5218 = vmatpush1.xpose.msra.mxu0 0.0
    %5219 = vmatprep.subr.mxu0 0.0
    %5220 = vmatpush1.xpose.msra.mxu0 0.0
    %5221 = vmatprep.subr.mxu0 0.0
    %5222 = vmatpush1.xpose.msra.mxu0 0.0
    %5223 = vmatprep.subr.mxu0 0.0
    %5224 = vmatpush1.xpose.msra.mxu0 0.0
    %5225 = vmatprep.subr.mxu0 0.0
    %5226 = vmatpush1.xpose.msra.mxu0 0.0
    %5227 = vmatprep.subr.mxu0 0.0
    %5228 = vmatpush1.xpose.msra.mxu0 0.0
    %5229 = vmatprep.subr.mxu0 0.0
    %5230 = vmatpush1.xpose.msra.mxu0 0.0
    %5231 = vmatprep.subr.mxu0 0.0
    %5232 = vmatpush1.xpose.msra.mxu0 0.0
    %5233 = vmatprep.subr.mxu0 0.0
    %5234 = vmatpush1.xpose.msra.mxu0 0.0
    %5235 = vmatprep.subr.mxu0 0.0
    %5236 = vmatpush1.xpose.msra.mxu0 0.0
    %5237 = vmatprep.subr.mxu0 0.0
    %5238 = vmatpush1.xpose.msra.mxu0 0.0
    %5239 = vmatprep.subr.mxu0 0.0
    %5240 = vmatpush1.xpose.msra.mxu0 0.0
    %5241 = vmatprep.subr.mxu0 0.0
    %5242 = vmatpush1.xpose.msra.mxu0 0.0
    %5243 = vmatprep.subr.mxu0 0.0
    %5244 = vmatpush1.xpose.msra.mxu0 0.0
    %5245 = vmatprep.subr.mxu0 0.0
    %5246 = vmatpush1.xpose.msra.mxu0 0.0
    %5247 = vmatprep.subr.mxu0 0.0
    %5248 = vmatpush1.xpose.msra.mxu0 0.0
    %5249 = vmatprep.subr.mxu0 0.0
    %5250 = vmatpush1.xpose.msra.mxu0 0.0
    %5251 = vmatprep.subr.mxu0 0.0
    %5252 = vmatpush1.xpose.msra.mxu0 0.0
    %5253 = vmatprep.subr.mxu0 0.0
    %5254 = vmatpush1.xpose.msra.mxu0 0.0
    %5255 = vmatprep.subr.mxu0 0.0
    %5256 = vmatpush1.xpose.msra.mxu0 0.0
    %5257 = vmatprep.subr.mxu0 0.0
    %5258 = vmatpush1.xpose.msra.mxu0 0.0
    %5259 = vmatprep.subr.mxu0 0.0
    %5260 = vmatpush1.xpose.msra.mxu0 0.0
    %5261 = vmatprep.subr.mxu0 0.0
    %5262 = vmatpush1.xpose.msra.mxu0 0.0
    %5263 = vmatprep.subr.mxu0 0.0
    %5264 = vmatpush1.xpose.msra.mxu0 0.0
    %5265 = vmatprep.subr.mxu0 0.0
    %5266 = vmatpush1.xpose.msra.mxu0 0.0
    %5267 = vmatprep.subr.mxu0 0.0
    %5268 = vmatpush1.xpose.msra.mxu0 0.0
    %5269 = vmatprep.subr.mxu0 0.0
    %5270 = vmatpush1.xpose.msra.mxu0 0.0
    %5271 = vmatprep.subr.mxu0 0.0
    %5272 = vmatpush1.xpose.msra.mxu0 0.0
    %5273 = vmatprep.subr.mxu0 0.0
    %5274 = vmatpush1.xpose.msra.mxu0 0.0
    %5275 = vmatprep.subr.mxu0 0.0
    %5276 = vmatpush1.xpose.msra.mxu0 0.0
    %5277 = vmatprep.subr.mxu0 0.0
    %5278 = vmatpush1.xpose.msra.mxu0 0.0
    %5279 = vmatprep.mubr.f32.mxu0 0.0
    %v5280 = vand.u32 %v3709, 4294901760
    %v5281 = vsub.f32 %v3709, %v5280
    %5282 = vmatmul.mubr.f32.gmra.mrb[0].mxu0 %v5281
    %v5283 = vpop.f32.mrb[0].mxu0
    %v5284 = vadd.f32 %v5210, %v5283
    %v5285 = vpop.f32.mrb[0].mxu0
    %5286 = vdwg.mxu0
    %5287 = vmatprep.subr.mxu0 0.0
    %v5288 = vand.u32 %v5059, 4294901760
    %5289 = vmatpush1.xpose.msra.mxu0 %v5288
    %5290 = vmatprep.subr.mxu0 0.0
    %5291 = vmatpush1.xpose.msra.mxu0 0.0
    %5292 = vmatprep.subr.mxu0 0.0
    %5293 = vmatpush1.xpose.msra.mxu0 0.0
    %5294 = vmatprep.subr.mxu0 0.0
    %5295 = vmatpush1.xpose.msra.mxu0 0.0
    %5296 = vmatprep.subr.mxu0 0.0
    %5297 = vmatpush1.xpose.msra.mxu0 0.0
    %5298 = vmatprep.subr.mxu0 0.0
    %5299 = vmatpush1.xpose.msra.mxu0 0.0
    %5300 = vmatprep.subr.mxu0 0.0
    %5301 = vmatpush1.xpose.msra.mxu0 0.0
    %5302 = vmatprep.subr.mxu0 0.0
    %5303 = vmatpush1.xpose.msra.mxu0 0.0
    %5304 = vmatprep.subr.mxu0 0.0
    %5305 = vmatpush1.xpose.msra.mxu0 0.0
    %5306 = vmatprep.subr.mxu0 0.0
    %5307 = vmatpush1.xpose.msra.mxu0 0.0
    %5308 = vmatprep.subr.mxu0 0.0
    %5309 = vmatpush1.xpose.msra.mxu0 0.0
    %5310 = vmatprep.subr.mxu0 0.0
    %5311 = vmatpush1.xpose.msra.mxu0 0.0
    %5312 = vmatprep.subr.mxu0 0.0
    %5313 = vmatpush1.xpose.msra.mxu0 0.0
    %5314 = vmatprep.subr.mxu0 0.0
    %5315 = vmatpush1.xpose.msra.mxu0 0.0
    %5316 = vmatprep.subr.mxu0 0.0
    %5317 = vmatpush1.xpose.msra.mxu0 0.0
    %5318 = vmatprep.subr.mxu0 0.0
    %5319 = vmatpush1.xpose.msra.mxu0 0.0
    %5320 = vmatprep.subr.mxu0 0.0
    %5321 = vmatpush1.xpose.msra.mxu0 0.0
    %5322 = vmatprep.subr.mxu0 0.0
    %5323 = vmatpush1.xpose.msra.mxu0 0.0
    %5324 = vmatprep.subr.mxu0 0.0
    %5325 = vmatpush1.xpose.msra.mxu0 0.0
    %5326 = vmatprep.subr.mxu0 0.0
    %5327 = vmatpush1.xpose.msra.mxu0 0.0
    %5328 = vmatprep.subr.mxu0 0.0
    %5329 = vmatpush1.xpose.msra.mxu0 0.0
    %5330 = vmatprep.subr.mxu0 0.0
    %5331 = vmatpush1.xpose.msra.mxu0 0.0
    %5332 = vmatprep.subr.mxu0 0.0
    %5333 = vmatpush1.xpose.msra.mxu0 0.0
    %5334 = vmatprep.subr.mxu0 0.0
    %5335 = vmatpush1.xpose.msra.mxu0 0.0
    %5336 = vmatprep.subr.mxu0 0.0
    %5337 = vmatpush1.xpose.msra.mxu0 0.0
    %5338 = vmatprep.subr.mxu0 0.0
    %5339 = vmatpush1.xpose.msra.mxu0 0.0
    %5340 = vmatprep.subr.mxu0 0.0
    %5341 = vmatpush1.xpose.msra.mxu0 0.0
    %5342 = vmatprep.subr.mxu0 0.0
    %5343 = vmatpush1.xpose.msra.mxu0 0.0
    %5344 = vmatprep.subr.mxu0 0.0
    %5345 = vmatpush1.xpose.msra.mxu0 0.0
    %5346 = vmatprep.subr.mxu0 0.0
    %5347 = vmatpush1.xpose.msra.mxu0 0.0
    %5348 = vmatprep.subr.mxu0 0.0
    %5349 = vmatpush1.xpose.msra.mxu0 0.0
    %5350 = vmatprep.subr.mxu0 0.0
    %5351 = vmatpush1.xpose.msra.mxu0 0.0
    %5352 = vmatprep.mubr.f32.mxu0 0.0
    %v5353 = vand.u32 %v3709, 4294901760
    %v5354 = vsub.f32 %v3709, %v5353
    %v5355 = vand.u32 %v5354, 4294901760
    %5356 = vmatmul.mubr.f32.gmra.mrb[0].mxu0 %v5355
    %v5357 = vpop.f32.mrb[0].mxu0
    %v5358 = vadd.f32 %v5284, %v5357
    %v5359 = vpop.f32.mrb[0].mxu0
    %5360 = vdwg.mxu0
    %5361 = vmatprep.subr.mxu0 0.0
    %v5362 = vand.u32 %v5059, 4294901760
    %v5363 = vsub.f32 %v5059, %v5362
    %v5364 = vand.u32 %v5363, 4294901760
    %5365 = vmatpush1.xpose.msra.mxu0 %v5364
    %5366 = vmatprep.subr.mxu0 0.0
    %5367 = vmatpush1.xpose.msra.mxu0 0.0
    %5368 = vmatprep.subr.mxu0 0.0
    %5369 = vmatpush1.xpose.msra.mxu0 0.0
    %5370 = vmatprep.subr.mxu0 0.0
    %5371 = vmatpush1.xpose.msra.mxu0 0.0
    %5372 = vmatprep.subr.mxu0 0.0
    %5373 = vmatpush1.xpose.msra.mxu0 0.0
    %5374 = vmatprep.subr.mxu0 0.0
    %5375 = vmatpush1.xpose.msra.mxu0 0.0
    %5376 = vmatprep.subr.mxu0 0.0
    %5377 = vmatpush1.xpose.msra.mxu0 0.0
    %5378 = vmatprep.subr.mxu0 0.0
    %5379 = vmatpush1.xpose.msra.mxu0 0.0
    %5380 = vmatprep.subr.mxu0 0.0
    %5381 = vmatpush1.xpose.msra.mxu0 0.0
    %5382 = vmatprep.subr.mxu0 0.0
    %5383 = vmatpush1.xpose.msra.mxu0 0.0
    %5384 = vmatprep.subr.mxu0 0.0
    %5385 = vmatpush1.xpose.msra.mxu0 0.0
    %5386 = vmatprep.subr.mxu0 0.0
    %5387 = vmatpush1.xpose.msra.mxu0 0.0
    %5388 = vmatprep.subr.mxu0 0.0
    %5389 = vmatpush1.xpose.msra.mxu0 0.0
    %5390 = vmatprep.subr.mxu0 0.0
    %5391 = vmatpush1.xpose.msra.mxu0 0.0
    %5392 = vmatprep.subr.mxu0 0.0
    %5393 = vmatpush1.xpose.msra.mxu0 0.0
    %5394 = vmatprep.subr.mxu0 0.0
    %5395 = vmatpush1.xpose.msra.mxu0 0.0
    %5396 = vmatprep.subr.mxu0 0.0
    %5397 = vmatpush1.xpose.msra.mxu0 0.0
    %5398 = vmatprep.subr.mxu0 0.0
    %5399 = vmatpush1.xpose.msra.mxu0 0.0
    %5400 = vmatprep.subr.mxu0 0.0
    %5401 = vmatpush1.xpose.msra.mxu0 0.0
    %5402 = vmatprep.subr.mxu0 0.0
    %5403 = vmatpush1.xpose.msra.mxu0 0.0
    %5404 = vmatprep.subr.mxu0 0.0
    %5405 = vmatpush1.xpose.msra.mxu0 0.0
    %5406 = vmatprep.subr.mxu0 0.0
    %5407 = vmatpush1.xpose.msra.mxu0 0.0
    %5408 = vmatprep.subr.mxu0 0.0
    %5409 = vmatpush1.xpose.msra.mxu0 0.0
    %5410 = vmatprep.subr.mxu0 0.0
    %5411 = vmatpush1.xpose.msra.mxu0 0.0
    %5412 = vmatprep.subr.mxu0 0.0
    %5413 = vmatpush1.xpose.msra.mxu0 0.0
    %5414 = vmatprep.subr.mxu0 0.0
    %5415 = vmatpush1.xpose.msra.mxu0 0.0
    %5416 = vmatprep.subr.mxu0 0.0
    %5417 = vmatpush1.xpose.msra.mxu0 0.0
    %5418 = vmatprep.subr.mxu0 0.0
    %5419 = vmatpush1.xpose.msra.mxu0 0.0
    %5420 = vmatprep.subr.mxu0 0.0
    %5421 = vmatpush1.xpose.msra.mxu0 0.0
    %5422 = vmatprep.subr.mxu0 0.0
    %5423 = vmatpush1.xpose.msra.mxu0 0.0
    %5424 = vmatprep.subr.mxu0 0.0
    %5425 = vmatpush1.xpose.msra.mxu0 0.0
    %5426 = vmatprep.subr.mxu0 0.0
    %5427 = vmatpush1.xpose.msra.mxu0 0.0
    %5428 = vmatprep.mubr.f32.mxu0 0.0
    %v5429 = vand.u32 %v3709, 4294901760
    %5430 = vmatmul.mubr.f32.gmra.mrb[0].mxu0 %v5429
    %v5431 = vpop.f32.mrb[0].mxu0
    %v5432 = vadd.f32 %v5358, %v5431
    %v5433 = vpop.f32.mrb[0].mxu0
    %5434 = vdwg.mxu0
    %5435 = vmatprep.subr.mxu0 0.0
    %v5436 = vand.u32 %v5059, 4294901760
    %5437 = vmatpush1.xpose.msra.mxu0 %v5436
    %5438 = vmatprep.subr.mxu0 0.0
    %5439 = vmatpush1.xpose.msra.mxu0 0.0
    %5440 = vmatprep.subr.mxu0 0.0
    %5441 = vmatpush1.xpose.msra.mxu0 0.0
    %5442 = vmatprep.subr.mxu0 0.0
    %5443 = vmatpush1.xpose.msra.mxu0 0.0
    %5444 = vmatprep.subr.mxu0 0.0
    %5445 = vmatpush1.xpose.msra.mxu0 0.0
    %5446 = vmatprep.subr.mxu0 0.0
    %5447 = vmatpush1.xpose.msra.mxu0 0.0
    %5448 = vmatprep.subr.mxu0 0.0
    %5449 = vmatpush1.xpose.msra.mxu0 0.0
    %5450 = vmatprep.subr.mxu0 0.0
    %5451 = vmatpush1.xpose.msra.mxu0 0.0
    %5452 = vmatprep.subr.mxu0 0.0
    %5453 = vmatpush1.xpose.msra.mxu0 0.0
    %5454 = vmatprep.subr.mxu0 0.0
    %5455 = vmatpush1.xpose.msra.mxu0 0.0
    %5456 = vmatprep.subr.mxu0 0.0
    %5457 = vmatpush1.xpose.msra.mxu0 0.0
    %5458 = vmatprep.subr.mxu0 0.0
    %5459 = vmatpush1.xpose.msra.mxu0 0.0
    %5460 = vmatprep.subr.mxu0 0.0
    %5461 = vmatpush1.xpose.msra.mxu0 0.0
    %5462 = vmatprep.subr.mxu0 0.0
    %5463 = vmatpush1.xpose.msra.mxu0 0.0
    %5464 = vmatprep.subr.mxu0 0.0
    %5465 = vmatpush1.xpose.msra.mxu0 0.0
    %5466 = vmatprep.subr.mxu0 0.0
    %5467 = vmatpush1.xpose.msra.mxu0 0.0
    %5468 = vmatprep.subr.mxu0 0.0
    %5469 = vmatpush1.xpose.msra.mxu0 0.0
    %5470 = vmatprep.subr.mxu0 0.0
    %5471 = vmatpush1.xpose.msra.mxu0 0.0
    %5472 = vmatprep.subr.mxu0 0.0
    %5473 = vmatpush1.xpose.msra.mxu0 0.0
    %5474 = vmatprep.subr.mxu0 0.0
    %5475 = vmatpush1.xpose.msra.mxu0 0.0
    %5476 = vmatprep.subr.mxu0 0.0
    %5477 = vmatpush1.xpose.msra.mxu0 0.0
    %5478 = vmatprep.subr.mxu0 0.0
    %5479 = vmatpush1.xpose.msra.mxu0 0.0
    %5480 = vmatprep.subr.mxu0 0.0
    %5481 = vmatpush1.xpose.msra.mxu0 0.0
    %5482 = vmatprep.subr.mxu0 0.0
    %5483 = vmatpush1.xpose.msra.mxu0 0.0
    %5484 = vmatprep.subr.mxu0 0.0
    %5485 = vmatpush1.xpose.msra.mxu0 0.0
    %5486 = vmatprep.subr.mxu0 0.0
    %5487 = vmatpush1.xpose.msra.mxu0 0.0
    %5488 = vmatprep.subr.mxu0 0.0
    %5489 = vmatpush1.xpose.msra.mxu0 0.0
    %5490 = vmatprep.subr.mxu0 0.0
    %5491 = vmatpush1.xpose.msra.mxu0 0.0
    %5492 = vmatprep.subr.mxu0 0.0
    %5493 = vmatpush1.xpose.msra.mxu0 0.0
    %5494 = vmatprep.subr.mxu0 0.0
    %5495 = vmatpush1.xpose.msra.mxu0 0.0
    %5496 = vmatprep.subr.mxu0 0.0
    %5497 = vmatpush1.xpose.msra.mxu0 0.0
    %5498 = vmatprep.subr.mxu0 0.0
    %5499 = vmatpush1.xpose.msra.mxu0 0.0
    %5500 = vmatprep.mubr.f32.mxu0 0.0
    %v5501 = vand.u32 %v3709, 4294901760
    %5502 = vmatmul.mubr.f32.gmra.mrb[0].mxu0 %v5501
    %v5503 = vpop.f32.mrb[0].mxu0
    %v5504 = vadd.f32 %v5432, %v5503
    %v5505 = vpop.f32.mrb[0].mxu0
    %5506 = vdwg.mxu0
    %v5508 = vsel %vm26, %v3704, 0
    %5510 = vmatprep.subr.mxu0 0.0
    %v5511 = vand.u32 %v5508, 4294901760
    %5512 = vmatpush1.xpose.msra.mxu0 %v5511
    %5513 = vmatprep.subr.mxu0 0.0
    %5514 = vmatpush1.xpose.msra.mxu0 0.0
    %5515 = vmatprep.subr.mxu0 0.0
    %5516 = vmatpush1.xpose.msra.mxu0 0.0
    %5517 = vmatprep.subr.mxu0 0.0
    %5518 = vmatpush1.xpose.msra.mxu0 0.0
    %5519 = vmatprep.subr.mxu0 0.0
    %5520 = vmatpush1.xpose.msra.mxu0 0.0
    %5521 = vmatprep.subr.mxu0 0.0
    %5522 = vmatpush1.xpose.msra.mxu0 0.0
    %5523 = vmatprep.subr.mxu0 0.0
    %5524 = vmatpush1.xpose.msra.mxu0 0.0
    %5525 = vmatprep.subr.mxu0 0.0
    %5526 = vmatpush1.xpose.msra.mxu0 0.0
    %5527 = vmatprep.subr.mxu0 0.0
    %5528 = vmatpush1.xpose.msra.mxu0 0.0
    %5529 = vmatprep.subr.mxu0 0.0
    %5530 = vmatpush1.xpose.msra.mxu0 0.0
    %5531 = vmatprep.subr.mxu0 0.0
    %5532 = vmatpush1.xpose.msra.mxu0 0.0
    %5533 = vmatprep.subr.mxu0 0.0
    %5534 = vmatpush1.xpose.msra.mxu0 0.0
    %5535 = vmatprep.subr.mxu0 0.0
    %5536 = vmatpush1.xpose.msra.mxu0 0.0
    %5537 = vmatprep.subr.mxu0 0.0
    %5538 = vmatpush1.xpose.msra.mxu0 0.0
    %5539 = vmatprep.subr.mxu0 0.0
    %5540 = vmatpush1.xpose.msra.mxu0 0.0
    %5541 = vmatprep.subr.mxu0 0.0
    %5542 = vmatpush1.xpose.msra.mxu0 0.0
    %5543 = vmatprep.subr.mxu0 0.0
    %5544 = vmatpush1.xpose.msra.mxu0 0.0
    %5545 = vmatprep.subr.mxu0 0.0
    %5546 = vmatpush1.xpose.msra.mxu0 0.0
    %5547 = vmatprep.subr.mxu0 0.0
    %5548 = vmatpush1.xpose.msra.mxu0 0.0
    %5549 = vmatprep.subr.mxu0 0.0
    %5550 = vmatpush1.xpose.msra.mxu0 0.0
    %5551 = vmatprep.subr.mxu0 0.0
    %5552 = vmatpush1.xpose.msra.mxu0 0.0
    %5553 = vmatprep.subr.mxu0 0.0
    %5554 = vmatpush1.xpose.msra.mxu0 0.0
    %5555 = vmatprep.subr.mxu0 0.0
    %5556 = vmatpush1.xpose.msra.mxu0 0.0
    %5557 = vmatprep.subr.mxu0 0.0
    %5558 = vmatpush1.xpose.msra.mxu0 0.0
    %5559 = vmatprep.subr.mxu0 0.0
    %5560 = vmatpush1.xpose.msra.mxu0 0.0
    %5561 = vmatprep.subr.mxu0 0.0
    %5562 = vmatpush1.xpose.msra.mxu0 0.0
    %5563 = vmatprep.subr.mxu0 0.0
    %5564 = vmatpush1.xpose.msra.mxu0 0.0
    %5565 = vmatprep.subr.mxu0 0.0
    %5566 = vmatpush1.xpose.msra.mxu0 0.0
    %5567 = vmatprep.subr.mxu0 0.0
    %5568 = vmatpush1.xpose.msra.mxu0 0.0
    %5569 = vmatprep.subr.mxu0 0.0
    %5570 = vmatpush1.xpose.msra.mxu0 0.0
    %5571 = vmatprep.subr.mxu0 0.0
    %5572 = vmatpush1.xpose.msra.mxu0 0.0
    %5573 = vmatprep.subr.mxu0 0.0
    %5574 = vmatpush1.xpose.msra.mxu0 0.0
    %5575 = vmatprep.mubr.f32.mxu0 0.0
    %v5576 = vand.u32 %v3709, 4294901760
    %v5577 = vsub.f32 %v3709, %v5576
    %v5578 = vand.u32 %v5577, 4294901760
    %v5579 = vsub.f32 %v5577, %v5578
    %v5580 = vand.u32 %v5579, 4294901760
    %5581 = vmatmul.mubr.f32.gmra.mrb[0].mxu0 %v5580
    %v5582 = vpop.f32.mrb[0].mxu0
    %v5583 = vadd.f32 0.0, %v5582
    %v5584 = vpop.f32.mrb[0].mxu0
    %5585 = vdwg.mxu0
    %5586 = vmatprep.subr.mxu0 0.0
    %v5587 = vand.u32 %v5508, 4294901760
    %v5588 = vsub.f32 %v5508, %v5587
    %v5589 = vand.u32 %v5588, 4294901760
    %v5590 = vsub.f32 %v5588, %v5589
    %v5591 = vand.u32 %v5590, 4294901760
    %5592 = vmatpush1.xpose.msra.mxu0 %v5591
    %5593 = vmatprep.subr.mxu0 0.0
    %5594 = vmatpush1.xpose.msra.mxu0 0.0
    %5595 = vmatprep.subr.mxu0 0.0
    %5596 = vmatpush1.xpose.msra.mxu0 0.0
    %5597 = vmatprep.subr.mxu0 0.0
    %5598 = vmatpush1.xpose.msra.mxu0 0.0
    %5599 = vmatprep.subr.mxu0 0.0
    %5600 = vmatpush1.xpose.msra.mxu0 0.0
    %5601 = vmatprep.subr.mxu0 0.0
    %5602 = vmatpush1.xpose.msra.mxu0 0.0
    %5603 = vmatprep.subr.mxu0 0.0
    %5604 = vmatpush1.xpose.msra.mxu0 0.0
    %5605 = vmatprep.subr.mxu0 0.0
    %5606 = vmatpush1.xpose.msra.mxu0 0.0
    %5607 = vmatprep.subr.mxu0 0.0
    %5608 = vmatpush1.xpose.msra.mxu0 0.0
    %5609 = vmatprep.subr.mxu0 0.0
    %5610 = vmatpush1.xpose.msra.mxu0 0.0
    %5611 = vmatprep.subr.mxu0 0.0
    %5612 = vmatpush1.xpose.msra.mxu0 0.0
    %5613 = vmatprep.subr.mxu0 0.0
    %5614 = vmatpush1.xpose.msra.mxu0 0.0
    %5615 = vmatprep.subr.mxu0 0.0
    %5616 = vmatpush1.xpose.msra.mxu0 0.0
    %5617 = vmatprep.subr.mxu0 0.0
    %5618 = vmatpush1.xpose.msra.mxu0 0.0
    %5619 = vmatprep.subr.mxu0 0.0
    %5620 = vmatpush1.xpose.msra.mxu0 0.0
    %5621 = vmatprep.subr.mxu0 0.0
    %5622 = vmatpush1.xpose.msra.mxu0 0.0
    %5623 = vmatprep.subr.mxu0 0.0
    %5624 = vmatpush1.xpose.msra.mxu0 0.0
    %5625 = vmatprep.subr.mxu0 0.0
    %5626 = vmatpush1.xpose.msra.mxu0 0.0
    %5627 = vmatprep.subr.mxu0 0.0
    %5628 = vmatpush1.xpose.msra.mxu0 0.0
    %5629 = vmatprep.subr.mxu0 0.0
    %5630 = vmatpush1.xpose.msra.mxu0 0.0
    %5631 = vmatprep.subr.mxu0 0.0
    %5632 = vmatpush1.xpose.msra.mxu0 0.0
    %5633 = vmatprep.subr.mxu0 0.0
    %5634 = vmatpush1.xpose.msra.mxu0 0.0
    %5635 = vmatprep.subr.mxu0 0.0
    %5636 = vmatpush1.xpose.msra.mxu0 0.0
    %5637 = vmatprep.subr.mxu0 0.0
    %5638 = vmatpush1.xpose.msra.mxu0 0.0
    %5639 = vmatprep.subr.mxu0 0.0
    %5640 = vmatpush1.xpose.msra.mxu0 0.0
    %5641 = vmatprep.subr.mxu0 0.0
    %5642 = vmatpush1.xpose.msra.mxu0 0.0
    %5643 = vmatprep.subr.mxu0 0.0
    %5644 = vmatpush1.xpose.msra.mxu0 0.0
    %5645 = vmatprep.subr.mxu0 0.0
    %5646 = vmatpush1.xpose.msra.mxu0 0.0
    %5647 = vmatprep.subr.mxu0 0.0
    %5648 = vmatpush1.xpose.msra.mxu0 0.0
    %5649 = vmatprep.subr.mxu0 0.0
    %5650 = vmatpush1.xpose.msra.mxu0 0.0
    %5651 = vmatprep.subr.mxu0 0.0
    %5652 = vmatpush1.xpose.msra.mxu0 0.0
    %5653 = vmatprep.subr.mxu0 0.0
    %5654 = vmatpush1.xpose.msra.mxu0 0.0
    %5655 = vmatprep.mubr.f32.mxu0 0.0
    %v5656 = vand.u32 %v3709, 4294901760
    %5657 = vmatmul.mubr.f32.gmra.mrb[0].mxu0 %v5656
    %v5658 = vpop.f32.mrb[0].mxu0
    %v5659 = vadd.f32 %v5583, %v5658
    %v5660 = vpop.f32.mrb[0].mxu0
    %5661 = vdwg.mxu0
    %5662 = vmatprep.subr.mxu0 0.0
    %v5663 = vand.u32 %v5508, 4294901760
    %v5664 = vsub.f32 %v5508, %v5663
    %5665 = vmatpush1.xpose.msra.mxu0 %v5664
    %5666 = vmatprep.subr.mxu0 0.0
    %5667 = vmatpush1.xpose.msra.mxu0 0.0
    %5668 = vmatprep.subr.mxu0 0.0
    %5669 = vmatpush1.xpose.msra.mxu0 0.0
    %5670 = vmatprep.subr.mxu0 0.0
    %5671 = vmatpush1.xpose.msra.mxu0 0.0
    %5672 = vmatprep.subr.mxu0 0.0
    %5673 = vmatpush1.xpose.msra.mxu0 0.0
    %5674 = vmatprep.subr.mxu0 0.0
    %5675 = vmatpush1.xpose.msra.mxu0 0.0
    %5676 = vmatprep.subr.mxu0 0.0
    %5677 = vmatpush1.xpose.msra.mxu0 0.0
    %5678 = vmatprep.subr.mxu0 0.0
    %5679 = vmatpush1.xpose.msra.mxu0 0.0
    %5680 = vmatprep.subr.mxu0 0.0
    %5681 = vmatpush1.xpose.msra.mxu0 0.0
    %5682 = vmatprep.subr.mxu0 0.0
    %5683 = vmatpush1.xpose.msra.mxu0 0.0
    %5684 = vmatprep.subr.mxu0 0.0
    %5685 = vmatpush1.xpose.msra.mxu0 0.0
    %5686 = vmatprep.subr.mxu0 0.0
    %5687 = vmatpush1.xpose.msra.mxu0 0.0
    %5688 = vmatprep.subr.mxu0 0.0
    %5689 = vmatpush1.xpose.msra.mxu0 0.0
    %5690 = vmatprep.subr.mxu0 0.0
    %5691 = vmatpush1.xpose.msra.mxu0 0.0
    %5692 = vmatprep.subr.mxu0 0.0
    %5693 = vmatpush1.xpose.msra.mxu0 0.0
    %5694 = vmatprep.subr.mxu0 0.0
    %5695 = vmatpush1.xpose.msra.mxu0 0.0
    %5696 = vmatprep.subr.mxu0 0.0
    %5697 = vmatpush1.xpose.msra.mxu0 0.0
    %5698 = vmatprep.subr.mxu0 0.0
    %5699 = vmatpush1.xpose.msra.mxu0 0.0
    %5700 = vmatprep.subr.mxu0 0.0
    %5701 = vmatpush1.xpose.msra.mxu0 0.0
    %5702 = vmatprep.subr.mxu0 0.0
    %5703 = vmatpush1.xpose.msra.mxu0 0.0
    %5704 = vmatprep.subr.mxu0 0.0
    %5705 = vmatpush1.xpose.msra.mxu0 0.0
    %5706 = vmatprep.subr.mxu0 0.0
    %5707 = vmatpush1.xpose.msra.mxu0 0.0
    %5708 = vmatprep.subr.mxu0 0.0
    %5709 = vmatpush1.xpose.msra.mxu0 0.0
    %5710 = vmatprep.subr.mxu0 0.0
    %5711 = vmatpush1.xpose.msra.mxu0 0.0
    %5712 = vmatprep.subr.mxu0 0.0
    %5713 = vmatpush1.xpose.msra.mxu0 0.0
    %5714 = vmatprep.subr.mxu0 0.0
    %5715 = vmatpush1.xpose.msra.mxu0 0.0
    %5716 = vmatprep.subr.mxu0 0.0
    %5717 = vmatpush1.xpose.msra.mxu0 0.0
    %5718 = vmatprep.subr.mxu0 0.0
    %5719 = vmatpush1.xpose.msra.mxu0 0.0
    %5720 = vmatprep.subr.mxu0 0.0
    %5721 = vmatpush1.xpose.msra.mxu0 0.0
    %5722 = vmatprep.subr.mxu0 0.0
    %5723 = vmatpush1.xpose.msra.mxu0 0.0
    %5724 = vmatprep.subr.mxu0 0.0
    %5725 = vmatpush1.xpose.msra.mxu0 0.0
    %5726 = vmatprep.subr.mxu0 0.0
    %5727 = vmatpush1.xpose.msra.mxu0 0.0
    %5728 = vmatprep.mubr.f32.mxu0 0.0
    %v5729 = vand.u32 %v3709, 4294901760
    %v5730 = vsub.f32 %v3709, %v5729
    %5731 = vmatmul.mubr.f32.gmra.mrb[0].mxu0 %v5730
    %v5732 = vpop.f32.mrb[0].mxu0
    %v5733 = vadd.f32 %v5659, %v5732
    %v5734 = vpop.f32.mrb[0].mxu0
    %5735 = vdwg.mxu0
    %5736 = vmatprep.subr.mxu0 0.0
    %v5737 = vand.u32 %v5508, 4294901760
    %5738 = vmatpush1.xpose.msra.mxu0 %v5737
    %5739 = vmatprep.subr.mxu0 0.0
    %5740 = vmatpush1.xpose.msra.mxu0 0.0
    %5741 = vmatprep.subr.mxu0 0.0
    %5742 = vmatpush1.xpose.msra.mxu0 0.0
    %5743 = vmatprep.subr.mxu0 0.0
    %5744 = vmatpush1.xpose.msra.mxu0 0.0
    %5745 = vmatprep.subr.mxu0 0.0
    %5746 = vmatpush1.xpose.msra.mxu0 0.0
    %5747 = vmatprep.subr.mxu0 0.0
    %5748 = vmatpush1.xpose.msra.mxu0 0.0
    %5749 = vmatprep.subr.mxu0 0.0
    %5750 = vmatpush1.xpose.msra.mxu0 0.0
    %5751 = vmatprep.subr.mxu0 0.0
    %5752 = vmatpush1.xpose.msra.mxu0 0.0
    %5753 = vmatprep.subr.mxu0 0.0
    %5754 = vmatpush1.xpose.msra.mxu0 0.0
    %5755 = vmatprep.subr.mxu0 0.0
    %5756 = vmatpush1.xpose.msra.mxu0 0.0
    %5757 = vmatprep.subr.mxu0 0.0
    %5758 = vmatpush1.xpose.msra.mxu0 0.0
    %5759 = vmatprep.subr.mxu0 0.0
    %5760 = vmatpush1.xpose.msra.mxu0 0.0
    %5761 = vmatprep.subr.mxu0 0.0
    %5762 = vmatpush1.xpose.msra.mxu0 0.0
    %5763 = vmatprep.subr.mxu0 0.0
    %5764 = vmatpush1.xpose.msra.mxu0 0.0
    %5765 = vmatprep.subr.mxu0 0.0
    %5766 = vmatpush1.xpose.msra.mxu0 0.0
    %5767 = vmatprep.subr.mxu0 0.0
    %5768 = vmatpush1.xpose.msra.mxu0 0.0
    %5769 = vmatprep.subr.mxu0 0.0
    %5770 = vmatpush1.xpose.msra.mxu0 0.0
    %5771 = vmatprep.subr.mxu0 0.0
    %5772 = vmatpush1.xpose.msra.mxu0 0.0
    %5773 = vmatprep.subr.mxu0 0.0
    %5774 = vmatpush1.xpose.msra.mxu0 0.0
    %5775 = vmatprep.subr.mxu0 0.0
    %5776 = vmatpush1.xpose.msra.mxu0 0.0
    %5777 = vmatprep.subr.mxu0 0.0
    %5778 = vmatpush1.xpose.msra.mxu0 0.0
    %5779 = vmatprep.subr.mxu0 0.0
    %5780 = vmatpush1.xpose.msra.mxu0 0.0
    %5781 = vmatprep.subr.mxu0 0.0
    %5782 = vmatpush1.xpose.msra.mxu0 0.0
    %5783 = vmatprep.subr.mxu0 0.0
    %5784 = vmatpush1.xpose.msra.mxu0 0.0
    %5785 = vmatprep.subr.mxu0 0.0
    %5786 = vmatpush1.xpose.msra.mxu0 0.0
    %5787 = vmatprep.subr.mxu0 0.0
    %5788 = vmatpush1.xpose.msra.mxu0 0.0
    %5789 = vmatprep.subr.mxu0 0.0
    %5790 = vmatpush1.xpose.msra.mxu0 0.0
    %5791 = vmatprep.subr.mxu0 0.0
    %5792 = vmatpush1.xpose.msra.mxu0 0.0
    %5793 = vmatprep.subr.mxu0 0.0
    %5794 = vmatpush1.xpose.msra.mxu0 0.0
    %5795 = vmatprep.subr.mxu0 0.0
    %5796 = vmatpush1.xpose.msra.mxu0 0.0
    %5797 = vmatprep.subr.mxu0 0.0
    %5798 = vmatpush1.xpose.msra.mxu0 0.0
    %5799 = vmatprep.subr.mxu0 0.0
    %5800 = vmatpush1.xpose.msra.mxu0 0.0
    %5801 = vmatprep.mubr.f32.mxu0 0.0
    %v5802 = vand.u32 %v3709, 4294901760
    %v5803 = vsub.f32 %v3709, %v5802
    %v5804 = vand.u32 %v5803, 4294901760
    %5805 = vmatmul.mubr.f32.gmra.mrb[0].mxu0 %v5804
    %v5806 = vpop.f32.mrb[0].mxu0
    %v5807 = vadd.f32 %v5733, %v5806
    %v5808 = vpop.f32.mrb[0].mxu0
    %5809 = vdwg.mxu0
    %5810 = vmatprep.subr.mxu0 0.0
    %v5811 = vand.u32 %v5508, 4294901760
    %v5812 = vsub.f32 %v5508, %v5811
    %v5813 = vand.u32 %v5812, 4294901760
    %5814 = vmatpush1.xpose.msra.mxu0 %v5813
    %5815 = vmatprep.subr.mxu0 0.0
    %5816 = vmatpush1.xpose.msra.mxu0 0.0
    %5817 = vmatprep.subr.mxu0 0.0
    %5818 = vmatpush1.xpose.msra.mxu0 0.0
    %5819 = vmatprep.subr.mxu0 0.0
    %5820 = vmatpush1.xpose.msra.mxu0 0.0
    %5821 = vmatprep.subr.mxu0 0.0
    %5822 = vmatpush1.xpose.msra.mxu0 0.0
    %5823 = vmatprep.subr.mxu0 0.0
    %5824 = vmatpush1.xpose.msra.mxu0 0.0
    %5825 = vmatprep.subr.mxu0 0.0
    %5826 = vmatpush1.xpose.msra.mxu0 0.0
    %5827 = vmatprep.subr.mxu0 0.0
    %5828 = vmatpush1.xpose.msra.mxu0 0.0
    %5829 = vmatprep.subr.mxu0 0.0
    %5830 = vmatpush1.xpose.msra.mxu0 0.0
    %5831 = vmatprep.subr.mxu0 0.0
    %5832 = vmatpush1.xpose.msra.mxu0 0.0
    %5833 = vmatprep.subr.mxu0 0.0
    %5834 = vmatpush1.xpose.msra.mxu0 0.0
    %5835 = vmatprep.subr.mxu0 0.0
    %5836 = vmatpush1.xpose.msra.mxu0 0.0
    %5837 = vmatprep.subr.mxu0 0.0
    %5838 = vmatpush1.xpose.msra.mxu0 0.0
    %5839 = vmatprep.subr.mxu0 0.0
    %5840 = vmatpush1.xpose.msra.mxu0 0.0
    %5841 = vmatprep.subr.mxu0 0.0
    %5842 = vmatpush1.xpose.msra.mxu0 0.0
    %5843 = vmatprep.subr.mxu0 0.0
    %5844 = vmatpush1.xpose.msra.mxu0 0.0
    %5845 = vmatprep.subr.mxu0 0.0
    %5846 = vmatpush1.xpose.msra.mxu0 0.0
    %5847 = vmatprep.subr.mxu0 0.0
    %5848 = vmatpush1.xpose.msra.mxu0 0.0
    %5849 = vmatprep.subr.mxu0 0.0
    %5850 = vmatpush1.xpose.msra.mxu0 0.0
    %5851 = vmatprep.subr.mxu0 0.0
    %5852 = vmatpush1.xpose.msra.mxu0 0.0
    %5853 = vmatprep.subr.mxu0 0.0
    %5854 = vmatpush1.xpose.msra.mxu0 0.0
    %5855 = vmatprep.subr.mxu0 0.0
    %5856 = vmatpush1.xpose.msra.mxu0 0.0
    %5857 = vmatprep.subr.mxu0 0.0
    %5858 = vmatpush1.xpose.msra.mxu0 0.0
    %5859 = vmatprep.subr.mxu0 0.0
    %5860 = vmatpush1.xpose.msra.mxu0 0.0
    %5861 = vmatprep.subr.mxu0 0.0
    %5862 = vmatpush1.xpose.msra.mxu0 0.0
    %5863 = vmatprep.subr.mxu0 0.0
    %5864 = vmatpush1.xpose.msra.mxu0 0.0
    %5865 = vmatprep.subr.mxu0 0.0
    %5866 = vmatpush1.xpose.msra.mxu0 0.0
    %5867 = vmatprep.subr.mxu0 0.0
    %5868 = vmatpush1.xpose.msra.mxu0 0.0
    %5869 = vmatprep.subr.mxu0 0.0
    %5870 = vmatpush1.xpose.msra.mxu0 0.0
    %5871 = vmatprep.subr.mxu0 0.0
    %5872 = vmatpush1.xpose.msra.mxu0 0.0
    %5873 = vmatprep.subr.mxu0 0.0
    %5874 = vmatpush1.xpose.msra.mxu0 0.0
    %5875 = vmatprep.subr.mxu0 0.0
    %5876 = vmatpush1.xpose.msra.mxu0 0.0
    %5877 = vmatprep.mubr.f32.mxu0 0.0
    %v5878 = vand.u32 %v3709, 4294901760
    %5879 = vmatmul.mubr.f32.gmra.mrb[0].mxu0 %v5878
    %v5880 = vpop.f32.mrb[0].mxu0
    %v5881 = vadd.f32 %v5807, %v5880
    %v5882 = vpop.f32.mrb[0].mxu0
    %5883 = vdwg.mxu0
    %5884 = vmatprep.subr.mxu0 0.0
    %v5885 = vand.u32 %v5508, 4294901760
    %5886 = vmatpush1.xpose.msra.mxu0 %v5885
    %5887 = vmatprep.subr.mxu0 0.0
    %5888 = vmatpush1.xpose.msra.mxu0 0.0
    %5889 = vmatprep.subr.mxu0 0.0
    %5890 = vmatpush1.xpose.msra.mxu0 0.0
    %5891 = vmatprep.subr.mxu0 0.0
    %5892 = vmatpush1.xpose.msra.mxu0 0.0
    %5893 = vmatprep.subr.mxu0 0.0
    %5894 = vmatpush1.xpose.msra.mxu0 0.0
    %5895 = vmatprep.subr.mxu0 0.0
    %5896 = vmatpush1.xpose.msra.mxu0 0.0
    %5897 = vmatprep.subr.mxu0 0.0
    %5898 = vmatpush1.xpose.msra.mxu0 0.0
    %5899 = vmatprep.subr.mxu0 0.0
    %5900 = vmatpush1.xpose.msra.mxu0 0.0
    %5901 = vmatprep.subr.mxu0 0.0
    %5902 = vmatpush1.xpose.msra.mxu0 0.0
    %5903 = vmatprep.subr.mxu0 0.0
    %5904 = vmatpush1.xpose.msra.mxu0 0.0
    %5905 = vmatprep.subr.mxu0 0.0
    %5906 = vmatpush1.xpose.msra.mxu0 0.0
    %5907 = vmatprep.subr.mxu0 0.0
    %5908 = vmatpush1.xpose.msra.mxu0 0.0
    %5909 = vmatprep.subr.mxu0 0.0
    %5910 = vmatpush1.xpose.msra.mxu0 0.0
    %5911 = vmatprep.subr.mxu0 0.0
    %5912 = vmatpush1.xpose.msra.mxu0 0.0
    %5913 = vmatprep.subr.mxu0 0.0
    %5914 = vmatpush1.xpose.msra.mxu0 0.0
    %5915 = vmatprep.subr.mxu0 0.0
    %5916 = vmatpush1.xpose.msra.mxu0 0.0
    %5917 = vmatprep.subr.mxu0 0.0
    %5918 = vmatpush1.xpose.msra.mxu0 0.0
    %5919 = vmatprep.subr.mxu0 0.0
    %5920 = vmatpush1.xpose.msra.mxu0 0.0
    %5921 = vmatprep.subr.mxu0 0.0
    %5922 = vmatpush1.xpose.msra.mxu0 0.0
    %5923 = vmatprep.subr.mxu0 0.0
    %5924 = vmatpush1.xpose.msra.mxu0 0.0
    %5925 = vmatprep.subr.mxu0 0.0
    %5926 = vmatpush1.xpose.msra.mxu0 0.0
    %5927 = vmatprep.subr.mxu0 0.0
    %5928 = vmatpush1.xpose.msra.mxu0 0.0
    %5929 = vmatprep.subr.mxu0 0.0
    %5930 = vmatpush1.xpose.msra.mxu0 0.0
    %5931 = vmatprep.subr.mxu0 0.0
    %5932 = vmatpush1.xpose.msra.mxu0 0.0
    %5933 = vmatprep.subr.mxu0 0.0
    %5934 = vmatpush1.xpose.msra.mxu0 0.0
    %5935 = vmatprep.subr.mxu0 0.0
    %5936 = vmatpush1.xpose.msra.mxu0 0.0
    %5937 = vmatprep.subr.mxu0 0.0
    %5938 = vmatpush1.xpose.msra.mxu0 0.0
    %5939 = vmatprep.subr.mxu0 0.0
    %5940 = vmatpush1.xpose.msra.mxu0 0.0
    %5941 = vmatprep.subr.mxu0 0.0
    %5942 = vmatpush1.xpose.msra.mxu0 0.0
    %5943 = vmatprep.subr.mxu0 0.0
    %5944 = vmatpush1.xpose.msra.mxu0 0.0
    %5945 = vmatprep.subr.mxu0 0.0
    %5946 = vmatpush1.xpose.msra.mxu0 0.0
    %5947 = vmatprep.subr.mxu0 0.0
    %5948 = vmatpush1.xpose.msra.mxu0 0.0
    %5949 = vmatprep.mubr.f32.mxu0 0.0
    %v5950 = vand.u32 %v3709, 4294901760
    %5951 = vmatmul.mubr.f32.gmra.mrb[0].mxu0 %v5950
    %v5952 = vpop.f32.mrb[0].mxu0
    %v5953 = vadd.f32 %v5881, %v5952
    %v5954 = vpop.f32.mrb[0].mxu0
    %5955 = vdwg.mxu0
    %v5957 = vsel %vm26, %v3705, 0
    %5959 = vmatprep.subr.mxu0 0.0
    %v5960 = vand.u32 %v5957, 4294901760
    %5961 = vmatpush1.xpose.msra.mxu0 %v5960
    %5962 = vmatprep.subr.mxu0 0.0
    %5963 = vmatpush1.xpose.msra.mxu0 0.0
    %5964 = vmatprep.subr.mxu0 0.0
    %5965 = vmatpush1.xpose.msra.mxu0 0.0
    %5966 = vmatprep.subr.mxu0 0.0
    %5967 = vmatpush1.xpose.msra.mxu0 0.0
    %5968 = vmatprep.subr.mxu0 0.0
    %5969 = vmatpush1.xpose.msra.mxu0 0.0
    %5970 = vmatprep.subr.mxu0 0.0
    %5971 = vmatpush1.xpose.msra.mxu0 0.0
    %5972 = vmatprep.subr.mxu0 0.0
    %5973 = vmatpush1.xpose.msra.mxu0 0.0
    %5974 = vmatprep.subr.mxu0 0.0
    %5975 = vmatpush1.xpose.msra.mxu0 0.0
    %5976 = vmatprep.subr.mxu0 0.0
    %5977 = vmatpush1.xpose.msra.mxu0 0.0
    %5978 = vmatprep.subr.mxu0 0.0
    %5979 = vmatpush1.xpose.msra.mxu0 0.0
    %5980 = vmatprep.subr.mxu0 0.0
    %5981 = vmatpush1.xpose.msra.mxu0 0.0
    %5982 = vmatprep.subr.mxu0 0.0
    %5983 = vmatpush1.xpose.msra.mxu0 0.0
    %5984 = vmatprep.subr.mxu0 0.0
    %5985 = vmatpush1.xpose.msra.mxu0 0.0
    %5986 = vmatprep.subr.mxu0 0.0
    %5987 = vmatpush1.xpose.msra.mxu0 0.0
    %5988 = vmatprep.subr.mxu0 0.0
    %5989 = vmatpush1.xpose.msra.mxu0 0.0
    %5990 = vmatprep.subr.mxu0 0.0
    %5991 = vmatpush1.xpose.msra.mxu0 0.0
    %5992 = vmatprep.subr.mxu0 0.0
    %5993 = vmatpush1.xpose.msra.mxu0 0.0
    %5994 = vmatprep.subr.mxu0 0.0
    %5995 = vmatpush1.xpose.msra.mxu0 0.0
    %5996 = vmatprep.subr.mxu0 0.0
    %5997 = vmatpush1.xpose.msra.mxu0 0.0
    %5998 = vmatprep.subr.mxu0 0.0
    %5999 = vmatpush1.xpose.msra.mxu0 0.0
    %6000 = vmatprep.subr.mxu0 0.0
    %6001 = vmatpush1.xpose.msra.mxu0 0.0
    %6002 = vmatprep.subr.mxu0 0.0
    %6003 = vmatpush1.xpose.msra.mxu0 0.0
    %6004 = vmatprep.subr.mxu0 0.0
    %6005 = vmatpush1.xpose.msra.mxu0 0.0
    %6006 = vmatprep.subr.mxu0 0.0
    %6007 = vmatpush1.xpose.msra.mxu0 0.0
    %6008 = vmatprep.subr.mxu0 0.0
    %6009 = vmatpush1.xpose.msra.mxu0 0.0
    %6010 = vmatprep.subr.mxu0 0.0
    %6011 = vmatpush1.xpose.msra.mxu0 0.0
    %6012 = vmatprep.subr.mxu0 0.0
    %6013 = vmatpush1.xpose.msra.mxu0 0.0
    %6014 = vmatprep.subr.mxu0 0.0
    %6015 = vmatpush1.xpose.msra.mxu0 0.0
    %6016 = vmatprep.subr.mxu0 0.0
    %6017 = vmatpush1.xpose.msra.mxu0 0.0
    %6018 = vmatprep.subr.mxu0 0.0
    %6019 = vmatpush1.xpose.msra.mxu0 0.0
    %6020 = vmatprep.subr.mxu0 0.0
    %6021 = vmatpush1.xpose.msra.mxu0 0.0
    %6022 = vmatprep.subr.mxu0 0.0
    %6023 = vmatpush1.xpose.msra.mxu0 0.0
    %6024 = vmatprep.mubr.f32.mxu0 0.0
    %v6025 = vand.u32 %v3709, 4294901760
    %v6026 = vsub.f32 %v3709, %v6025
    %v6027 = vand.u32 %v6026, 4294901760
    %v6028 = vsub.f32 %v6026, %v6027
    %v6029 = vand.u32 %v6028, 4294901760
    %6030 = vmatmul.mubr.f32.gmra.mrb[0].mxu0 %v6029
    %v6031 = vpop.f32.mrb[0].mxu0
    %v6032 = vadd.f32 0.0, %v6031
    %v6033 = vpop.f32.mrb[0].mxu0
    %6034 = vdwg.mxu0
    %6035 = vmatprep.subr.mxu0 0.0
    %v6036 = vand.u32 %v5957, 4294901760
    %v6037 = vsub.f32 %v5957, %v6036
    %v6038 = vand.u32 %v6037, 4294901760
    %v6039 = vsub.f32 %v6037, %v6038
    %v6040 = vand.u32 %v6039, 4294901760
    %6041 = vmatpush1.xpose.msra.mxu0 %v6040
    %6042 = vmatprep.subr.mxu0 0.0
    %6043 = vmatpush1.xpose.msra.mxu0 0.0
    %6044 = vmatprep.subr.mxu0 0.0
    %6045 = vmatpush1.xpose.msra.mxu0 0.0
    %6046 = vmatprep.subr.mxu0 0.0
    %6047 = vmatpush1.xpose.msra.mxu0 0.0
    %6048 = vmatprep.subr.mxu0 0.0
    %6049 = vmatpush1.xpose.msra.mxu0 0.0
    %6050 = vmatprep.subr.mxu0 0.0
    %6051 = vmatpush1.xpose.msra.mxu0 0.0
    %6052 = vmatprep.subr.mxu0 0.0
    %6053 = vmatpush1.xpose.msra.mxu0 0.0
    %6054 = vmatprep.subr.mxu0 0.0
    %6055 = vmatpush1.xpose.msra.mxu0 0.0
    %6056 = vmatprep.subr.mxu0 0.0
    %6057 = vmatpush1.xpose.msra.mxu0 0.0
    %6058 = vmatprep.subr.mxu0 0.0
    %6059 = vmatpush1.xpose.msra.mxu0 0.0
    %6060 = vmatprep.subr.mxu0 0.0
    %6061 = vmatpush1.xpose.msra.mxu0 0.0
    %6062 = vmatprep.subr.mxu0 0.0
    %6063 = vmatpush1.xpose.msra.mxu0 0.0
    %6064 = vmatprep.subr.mxu0 0.0
    %6065 = vmatpush1.xpose.msra.mxu0 0.0
    %6066 = vmatprep.subr.mxu0 0.0
    %6067 = vmatpush1.xpose.msra.mxu0 0.0
    %6068 = vmatprep.subr.mxu0 0.0
    %6069 = vmatpush1.xpose.msra.mxu0 0.0
    %6070 = vmatprep.subr.mxu0 0.0
    %6071 = vmatpush1.xpose.msra.mxu0 0.0
    %6072 = vmatprep.subr.mxu0 0.0
    %6073 = vmatpush1.xpose.msra.mxu0 0.0
    %6074 = vmatprep.subr.mxu0 0.0
    %6075 = vmatpush1.xpose.msra.mxu0 0.0
    %6076 = vmatprep.subr.mxu0 0.0
    %6077 = vmatpush1.xpose.msra.mxu0 0.0
    %6078 = vmatprep.subr.mxu0 0.0
    %6079 = vmatpush1.xpose.msra.mxu0 0.0
    %6080 = vmatprep.subr.mxu0 0.0
    %6081 = vmatpush1.xpose.msra.mxu0 0.0
    %6082 = vmatprep.subr.mxu0 0.0
    %6083 = vmatpush1.xpose.msra.mxu0 0.0
    %6084 = vmatprep.subr.mxu0 0.0
    %6085 = vmatpush1.xpose.msra.mxu0 0.0
    %6086 = vmatprep.subr.mxu0 0.0
    %6087 = vmatpush1.xpose.msra.mxu0 0.0
    %6088 = vmatprep.subr.mxu0 0.0
    %6089 = vmatpush1.xpose.msra.mxu0 0.0
    %6090 = vmatprep.subr.mxu0 0.0
    %6091 = vmatpush1.xpose.msra.mxu0 0.0
    %6092 = vmatprep.subr.mxu0 0.0
    %6093 = vmatpush1.xpose.msra.mxu0 0.0
    %6094 = vmatprep.subr.mxu0 0.0
    %6095 = vmatpush1.xpose.msra.mxu0 0.0
    %6096 = vmatprep.subr.mxu0 0.0
    %6097 = vmatpush1.xpose.msra.mxu0 0.0
    %6098 = vmatprep.subr.mxu0 0.0
    %6099 = vmatpush1.xpose.msra.mxu0 0.0
    %6100 = vmatprep.subr.mxu0 0.0
    %6101 = vmatpush1.xpose.msra.mxu0 0.0
    %6102 = vmatprep.subr.mxu0 0.0
    %6103 = vmatpush1.xpose.msra.mxu0 0.0
    %6104 = vmatprep.mubr.f32.mxu0 0.0
    %v6105 = vand.u32 %v3709, 4294901760
    %6106 = vmatmul.mubr.f32.gmra.mrb[0].mxu0 %v6105
    %v6107 = vpop.f32.mrb[0].mxu0
    %v6108 = vadd.f32 %v6032, %v6107
    %v6109 = vpop.f32.mrb[0].mxu0
    %6110 = vdwg.mxu0
    %6111 = vmatprep.subr.mxu0 0.0
    %v6112 = vand.u32 %v5957, 4294901760
    %v6113 = vsub.f32 %v5957, %v6112
    %6114 = vmatpush1.xpose.msra.mxu0 %v6113
    %6115 = vmatprep.subr.mxu0 0.0
    %6116 = vmatpush1.xpose.msra.mxu0 0.0
    %6117 = vmatprep.subr.mxu0 0.0
    %6118 = vmatpush1.xpose.msra.mxu0 0.0
    %6119 = vmatprep.subr.mxu0 0.0
    %6120 = vmatpush1.xpose.msra.mxu0 0.0
    %6121 = vmatprep.subr.mxu0 0.0
    %6122 = vmatpush1.xpose.msra.mxu0 0.0
    %6123 = vmatprep.subr.mxu0 0.0
    %6124 = vmatpush1.xpose.msra.mxu0 0.0
    %6125 = vmatprep.subr.mxu0 0.0
    %6126 = vmatpush1.xpose.msra.mxu0 0.0
    %6127 = vmatprep.subr.mxu0 0.0
    %6128 = vmatpush1.xpose.msra.mxu0 0.0
    %6129 = vmatprep.subr.mxu0 0.0
    %6130 = vmatpush1.xpose.msra.mxu0 0.0
    %6131 = vmatprep.subr.mxu0 0.0
    %6132 = vmatpush1.xpose.msra.mxu0 0.0
    %6133 = vmatprep.subr.mxu0 0.0
    %6134 = vmatpush1.xpose.msra.mxu0 0.0
    %6135 = vmatprep.subr.mxu0 0.0
    %6136 = vmatpush1.xpose.msra.mxu0 0.0
    %6137 = vmatprep.subr.mxu0 0.0
    %6138 = vmatpush1.xpose.msra.mxu0 0.0
    %6139 = vmatprep.subr.mxu0 0.0
    %6140 = vmatpush1.xpose.msra.mxu0 0.0
    %6141 = vmatprep.subr.mxu0 0.0
    %6142 = vmatpush1.xpose.msra.mxu0 0.0
    %6143 = vmatprep.subr.mxu0 0.0
    %6144 = vmatpush1.xpose.msra.mxu0 0.0
    %6145 = vmatprep.subr.mxu0 0.0
    %6146 = vmatpush1.xpose.msra.mxu0 0.0
    %6147 = vmatprep.subr.mxu0 0.0
    %6148 = vmatpush1.xpose.msra.mxu0 0.0
    %6149 = vmatprep.subr.mxu0 0.0
    %6150 = vmatpush1.xpose.msra.mxu0 0.0
    %6151 = vmatprep.subr.mxu0 0.0
    %6152 = vmatpush1.xpose.msra.mxu0 0.0
    %6153 = vmatprep.subr.mxu0 0.0
    %6154 = vmatpush1.xpose.msra.mxu0 0.0
    %6155 = vmatprep.subr.mxu0 0.0
    %6156 = vmatpush1.xpose.msra.mxu0 0.0
    %6157 = vmatprep.subr.mxu0 0.0
    %6158 = vmatpush1.xpose.msra.mxu0 0.0
    %6159 = vmatprep.subr.mxu0 0.0
    %6160 = vmatpush1.xpose.msra.mxu0 0.0
    %6161 = vmatprep.subr.mxu0 0.0
    %6162 = vmatpush1.xpose.msra.mxu0 0.0
    %6163 = vmatprep.subr.mxu0 0.0
    %6164 = vmatpush1.xpose.msra.mxu0 0.0
    %6165 = vmatprep.subr.mxu0 0.0
    %6166 = vmatpush1.xpose.msra.mxu0 0.0
    %6167 = vmatprep.subr.mxu0 0.0
    %6168 = vmatpush1.xpose.msra.mxu0 0.0
    %6169 = vmatprep.subr.mxu0 0.0
    %6170 = vmatpush1.xpose.msra.mxu0 0.0
    %6171 = vmatprep.subr.mxu0 0.0
    %6172 = vmatpush1.xpose.msra.mxu0 0.0
    %6173 = vmatprep.subr.mxu0 0.0
    %6174 = vmatpush1.xpose.msra.mxu0 0.0
    %6175 = vmatprep.subr.mxu0 0.0
    %6176 = vmatpush1.xpose.msra.mxu0 0.0
    %6177 = vmatprep.mubr.f32.mxu0 0.0
    %v6178 = vand.u32 %v3709, 4294901760
    %v6179 = vsub.f32 %v3709, %v6178
    %6180 = vmatmul.mubr.f32.gmra.mrb[0].mxu0 %v6179
    %v6181 = vpop.f32.mrb[0].mxu0
    %v6182 = vadd.f32 %v6108, %v6181
    %v6183 = vpop.f32.mrb[0].mxu0
    %6184 = vdwg.mxu0
    %6185 = vmatprep.subr.mxu0 0.0
    %v6186 = vand.u32 %v5957, 4294901760
    %6187 = vmatpush1.xpose.msra.mxu0 %v6186
    %6188 = vmatprep.subr.mxu0 0.0
    %6189 = vmatpush1.xpose.msra.mxu0 0.0
    %6190 = vmatprep.subr.mxu0 0.0
    %6191 = vmatpush1.xpose.msra.mxu0 0.0
    %6192 = vmatprep.subr.mxu0 0.0
    %6193 = vmatpush1.xpose.msra.mxu0 0.0
    %6194 = vmatprep.subr.mxu0 0.0
    %6195 = vmatpush1.xpose.msra.mxu0 0.0
    %6196 = vmatprep.subr.mxu0 0.0
    %6197 = vmatpush1.xpose.msra.mxu0 0.0
    %6198 = vmatprep.subr.mxu0 0.0
    %6199 = vmatpush1.xpose.msra.mxu0 0.0
    %6200 = vmatprep.subr.mxu0 0.0
    %6201 = vmatpush1.xpose.msra.mxu0 0.0
    %6202 = vmatprep.subr.mxu0 0.0
    %6203 = vmatpush1.xpose.msra.mxu0 0.0
    %6204 = vmatprep.subr.mxu0 0.0
    %6205 = vmatpush1.xpose.msra.mxu0 0.0
    %6206 = vmatprep.subr.mxu0 0.0
    %6207 = vmatpush1.xpose.msra.mxu0 0.0
    %6208 = vmatprep.subr.mxu0 0.0
    %6209 = vmatpush1.xpose.msra.mxu0 0.0
    %6210 = vmatprep.subr.mxu0 0.0
    %6211 = vmatpush1.xpose.msra.mxu0 0.0
    %6212 = vmatprep.subr.mxu0 0.0
    %6213 = vmatpush1.xpose.msra.mxu0 0.0
    %6214 = vmatprep.subr.mxu0 0.0
    %6215 = vmatpush1.xpose.msra.mxu0 0.0
    %6216 = vmatprep.subr.mxu0 0.0
    %6217 = vmatpush1.xpose.msra.mxu0 0.0
    %6218 = vmatprep.subr.mxu0 0.0
    %6219 = vmatpush1.xpose.msra.mxu0 0.0
    %6220 = vmatprep.subr.mxu0 0.0
    %6221 = vmatpush1.xpose.msra.mxu0 0.0
    %6222 = vmatprep.subr.mxu0 0.0
    %6223 = vmatpush1.xpose.msra.mxu0 0.0
    %6224 = vmatprep.subr.mxu0 0.0
    %6225 = vmatpush1.xpose.msra.mxu0 0.0
    %6226 = vmatprep.subr.mxu0 0.0
    %6227 = vmatpush1.xpose.msra.mxu0 0.0
    %6228 = vmatprep.subr.mxu0 0.0
    %6229 = vmatpush1.xpose.msra.mxu0 0.0
    %6230 = vmatprep.subr.mxu0 0.0
    %6231 = vmatpush1.xpose.msra.mxu0 0.0
    %6232 = vmatprep.subr.mxu0 0.0
    %6233 = vmatpush1.xpose.msra.mxu0 0.0
    %6234 = vmatprep.subr.mxu0 0.0
    %6235 = vmatpush1.xpose.msra.mxu0 0.0
    %6236 = vmatprep.subr.mxu0 0.0
    %6237 = vmatpush1.xpose.msra.mxu0 0.0
    %6238 = vmatprep.subr.mxu0 0.0
    %6239 = vmatpush1.xpose.msra.mxu0 0.0
    %6240 = vmatprep.subr.mxu0 0.0
    %6241 = vmatpush1.xpose.msra.mxu0 0.0
    %6242 = vmatprep.subr.mxu0 0.0
    %6243 = vmatpush1.xpose.msra.mxu0 0.0
    %6244 = vmatprep.subr.mxu0 0.0
    %6245 = vmatpush1.xpose.msra.mxu0 0.0
    %6246 = vmatprep.subr.mxu0 0.0
    %6247 = vmatpush1.xpose.msra.mxu0 0.0
    %6248 = vmatprep.subr.mxu0 0.0
    %6249 = vmatpush1.xpose.msra.mxu0 0.0
    %6250 = vmatprep.mubr.f32.mxu0 0.0
    %v6251 = vand.u32 %v3709, 4294901760
    %v6252 = vsub.f32 %v3709, %v6251
    %v6253 = vand.u32 %v6252, 4294901760
    %6254 = vmatmul.mubr.f32.gmra.mrb[0].mxu0 %v6253
    %v6255 = vpop.f32.mrb[0].mxu0
    %v6256 = vadd.f32 %v6182, %v6255
    %v6257 = vpop.f32.mrb[0].mxu0
    %6258 = vdwg.mxu0
    %6259 = vmatprep.subr.mxu0 0.0
    %v6260 = vand.u32 %v5957, 4294901760
    %v6261 = vsub.f32 %v5957, %v6260
    %v6262 = vand.u32 %v6261, 4294901760
    %6263 = vmatpush1.xpose.msra.mxu0 %v6262
    %6264 = vmatprep.subr.mxu0 0.0
    %6265 = vmatpush1.xpose.msra.mxu0 0.0
    %6266 = vmatprep.subr.mxu0 0.0
    %6267 = vmatpush1.xpose.msra.mxu0 0.0
    %6268 = vmatprep.subr.mxu0 0.0
    %6269 = vmatpush1.xpose.msra.mxu0 0.0
    %6270 = vmatprep.subr.mxu0 0.0
    %6271 = vmatpush1.xpose.msra.mxu0 0.0
    %6272 = vmatprep.subr.mxu0 0.0
    %6273 = vmatpush1.xpose.msra.mxu0 0.0
    %6274 = vmatprep.subr.mxu0 0.0
    %6275 = vmatpush1.xpose.msra.mxu0 0.0
    %6276 = vmatprep.subr.mxu0 0.0
    %6277 = vmatpush1.xpose.msra.mxu0 0.0
    %6278 = vmatprep.subr.mxu0 0.0
    %6279 = vmatpush1.xpose.msra.mxu0 0.0
    %6280 = vmatprep.subr.mxu0 0.0
    %6281 = vmatpush1.xpose.msra.mxu0 0.0
    %6282 = vmatprep.subr.mxu0 0.0
    %6283 = vmatpush1.xpose.msra.mxu0 0.0
    %6284 = vmatprep.subr.mxu0 0.0
    %6285 = vmatpush1.xpose.msra.mxu0 0.0
    %6286 = vmatprep.subr.mxu0 0.0
    %6287 = vmatpush1.xpose.msra.mxu0 0.0
    %6288 = vmatprep.subr.mxu0 0.0
    %6289 = vmatpush1.xpose.msra.mxu0 0.0
    %6290 = vmatprep.subr.mxu0 0.0
    %6291 = vmatpush1.xpose.msra.mxu0 0.0
    %6292 = vmatprep.subr.mxu0 0.0
    %6293 = vmatpush1.xpose.msra.mxu0 0.0
    %6294 = vmatprep.subr.mxu0 0.0
    %6295 = vmatpush1.xpose.msra.mxu0 0.0
    %6296 = vmatprep.subr.mxu0 0.0
    %6297 = vmatpush1.xpose.msra.mxu0 0.0
    %6298 = vmatprep.subr.mxu0 0.0
    %6299 = vmatpush1.xpose.msra.mxu0 0.0
    %6300 = vmatprep.subr.mxu0 0.0
    %6301 = vmatpush1.xpose.msra.mxu0 0.0
    %6302 = vmatprep.subr.mxu0 0.0
    %6303 = vmatpush1.xpose.msra.mxu0 0.0
    %6304 = vmatprep.subr.mxu0 0.0
    %6305 = vmatpush1.xpose.msra.mxu0 0.0
    %6306 = vmatprep.subr.mxu0 0.0
    %6307 = vmatpush1.xpose.msra.mxu0 0.0
    %6308 = vmatprep.subr.mxu0 0.0
    %6309 = vmatpush1.xpose.msra.mxu0 0.0
    %6310 = vmatprep.subr.mxu0 0.0
    %6311 = vmatpush1.xpose.msra.mxu0 0.0
    %6312 = vmatprep.subr.mxu0 0.0
    %6313 = vmatpush1.xpose.msra.mxu0 0.0
    %6314 = vmatprep.subr.mxu0 0.0
    %6315 = vmatpush1.xpose.msra.mxu0 0.0
    %6316 = vmatprep.subr.mxu0 0.0
    %6317 = vmatpush1.xpose.msra.mxu0 0.0
    %6318 = vmatprep.subr.mxu0 0.0
    %6319 = vmatpush1.xpose.msra.mxu0 0.0
    %6320 = vmatprep.subr.mxu0 0.0
    %6321 = vmatpush1.xpose.msra.mxu0 0.0
    %6322 = vmatprep.subr.mxu0 0.0
    %6323 = vmatpush1.xpose.msra.mxu0 0.0
    %6324 = vmatprep.subr.mxu0 0.0
    %6325 = vmatpush1.xpose.msra.mxu0 0.0
    %6326 = vmatprep.mubr.f32.mxu0 0.0
    %v6327 = vand.u32 %v3709, 4294901760
    %6328 = vmatmul.mubr.f32.gmra.mrb[0].mxu0 %v6327
    %v6329 = vpop.f32.mrb[0].mxu0
    %v6330 = vadd.f32 %v6256, %v6329
    %v6331 = vpop.f32.mrb[0].mxu0
    %6332 = vdwg.mxu0
    %6333 = vmatprep.subr.mxu0 0.0
    %v6334 = vand.u32 %v5957, 4294901760
    %6335 = vmatpush1.xpose.msra.mxu0 %v6334
    %6336 = vmatprep.subr.mxu0 0.0
    %6337 = vmatpush1.xpose.msra.mxu0 0.0
    %6338 = vmatprep.subr.mxu0 0.0
    %6339 = vmatpush1.xpose.msra.mxu0 0.0
    %6340 = vmatprep.subr.mxu0 0.0
    %6341 = vmatpush1.xpose.msra.mxu0 0.0
    %6342 = vmatprep.subr.mxu0 0.0
    %6343 = vmatpush1.xpose.msra.mxu0 0.0
    %6344 = vmatprep.subr.mxu0 0.0
    %6345 = vmatpush1.xpose.msra.mxu0 0.0
    %6346 = vmatprep.subr.mxu0 0.0
    %6347 = vmatpush1.xpose.msra.mxu0 0.0
    %6348 = vmatprep.subr.mxu0 0.0
    %6349 = vmatpush1.xpose.msra.mxu0 0.0
    %6350 = vmatprep.subr.mxu0 0.0
    %6351 = vmatpush1.xpose.msra.mxu0 0.0
    %6352 = vmatprep.subr.mxu0 0.0
    %6353 = vmatpush1.xpose.msra.mxu0 0.0
    %6354 = vmatprep.subr.mxu0 0.0
    %6355 = vmatpush1.xpose.msra.mxu0 0.0
    %6356 = vmatprep.subr.mxu0 0.0
    %6357 = vmatpush1.xpose.msra.mxu0 0.0
    %6358 = vmatprep.subr.mxu0 0.0
    %6359 = vmatpush1.xpose.msra.mxu0 0.0
    %6360 = vmatprep.subr.mxu0 0.0
    %6361 = vmatpush1.xpose.msra.mxu0 0.0
    %6362 = vmatprep.subr.mxu0 0.0
    %6363 = vmatpush1.xpose.msra.mxu0 0.0
    %6364 = vmatprep.subr.mxu0 0.0
    %6365 = vmatpush1.xpose.msra.mxu0 0.0
    %6366 = vmatprep.subr.mxu0 0.0
    %6367 = vmatpush1.xpose.msra.mxu0 0.0
    %6368 = vmatprep.subr.mxu0 0.0
    %6369 = vmatpush1.xpose.msra.mxu0 0.0
    %6370 = vmatprep.subr.mxu0 0.0
    %6371 = vmatpush1.xpose.msra.mxu0 0.0
    %6372 = vmatprep.subr.mxu0 0.0
    %6373 = vmatpush1.xpose.msra.mxu0 0.0
    %6374 = vmatprep.subr.mxu0 0.0
    %6375 = vmatpush1.xpose.msra.mxu0 0.0
    %6376 = vmatprep.subr.mxu0 0.0
    %6377 = vmatpush1.xpose.msra.mxu0 0.0
    %6378 = vmatprep.subr.mxu0 0.0
    %6379 = vmatpush1.xpose.msra.mxu0 0.0
    %6380 = vmatprep.subr.mxu0 0.0
    %6381 = vmatpush1.xpose.msra.mxu0 0.0
    %6382 = vmatprep.subr.mxu0 0.0
    %6383 = vmatpush1.xpose.msra.mxu0 0.0
    %6384 = vmatprep.subr.mxu0 0.0
    %6385 = vmatpush1.xpose.msra.mxu0 0.0
    %6386 = vmatprep.subr.mxu0 0.0
    %6387 = vmatpush1.xpose.msra.mxu0 0.0
    %6388 = vmatprep.subr.mxu0 0.0
    %6389 = vmatpush1.xpose.msra.mxu0 0.0
    %6390 = vmatprep.subr.mxu0 0.0
    %6391 = vmatpush1.xpose.msra.mxu0 0.0
    %6392 = vmatprep.subr.mxu0 0.0
    %6393 = vmatpush1.xpose.msra.mxu0 0.0
    %6394 = vmatprep.subr.mxu0 0.0
    %6395 = vmatpush1.xpose.msra.mxu0 0.0
    %6396 = vmatprep.subr.mxu0 0.0
    %6397 = vmatpush1.xpose.msra.mxu0 0.0
    %6398 = vmatprep.mubr.f32.mxu0 0.0
    %v6399 = vand.u32 %v3709, 4294901760
    %6400 = vmatmul.mubr.f32.gmra.mrb[0].mxu0 %v6399
    %v6401 = vpop.f32.mrb[0].mxu0
    %v6402 = vadd.f32 %v6330, %v6401
    %v6403 = vpop.f32.mrb[0].mxu0
    %6404 = vdwg.mxu0
    %v6406 = vsel %vm26, %v3706, 0
    %6408 = vmatprep.subr.mxu0 0.0
    %v6409 = vand.u32 %v6406, 4294901760
    %6410 = vmatpush1.xpose.msra.mxu0 %v6409
    %6411 = vmatprep.subr.mxu0 0.0
    %6412 = vmatpush1.xpose.msra.mxu0 0.0
    %6413 = vmatprep.subr.mxu0 0.0
    %6414 = vmatpush1.xpose.msra.mxu0 0.0
    %6415 = vmatprep.subr.mxu0 0.0
    %6416 = vmatpush1.xpose.msra.mxu0 0.0
    %6417 = vmatprep.subr.mxu0 0.0
    %6418 = vmatpush1.xpose.msra.mxu0 0.0
    %6419 = vmatprep.subr.mxu0 0.0
    %6420 = vmatpush1.xpose.msra.mxu0 0.0
    %6421 = vmatprep.subr.mxu0 0.0
    %6422 = vmatpush1.xpose.msra.mxu0 0.0
    %6423 = vmatprep.subr.mxu0 0.0
    %6424 = vmatpush1.xpose.msra.mxu0 0.0
    %6425 = vmatprep.subr.mxu0 0.0
    %6426 = vmatpush1.xpose.msra.mxu0 0.0
    %6427 = vmatprep.subr.mxu0 0.0
    %6428 = vmatpush1.xpose.msra.mxu0 0.0
    %6429 = vmatprep.subr.mxu0 0.0
    %6430 = vmatpush1.xpose.msra.mxu0 0.0
    %6431 = vmatprep.subr.mxu0 0.0
    %6432 = vmatpush1.xpose.msra.mxu0 0.0
    %6433 = vmatprep.subr.mxu0 0.0
    %6434 = vmatpush1.xpose.msra.mxu0 0.0
    %6435 = vmatprep.subr.mxu0 0.0
    %6436 = vmatpush1.xpose.msra.mxu0 0.0
    %6437 = vmatprep.subr.mxu0 0.0
    %6438 = vmatpush1.xpose.msra.mxu0 0.0
    %6439 = vmatprep.subr.mxu0 0.0
    %6440 = vmatpush1.xpose.msra.mxu0 0.0
    %6441 = vmatprep.subr.mxu0 0.0
    %6442 = vmatpush1.xpose.msra.mxu0 0.0
    %6443 = vmatprep.subr.mxu0 0.0
    %6444 = vmatpush1.xpose.msra.mxu0 0.0
    %6445 = vmatprep.subr.mxu0 0.0
    %6446 = vmatpush1.xpose.msra.mxu0 0.0
    %6447 = vmatprep.subr.mxu0 0.0
    %6448 = vmatpush1.xpose.msra.mxu0 0.0
    %6449 = vmatprep.subr.mxu0 0.0
    %6450 = vmatpush1.xpose.msra.mxu0 0.0
    %6451 = vmatprep.subr.mxu0 0.0
    %6452 = vmatpush1.xpose.msra.mxu0 0.0
    %6453 = vmatprep.subr.mxu0 0.0
    %6454 = vmatpush1.xpose.msra.mxu0 0.0
    %6455 = vmatprep.subr.mxu0 0.0
    %6456 = vmatpush1.xpose.msra.mxu0 0.0
    %6457 = vmatprep.subr.mxu0 0.0
    %6458 = vmatpush1.xpose.msra.mxu0 0.0
    %6459 = vmatprep.subr.mxu0 0.0
    %6460 = vmatpush1.xpose.msra.mxu0 0.0
    %6461 = vmatprep.subr.mxu0 0.0
    %6462 = vmatpush1.xpose.msra.mxu0 0.0
    %6463 = vmatprep.subr.mxu0 0.0
    %6464 = vmatpush1.xpose.msra.mxu0 0.0
    %6465 = vmatprep.subr.mxu0 0.0
    %6466 = vmatpush1.xpose.msra.mxu0 0.0
    %6467 = vmatprep.subr.mxu0 0.0
    %6468 = vmatpush1.xpose.msra.mxu0 0.0
    %6469 = vmatprep.subr.mxu0 0.0
    %6470 = vmatpush1.xpose.msra.mxu0 0.0
    %6471 = vmatprep.subr.mxu0 0.0
    %6472 = vmatpush1.xpose.msra.mxu0 0.0
    %6473 = vmatprep.mubr.f32.mxu0 0.0
    %v6474 = vand.u32 %v3709, 4294901760
    %v6475 = vsub.f32 %v3709, %v6474
    %v6476 = vand.u32 %v6475, 4294901760
    %v6477 = vsub.f32 %v6475, %v6476
    %v6478 = vand.u32 %v6477, 4294901760
    %6479 = vmatmul.mubr.f32.gmra.mrb[0].mxu0 %v6478
    %v6480 = vpop.f32.mrb[0].mxu0
    %v6481 = vadd.f32 0.0, %v6480
    %v6482 = vpop.f32.mrb[0].mxu0
    %6483 = vdwg.mxu0
    %6484 = vmatprep.subr.mxu0 0.0
    %v6485 = vand.u32 %v6406, 4294901760
    %v6486 = vsub.f32 %v6406, %v6485
    %v6487 = vand.u32 %v6486, 4294901760
    %v6488 = vsub.f32 %v6486, %v6487
    %v6489 = vand.u32 %v6488, 4294901760
    %6490 = vmatpush1.xpose.msra.mxu0 %v6489
    %6491 = vmatprep.subr.mxu0 0.0
    %6492 = vmatpush1.xpose.msra.mxu0 0.0
    %6493 = vmatprep.subr.mxu0 0.0
    %6494 = vmatpush1.xpose.msra.mxu0 0.0
    %6495 = vmatprep.subr.mxu0 0.0
    %6496 = vmatpush1.xpose.msra.mxu0 0.0
    %6497 = vmatprep.subr.mxu0 0.0
    %6498 = vmatpush1.xpose.msra.mxu0 0.0
    %6499 = vmatprep.subr.mxu0 0.0
    %6500 = vmatpush1.xpose.msra.mxu0 0.0
    %6501 = vmatprep.subr.mxu0 0.0
    %6502 = vmatpush1.xpose.msra.mxu0 0.0
    %6503 = vmatprep.subr.mxu0 0.0
    %6504 = vmatpush1.xpose.msra.mxu0 0.0
    %6505 = vmatprep.subr.mxu0 0.0
    %6506 = vmatpush1.xpose.msra.mxu0 0.0
    %6507 = vmatprep.subr.mxu0 0.0
    %6508 = vmatpush1.xpose.msra.mxu0 0.0
    %6509 = vmatprep.subr.mxu0 0.0
    %6510 = vmatpush1.xpose.msra.mxu0 0.0
    %6511 = vmatprep.subr.mxu0 0.0
    %6512 = vmatpush1.xpose.msra.mxu0 0.0
    %6513 = vmatprep.subr.mxu0 0.0
    %6514 = vmatpush1.xpose.msra.mxu0 0.0
    %6515 = vmatprep.subr.mxu0 0.0
    %6516 = vmatpush1.xpose.msra.mxu0 0.0
    %6517 = vmatprep.subr.mxu0 0.0
    %6518 = vmatpush1.xpose.msra.mxu0 0.0
    %6519 = vmatprep.subr.mxu0 0.0
    %6520 = vmatpush1.xpose.msra.mxu0 0.0
    %6521 = vmatprep.subr.mxu0 0.0
    %6522 = vmatpush1.xpose.msra.mxu0 0.0
    %6523 = vmatprep.subr.mxu0 0.0
    %6524 = vmatpush1.xpose.msra.mxu0 0.0
    %6525 = vmatprep.subr.mxu0 0.0
    %6526 = vmatpush1.xpose.msra.mxu0 0.0
    %6527 = vmatprep.subr.mxu0 0.0
    %6528 = vmatpush1.xpose.msra.mxu0 0.0
    %6529 = vmatprep.subr.mxu0 0.0
    %6530 = vmatpush1.xpose.msra.mxu0 0.0
    %6531 = vmatprep.subr.mxu0 0.0
    %6532 = vmatpush1.xpose.msra.mxu0 0.0
    %6533 = vmatprep.subr.mxu0 0.0
    %6534 = vmatpush1.xpose.msra.mxu0 0.0
    %6535 = vmatprep.subr.mxu0 0.0
    %6536 = vmatpush1.xpose.msra.mxu0 0.0
    %6537 = vmatprep.subr.mxu0 0.0
    %6538 = vmatpush1.xpose.msra.mxu0 0.0
    %6539 = vmatprep.subr.mxu0 0.0
    %6540 = vmatpush1.xpose.msra.mxu0 0.0
    %6541 = vmatprep.subr.mxu0 0.0
    %6542 = vmatpush1.xpose.msra.mxu0 0.0
    %6543 = vmatprep.subr.mxu0 0.0
    %6544 = vmatpush1.xpose.msra.mxu0 0.0
    %6545 = vmatprep.subr.mxu0 0.0
    %6546 = vmatpush1.xpose.msra.mxu0 0.0
    %6547 = vmatprep.subr.mxu0 0.0
    %6548 = vmatpush1.xpose.msra.mxu0 0.0
    %6549 = vmatprep.subr.mxu0 0.0
    %6550 = vmatpush1.xpose.msra.mxu0 0.0
    %6551 = vmatprep.subr.mxu0 0.0
    %6552 = vmatpush1.xpose.msra.mxu0 0.0
    %6553 = vmatprep.mubr.f32.mxu0 0.0
    %v6554 = vand.u32 %v3709, 4294901760
    %6555 = vmatmul.mubr.f32.gmra.mrb[0].mxu0 %v6554
    %v6556 = vpop.f32.mrb[0].mxu0
    %v6557 = vadd.f32 %v6481, %v6556
    %v6558 = vpop.f32.mrb[0].mxu0
    %6559 = vdwg.mxu0
    %6560 = vmatprep.subr.mxu0 0.0
    %v6561 = vand.u32 %v6406, 4294901760
    %v6562 = vsub.f32 %v6406, %v6561
    %6563 = vmatpush1.xpose.msra.mxu0 %v6562
    %6564 = vmatprep.subr.mxu0 0.0
    %6565 = vmatpush1.xpose.msra.mxu0 0.0
    %6566 = vmatprep.subr.mxu0 0.0
    %6567 = vmatpush1.xpose.msra.mxu0 0.0
    %6568 = vmatprep.subr.mxu0 0.0
    %6569 = vmatpush1.xpose.msra.mxu0 0.0
    %6570 = vmatprep.subr.mxu0 0.0
    %6571 = vmatpush1.xpose.msra.mxu0 0.0
    %6572 = vmatprep.subr.mxu0 0.0
    %6573 = vmatpush1.xpose.msra.mxu0 0.0
    %6574 = vmatprep.subr.mxu0 0.0
    %6575 = vmatpush1.xpose.msra.mxu0 0.0
    %6576 = vmatprep.subr.mxu0 0.0
    %6577 = vmatpush1.xpose.msra.mxu0 0.0
    %6578 = vmatprep.subr.mxu0 0.0
    %6579 = vmatpush1.xpose.msra.mxu0 0.0
    %6580 = vmatprep.subr.mxu0 0.0
    %6581 = vmatpush1.xpose.msra.mxu0 0.0
    %6582 = vmatprep.subr.mxu0 0.0
    %6583 = vmatpush1.xpose.msra.mxu0 0.0
    %6584 = vmatprep.subr.mxu0 0.0
    %6585 = vmatpush1.xpose.msra.mxu0 0.0
    %6586 = vmatprep.subr.mxu0 0.0
    %6587 = vmatpush1.xpose.msra.mxu0 0.0
    %6588 = vmatprep.subr.mxu0 0.0
    %6589 = vmatpush1.xpose.msra.mxu0 0.0
    %6590 = vmatprep.subr.mxu0 0.0
    %6591 = vmatpush1.xpose.msra.mxu0 0.0
    %6592 = vmatprep.subr.mxu0 0.0
    %6593 = vmatpush1.xpose.msra.mxu0 0.0
    %6594 = vmatprep.subr.mxu0 0.0
    %6595 = vmatpush1.xpose.msra.mxu0 0.0
    %6596 = vmatprep.subr.mxu0 0.0
    %6597 = vmatpush1.xpose.msra.mxu0 0.0
    %6598 = vmatprep.subr.mxu0 0.0
    %6599 = vmatpush1.xpose.msra.mxu0 0.0
    %6600 = vmatprep.subr.mxu0 0.0
    %6601 = vmatpush1.xpose.msra.mxu0 0.0
    %6602 = vmatprep.subr.mxu0 0.0
    %6603 = vmatpush1.xpose.msra.mxu0 0.0
    %6604 = vmatprep.subr.mxu0 0.0
    %6605 = vmatpush1.xpose.msra.mxu0 0.0
    %6606 = vmatprep.subr.mxu0 0.0
    %6607 = vmatpush1.xpose.msra.mxu0 0.0
    %6608 = vmatprep.subr.mxu0 0.0
    %6609 = vmatpush1.xpose.msra.mxu0 0.0
    %6610 = vmatprep.subr.mxu0 0.0
    %6611 = vmatpush1.xpose.msra.mxu0 0.0
    %6612 = vmatprep.subr.mxu0 0.0
    %6613 = vmatpush1.xpose.msra.mxu0 0.0
    %6614 = vmatprep.subr.mxu0 0.0
    %6615 = vmatpush1.xpose.msra.mxu0 0.0
    %6616 = vmatprep.subr.mxu0 0.0
    %6617 = vmatpush1.xpose.msra.mxu0 0.0
    %6618 = vmatprep.subr.mxu0 0.0
    %6619 = vmatpush1.xpose.msra.mxu0 0.0
    %6620 = vmatprep.subr.mxu0 0.0
    %6621 = vmatpush1.xpose.msra.mxu0 0.0
    %6622 = vmatprep.subr.mxu0 0.0
    %6623 = vmatpush1.xpose.msra.mxu0 0.0
    %6624 = vmatprep.subr.mxu0 0.0
    %6625 = vmatpush1.xpose.msra.mxu0 0.0
    %6626 = vmatprep.mubr.f32.mxu0 0.0
    %v6627 = vand.u32 %v3709, 4294901760
    %v6628 = vsub.f32 %v3709, %v6627
    %6629 = vmatmul.mubr.f32.gmra.mrb[0].mxu0 %v6628
    %v6630 = vpop.f32.mrb[0].mxu0
    %v6631 = vadd.f32 %v6557, %v6630
    %v6632 = vpop.f32.mrb[0].mxu0
    %6633 = vdwg.mxu0
    %6634 = vmatprep.subr.mxu0 0.0
    %v6635 = vand.u32 %v6406, 4294901760
    %6636 = vmatpush1.xpose.msra.mxu0 %v6635
    %6637 = vmatprep.subr.mxu0 0.0
    %6638 = vmatpush1.xpose.msra.mxu0 0.0
    %6639 = vmatprep.subr.mxu0 0.0
    %6640 = vmatpush1.xpose.msra.mxu0 0.0
    %6641 = vmatprep.subr.mxu0 0.0
    %6642 = vmatpush1.xpose.msra.mxu0 0.0
    %6643 = vmatprep.subr.mxu0 0.0
    %6644 = vmatpush1.xpose.msra.mxu0 0.0
    %6645 = vmatprep.subr.mxu0 0.0
    %6646 = vmatpush1.xpose.msra.mxu0 0.0
    %6647 = vmatprep.subr.mxu0 0.0
    %6648 = vmatpush1.xpose.msra.mxu0 0.0
    %6649 = vmatprep.subr.mxu0 0.0
    %6650 = vmatpush1.xpose.msra.mxu0 0.0
    %6651 = vmatprep.subr.mxu0 0.0
    %6652 = vmatpush1.xpose.msra.mxu0 0.0
    %6653 = vmatprep.subr.mxu0 0.0
    %6654 = vmatpush1.xpose.msra.mxu0 0.0
    %6655 = vmatprep.subr.mxu0 0.0
    %6656 = vmatpush1.xpose.msra.mxu0 0.0
    %6657 = vmatprep.subr.mxu0 0.0
    %6658 = vmatpush1.xpose.msra.mxu0 0.0
    %6659 = vmatprep.subr.mxu0 0.0
    %6660 = vmatpush1.xpose.msra.mxu0 0.0
    %6661 = vmatprep.subr.mxu0 0.0
    %6662 = vmatpush1.xpose.msra.mxu0 0.0
    %6663 = vmatprep.subr.mxu0 0.0
    %6664 = vmatpush1.xpose.msra.mxu0 0.0
    %6665 = vmatprep.subr.mxu0 0.0
    %6666 = vmatpush1.xpose.msra.mxu0 0.0
    %6667 = vmatprep.subr.mxu0 0.0
    %6668 = vmatpush1.xpose.msra.mxu0 0.0
    %6669 = vmatprep.subr.mxu0 0.0
    %6670 = vmatpush1.xpose.msra.mxu0 0.0
    %6671 = vmatprep.subr.mxu0 0.0
    %6672 = vmatpush1.xpose.msra.mxu0 0.0
    %6673 = vmatprep.subr.mxu0 0.0
    %6674 = vmatpush1.xpose.msra.mxu0 0.0
    %6675 = vmatprep.subr.mxu0 0.0
    %6676 = vmatpush1.xpose.msra.mxu0 0.0
    %6677 = vmatprep.subr.mxu0 0.0
    %6678 = vmatpush1.xpose.msra.mxu0 0.0
    %6679 = vmatprep.subr.mxu0 0.0
    %6680 = vmatpush1.xpose.msra.mxu0 0.0
    %6681 = vmatprep.subr.mxu0 0.0
    %6682 = vmatpush1.xpose.msra.mxu0 0.0
    %6683 = vmatprep.subr.mxu0 0.0
    %6684 = vmatpush1.xpose.msra.mxu0 0.0
    %6685 = vmatprep.subr.mxu0 0.0
    %6686 = vmatpush1.xpose.msra.mxu0 0.0
    %6687 = vmatprep.subr.mxu0 0.0
    %6688 = vmatpush1.xpose.msra.mxu0 0.0
    %6689 = vmatprep.subr.mxu0 0.0
    %6690 = vmatpush1.xpose.msra.mxu0 0.0
    %6691 = vmatprep.subr.mxu0 0.0
    %6692 = vmatpush1.xpose.msra.mxu0 0.0
    %6693 = vmatprep.subr.mxu0 0.0
    %6694 = vmatpush1.xpose.msra.mxu0 0.0
    %6695 = vmatprep.subr.mxu0 0.0
    %6696 = vmatpush1.xpose.msra.mxu0 0.0
    %6697 = vmatprep.subr.mxu0 0.0
    %6698 = vmatpush1.xpose.msra.mxu0 0.0
    %6699 = vmatprep.mubr.f32.mxu0 0.0
    %v6700 = vand.u32 %v3709, 4294901760
    %v6701 = vsub.f32 %v3709, %v6700
    %v6702 = vand.u32 %v6701, 4294901760
    %6703 = vmatmul.mubr.f32.gmra.mrb[0].mxu0 %v6702
    %v6704 = vpop.f32.mrb[0].mxu0
    %v6705 = vadd.f32 %v6631, %v6704
    %v6706 = vpop.f32.mrb[0].mxu0
    %6707 = vdwg.mxu0
    %6708 = vmatprep.subr.mxu0 0.0
    %v6709 = vand.u32 %v6406, 4294901760
    %v6710 = vsub.f32 %v6406, %v6709
    %v6711 = vand.u32 %v6710, 4294901760
    %6712 = vmatpush1.xpose.msra.mxu0 %v6711
    %6713 = vmatprep.subr.mxu0 0.0
    %6714 = vmatpush1.xpose.msra.mxu0 0.0
    %6715 = vmatprep.subr.mxu0 0.0
    %6716 = vmatpush1.xpose.msra.mxu0 0.0
    %6717 = vmatprep.subr.mxu0 0.0
    %6718 = vmatpush1.xpose.msra.mxu0 0.0
    %6719 = vmatprep.subr.mxu0 0.0
    %6720 = vmatpush1.xpose.msra.mxu0 0.0
    %6721 = vmatprep.subr.mxu0 0.0
    %6722 = vmatpush1.xpose.msra.mxu0 0.0
    %6723 = vmatprep.subr.mxu0 0.0
    %6724 = vmatpush1.xpose.msra.mxu0 0.0
    %6725 = vmatprep.subr.mxu0 0.0
    %6726 = vmatpush1.xpose.msra.mxu0 0.0
    %6727 = vmatprep.subr.mxu0 0.0
    %6728 = vmatpush1.xpose.msra.mxu0 0.0
    %6729 = vmatprep.subr.mxu0 0.0
    %6730 = vmatpush1.xpose.msra.mxu0 0.0
    %6731 = vmatprep.subr.mxu0 0.0
    %6732 = vmatpush1.xpose.msra.mxu0 0.0
    %6733 = vmatprep.subr.mxu0 0.0
    %6734 = vmatpush1.xpose.msra.mxu0 0.0
    %6735 = vmatprep.subr.mxu0 0.0
    %6736 = vmatpush1.xpose.msra.mxu0 0.0
    %6737 = vmatprep.subr.mxu0 0.0
    %6738 = vmatpush1.xpose.msra.mxu0 0.0
    %6739 = vmatprep.subr.mxu0 0.0
    %6740 = vmatpush1.xpose.msra.mxu0 0.0
    %6741 = vmatprep.subr.mxu0 0.0
    %6742 = vmatpush1.xpose.msra.mxu0 0.0
    %6743 = vmatprep.subr.mxu0 0.0
    %6744 = vmatpush1.xpose.msra.mxu0 0.0
    %6745 = vmatprep.subr.mxu0 0.0
    %6746 = vmatpush1.xpose.msra.mxu0 0.0
    %6747 = vmatprep.subr.mxu0 0.0
    %6748 = vmatpush1.xpose.msra.mxu0 0.0
    %6749 = vmatprep.subr.mxu0 0.0
    %6750 = vmatpush1.xpose.msra.mxu0 0.0
    %6751 = vmatprep.subr.mxu0 0.0
    %6752 = vmatpush1.xpose.msra.mxu0 0.0
    %6753 = vmatprep.subr.mxu0 0.0
    %6754 = vmatpush1.xpose.msra.mxu0 0.0
    %6755 = vmatprep.subr.mxu0 0.0
    %6756 = vmatpush1.xpose.msra.mxu0 0.0
    %6757 = vmatprep.subr.mxu0 0.0
    %6758 = vmatpush1.xpose.msra.mxu0 0.0
    %6759 = vmatprep.subr.mxu0 0.0
    %6760 = vmatpush1.xpose.msra.mxu0 0.0
    %6761 = vmatprep.subr.mxu0 0.0
    %6762 = vmatpush1.xpose.msra.mxu0 0.0
    %6763 = vmatprep.subr.mxu0 0.0
    %6764 = vmatpush1.xpose.msra.mxu0 0.0
    %6765 = vmatprep.subr.mxu0 0.0
    %6766 = vmatpush1.xpose.msra.mxu0 0.0
    %6767 = vmatprep.subr.mxu0 0.0
    %6768 = vmatpush1.xpose.msra.mxu0 0.0
    %6769 = vmatprep.subr.mxu0 0.0
    %6770 = vmatpush1.xpose.msra.mxu0 0.0
    %6771 = vmatprep.subr.mxu0 0.0
    %6772 = vmatpush1.xpose.msra.mxu0 0.0
    %6773 = vmatprep.subr.mxu0 0.0
    %6774 = vmatpush1.xpose.msra.mxu0 0.0
    %6775 = vmatprep.mubr.f32.mxu0 0.0
    %v6776 = vand.u32 %v3709, 4294901760
    %6777 = vmatmul.mubr.f32.gmra.mrb[0].mxu0 %v6776
    %v6778 = vpop.f32.mrb[0].mxu0
    %v6779 = vadd.f32 %v6705, %v6778
    %v6780 = vpop.f32.mrb[0].mxu0
    %6781 = vdwg.mxu0
    %6782 = vmatprep.subr.mxu0 0.0
    %v6783 = vand.u32 %v6406, 4294901760
    %6784 = vmatpush1.xpose.msra.mxu0 %v6783
    %6785 = vmatprep.subr.mxu0 0.0
    %6786 = vmatpush1.xpose.msra.mxu0 0.0
    %6787 = vmatprep.subr.mxu0 0.0
    %6788 = vmatpush1.xpose.msra.mxu0 0.0
    %6789 = vmatprep.subr.mxu0 0.0
    %6790 = vmatpush1.xpose.msra.mxu0 0.0
    %6791 = vmatprep.subr.mxu0 0.0
    %6792 = vmatpush1.xpose.msra.mxu0 0.0
    %6793 = vmatprep.subr.mxu0 0.0
    %6794 = vmatpush1.xpose.msra.mxu0 0.0
    %6795 = vmatprep.subr.mxu0 0.0
    %6796 = vmatpush1.xpose.msra.mxu0 0.0
    %6797 = vmatprep.subr.mxu0 0.0
    %6798 = vmatpush1.xpose.msra.mxu0 0.0
    %6799 = vmatprep.subr.mxu0 0.0
    %6800 = vmatpush1.xpose.msra.mxu0 0.0
    %6801 = vmatprep.subr.mxu0 0.0
    %6802 = vmatpush1.xpose.msra.mxu0 0.0
    %6803 = vmatprep.subr.mxu0 0.0
    %6804 = vmatpush1.xpose.msra.mxu0 0.0
    %6805 = vmatprep.subr.mxu0 0.0
    %6806 = vmatpush1.xpose.msra.mxu0 0.0
    %6807 = vmatprep.subr.mxu0 0.0
    %6808 = vmatpush1.xpose.msra.mxu0 0.0
    %6809 = vmatprep.subr.mxu0 0.0
    %6810 = vmatpush1.xpose.msra.mxu0 0.0
    %6811 = vmatprep.subr.mxu0 0.0
    %6812 = vmatpush1.xpose.msra.mxu0 0.0
    %6813 = vmatprep.subr.mxu0 0.0
    %6814 = vmatpush1.xpose.msra.mxu0 0.0
    %6815 = vmatprep.subr.mxu0 0.0
    %6816 = vmatpush1.xpose.msra.mxu0 0.0
    %6817 = vmatprep.subr.mxu0 0.0
    %6818 = vmatpush1.xpose.msra.mxu0 0.0
    %6819 = vmatprep.subr.mxu0 0.0
    %6820 = vmatpush1.xpose.msra.mxu0 0.0
    %6821 = vmatprep.subr.mxu0 0.0
    %6822 = vmatpush1.xpose.msra.mxu0 0.0
    %6823 = vmatprep.subr.mxu0 0.0
    %6824 = vmatpush1.xpose.msra.mxu0 0.0
    %6825 = vmatprep.subr.mxu0 0.0
    %6826 = vmatpush1.xpose.msra.mxu0 0.0
    %6827 = vmatprep.subr.mxu0 0.0
    %6828 = vmatpush1.xpose.msra.mxu0 0.0
    %6829 = vmatprep.subr.mxu0 0.0
    %6830 = vmatpush1.xpose.msra.mxu0 0.0
    %6831 = vmatprep.subr.mxu0 0.0
    %6832 = vmatpush1.xpose.msra.mxu0 0.0
    %6833 = vmatprep.subr.mxu0 0.0
    %6834 = vmatpush1.xpose.msra.mxu0 0.0
    %6835 = vmatprep.subr.mxu0 0.0
    %6836 = vmatpush1.xpose.msra.mxu0 0.0
    %6837 = vmatprep.subr.mxu0 0.0
    %6838 = vmatpush1.xpose.msra.mxu0 0.0
    %6839 = vmatprep.subr.mxu0 0.0
    %6840 = vmatpush1.xpose.msra.mxu0 0.0
    %6841 = vmatprep.subr.mxu0 0.0
    %6842 = vmatpush1.xpose.msra.mxu0 0.0
    %6843 = vmatprep.subr.mxu0 0.0
    %6844 = vmatpush1.xpose.msra.mxu0 0.0
    %6845 = vmatprep.subr.mxu0 0.0
    %6846 = vmatpush1.xpose.msra.mxu0 0.0
    %6847 = vmatprep.mubr.f32.mxu0 0.0
    %v6848 = vand.u32 %v3709, 4294901760
    %6849 = vmatmul.mubr.f32.gmra.mrb[0].mxu0 %v6848
    %v6850 = vpop.f32.mrb[0].mxu0
    %v6851 = vadd.f32 %v6779, %v6850
    %v6852 = vpop.f32.mrb[0].mxu0
    %6853 = vdwg.mxu0
    %v6855 = vsel %vm26, %v3707, 0
    %6857 = vmatprep.subr.mxu0 0.0
    %v6858 = vand.u32 %v6855, 4294901760
    %6859 = vmatpush1.xpose.msra.mxu0 %v6858
    %6860 = vmatprep.subr.mxu0 0.0
    %6861 = vmatpush1.xpose.msra.mxu0 0.0
    %6862 = vmatprep.subr.mxu0 0.0
    %6863 = vmatpush1.xpose.msra.mxu0 0.0
    %6864 = vmatprep.subr.mxu0 0.0
    %6865 = vmatpush1.xpose.msra.mxu0 0.0
    %6866 = vmatprep.subr.mxu0 0.0
    %6867 = vmatpush1.xpose.msra.mxu0 0.0
    %6868 = vmatprep.subr.mxu0 0.0
    %6869 = vmatpush1.xpose.msra.mxu0 0.0
    %6870 = vmatprep.subr.mxu0 0.0
    %6871 = vmatpush1.xpose.msra.mxu0 0.0
    %6872 = vmatprep.subr.mxu0 0.0
    %6873 = vmatpush1.xpose.msra.mxu0 0.0
    %6874 = vmatprep.subr.mxu0 0.0
    %6875 = vmatpush1.xpose.msra.mxu0 0.0
    %6876 = vmatprep.subr.mxu0 0.0
    %6877 = vmatpush1.xpose.msra.mxu0 0.0
    %6878 = vmatprep.subr.mxu0 0.0
    %6879 = vmatpush1.xpose.msra.mxu0 0.0
    %6880 = vmatprep.subr.mxu0 0.0
    %6881 = vmatpush1.xpose.msra.mxu0 0.0
    %6882 = vmatprep.subr.mxu0 0.0
    %6883 = vmatpush1.xpose.msra.mxu0 0.0
    %6884 = vmatprep.subr.mxu0 0.0
    %6885 = vmatpush1.xpose.msra.mxu0 0.0
    %6886 = vmatprep.subr.mxu0 0.0
    %6887 = vmatpush1.xpose.msra.mxu0 0.0
    %6888 = vmatprep.subr.mxu0 0.0
    %6889 = vmatpush1.xpose.msra.mxu0 0.0
    %6890 = vmatprep.subr.mxu0 0.0
    %6891 = vmatpush1.xpose.msra.mxu0 0.0
    %6892 = vmatprep.subr.mxu0 0.0
    %6893 = vmatpush1.xpose.msra.mxu0 0.0
    %6894 = vmatprep.subr.mxu0 0.0
    %6895 = vmatpush1.xpose.msra.mxu0 0.0
    %6896 = vmatprep.subr.mxu0 0.0
    %6897 = vmatpush1.xpose.msra.mxu0 0.0
    %6898 = vmatprep.subr.mxu0 0.0
    %6899 = vmatpush1.xpose.msra.mxu0 0.0
    %6900 = vmatprep.subr.mxu0 0.0
    %6901 = vmatpush1.xpose.msra.mxu0 0.0
    %6902 = vmatprep.subr.mxu0 0.0
    %6903 = vmatpush1.xpose.msra.mxu0 0.0
    %6904 = vmatprep.subr.mxu0 0.0
    %6905 = vmatpush1.xpose.msra.mxu0 0.0
    %6906 = vmatprep.subr.mxu0 0.0
    %6907 = vmatpush1.xpose.msra.mxu0 0.0
    %6908 = vmatprep.subr.mxu0 0.0
    %6909 = vmatpush1.xpose.msra.mxu0 0.0
    %6910 = vmatprep.subr.mxu0 0.0
    %6911 = vmatpush1.xpose.msra.mxu0 0.0
    %6912 = vmatprep.subr.mxu0 0.0
    %6913 = vmatpush1.xpose.msra.mxu0 0.0
    %6914 = vmatprep.subr.mxu0 0.0
    %6915 = vmatpush1.xpose.msra.mxu0 0.0
    %6916 = vmatprep.subr.mxu0 0.0
    %6917 = vmatpush1.xpose.msra.mxu0 0.0
    %6918 = vmatprep.subr.mxu0 0.0
    %6919 = vmatpush1.xpose.msra.mxu0 0.0
    %6920 = vmatprep.subr.mxu0 0.0
    %6921 = vmatpush1.xpose.msra.mxu0 0.0
    %6922 = vmatprep.mubr.f32.mxu0 0.0
    %v6923 = vand.u32 %v3709, 4294901760
    %v6924 = vsub.f32 %v3709, %v6923
    %v6925 = vand.u32 %v6924, 4294901760
    %v6926 = vsub.f32 %v6924, %v6925
    %v6927 = vand.u32 %v6926, 4294901760
    %6928 = vmatmul.mubr.f32.gmra.mrb[0].mxu0 %v6927
    %v6929 = vpop.f32.mrb[0].mxu0
    %v6930 = vadd.f32 0.0, %v6929
    %v6931 = vpop.f32.mrb[0].mxu0
    %6932 = vdwg.mxu0
    %6933 = vmatprep.subr.mxu0 0.0
    %v6934 = vand.u32 %v6855, 4294901760
    %v6935 = vsub.f32 %v6855, %v6934
    %v6936 = vand.u32 %v6935, 4294901760
    %v6937 = vsub.f32 %v6935, %v6936
    %v6938 = vand.u32 %v6937, 4294901760
    %6939 = vmatpush1.xpose.msra.mxu0 %v6938
    %6940 = vmatprep.subr.mxu0 0.0
    %6941 = vmatpush1.xpose.msra.mxu0 0.0
    %6942 = vmatprep.subr.mxu0 0.0
    %6943 = vmatpush1.xpose.msra.mxu0 0.0
    %6944 = vmatprep.subr.mxu0 0.0
    %6945 = vmatpush1.xpose.msra.mxu0 0.0
    %6946 = vmatprep.subr.mxu0 0.0
    %6947 = vmatpush1.xpose.msra.mxu0 0.0
    %6948 = vmatprep.subr.mxu0 0.0
    %6949 = vmatpush1.xpose.msra.mxu0 0.0
    %6950 = vmatprep.subr.mxu0 0.0
    %6951 = vmatpush1.xpose.msra.mxu0 0.0
    %6952 = vmatprep.subr.mxu0 0.0
    %6953 = vmatpush1.xpose.msra.mxu0 0.0
    %6954 = vmatprep.subr.mxu0 0.0
    %6955 = vmatpush1.xpose.msra.mxu0 0.0
    %6956 = vmatprep.subr.mxu0 0.0
    %6957 = vmatpush1.xpose.msra.mxu0 0.0
    %6958 = vmatprep.subr.mxu0 0.0
    %6959 = vmatpush1.xpose.msra.mxu0 0.0
    %6960 = vmatprep.subr.mxu0 0.0
    %6961 = vmatpush1.xpose.msra.mxu0 0.0
    %6962 = vmatprep.subr.mxu0 0.0
    %6963 = vmatpush1.xpose.msra.mxu0 0.0
    %6964 = vmatprep.subr.mxu0 0.0
    %6965 = vmatpush1.xpose.msra.mxu0 0.0
    %6966 = vmatprep.subr.mxu0 0.0
    %6967 = vmatpush1.xpose.msra.mxu0 0.0
    %6968 = vmatprep.subr.mxu0 0.0
    %6969 = vmatpush1.xpose.msra.mxu0 0.0
    %6970 = vmatprep.subr.mxu0 0.0
    %6971 = vmatpush1.xpose.msra.mxu0 0.0
    %6972 = vmatprep.subr.mxu0 0.0
    %6973 = vmatpush1.xpose.msra.mxu0 0.0
    %6974 = vmatprep.subr.mxu0 0.0
    %6975 = vmatpush1.xpose.msra.mxu0 0.0
    %6976 = vmatprep.subr.mxu0 0.0
    %6977 = vmatpush1.xpose.msra.mxu0 0.0
    %6978 = vmatprep.subr.mxu0 0.0
    %6979 = vmatpush1.xpose.msra.mxu0 0.0
    %6980 = vmatprep.subr.mxu0 0.0
    %6981 = vmatpush1.xpose.msra.mxu0 0.0
    %6982 = vmatprep.subr.mxu0 0.0
    %6983 = vmatpush1.xpose.msra.mxu0 0.0
    %6984 = vmatprep.subr.mxu0 0.0
    %6985 = vmatpush1.xpose.msra.mxu0 0.0
    %6986 = vmatprep.subr.mxu0 0.0
    %6987 = vmatpush1.xpose.msra.mxu0 0.0
    %6988 = vmatprep.subr.mxu0 0.0
    %6989 = vmatpush1.xpose.msra.mxu0 0.0
    %6990 = vmatprep.subr.mxu0 0.0
    %6991 = vmatpush1.xpose.msra.mxu0 0.0
    %6992 = vmatprep.subr.mxu0 0.0
    %6993 = vmatpush1.xpose.msra.mxu0 0.0
    %6994 = vmatprep.subr.mxu0 0.0
    %6995 = vmatpush1.xpose.msra.mxu0 0.0
    %6996 = vmatprep.subr.mxu0 0.0
    %6997 = vmatpush1.xpose.msra.mxu0 0.0
    %6998 = vmatprep.subr.mxu0 0.0
    %6999 = vmatpush1.xpose.msra.mxu0 0.0
    %7000 = vmatprep.subr.mxu0 0.0
    %7001 = vmatpush1.xpose.msra.mxu0 0.0
    %7002 = vmatprep.mubr.f32.mxu0 0.0
    %v7003 = vand.u32 %v3709, 4294901760
    %7004 = vmatmul.mubr.f32.gmra.mrb[0].mxu0 %v7003
    %v7005 = vpop.f32.mrb[0].mxu0
    %v7006 = vadd.f32 %v6930, %v7005
    %v7007 = vpop.f32.mrb[0].mxu0
    %7008 = vdwg.mxu0
    %7009 = vmatprep.subr.mxu0 0.0
    %v7010 = vand.u32 %v6855, 4294901760
    %v7011 = vsub.f32 %v6855, %v7010
    %7012 = vmatpush1.xpose.msra.mxu0 %v7011
    %7013 = vmatprep.subr.mxu0 0.0
    %7014 = vmatpush1.xpose.msra.mxu0 0.0
    %7015 = vmatprep.subr.mxu0 0.0
    %7016 = vmatpush1.xpose.msra.mxu0 0.0
    %7017 = vmatprep.subr.mxu0 0.0
    %7018 = vmatpush1.xpose.msra.mxu0 0.0
    %7019 = vmatprep.subr.mxu0 0.0
    %7020 = vmatpush1.xpose.msra.mxu0 0.0
    %7021 = vmatprep.subr.mxu0 0.0
    %7022 = vmatpush1.xpose.msra.mxu0 0.0
    %7023 = vmatprep.subr.mxu0 0.0
    %7024 = vmatpush1.xpose.msra.mxu0 0.0
    %7025 = vmatprep.subr.mxu0 0.0
    %7026 = vmatpush1.xpose.msra.mxu0 0.0
    %7027 = vmatprep.subr.mxu0 0.0
    %7028 = vmatpush1.xpose.msra.mxu0 0.0
    %7029 = vmatprep.subr.mxu0 0.0
    %7030 = vmatpush1.xpose.msra.mxu0 0.0
    %7031 = vmatprep.subr.mxu0 0.0
    %7032 = vmatpush1.xpose.msra.mxu0 0.0
    %7033 = vmatprep.subr.mxu0 0.0
    %7034 = vmatpush1.xpose.msra.mxu0 0.0
    %7035 = vmatprep.subr.mxu0 0.0
    %7036 = vmatpush1.xpose.msra.mxu0 0.0
    %7037 = vmatprep.subr.mxu0 0.0
    %7038 = vmatpush1.xpose.msra.mxu0 0.0
    %7039 = vmatprep.subr.mxu0 0.0
    %7040 = vmatpush1.xpose.msra.mxu0 0.0
    %7041 = vmatprep.subr.mxu0 0.0
    %7042 = vmatpush1.xpose.msra.mxu0 0.0
    %7043 = vmatprep.subr.mxu0 0.0
    %7044 = vmatpush1.xpose.msra.mxu0 0.0
    %7045 = vmatprep.subr.mxu0 0.0
    %7046 = vmatpush1.xpose.msra.mxu0 0.0
    %7047 = vmatprep.subr.mxu0 0.0
    %7048 = vmatpush1.xpose.msra.mxu0 0.0
    %7049 = vmatprep.subr.mxu0 0.0
    %7050 = vmatpush1.xpose.msra.mxu0 0.0
    %7051 = vmatprep.subr.mxu0 0.0
    %7052 = vmatpush1.xpose.msra.mxu0 0.0
    %7053 = vmatprep.subr.mxu0 0.0
    %7054 = vmatpush1.xpose.msra.mxu0 0.0
    %7055 = vmatprep.subr.mxu0 0.0
    %7056 = vmatpush1.xpose.msra.mxu0 0.0
    %7057 = vmatprep.subr.mxu0 0.0
    %7058 = vmatpush1.xpose.msra.mxu0 0.0
    %7059 = vmatprep.subr.mxu0 0.0
    %7060 = vmatpush1.xpose.msra.mxu0 0.0
    %7061 = vmatprep.subr.mxu0 0.0
    %7062 = vmatpush1.xpose.msra.mxu0 0.0
    %7063 = vmatprep.subr.mxu0 0.0
    %7064 = vmatpush1.xpose.msra.mxu0 0.0
    %7065 = vmatprep.subr.mxu0 0.0
    %7066 = vmatpush1.xpose.msra.mxu0 0.0
    %7067 = vmatprep.subr.mxu0 0.0
    %7068 = vmatpush1.xpose.msra.mxu0 0.0
    %7069 = vmatprep.subr.mxu0 0.0
    %7070 = vmatpush1.xpose.msra.mxu0 0.0
    %7071 = vmatprep.subr.mxu0 0.0
    %7072 = vmatpush1.xpose.msra.mxu0 0.0
    %7073 = vmatprep.subr.mxu0 0.0
    %7074 = vmatpush1.xpose.msra.mxu0 0.0
    %7075 = vmatprep.mubr.f32.mxu0 0.0
    %v7076 = vand.u32 %v3709, 4294901760
    %v7077 = vsub.f32 %v3709, %v7076
    %7078 = vmatmul.mubr.f32.gmra.mrb[0].mxu0 %v7077
    %v7079 = vpop.f32.mrb[0].mxu0
    %v7080 = vadd.f32 %v7006, %v7079
    %v7081 = vpop.f32.mrb[0].mxu0
    %7082 = vdwg.mxu0
    %7083 = vmatprep.subr.mxu0 0.0
    %v7084 = vand.u32 %v6855, 4294901760
    %7085 = vmatpush1.xpose.msra.mxu0 %v7084
    %7086 = vmatprep.subr.mxu0 0.0
    %7087 = vmatpush1.xpose.msra.mxu0 0.0
    %7088 = vmatprep.subr.mxu0 0.0
    %7089 = vmatpush1.xpose.msra.mxu0 0.0
    %7090 = vmatprep.subr.mxu0 0.0
    %7091 = vmatpush1.xpose.msra.mxu0 0.0
    %7092 = vmatprep.subr.mxu0 0.0
    %7093 = vmatpush1.xpose.msra.mxu0 0.0
    %7094 = vmatprep.subr.mxu0 0.0
    %7095 = vmatpush1.xpose.msra.mxu0 0.0
    %7096 = vmatprep.subr.mxu0 0.0
    %7097 = vmatpush1.xpose.msra.mxu0 0.0
    %7098 = vmatprep.subr.mxu0 0.0
    %7099 = vmatpush1.xpose.msra.mxu0 0.0
    %7100 = vmatprep.subr.mxu0 0.0
    %7101 = vmatpush1.xpose.msra.mxu0 0.0
    %7102 = vmatprep.subr.mxu0 0.0
    %7103 = vmatpush1.xpose.msra.mxu0 0.0
    %7104 = vmatprep.subr.mxu0 0.0
    %7105 = vmatpush1.xpose.msra.mxu0 0.0
    %7106 = vmatprep.subr.mxu0 0.0
    %7107 = vmatpush1.xpose.msra.mxu0 0.0
    %7108 = vmatprep.subr.mxu0 0.0
    %7109 = vmatpush1.xpose.msra.mxu0 0.0
    %7110 = vmatprep.subr.mxu0 0.0
    %7111 = vmatpush1.xpose.msra.mxu0 0.0
    %7112 = vmatprep.subr.mxu0 0.0
    %7113 = vmatpush1.xpose.msra.mxu0 0.0
    %7114 = vmatprep.subr.mxu0 0.0
    %7115 = vmatpush1.xpose.msra.mxu0 0.0
    %7116 = vmatprep.subr.mxu0 0.0
    %7117 = vmatpush1.xpose.msra.mxu0 0.0
    %7118 = vmatprep.subr.mxu0 0.0
    %7119 = vmatpush1.xpose.msra.mxu0 0.0
    %7120 = vmatprep.subr.mxu0 0.0
    %7121 = vmatpush1.xpose.msra.mxu0 0.0
    %7122 = vmatprep.subr.mxu0 0.0
    %7123 = vmatpush1.xpose.msra.mxu0 0.0
    %7124 = vmatprep.subr.mxu0 0.0
    %7125 = vmatpush1.xpose.msra.mxu0 0.0
    %7126 = vmatprep.subr.mxu0 0.0
    %7127 = vmatpush1.xpose.msra.mxu0 0.0
    %7128 = vmatprep.subr.mxu0 0.0
    %7129 = vmatpush1.xpose.msra.mxu0 0.0
    %7130 = vmatprep.subr.mxu0 0.0
    %7131 = vmatpush1.xpose.msra.mxu0 0.0
    %7132 = vmatprep.subr.mxu0 0.0
    %7133 = vmatpush1.xpose.msra.mxu0 0.0
    %7134 = vmatprep.subr.mxu0 0.0
    %7135 = vmatpush1.xpose.msra.mxu0 0.0
    %7136 = vmatprep.subr.mxu0 0.0
    %7137 = vmatpush1.xpose.msra.mxu0 0.0
    %7138 = vmatprep.subr.mxu0 0.0
    %7139 = vmatpush1.xpose.msra.mxu0 0.0
    %7140 = vmatprep.subr.mxu0 0.0
    %7141 = vmatpush1.xpose.msra.mxu0 0.0
    %7142 = vmatprep.subr.mxu0 0.0
    %7143 = vmatpush1.xpose.msra.mxu0 0.0
    %7144 = vmatprep.subr.mxu0 0.0
    %7145 = vmatpush1.xpose.msra.mxu0 0.0
    %7146 = vmatprep.subr.mxu0 0.0
    %7147 = vmatpush1.xpose.msra.mxu0 0.0
    %7148 = vmatprep.mubr.f32.mxu0 0.0
    %v7149 = vand.u32 %v3709, 4294901760
    %v7150 = vsub.f32 %v3709, %v7149
    %v7151 = vand.u32 %v7150, 4294901760
    %7152 = vmatmul.mubr.f32.gmra.mrb[0].mxu0 %v7151
    %v7153 = vpop.f32.mrb[0].mxu0
    %v7154 = vadd.f32 %v7080, %v7153
    %v7155 = vpop.f32.mrb[0].mxu0
    %7156 = vdwg.mxu0
    %7157 = vmatprep.subr.mxu0 0.0
    %v7158 = vand.u32 %v6855, 4294901760
    %v7159 = vsub.f32 %v6855, %v7158
    %v7160 = vand.u32 %v7159, 4294901760
    %7161 = vmatpush1.xpose.msra.mxu0 %v7160
    %7162 = vmatprep.subr.mxu0 0.0
    %7163 = vmatpush1.xpose.msra.mxu0 0.0
    %7164 = vmatprep.subr.mxu0 0.0
    %7165 = vmatpush1.xpose.msra.mxu0 0.0
    %7166 = vmatprep.subr.mxu0 0.0
    %7167 = vmatpush1.xpose.msra.mxu0 0.0
    %7168 = vmatprep.subr.mxu0 0.0
    %7169 = vmatpush1.xpose.msra.mxu0 0.0
    %7170 = vmatprep.subr.mxu0 0.0
    %7171 = vmatpush1.xpose.msra.mxu0 0.0
    %7172 = vmatprep.subr.mxu0 0.0
    %7173 = vmatpush1.xpose.msra.mxu0 0.0
    %7174 = vmatprep.subr.mxu0 0.0
    %7175 = vmatpush1.xpose.msra.mxu0 0.0
    %7176 = vmatprep.subr.mxu0 0.0
    %7177 = vmatpush1.xpose.msra.mxu0 0.0
    %7178 = vmatprep.subr.mxu0 0.0
    %7179 = vmatpush1.xpose.msra.mxu0 0.0
    %7180 = vmatprep.subr.mxu0 0.0
    %7181 = vmatpush1.xpose.msra.mxu0 0.0
    %7182 = vmatprep.subr.mxu0 0.0
    %7183 = vmatpush1.xpose.msra.mxu0 0.0
    %7184 = vmatprep.subr.mxu0 0.0
    %7185 = vmatpush1.xpose.msra.mxu0 0.0
    %7186 = vmatprep.subr.mxu0 0.0
    %7187 = vmatpush1.xpose.msra.mxu0 0.0
    %7188 = vmatprep.subr.mxu0 0.0
    %7189 = vmatpush1.xpose.msra.mxu0 0.0
    %7190 = vmatprep.subr.mxu0 0.0
    %7191 = vmatpush1.xpose.msra.mxu0 0.0
    %7192 = vmatprep.subr.mxu0 0.0
    %7193 = vmatpush1.xpose.msra.mxu0 0.0
    %7194 = vmatprep.subr.mxu0 0.0
    %7195 = vmatpush1.xpose.msra.mxu0 0.0
    %7196 = vmatprep.subr.mxu0 0.0
    %7197 = vmatpush1.xpose.msra.mxu0 0.0
    %7198 = vmatprep.subr.mxu0 0.0
    %7199 = vmatpush1.xpose.msra.mxu0 0.0
    %7200 = vmatprep.subr.mxu0 0.0
    %7201 = vmatpush1.xpose.msra.mxu0 0.0
    %7202 = vmatprep.subr.mxu0 0.0
    %7203 = vmatpush1.xpose.msra.mxu0 0.0
    %7204 = vmatprep.subr.mxu0 0.0
    %7205 = vmatpush1.xpose.msra.mxu0 0.0
    %7206 = vmatprep.subr.mxu0 0.0
    %7207 = vmatpush1.xpose.msra.mxu0 0.0
    %7208 = vmatprep.subr.mxu0 0.0
    %7209 = vmatpush1.xpose.msra.mxu0 0.0
    %7210 = vmatprep.subr.mxu0 0.0
    %7211 = vmatpush1.xpose.msra.mxu0 0.0
    %7212 = vmatprep.subr.mxu0 0.0
    %7213 = vmatpush1.xpose.msra.mxu0 0.0
    %7214 = vmatprep.subr.mxu0 0.0
    %7215 = vmatpush1.xpose.msra.mxu0 0.0
    %7216 = vmatprep.subr.mxu0 0.0
    %7217 = vmatpush1.xpose.msra.mxu0 0.0
    %7218 = vmatprep.subr.mxu0 0.0
    %7219 = vmatpush1.xpose.msra.mxu0 0.0
    %7220 = vmatprep.subr.mxu0 0.0
    %7221 = vmatpush1.xpose.msra.mxu0 0.0
    %7222 = vmatprep.subr.mxu0 0.0
    %7223 = vmatpush1.xpose.msra.mxu0 0.0
    %7224 = vmatprep.mubr.f32.mxu0 0.0
    %v7225 = vand.u32 %v3709, 4294901760
    %7226 = vmatmul.mubr.f32.gmra.mrb[0].mxu0 %v7225
    %v7227 = vpop.f32.mrb[0].mxu0
    %v7228 = vadd.f32 %v7154, %v7227
    %v7229 = vpop.f32.mrb[0].mxu0
    %7230 = vdwg.mxu0
    %7231 = vmatprep.subr.mxu0 0.0
    %v7232 = vand.u32 %v6855, 4294901760
    %7233 = vmatpush1.xpose.msra.mxu0 %v7232
    %7234 = vmatprep.subr.mxu0 0.0
    %7235 = vmatpush1.xpose.msra.mxu0 0.0
    %7236 = vmatprep.subr.mxu0 0.0
    %7237 = vmatpush1.xpose.msra.mxu0 0.0
    %7238 = vmatprep.subr.mxu0 0.0
    %7239 = vmatpush1.xpose.msra.mxu0 0.0
    %7240 = vmatprep.subr.mxu0 0.0
    %7241 = vmatpush1.xpose.msra.mxu0 0.0
    %7242 = vmatprep.subr.mxu0 0.0
    %7243 = vmatpush1.xpose.msra.mxu0 0.0
    %7244 = vmatprep.subr.mxu0 0.0
    %7245 = vmatpush1.xpose.msra.mxu0 0.0
    %7246 = vmatprep.subr.mxu0 0.0
    %7247 = vmatpush1.xpose.msra.mxu0 0.0
    %7248 = vmatprep.subr.mxu0 0.0
    %7249 = vmatpush1.xpose.msra.mxu0 0.0
    %7250 = vmatprep.subr.mxu0 0.0
    %7251 = vmatpush1.xpose.msra.mxu0 0.0
    %7252 = vmatprep.subr.mxu0 0.0
    %7253 = vmatpush1.xpose.msra.mxu0 0.0
    %7254 = vmatprep.subr.mxu0 0.0
    %7255 = vmatpush1.xpose.msra.mxu0 0.0
    %7256 = vmatprep.subr.mxu0 0.0
    %7257 = vmatpush1.xpose.msra.mxu0 0.0
    %7258 = vmatprep.subr.mxu0 0.0
    %7259 = vmatpush1.xpose.msra.mxu0 0.0
    %7260 = vmatprep.subr.mxu0 0.0
    %7261 = vmatpush1.xpose.msra.mxu0 0.0
    %7262 = vmatprep.subr.mxu0 0.0
    %7263 = vmatpush1.xpose.msra.mxu0 0.0
    %7264 = vmatprep.subr.mxu0 0.0
    %7265 = vmatpush1.xpose.msra.mxu0 0.0
    %7266 = vmatprep.subr.mxu0 0.0
    %7267 = vmatpush1.xpose.msra.mxu0 0.0
    %7268 = vmatprep.subr.mxu0 0.0
    %7269 = vmatpush1.xpose.msra.mxu0 0.0
    %7270 = vmatprep.subr.mxu0 0.0
    %7271 = vmatpush1.xpose.msra.mxu0 0.0
    %7272 = vmatprep.subr.mxu0 0.0
    %7273 = vmatpush1.xpose.msra.mxu0 0.0
    %7274 = vmatprep.subr.mxu0 0.0
    %7275 = vmatpush1.xpose.msra.mxu0 0.0
    %7276 = vmatprep.subr.mxu0 0.0
    %7277 = vmatpush1.xpose.msra.mxu0 0.0
    %7278 = vmatprep.subr.mxu0 0.0
    %7279 = vmatpush1.xpose.msra.mxu0 0.0
    %7280 = vmatprep.subr.mxu0 0.0
    %7281 = vmatpush1.xpose.msra.mxu0 0.0
    %7282 = vmatprep.subr.mxu0 0.0
    %7283 = vmatpush1.xpose.msra.mxu0 0.0
    %7284 = vmatprep.subr.mxu0 0.0
    %7285 = vmatpush1.xpose.msra.mxu0 0.0
    %7286 = vmatprep.subr.mxu0 0.0
    %7287 = vmatpush1.xpose.msra.mxu0 0.0
    %7288 = vmatprep.subr.mxu0 0.0
    %7289 = vmatpush1.xpose.msra.mxu0 0.0
    %7290 = vmatprep.subr.mxu0 0.0
    %7291 = vmatpush1.xpose.msra.mxu0 0.0
    %7292 = vmatprep.subr.mxu0 0.0
    %7293 = vmatpush1.xpose.msra.mxu0 0.0
    %7294 = vmatprep.subr.mxu0 0.0
    %7295 = vmatpush1.xpose.msra.mxu0 0.0
    %7296 = vmatprep.mubr.f32.mxu0 0.0
    %v7297 = vand.u32 %v3709, 4294901760
    %7298 = vmatmul.mubr.f32.gmra.mrb[0].mxu0 %v7297
    %v7299 = vpop.f32.mrb[0].mxu0
    %v7300 = vadd.f32 %v7228, %v7299
    %v7301 = vpop.f32.mrb[0].mxu0
    %7302 = vdwg.mxu0
    %v7303 = vmax.f32 %v4157, 1e-24
    %v7304 = vmax.f32 %v4606, 1e-24
    %v7305 = vmax.f32 %v5055, 1e-24
    %v7306 = vmax.f32 %v5504, 1e-24
    %v7307 = vmax.f32 %v5953, 1e-24
    %v7308 = vmax.f32 %v6402, 1e-24
    %v7309 = vmax.f32 %v6851, 1e-24
    %v7310 = vmax.f32 %v7300, 1e-24
    %v7311 = vrsqrt.pop %v7303
    %v7312 = vrsqrt.pop %v7304
    %v7313 = vrsqrt.pop %v7305
    %v7314 = vrsqrt.pop %v7306
    %v7315 = vrsqrt.pop %v7307
    %v7316 = vrsqrt.pop %v7308
    %v7317 = vrsqrt.pop %v7309
    %v7318 = vrsqrt.pop %v7310
    %v7319 = vmul.f32 %v39, %v41
    %v7320 = vmul.f32 %v37, %v7319
    %v7321 = vmul.f32 %v7320, 14.285714
    %v7330 = vrot.slane %v7312, 7
    %vm7331 = vcmask 1041409
    %v7332 = vsel %vm7331, %v7330, %v7311
    %v7333 = vrot.slane %v7313, 6
    %vm7334 = vcmask 1042434
    %v7335 = vsel %vm7334, %v7333, %v7332
    %v7336 = vrot.slane %v7314, 5
    %vm7337 = vcmask 1043459
    %v7338 = vsel %vm7337, %v7336, %v7335
    %v7339 = vrot.slane %v7315, 4
    %vm7340 = vcmask 1044484
    %v7341 = vsel %vm7340, %v7339, %v7338
    %v7342 = vrot.slane %v7316, 3
    %vm7343 = vcmask 1045509
    %v7344 = vsel %vm7343, %v7342, %v7341
    %v7345 = vrot.slane %v7317, 2
    %vm7346 = vcmask 1046534
    %v7347 = vsel %vm7346, %v7345, %v7344
    %v7348 = vrot.slane %v7318, 1
    %vm7349 = vcmask 1047559
    %v7350 = vsel %vm7349, %v7348, %v7347
    %v7352 = vmul.f32 %v39, %v7350
    %v7354 = vrot.slane %v7352, 1
    %v7355 = vrot.slane %v7352, 2
    %v7356 = vrot.slane %v7352, 3
    %v7357 = vrot.slane %v7352, 4
    %v7358 = vrot.slane %v7352, 5
    %v7359 = vrot.slane %v7352, 6
    %v7360 = vrot.slane %v7352, 7
    %v7369 = vmul.f32 %v540, %v7352
    %v7370 = vmul.f32 %v991, %v7354
    %v7371 = vmul.f32 %v1442, %v7355
    %v7372 = vmul.f32 %v1893, %v7356
    %v7373 = vmul.f32 %v2344, %v7357
    %v7374 = vmul.f32 %v2795, %v7358
    %v7375 = vmul.f32 %v3246, %v7359
    %v7376 = vmul.f32 %v3697, %v7360
    %v7377 = vmul.f32 %v7369, 14.285714
    %v7378 = vmul.f32 %v7370, 14.285714
    %v7379 = vmul.f32 %v7371, 14.285714
    %v7380 = vmul.f32 %v7372, 14.285714
    %v7381 = vmul.f32 %v7373, 14.285714
    %v7382 = vmul.f32 %v7374, 14.285714
    %v7383 = vmul.f32 %v7375, 14.285714
    %v7384 = vmul.f32 %v7376, 14.285714
    %v7393 = vrot.slane %v7378, 7
    %v7394 = vsel %vm7331, %v7393, %v7377
    %v7395 = vrot.slane %v7379, 6
    %v7396 = vsel %vm7334, %v7395, %v7394
    %v7397 = vrot.slane %v7380, 5
    %v7398 = vsel %vm7337, %v7397, %v7396
    %v7399 = vrot.slane %v7381, 4
    %v7400 = vsel %vm7340, %v7399, %v7398
    %v7401 = vrot.slane %v7382, 3
    %v7402 = vsel %vm7343, %v7401, %v7400
    %v7403 = vrot.slane %v7383, 2
    %v7404 = vsel %vm7346, %v7403, %v7402
    %v7405 = vrot.slane %v7384, 1
    %v7406 = vsel %vm7349, %v7405, %v7404
    %vm7408 = vcmask 56320
    %v7409 = vsel %vm7408, %v7406, -inf
    %7410 = vmax.xlane.f32.xlu0 %v7409
    %v7411 = vpop.xlane.xlu0 %7410
    %v7412 = vmax.f32 %v7321, %v7411
    %v7413 = vsub.f32 %v7321, %v7412
    %v7414 = vmul.f32 %v7413, 1.442695
    %v7415 = vpow.pop %v7414
    %v7417 = vrot.slane %v7412, 1
    %v7418 = vrot.slane %v7412, 2
    %v7419 = vrot.slane %v7412, 3
    %v7420 = vrot.slane %v7412, 4
    %v7421 = vrot.slane %v7412, 5
    %v7422 = vrot.slane %v7412, 6
    %v7423 = vrot.slane %v7412, 7
    %v7432 = vsub.f32 %v7377, %v7412
    %v7433 = vsub.f32 %v7378, %v7417
    %v7434 = vsub.f32 %v7379, %v7418
    %v7435 = vsub.f32 %v7380, %v7419
    %v7436 = vsub.f32 %v7381, %v7420
    %v7437 = vsub.f32 %v7382, %v7421
    %v7438 = vsub.f32 %v7383, %v7422
    %v7439 = vsub.f32 %v7384, %v7423
    %v7440 = vmul.f32 %v7432, 1.442695
    %v7441 = vpow.pop %v7440
    %v7442 = vmul.f32 %v7433, 1.442695
    %v7443 = vpow.pop %v7442
    %v7444 = vmul.f32 %v7434, 1.442695
    %v7445 = vpow.pop %v7444
    %v7446 = vmul.f32 %v7435, 1.442695
    %v7447 = vpow.pop %v7446
    %v7448 = vmul.f32 %v7436, 1.442695
    %v7449 = vpow.pop %v7448
    %v7450 = vmul.f32 %v7437, 1.442695
    %v7451 = vpow.pop %v7450
    %v7452 = vmul.f32 %v7438, 1.442695
    %v7453 = vpow.pop %v7452
    %v7454 = vmul.f32 %v7439, 1.442695
    %v7455 = vpow.pop %v7454
    %v7464 = vrot.slane %v7443, 7
    %v7465 = vsel %vm7331, %v7464, %v7441
    %v7466 = vrot.slane %v7445, 6
    %v7467 = vsel %vm7334, %v7466, %v7465
    %v7468 = vrot.slane %v7447, 5
    %v7469 = vsel %vm7337, %v7468, %v7467
    %v7470 = vrot.slane %v7449, 4
    %v7471 = vsel %vm7340, %v7470, %v7469
    %v7472 = vrot.slane %v7451, 3
    %v7473 = vsel %vm7343, %v7472, %v7471
    %v7474 = vrot.slane %v7453, 2
    %v7475 = vsel %vm7346, %v7474, %v7473
    %v7476 = vrot.slane %v7455, 1
    %v7477 = vsel %vm7349, %v7476, %v7475
    %v7479 = vsel %vm7408, %v7477, 0.0
    %7480 = vadd.xlane.f32.xlu0 %v7479
    %v7481 = vpop.xlane.xlu0 %7480
    %v7482 = vadd.f32 %v7415, %v7481
    %v7483 = vsub.f32 %v7412, %v7321
    %v7484 = vlog2.pop %v7482
    %v7485 = vmul.f32 %v7484, 0.6931472
    %v7486 = vadd.f32 %v7483, %v7485
    %7487 = vst [vmem:[#allocation2] sm:$0xff] %v7486
    // Predicated region
    $region14: #{tpu_custom_call.1} parent=1 // pred_check
      _
    $region15: #{tpu_custom_call.1} parent=1 // pred_check_branch
      %7489 = sbr.rel (0) target = $region17
    $region16: #{tpu_custom_call.1} parent=1 // pred_region
      %s7491 = ssub.s32 128, 128
      %7492 = vsyncadd [#allocation3], %s7491
      %s7494 = sshll.u32 [#allocation2], 4
      %s7495 = int_to_ptr.vmem [resolvable:$true] %s7494
      %7497 = dma.vmem_to_hbm [thread:$0]  %s7495, 128, %s3, [#allocation3]
    $region17: #{tpu_custom_call.1} parent=1 // pred_fallthru
      _
    // Predicated region
    $region18: #{tpu_custom_call.1} parent=1 // pred_check
      _
    $region19: #{tpu_custom_call.1} parent=1 // pred_check_branch
      %7499 = sbr.rel (0) target = $region21
    $region20: #{tpu_custom_call.1} parent=1 // pred_region
      %7500 = dma.done [#allocation3], 128
    $region21: #{tpu_custom_call.1} parent=1 // pred_fallthru
      _
    %7501 = vsyncpa [#allocation3], 1

</llo_original>
